<compile_context>
chip_gen: v7x
topology: tpu7x:2x2x1
jax: 0.10.0
libtpu: 0.0.40
codegen_flags: <defaults>
</compile_context>

<pallas_src>
import functools
import numpy as np
import jax
import jax.numpy as jnp
from jax.experimental import pallas as pl
from jax.experimental.pallas import tpu as pltpu


# ----------------------------------------------------------------------------
# helpers
# ----------------------------------------------------------------------------
def _pick_tile(dim, pref, unit):
    """Tile for `dim`: full extent if dim <= pref (always legal via the full-dim exception of
    the (8,128) rule), else the largest multiple of `unit` <= pref that divides dim, else the
    full extent (single big block). Guarantees dim % tile == 0 -> no padding copies, ever."""
    if dim <= pref:
        return dim
    t = (pref // unit) * unit
    while t >= unit:
        if dim % t == 0:
            return t
        t -= unit
    return dim


def _vmem_limit(nbytes):
    """Per-kernel scoped-VMEM cap: ~2x the live block footprint (covers double-buffering),
    floored at 8 MiB for Mosaic internal scratch, capped well below v7x's 64 MiB physical."""
    return int(min(32 * 1024 * 1024, max(8 * 1024 * 1024, 2 * int(nbytes))))


# ----------------------------------------------------------------------------
# Pallas kernels
# ----------------------------------------------------------------------------
def _mm_kernel(a_ref, b_ref, bias_ref, o_ref, acc_ref, *, relu):
    """out = relu?((a @ b) + bias); bf16 operands, f32 accumulation in VMEM scratch, bf16 out."""
    @pl.when(pl.program_id(2) == 0)
    def _():
        acc_ref[...] = jnp.zeros_like(acc_ref)

    acc_ref[...] += jnp.dot(a_ref[...], b_ref[...], preferred_element_type=jnp.float32)

    @pl.when(pl.program_id(2) == pl.num_programs(2) - 1)
    def _():
        acc = acc_ref[...] + bias_ref[...]
        if relu:
            acc = jnp.maximum(acc, 0.0)
        o_ref[...] = acc.astype(o_ref.dtype)


def pallas_matmul(a, b, bias, relu=False, *, out_dtype=jnp.bfloat16):
    """out = relu?(a @ b + bias). a:(M,K) bf16, b:(K,N) bf16 (pre-cast), bias:(N,) f32."""
    M, K = a.shape
    K2, N = b.shape
    assert K == K2, (K, K2)
    if a.dtype != jnp.bfloat16:          # safety only; activations are bf16 end-to-end
        a = a.astype(jnp.bfloat16)

    tm = _pick_tile(M, 128, 8)           # 128 -> >=4 parallel M blocks for v7x megacore
    tn = _pick_tile(N, 256, 128)
    tk = _pick_tile(K, 512, 128)
    grid = (M // tm, N // tn, K // tk)

    bias2 = bias.reshape(1, N).astype(jnp.float32)
    vmem = 2 * 2 * (tm * tk + tk * tn + tm * tn) + tm * tn * 4 + 2 * 4 * tn
    cost = pl.CostEstimate(flops=2 * M * N * K, transcendentals=0,
                           bytes_accessed=2 * (M * K + K * N + M * N) + 4 * N)

    return pl.pallas_call(
        functools.partial(_mm_kernel, relu=relu),
        out_shape=jax.ShapeDtypeStruct((M, N), out_dtype),
        grid_spec=pltpu.PrefetchScalarGridSpec(
            num_scalar_prefetch=0,
            grid=grid,
            in_specs=[
                pl.BlockSpec((tm, tk), lambda i, j, k: (i, k)),
                pl.BlockSpec((tk, tn), lambda i, j, k: (k, j)),
                pl.BlockSpec((1, tn), lambda i, j, k: (0, j)),
            ],
            out_specs=pl.BlockSpec((tm, tn), lambda i, j, k: (i, j)),
            scratch_shapes=[pltpu.VMEM((tm, tn), jnp.float32)],
        ),
        compiler_params=pltpu.CompilerParams(
            dimension_semantics=("parallel", "parallel", "arbitrary"),
            vmem_limit_bytes=_vmem_limit(vmem),
        ),
        cost_estimate=cost,
    )(a, b, bias2)


def _mm2_kernel(a1_ref, a2_ref, b1_ref, b2_ref, bias_ref, o_ref, acc_ref, *, relu):
    """out = relu?(a1 @ b1 + a2 @ b2 + bias) — replaces concat([a1,a2]) @ [b1;b2]."""
    @pl.when(pl.program_id(2) == 0)
    def _():
        acc_ref[...] = jnp.zeros_like(acc_ref)

    acc = jnp.dot(a1_ref[...], b1_ref[...], preferred_element_type=jnp.float32)
    acc += jnp.dot(a2_ref[...], b2_ref[...], preferred_element_type=jnp.float32)
    acc_ref[...] += acc

    @pl.when(pl.program_id(2) == pl.num_programs(2) - 1)
    def _():
        r = acc_ref[...] + bias_ref[...]
        if relu:
            r = jnp.maximum(r, 0.0)
        o_ref[...] = r.astype(o_ref.dtype)


def pallas_dual_matmul(a1, a2, b1, b2, bias, relu=False, *, out_dtype=jnp.bfloat16):
    M, K = a1.shape
    assert a2.shape == (M, K) and b1.shape[0] == K and b2.shape[0] == K
    N = b1.shape[1]
    assert b2.shape[1] == N

    tm = _pick_tile(M, 128, 8)
    tn = _pick_tile(N, 256, 128)
    tk = _pick_tile(K, 512, 128)
    grid = (M // tm, N // tn, K // tk)
    bias2 = bias.reshape(1, N).astype(jnp.float32)
    vmem = 2 * 2 * (2 * tm * tk + 2 * tk * tn + tm * tn) + tm * tn * 4 + 2 * 4 * tn

    return pl.pallas_call(
        functools.partial(_mm2_kernel, relu=relu),
        out_shape=jax.ShapeDtypeStruct((M, N), out_dtype),
        grid_spec=pltpu.PrefetchScalarGridSpec(
            num_scalar_prefetch=0,
            grid=grid,
            in_specs=[
                pl.BlockSpec((tm, tk), lambda i, j, k: (i, k)),
                pl.BlockSpec((tm, tk), lambda i, j, k: (i, k)),
                pl.BlockSpec((tk, tn), lambda i, j, k: (k, j)),
                pl.BlockSpec((tk, tn), lambda i, j, k: (k, j)),
                pl.BlockSpec((1, tn), lambda i, j, k: (0, j)),
            ],
            out_specs=pl.BlockSpec((tm, tn), lambda i, j, k: (i, j)),
            scratch_shapes=[pltpu.VMEM((tm, tn), jnp.float32)],
        ),
        compiler_params=pltpu.CompilerParams(
            dimension_semantics=("parallel", "parallel", "arbitrary"),
            vmem_limit_bytes=_vmem_limit(vmem),
        ),
        cost_estimate=pl.CostEstimate(flops=4 * M * N * K, transcendentals=0,
                                      bytes_accessed=2 * (2 * M * K + 2 * K * N + M * N)),
    )(a1, a2, b1, b2, bias2)


def _ffn_kernel(x_ref, w1_ref, b1_ref, w2_ref, b2_ref, o_ref):
    """Fused encoder FFN: y = (relu(x @ w1 + b1)) @ w2 + b2, hidden stays in VMEM."""
    h = jnp.dot(x_ref[...], w1_ref[...], preferred_element_type=jnp.float32) + b1_ref[...]
    h = jnp.maximum(h, 0.0).astype(jnp.bfloat16)
    y = jnp.dot(h, w2_ref[...], preferred_element_type=jnp.float32) + b2_ref[...]
    o_ref[...] = y.astype(o_ref.dtype)


def pallas_ffn(x, w1, b1, w2, b2):
    M, D = x.shape
    F = w1.shape[1]
    tm = _pick_tile(M, 256, 8)
    vmem = 2 * (2 * tm * D + 2 * D * F + 2 * F * D + 2 * tm * D + 4 * F + 4 * D) + 4 * tm * F
    return pl.pallas_call(
        _ffn_kernel,
        out_shape=jax.ShapeDtypeStruct((M, D), jnp.bfloat16),
        grid=(M // tm,),
        in_specs=[
            pl.BlockSpec((tm, D), lambda i: (i, 0)),
            pl.BlockSpec((D, F), lambda i: (0, 0)),
            pl.BlockSpec((1, F), lambda i: (0, 0)),
            pl.BlockSpec((F, D), lambda i: (0, 0)),
            pl.BlockSpec((1, D), lambda i: (0, 0)),
        ],
        out_specs=pl.BlockSpec((tm, D), lambda i: (i, 0)),
        compiler_params=pltpu.CompilerParams(
            dimension_semantics=("parallel",),
            vmem_limit_bytes=_vmem_limit(vmem),
        ),
        cost_estimate=pl.CostEstimate(flops=4 * M * D * F, transcendentals=0,
                                      bytes_accessed=2 * (2 * M * D + 2 * D * F)),
    )(x, w1, b1.reshape(1, F).astype(jnp.float32), w2, b2.reshape(1, D).astype(jnp.float32))


def _attn_kernel(q_ref, k_ref, v_ref, m_ref, o_ref, *, scale):
    """softmax over keys of (q @ k^T)*scale with {mask, -1e7} select, then @ v. Batched over G."""
    q = q_ref[...]                                   # (G, tq, D)  bf16
    k = k_ref[...]                                   # (G, Lk, D)  bf16
    v = v_ref[...]                                   # (G, Lk, D)  bf16
    m = m_ref[...]                                   # (G, 1,  Lk) f32, 1 = attend
    s = jnp.einsum("gqd,gkd->gqk", q, k, preferred_element_type=jnp.float32) * scale
    s = jnp.where(m != 0.0, s, -1.0e7)               # matches torch: sim*mask + -1e7*(~mask)
    s = s - jnp.max(s, axis=-1, keepdims=True)
    p = jnp.exp(s)
    p = p * pl.reciprocal(jnp.sum(p, axis=-1, keepdims=True), approx=True)
    o = jnp.einsum("gqk,gkd->gqd", p.astype(v.dtype), v, preferred_element_type=jnp.float32)
    o_ref[...] = o.astype(o_ref.dtype)


def pallas_attention(q, k, v, mask_f, scale):
    """q:(G,Lq,D), k/v:(G,Lk,D), mask:(G,1,Lk). Head/feature dim kept unpadded (full-extent
    blocks); large Lq gridded in 128-row 'parallel' blocks so v7x's second TC gets work."""
    G, Lq, D = q.shape
    _, Lk, _ = k.shape
    tq = _pick_tile(Lq, 128, 8)
    mf = mask_f.astype(jnp.float32)
    vmem = 2 * 2 * (G * tq * D + 2 * G * Lk * D + G * tq * D) + 2 * 4 * G * Lk + 4 * G * tq * Lk

    return pl.pallas_call(
        functools.partial(_attn_kernel, scale=float(scale)),
        out_shape=jax.ShapeDtypeStruct((G, Lq, D), jnp.bfloat16),
        grid=(Lq // tq,),
        in_specs=[
            pl.BlockSpec((G, tq, D), lambda i: (0, i, 0)),
            pl.BlockSpec((G, Lk, D), lambda i: (0, 0, 0)),
            pl.BlockSpec((G, Lk, D), lambda i: (0, 0, 0)),
            pl.BlockSpec((G, 1, Lk), lambda i: (0, 0, 0)),
        ],
        out_specs=pl.BlockSpec((G, tq, D), lambda i: (0, i, 0)),
        compiler_params=pltpu.CompilerParams(
            dimension_semantics=("parallel",),
            vmem_limit_bytes=_vmem_limit(vmem),
        ),
    )(q, k, v, mf)


def _add_ln_kernel(x_ref, y_ref, g_ref, b_ref, o_ref, *, eps):
    x = x_ref[...].astype(jnp.float32) + y_ref[...].astype(jnp.float32)   # fused residual add
    mu = jnp.mean(x, axis=-1, keepdims=True)
    var = jnp.mean((x - mu) ** 2, axis=-1, keepdims=True)
    o_ref[...] = ((x - mu) * jax.lax.rsqrt(var + eps) * g_ref[...] + b_ref[...]).astype(o_ref.dtype)


def pallas_add_layernorm(x, y, gamma, beta, eps=1e-5):
    M, D = x.shape
    tm = _pick_tile(M, 256, 8)
    vmem = 2 * (2 * 2 * tm * D + 2 * 4 * D + 2 * tm * D) + 8 * tm * D
    return pl.pallas_call(
        functools.partial(_add_ln_kernel, eps=float(eps)),
        out_shape=jax.ShapeDtypeStruct((M, D), jnp.bfloat16),
        grid=(M // tm,),
        in_specs=[
            pl.BlockSpec((tm, D), lambda i: (i, 0)),
            pl.BlockSpec((tm, D), lambda i: (i, 0)),
            pl.BlockSpec((1, D), lambda i: (0, 0)),
            pl.BlockSpec((1, D), lambda i: (0, 0)),
        ],
        out_specs=pl.BlockSpec((tm, D), lambda i: (i, 0)),
        compiler_params=pltpu.CompilerParams(
            dimension_semantics=("parallel",),
            vmem_limit_bytes=_vmem_limit(vmem),
        ),
    )(x, y, gamma.reshape(1, D).astype(jnp.float32), beta.reshape(1, D).astype(jnp.float32))


def _sample_kernel(s_ref, f_ref, o_ref, *, thresh, inv_t):
    """Per-batch masked np_softmax (no max-subtract, +1e-7 denom) weighted feature pooling."""
    s = s_ref[...]                                     # (1, N, HW)  f32
    f = f_ref[...]                                     # (1, HW, C)  bf16
    m = s > thresh
    logits = jnp.where(m, s, -1.0e7) * inv_t           # == score_tmp / t
    e = jnp.exp(logits)
    w = e * pl.reciprocal(jnp.sum(e, axis=-1, keepdims=True) + 1e-7, approx=True)
    o = jnp.einsum("bns,bsc->bnc", w.astype(f.dtype), f, preferred_element_type=jnp.float32)
    o_ref[...] = o.astype(o_ref.dtype)


def pallas_sample(score_bnhw, feat_bhwc, thresh, t):
    B, N, H, W = score_bnhw.shape
    C = feat_bhwc.shape[-1]
    HW = H * W
    s = score_bnhw.reshape(B, N, HW).astype(jnp.float32)
    f = feat_bhwc.reshape(B, HW, C)
    vmem = 2 * (2 * 4 * N * HW + 2 * 2 * HW * C + 2 * 2 * N * C) + 4 * N * HW
    return pl.pallas_call(
        functools.partial(_sample_kernel, thresh=float(thresh), inv_t=float(1.0 / t)),
        out_shape=jax.ShapeDtypeStruct((B, N, C), jnp.bfloat16),
        grid=(B,),
        in_specs=[
            pl.BlockSpec((1, N, HW), lambda b: (b, 0, 0)),
            pl.BlockSpec((1, HW, C), lambda b: (b, 0, 0)),
        ],
        out_specs=pl.BlockSpec((1, N, C), lambda b: (b, 0, 0)),
        compiler_params=pltpu.CompilerParams(
            dimension_semantics=("parallel",),
            vmem_limit_bytes=_vmem_limit(vmem),
        ),
    )(s, f)


# ----------------------------------------------------------------------------
# Glue: channels-last convs via Pallas matmul, pos embedding
# ----------------------------------------------------------------------------
def conv3x3(x_bhwc, w_flat, bias, relu):
    """x: (B,H,W,C) channels-last bf16; w_flat: (9*C, OC) bf16, rows ordered (kh, kw, c).
    Patches are built directly in (B*HW, 9*C) bf16 order — no transposes, no f32 blow-up."""
    B, H, W, C = x_bhwc.shape
    xp = jnp.pad(x_bhwc, ((0, 0), (1, 1), (1, 1), (0, 0)))
    cols = [xp[:, kh:kh + H, kw:kw + W, :] for kh in range(3) for kw in range(3)]
    patches = jnp.concatenate(cols, axis=-1)           # (B, H, W, 9*C) bf16
    a = patches.reshape(B * H * W, 9 * C)
    out = pallas_matmul(a, w_flat, bias, relu)
    return out.reshape(B, H, W, -1)


def pos_embd(B, H, W, dtype):
    x_range = jnp.linspace(-1.0, 1.0, W)
    y_range = jnp.linspace(-1.0, 1.0, H)
    y, x = jnp.meshgrid(y_range, x_range, indexing="ij")
    x = jnp.broadcast_to(x[None, :, :, None], (B, H, W, 1))
    y = jnp.broadcast_to(y[None, :, :, None], (B, H, W, 1))
    return jnp.concatenate([x, y], axis=-1).astype(dtype)


# ----------------------------------------------------------------------------
# Transformer encoder (post-norm, eval mode -> dropout = identity)
# ----------------------------------------------------------------------------
def mha(src, mask_f, lp, nhead):
    # src: (L, B, d) bf16; mask_f: (B, L) float, 1 = attend (== batch_mask, i.e. not padded)
    L, B, d = src.shape
    dh = d // nhead
    tok = src.reshape(L * B, d)
    qkv = pallas_matmul(tok, lp["in_w"], lp["in_b"])                 # fused QKV, width 3*d
    q, k, v = jnp.split(qkv, 3, axis=-1)

    def to_heads(t):
        return t.reshape(L, B, nhead, dh).transpose(1, 2, 0, 3).reshape(B * nhead, L, dh)

    qh, kh, vh = to_heads(q), to_heads(k), to_heads(v)
    m = jnp.repeat(mask_f, nhead, axis=0).reshape(B * nhead, 1, L)
    oh = pallas_attention(qh, kh, vh, m, scale=1.0 / np.sqrt(dh))
    o = oh.reshape(B, nhead, L, dh).transpose(2, 0, 1, 3).reshape(L * B, d)
    o = pallas_matmul(o, lp["out_w"], lp["out_b"])
    return o.reshape(L, B, d)


def encoder_layer(src, mask_f, lp, nhead):
    L, B, d = src.shape
    attn = mha(src, mask_f, lp, nhead)
    x = pallas_add_layernorm(src.reshape(L * B, d), attn.reshape(L * B, d),
                             lp["ln1_g"], lp["ln1_b"])               # (L*B, d) bf16
    y = pallas_ffn(x, lp["lin1_w"], lp["lin1_b"], lp["lin2_w"], lp["lin2_b"])
    x = pallas_add_layernorm(x, y, lp["ln2_g"], lp["ln2_b"])
    return x.reshape(L, B, d)


# ----------------------------------------------------------------------------
# ObjectAttentionBlock decoder (channels-last throughout)
# ----------------------------------------------------------------------------
def decoder(feat_bhwc, key_feats_blc, batch_mask_f, dp, C_inner):
    B, H, W, C = feat_bhwc.shape
    L = key_feats_blc.shape[1]
    HW = H * W

    feat2d = feat_bhwc.reshape(B * HW, C)
    key2d = key_feats_blc.reshape(B * L, C)

    # query_project: 2x ConvModule (1x1 conv + BN folded + ReLU)
    q2 = pallas_matmul(pallas_matmul(feat2d, dp["qp1_w"], dp["qp1_b"], relu=True),
                       dp["qp2_w"], dp["qp2_b"], relu=True)
    # key_project[0] and value_project share key2d -> fused into one matmul (N = 2*C_inner)
    kv = pallas_matmul(key2d, dp["kv_w"], dp["kv_b"], relu=True)
    k1, v2 = kv[:, :C_inner], kv[:, C_inner:]
    k2 = pallas_matmul(k1, dp["kp2_w"], dp["kp2_b"], relu=True)

    m = batch_mask_f.reshape(B, 1, L)
    ctx = pallas_attention(q2.reshape(B, HW, C_inner), k2.reshape(B, L, C_inner),
                           v2.reshape(B, L, C_inner), m,
                           scale=float(C_inner) ** (-0.5))           # (B, HW, C_inner) bf16
    ctx2 = pallas_matmul(ctx.reshape(B * HW, C_inner), dp["op_w"], dp["op_b"], relu=True)
    # bottleneck on cat([context, query_feats]) -> dual-input matmul (no concat copy)
    out2 = pallas_dual_matmul(ctx2, feat2d, dp["bt_w1"], dp["bt_w2"], dp["bt_b"], relu=True)
    return out2.reshape(B, H, W, -1)


# ----------------------------------------------------------------------------
# Full forward
# ----------------------------------------------------------------------------
def instance_attention_forward(params, score, feature, *, C_in, C_inner,
                               sample_n, thresh, nhead):
    B, _, H, W = feature.shape
    N = score.shape[1]

    # NCHW -> channels-last bf16 once at the module boundary
    feat_in = jnp.transpose(feature, (0, 2, 3, 1)).astype(jnp.bfloat16)  # (B,H,W,C_in)
    pos = pos_embd(B, H, W, jnp.bfloat16)
    x = jnp.concatenate([feat_in, pos], axis=-1)                         # (B,H,W,C_in+2)

    # embd_conv: conv3x3+BN+ReLU, conv3x3+BN+ReLU, conv3x3
    x = conv3x3(x, params["ec1_w"], params["ec1_b"], relu=True)
    x = conv3x3(x, params["ec2_w"], params["ec2_b"], relu=True)
    feat = conv3x3(x, params["ec3_w"], params["ec3_b"], relu=False)      # (B,H,W,C_inner) bf16

    # sample_features
    # TODO(synk): cv2.connectedComponentsWithStats + area-sorted top-sample_n selection has no
    # Pallas/JAX equivalent; the whole thresholded score map per (b, n) is treated as the single
    # component filling slot j=0 (other sample_n-1 slots stay zero & masked).
    t = float(np.sqrt(C_in))
    key_slot = pallas_sample(score, feat, thresh, t)                     # (B, N, C_inner) bf16
    L = N * sample_n
    key_feature = jnp.zeros((L, B, C_inner), jnp.bfloat16)
    key_feature = key_feature.at[jnp.arange(N) * sample_n].set(
        jnp.transpose(key_slot, (1, 0, 2)))
    any_mask = jnp.any(score > thresh, axis=(2, 3)).astype(jnp.float32)  # (B, N)
    batch_mask_f = jnp.zeros((B, L), jnp.float32).at[:, jnp.arange(N) * sample_n].set(any_mask)

    # transformer encoder (src_key_padding_mask = ~batch_mask -> attend where batch_mask)
    src = key_feature
    for lp in params["enc"]:
        src = encoder_layer(src, batch_mask_f, lp, nhead)

    # decoder (ObjectAttentionBlock, scale=1 -> no downsample)
    key_feats = jnp.transpose(src, (1, 0, 2))                            # (B, L, C_inner)
    out_bhwc = decoder(feat, key_feats, batch_mask_f, params["dec"], C_inner)
    return jnp.transpose(out_bhwc, (0, 3, 1, 2)).astype(jnp.float32)     # back to NCHW f32


# ----------------------------------------------------------------------------
# Parameter preparation: fold BN, pre-transpose, pre-cast to bf16 (done ONCE)
# ----------------------------------------------------------------------------
def fold_bn(bn, conv_bias=None, eps=1e-5):
    gamma, beta, mean, var = bn
    scale = gamma / jnp.sqrt(var + eps)
    b = conv_bias if conv_bias is not None else jnp.zeros_like(mean)
    shift = (b - mean) * scale + beta
    return scale, shift


def prepare_params(raw, C_inner):
    def conv3x3_w(w, scale):
        # (OC, IC, 3, 3) -> (9*IC, OC), row order (kh, kw, ic); per-output-channel scale folded in
        wf = jnp.transpose(w, (2, 3, 1, 0)).reshape(-1, w.shape[0])
        return (wf * scale[None, :]).astype(jnp.bfloat16)

    def conv1x1_w(w, scale):
        wf = w.reshape(w.shape[0], w.shape[1]).T
        return (wf * scale[None, :]).astype(jnp.bfloat16)

    def lin_w(w):
        return w.T.astype(jnp.bfloat16)

    p = {}
    s, sh = fold_bn(raw["ec1_bn"], raw["ec1_b"])
    p["ec1_w"], p["ec1_b"] = conv3x3_w(raw["ec1_w"], s), sh.astype(jnp.float32)
    s, sh = fold_bn(raw["ec2_bn"], raw["ec2_b"])
    p["ec2_w"], p["ec2_b"] = conv3x3_w(raw["ec2_w"], s), sh.astype(jnp.float32)
    p["ec3_w"] = conv3x3_w(raw["ec3_w"], jnp.ones((C_inner,), jnp.float32))
    p["ec3_b"] = raw["ec3_b"].astype(jnp.float32)

    enc = []
    for l in raw["enc"]:
        enc.append({
            "in_w": lin_w(l["in_w"]),   "in_b": l["in_b"].astype(jnp.float32),
            "out_w": lin_w(l["out_w"]), "out_b": l["out_b"].astype(jnp.float32),
            "lin1_w": lin_w(l["lin1_w"]), "lin1_b": l["lin1_b"].astype(jnp.float32),
            "lin2_w": lin_w(l["lin2_w"]), "lin2_b": l["lin2_b"].astype(jnp.float32),
            "ln1_g": l["ln1_g"].astype(jnp.float32), "ln1_b": l["ln1_b"].astype(jnp.float32),
            "ln2_g": l["ln2_g"].astype(jnp.float32), "ln2_b": l["ln2_b"].astype(jnp.float32),
        })
    p["enc"] = enc

    folded = {}
    for name in ("qp1", "qp2", "kp1", "kp2", "vp", "op", "bt"):
        s, sh = fold_bn(raw["dec"][name + "_bn"])
        folded[name] = (conv1x1_w(raw["dec"][name + "_w"], s), sh.astype(jnp.float32))
    d = {}
    for name in ("qp1", "qp2", "kp2", "op"):
        d[name + "_w"], d[name + "_b"] = folded[name]
    # key_project[0] | value_project fused (share the same input)
    d["kv_w"] = jnp.concatenate([folded["kp1"][0], folded["vp"][0]], axis=1)
    d["kv_b"] = jnp.concatenate([folded["kp1"][1], folded["vp"][1]], axis=0)
    # bottleneck split along K: rows [:C_inner] act on context, rows [C_inner:] on query feats
    bt_w, bt_b = folded["bt"]
    d["bt_w1"], d["bt_w2"], d["bt_b"] = bt_w[:C_inner], bt_w[C_inner:], bt_b
    p["dec"] = d
    return p


# ----------------------------------------------------------------------------
# Deterministic parameter init (synthetic weights in PyTorch layouts, no checkpoint loading)
# ----------------------------------------------------------------------------
def init_params(key, C_in, C_inner, C_ff, nhead, n_layers):
    ki = iter(jax.random.split(key, 256))

    def nrm(shape, s=0.1):
        return (s * jax.random.normal(next(ki), shape)).astype(jnp.float32)

    def bn(c):
        return (1.0 + nrm((c,), 0.05), nrm((c,), 0.05),
                jnp.zeros((c,), jnp.float32), jnp.ones((c,), jnp.float32))

    p = {
        "ec1_w": nrm((C_in, C_in + 2, 3, 3)), "ec1_b": nrm((C_in,)), "ec1_bn": bn(C_in),
        "ec2_w": nrm((C_in, C_in, 3, 3)),     "ec2_b": nrm((C_in,)), "ec2_bn": bn(C_in),
        "ec3_w": nrm((C_inner, C_in, 3, 3)),  "ec3_b": nrm((C_inner,)),
    }
    enc = []
    for _ in range(n_layers):
        enc.append({
            "in_w": nrm((3 * C_inner, C_inner)), "in_b": nrm((3 * C_inner,)),
            "out_w": nrm((C_inner, C_inner)),    "out_b": nrm((C_inner,)),
            "lin1_w": nrm((C_ff, C_inner)),      "lin1_b": nrm((C_ff,)),
            "lin2_w": nrm((C_inner, C_ff)),      "lin2_b": nrm((C_inner,)),
            "ln1_g": jnp.ones((C_inner,), jnp.float32), "ln1_b": jnp.zeros((C_inner,), jnp.float32),
            "ln2_g": jnp.ones((C_inner,), jnp.float32), "ln2_b": jnp.zeros((C_inner,), jnp.float32),
        })
    p["enc"] = enc
    p["dec"] = {
        "qp1_w": nrm((C_inner, C_inner, 1, 1)), "qp1_bn": bn(C_inner),
        "qp2_w": nrm((C_inner, C_inner, 1, 1)), "qp2_bn": bn(C_inner),
        "kp1_w": nrm((C_inner, C_inner, 1, 1)), "kp1_bn": bn(C_inner),
        "kp2_w": nrm((C_inner, C_inner, 1, 1)), "kp2_bn": bn(C_inner),
        "vp_w":  nrm((C_inner, C_inner, 1, 1)), "vp_bn":  bn(C_inner),
        "op_w":  nrm((C_inner, C_inner, 1, 1)), "op_bn":  bn(C_inner),
        "bt_w":  nrm((C_in, 2 * C_inner, 1, 1)), "bt_bn": bn(C_in),
    }
    return p


if __name__ == "__main__":
    B, N, H, W = 2, 2, 16, 16
    C_in, C_inner, C_ff = 16, 64, 512      # in_channel, inner_channel, dim_feedforward
    sample_n, nhead, n_layers = 4, 8, 1
    thresh_p = 0.3
    thresh = float(-np.log(1.0 / thresh_p - 1.0))

    key = jax.random.PRNGKey(0)
    k1, k2, k3 = jax.random.split(key, 3)
    score = jax.random.normal(k1, (B, N, H, W), jnp.float32)
    feature = jax.random.normal(k2, (B, C_in, H, W), jnp.float32)
    raw = init_params(k3, C_in, C_inner, C_ff, nhead, n_layers)
    params = prepare_params(raw, C_inner)   # fold BN, transpose, cast bf16, fuse kp1|vp — once

    fwd = jax.jit(functools.partial(
        instance_attention_forward,
        C_in=C_in, C_inner=C_inner, sample_n=sample_n, thresh=thresh, nhead=nhead))

    out = fwd(params, score, feature)
    out = jax.block_until_ready(out)
    assert out.shape == (B, C_in, H, W), out.shape
    assert bool(jnp.all(jnp.isfinite(out)))
    print("KERNEL_OK")
</pallas_src>

<mosaic_0001>
module attributes {stable_mosaic.version = 11 : i64} {
  func.func @_mm_kernel(%arg0: i32, %arg1: i32, %arg2: i32, %arg3: memref<128x162xbf16, #tpu.memory_space<vmem>>, %arg4: memref<162x16xbf16, #tpu.memory_space<vmem>>, %arg5: memref<1x16xf32, #tpu.memory_space<vmem>>, %arg6: memref<128x16xbf16, #tpu.memory_space<vmem>>, %arg7: memref<128x16xf32, #tpu.memory_space<vmem>>) attributes {dimension_semantics = [#tpu.dimension_semantics<parallel>, #tpu.dimension_semantics<parallel>, #tpu.dimension_semantics<arbitrary>], iteration_bounds = array<i64: 4, 1, 1>, scalar_prefetch = 0 : i64, scratch_operands = 1 : i64, tpu.core_type = #tpu.core_type<tc>, window_params = [{transform_indices = @transform_0, window_bounds = array<i64: 128, 162>}, {transform_indices = @transform_1, window_bounds = array<i64: 162, 16>}, {transform_indices = @transform_2, window_bounds = array<i64: 1, 16>}, {transform_indices = @transform_3, window_bounds = array<i64: 128, 16>}]} {
    %c0_i32 = arith.constant 0 : i32
    %0 = arith.cmpi eq, %arg2, %c0_i32 : i32
    %1 = arith.extui %0 : i1 to i32
    %c0_i32_0 = arith.constant 0 : i32
    %2 = arith.cmpi ne, %1, %c0_i32_0 : i32
    scf.if %2 {
      %cst_10 = arith.constant 0.000000e+00 : f32
      %12 = vector.broadcast %cst_10 : f32 to vector<128x16xf32>
      %c0_11 = arith.constant 0 : index
      %c0_12 = arith.constant 0 : index
      %13 = vector.load %arg7[%c0_11, %c0_12] : memref<128x16xf32, #tpu.memory_space<vmem>>, vector<128x16xf32>
      tpu.vector_store %arg7[%c0_11, %c0_12], %12 {strides = array<i32>} : memref<128x16xf32, #tpu.memory_space<vmem>>, vector<128x16xf32>,
    } else {
    }
    %c0 = arith.constant 0 : index
    %c0_1 = arith.constant 0 : index
    %3 = vector.load %arg7[%c0, %c0_1] : memref<128x16xf32, #tpu.memory_space<vmem>>, vector<128x16xf32>
    %c0_2 = arith.constant 0 : index
    %c0_3 = arith.constant 0 : index
    %4 = vector.load %arg3[%c0_2, %c0_3] : memref<128x162xbf16, #tpu.memory_space<vmem>>, vector<128x162xbf16>
    %c0_4 = arith.constant 0 : index
    %c0_5 = arith.constant 0 : index
    %5 = vector.load %arg4[%c0_4, %c0_5] : memref<162x16xbf16, #tpu.memory_space<vmem>>, vector<162x16xbf16>
    %cst = arith.constant dense<0.000000e+00> : vector<128x16xf32>
    %6 = tpu.matmul %4, %5, %cst {dimension_numbers = #tpu.dot_dimension_numbers<[1], [0], [0], [1], [0, 0, 1, 1], [], []>} : vector<128x162xbf16>, vector<162x16xbf16>, vector<128x16xf32> -> vector<128x16xf32>
    %7 = arith.addf %3, %6 : vector<128x16xf32>
    %c0_6 = arith.constant 0 : index
    %c0_7 = arith.constant 0 : index
    %8 = vector.load %arg7[%c0_6, %c0_7] : memref<128x16xf32, #tpu.memory_space<vmem>>, vector<128x16xf32>
    tpu.vector_store %arg7[%c0_6, %c0_7], %7 {strides = array<i32>} : memref<128x16xf32, #tpu.memory_space<vmem>>, vector<128x16xf32>,
    %c0_i32_8 = arith.constant 0 : i32
    %9 = arith.cmpi eq, %arg2, %c0_i32_8 : i32
    %10 = arith.extui %9 : i1 to i32
    %c0_i32_9 = arith.constant 0 : i32
    %11 = arith.cmpi ne, %10, %c0_i32_9 : i32
    scf.if %11 {
      %c0_10 = arith.constant 0 : index
      %c0_11 = arith.constant 0 : index
      %12 = vector.load %arg7[%c0_10, %c0_11] : memref<128x16xf32, #tpu.memory_space<vmem>>, vector<128x16xf32>
      %c0_12 = arith.constant 0 : index
      %c0_13 = arith.constant 0 : index
      %13 = vector.load %arg5[%c0_12, %c0_13] : memref<1x16xf32, #tpu.memory_space<vmem>>, vector<1x16xf32>
      %14 = vector.broadcast %13 : vector<1x16xf32> to vector<128x16xf32>
      %15 = arith.addf %12, %14 : vector<128x16xf32>
      %cst_14 = arith.constant 0.000000e+00 : f32
      %16 = vector.broadcast %cst_14 : f32 to vector<128x16xf32>
      %17 = arith.maximumf %15, %16 : vector<128x16xf32>
      %18 = arith.truncf %17 : vector<128x16xf32> to vector<128x16xbf16>
      %c0_15 = arith.constant 0 : index
      %c0_16 = arith.constant 0 : index
      %19 = vector.load %arg6[%c0_15, %c0_16] : memref<128x16xbf16, #tpu.memory_space<vmem>>, vector<128x16xbf16>
      tpu.vector_store %arg6[%c0_15, %c0_16], %18 {strides = array<i32>} : memref<128x16xbf16, #tpu.memory_space<vmem>>, vector<128x16xbf16>,
    } else {
    }
    return
  }
  func.func @transform_0(%arg0: i32, %arg1: i32, %arg2: i32) -> (i32, i32) {
    %c0_i32 = arith.constant 0 : i32
    return %arg0, %arg2 : i32, i32
  }
  func.func @transform_1(%arg0: i32, %arg1: i32, %arg2: i32) -> (i32, i32) {
    %c0_i32 = arith.constant 0 : i32
    return %arg2, %arg1 : i32, i32
  }
  func.func @transform_2(%arg0: i32, %arg1: i32, %arg2: i32) -> (i32, i32) {
    %c0_i32 = arith.constant 0 : i32
    %c0_i32_0 = arith.constant 0 : i32
    return %c0_i32, %arg1 : i32, i32
  }
  func.func @transform_3(%arg0: i32, %arg1: i32, %arg2: i32) -> (i32, i32) {
    %c0_i32 = arith.constant 0 : i32
    return %arg0, %arg1 : i32, i32
  }
}

module attributes {stable_mosaic.version = 11 : i64} {
  func.func @_mm_kernel(%arg0: i32, %arg1: i32, %arg2: i32, %arg3: memref<128x144xbf16, #tpu.memory_space<vmem>>, %arg4: memref<144x16xbf16, #tpu.memory_space<vmem>>, %arg5: memref<1x16xf32, #tpu.memory_space<vmem>>, %arg6: memref<128x16xbf16, #tpu.memory_space<vmem>>, %arg7: memref<128x16xf32, #tpu.memory_space<vmem>>) attributes {dimension_semantics = [#tpu.dimension_semantics<parallel>, #tpu.dimension_semantics<parallel>, #tpu.dimension_semantics<arbitrary>], iteration_bounds = array<i64: 4, 1, 1>, scalar_prefetch = 0 : i64, scratch_operands = 1 : i64, tpu.core_type = #tpu.core_type<tc>, window_params = [{transform_indices = @transform_0, window_bounds = array<i64: 128, 144>}, {transform_indices = @transform_1, window_bounds = array<i64: 144, 16>}, {transform_indices = @transform_2, window_bounds = array<i64: 1, 16>}, {transform_indices = @transform_3, window_bounds = array<i64: 128, 16>}]} {
    %c0_i32 = arith.constant 0 : i32
    %0 = arith.cmpi eq, %arg2, %c0_i32 : i32
    %1 = arith.extui %0 : i1 to i32
    %c0_i32_0 = arith.constant 0 : i32
    %2 = arith.cmpi ne, %1, %c0_i32_0 : i32
    scf.if %2 {
      %cst_10 = arith.constant 0.000000e+00 : f32
      %12 = vector.broadcast %cst_10 : f32 to vector<128x16xf32>
      %c0_11 = arith.constant 0 : index
      %c0_12 = arith.constant 0 : index
      %13 = vector.load %arg7[%c0_11, %c0_12] : memref<128x16xf32, #tpu.memory_space<vmem>>, vector<128x16xf32>
      tpu.vector_store %arg7[%c0_11, %c0_12], %12 {strides = array<i32>} : memref<128x16xf32, #tpu.memory_space<vmem>>, vector<128x16xf32>,
    } else {
    }
    %c0 = arith.constant 0 : index
    %c0_1 = arith.constant 0 : index
    %3 = vector.load %arg7[%c0, %c0_1] : memref<128x16xf32, #tpu.memory_space<vmem>>, vector<128x16xf32>
    %c0_2 = arith.constant 0 : index
    %c0_3 = arith.constant 0 : index
    %4 = vector.load %arg3[%c0_2, %c0_3] : memref<128x144xbf16, #tpu.memory_space<vmem>>, vector<128x144xbf16>
    %c0_4 = arith.constant 0 : index
    %c0_5 = arith.constant 0 : index
    %5 = vector.load %arg4[%c0_4, %c0_5] : memref<144x16xbf16, #tpu.memory_space<vmem>>, vector<144x16xbf16>
    %cst = arith.constant dense<0.000000e+00> : vector<128x16xf32>
    %6 = tpu.matmul %4, %5, %cst {dimension_numbers = #tpu.dot_dimension_numbers<[1], [0], [0], [1], [0, 0, 1, 1], [], []>} : vector<128x144xbf16>, vector<144x16xbf16>, vector<128x16xf32> -> vector<128x16xf32>
    %7 = arith.addf %3, %6 : vector<128x16xf32>
    %c0_6 = arith.constant 0 : index
    %c0_7 = arith.constant 0 : index
    %8 = vector.load %arg7[%c0_6, %c0_7] : memref<128x16xf32, #tpu.memory_space<vmem>>, vector<128x16xf32>
    tpu.vector_store %arg7[%c0_6, %c0_7], %7 {strides = array<i32>} : memref<128x16xf32, #tpu.memory_space<vmem>>, vector<128x16xf32>,
    %c0_i32_8 = arith.constant 0 : i32
    %9 = arith.cmpi eq, %arg2, %c0_i32_8 : i32
    %10 = arith.extui %9 : i1 to i32
    %c0_i32_9 = arith.constant 0 : i32
    %11 = arith.cmpi ne, %10, %c0_i32_9 : i32
    scf.if %11 {
      %c0_10 = arith.constant 0 : index
      %c0_11 = arith.constant 0 : index
      %12 = vector.load %arg7[%c0_10, %c0_11] : memref<128x16xf32, #tpu.memory_space<vmem>>, vector<128x16xf32>
      %c0_12 = arith.constant 0 : index
      %c0_13 = arith.constant 0 : index
      %13 = vector.load %arg5[%c0_12, %c0_13] : memref<1x16xf32, #tpu.memory_space<vmem>>, vector<1x16xf32>
      %14 = vector.broadcast %13 : vector<1x16xf32> to vector<128x16xf32>
      %15 = arith.addf %12, %14 : vector<128x16xf32>
      %cst_14 = arith.constant 0.000000e+00 : f32
      %16 = vector.broadcast %cst_14 : f32 to vector<128x16xf32>
      %17 = arith.maximumf %15, %16 : vector<128x16xf32>
      %18 = arith.truncf %17 : vector<128x16xf32> to vector<128x16xbf16>
      %c0_15 = arith.constant 0 : index
      %c0_16 = arith.constant 0 : index
      %19 = vector.load %arg6[%c0_15, %c0_16] : memref<128x16xbf16, #tpu.memory_space<vmem>>, vector<128x16xbf16>
      tpu.vector_store %arg6[%c0_15, %c0_16], %18 {strides = array<i32>} : memref<128x16xbf16, #tpu.memory_space<vmem>>, vector<128x16xbf16>,
    } else {
    }
    return
  }
  func.func @transform_0(%arg0: i32, %arg1: i32, %arg2: i32) -> (i32, i32) {
    %c0_i32 = arith.constant 0 : i32
    return %arg0, %arg2 : i32, i32
  }
  func.func @transform_1(%arg0: i32, %arg1: i32, %arg2: i32) -> (i32, i32) {
    %c0_i32 = arith.constant 0 : i32
    return %arg2, %arg1 : i32, i32
  }
  func.func @transform_2(%arg0: i32, %arg1: i32, %arg2: i32) -> (i32, i32) {
    %c0_i32 = arith.constant 0 : i32
    %c0_i32_0 = arith.constant 0 : i32
    return %c0_i32, %arg1 : i32, i32
  }
  func.func @transform_3(%arg0: i32, %arg1: i32, %arg2: i32) -> (i32, i32) {
    %c0_i32 = arith.constant 0 : i32
    return %arg0, %arg1 : i32, i32
  }
}

module attributes {stable_mosaic.version = 11 : i64} {
  func.func @_mm_kernel(%arg0: i32, %arg1: i32, %arg2: i32, %arg3: memref<128x144xbf16, #tpu.memory_space<vmem>>, %arg4: memref<144x64xbf16, #tpu.memory_space<vmem>>, %arg5: memref<1x64xf32, #tpu.memory_space<vmem>>, %arg6: memref<128x64xbf16, #tpu.memory_space<vmem>>, %arg7: memref<128x64xf32, #tpu.memory_space<vmem>>) attributes {dimension_semantics = [#tpu.dimension_semantics<parallel>, #tpu.dimension_semantics<parallel>, #tpu.dimension_semantics<arbitrary>], iteration_bounds = array<i64: 4, 1, 1>, scalar_prefetch = 0 : i64, scratch_operands = 1 : i64, tpu.core_type = #tpu.core_type<tc>, window_params = [{transform_indices = @transform_0, window_bounds = array<i64: 128, 144>}, {transform_indices = @transform_1, window_bounds = array<i64: 144, 64>}, {transform_indices = @transform_2, window_bounds = array<i64: 1, 64>}, {transform_indices = @transform_3, window_bounds = array<i64: 128, 64>}]} {
    %c0_i32 = arith.constant 0 : i32
    %0 = arith.cmpi eq, %arg2, %c0_i32 : i32
    %1 = arith.extui %0 : i1 to i32
    %c0_i32_0 = arith.constant 0 : i32
    %2 = arith.cmpi ne, %1, %c0_i32_0 : i32
    scf.if %2 {
      %cst_10 = arith.constant 0.000000e+00 : f32
      %12 = vector.broadcast %cst_10 : f32 to vector<128x64xf32>
      %c0_11 = arith.constant 0 : index
      %c0_12 = arith.constant 0 : index
      %13 = vector.load %arg7[%c0_11, %c0_12] : memref<128x64xf32, #tpu.memory_space<vmem>>, vector<128x64xf32>
      tpu.vector_store %arg7[%c0_11, %c0_12], %12 {strides = array<i32>} : memref<128x64xf32, #tpu.memory_space<vmem>>, vector<128x64xf32>,
    } else {
    }
    %c0 = arith.constant 0 : index
    %c0_1 = arith.constant 0 : index
    %3 = vector.load %arg7[%c0, %c0_1] : memref<128x64xf32, #tpu.memory_space<vmem>>, vector<128x64xf32>
    %c0_2 = arith.constant 0 : index
    %c0_3 = arith.constant 0 : index
    %4 = vector.load %arg3[%c0_2, %c0_3] : memref<128x144xbf16, #tpu.memory_space<vmem>>, vector<128x144xbf16>
    %c0_4 = arith.constant 0 : index
    %c0_5 = arith.constant 0 : index
    %5 = vector.load %arg4[%c0_4, %c0_5] : memref<144x64xbf16, #tpu.memory_space<vmem>>, vector<144x64xbf16>
    %cst = arith.constant dense<0.000000e+00> : vector<128x64xf32>
    %6 = tpu.matmul %4, %5, %cst {dimension_numbers = #tpu.dot_dimension_numbers<[1], [0], [0], [1], [0, 0, 1, 1], [], []>} : vector<128x144xbf16>, vector<144x64xbf16>, vector<128x64xf32> -> vector<128x64xf32>
    %7 = arith.addf %3, %6 : vector<128x64xf32>
    %c0_6 = arith.constant 0 : index
    %c0_7 = arith.constant 0 : index
    %8 = vector.load %arg7[%c0_6, %c0_7] : memref<128x64xf32, #tpu.memory_space<vmem>>, vector<128x64xf32>
    tpu.vector_store %arg7[%c0_6, %c0_7], %7 {strides = array<i32>} : memref<128x64xf32, #tpu.memory_space<vmem>>, vector<128x64xf32>,
    %c0_i32_8 = arith.constant 0 : i32
    %9 = arith.cmpi eq, %arg2, %c0_i32_8 : i32
    %10 = arith.extui %9 : i1 to i32
    %c0_i32_9 = arith.constant 0 : i32
    %11 = arith.cmpi ne, %10, %c0_i32_9 : i32
    scf.if %11 {
      %c0_10 = arith.constant 0 : index
      %c0_11 = arith.constant 0 : index
      %12 = vector.load %arg7[%c0_10, %c0_11] : memref<128x64xf32, #tpu.memory_space<vmem>>, vector<128x64xf32>
      %c0_12 = arith.constant 0 : index
      %c0_13 = arith.constant 0 : index
      %13 = vector.load %arg5[%c0_12, %c0_13] : memref<1x64xf32, #tpu.memory_space<vmem>>, vector<1x64xf32>
      %14 = vector.broadcast %13 : vector<1x64xf32> to vector<128x64xf32>
      %15 = arith.addf %12, %14 : vector<128x64xf32>
      %16 = arith.truncf %15 : vector<128x64xf32> to vector<128x64xbf16>
      %c0_14 = arith.constant 0 : index
      %c0_15 = arith.constant 0 : index
      %17 = vector.load %arg6[%c0_14, %c0_15] : memref<128x64xbf16, #tpu.memory_space<vmem>>, vector<128x64xbf16>
      tpu.vector_store %arg6[%c0_14, %c0_15], %16 {strides = array<i32>} : memref<128x64xbf16, #tpu.memory_space<vmem>>, vector<128x64xbf16>,
    } else {
    }
    return
  }
  func.func @transform_0(%arg0: i32, %arg1: i32, %arg2: i32) -> (i32, i32) {
    %c0_i32 = arith.constant 0 : i32
    return %arg0, %arg2 : i32, i32
  }
  func.func @transform_1(%arg0: i32, %arg1: i32, %arg2: i32) -> (i32, i32) {
    %c0_i32 = arith.constant 0 : i32
    return %arg2, %arg1 : i32, i32
  }
  func.func @transform_2(%arg0: i32, %arg1: i32, %arg2: i32) -> (i32, i32) {
    %c0_i32 = arith.constant 0 : i32
    %c0_i32_0 = arith.constant 0 : i32
    return %c0_i32, %arg1 : i32, i32
  }
  func.func @transform_3(%arg0: i32, %arg1: i32, %arg2: i32) -> (i32, i32) {
    %c0_i32 = arith.constant 0 : i32
    return %arg0, %arg1 : i32, i32
  }
}

module attributes {stable_mosaic.version = 11 : i64} {
  func.func @_sample_kernel(%arg0: i32, %arg1: memref<1x2x256xf32, #tpu.memory_space<vmem>>, %arg2: memref<1x256x64xbf16, #tpu.memory_space<vmem>>, %arg3: memref<1x2x64xbf16, #tpu.memory_space<vmem>>) attributes {dimension_semantics = [#tpu.dimension_semantics<parallel>], iteration_bounds = array<i64: 2>, scalar_prefetch = 0 : i64, scratch_operands = 0 : i64, tpu.core_type = #tpu.core_type<tc>, window_params = [{transform_indices = @transform_0, window_bounds = array<i64: 1, 2, 256>}, {transform_indices = @transform_1, window_bounds = array<i64: 1, 256, 64>}, {transform_indices = @transform_2, window_bounds = array<i64: 1, 2, 64>}]} {
    %c0 = arith.constant 0 : index
    %c0_0 = arith.constant 0 : index
    %c0_1 = arith.constant 0 : index
    %0 = vector.load %arg1[%c0, %c0_0, %c0_1] : memref<1x2x256xf32, #tpu.memory_space<vmem>>, vector<1x2x256xf32>
    %c0_2 = arith.constant 0 : index
    %c0_3 = arith.constant 0 : index
    %c0_4 = arith.constant 0 : index
    %1 = vector.load %arg2[%c0_2, %c0_3, %c0_4] : memref<1x256x64xbf16, #tpu.memory_space<vmem>>, vector<1x256x64xbf16>
    %cst = arith.constant -0.847297847 : f32
    %2 = vector.broadcast %cst : f32 to vector<1x2x256xf32>
    %3 = arith.cmpf ogt, %0, %2 : vector<1x2x256xf32>
    %cst_5 = arith.constant -1.000000e+07 : f32
    %4 = vector.broadcast %cst_5 : f32 to vector<1x2x256xf32>
    %5 = arith.select %3, %0, %4 : vector<1x2x256xi1>, vector<1x2x256xf32>
    %cst_6 = arith.constant 2.500000e-01 : f32
    %6 = vector.broadcast %cst_6 : f32 to vector<1x2x256xf32>
    %7 = arith.mulf %5, %6 : vector<1x2x256xf32>
    %8 = math.exp %7 : vector<1x2x256xf32>
    %cst_7 = arith.constant dense<0.000000e+00> : vector<1x2xf32>
    %9 = vector.multi_reduction <add>, %8, %cst_7 [2] : vector<1x2x256xf32> to vector<1x2xf32>
    %10 = vector.shape_cast %9 : vector<1x2xf32> to vector<1x2x1xf32>
    %cst_8 = arith.constant 1.000000e-07 : f32
    %11 = vector.broadcast %cst_8 : f32 to vector<1x2x1xf32>
    %12 = arith.addf %10, %11 : vector<1x2x1xf32>
    %13 = tpu.reciprocal %12 {approx = true} : vector<1x2x1xf32> -> vector<1x2x1xf32>
    %14 = vector.broadcast %13 : vector<1x2x1xf32> to vector<1x2x256xf32>
    %15 = arith.mulf %8, %14 : vector<1x2x256xf32>
    %16 = arith.truncf %15 : vector<1x2x256xf32> to vector<1x2x256xbf16>
    "tpu.trace_start"() <{level = 10 : i32, message = "bns,bsc->bnc"}> : () -> ()
    %cst_9 = arith.constant dense<0.000000e+00> : vector<1x2x64xf32>
    %17 = tpu.matmul %16, %1, %cst_9 {dimension_numbers = #tpu.dot_dimension_numbers<[2], [1], [1], [2], [0, 0, 0, 1, 1, 2], [0], [0]>} : vector<1x2x256xbf16>, vector<1x256x64xbf16>, vector<1x2x64xf32> -> vector<1x2x64xf32>
    "tpu.trace_stop"() : () -> ()
    %18 = arith.truncf %17 : vector<1x2x64xf32> to vector<1x2x64xbf16>
    %c0_10 = arith.constant 0 : index
    %c0_11 = arith.constant 0 : index
    %c0_12 = arith.constant 0 : index
    %19 = vector.load %arg3[%c0_10, %c0_11, %c0_12] : memref<1x2x64xbf16, #tpu.memory_space<vmem>>, vector<1x2x64xbf16>
    tpu.vector_store %arg3[%c0_10, %c0_11, %c0_12], %18 {strides = array<i32>} : memref<1x2x64xbf16, #tpu.memory_space<vmem>>, vector<1x2x64xbf16>,
    return
  }
  func.func @transform_0(%arg0: i32) -> (i32, i32, i32) {
    %c0_i32 = arith.constant 0 : i32
    %c0_i32_0 = arith.constant 0 : i32
    %c0_i32_1 = arith.constant 0 : i32
    return %arg0, %c0_i32, %c0_i32_0 : i32, i32, i32
  }
  func.func @transform_1(%arg0: i32) -> (i32, i32, i32) {
    %c0_i32 = arith.constant 0 : i32
    %c0_i32_0 = arith.constant 0 : i32
    %c0_i32_1 = arith.constant 0 : i32
    return %arg0, %c0_i32, %c0_i32_0 : i32, i32, i32
  }
  func.func @transform_2(%arg0: i32) -> (i32, i32, i32) {
    %c0_i32 = arith.constant 0 : i32
    %c0_i32_0 = arith.constant 0 : i32
    %c0_i32_1 = arith.constant 0 : i32
    return %arg0, %c0_i32, %c0_i32_0 : i32, i32, i32
  }
}

module attributes {stable_mosaic.version = 11 : i64} {
  func.func @_mm_kernel(%arg0: i32, %arg1: i32, %arg2: i32, %arg3: memref<16x64xbf16, #tpu.memory_space<vmem>>, %arg4: memref<64x192xbf16, #tpu.memory_space<vmem>>, %arg5: memref<1x192xf32, #tpu.memory_space<vmem>>, %arg6: memref<16x192xbf16, #tpu.memory_space<vmem>>, %arg7: memref<16x192xf32, #tpu.memory_space<vmem>>) attributes {dimension_semantics = [#tpu.dimension_semantics<parallel>, #tpu.dimension_semantics<parallel>, #tpu.dimension_semantics<arbitrary>], iteration_bounds = array<i64: 1, 1, 1>, scalar_prefetch = 0 : i64, scratch_operands = 1 : i64, tpu.core_type = #tpu.core_type<tc>, window_params = [{transform_indices = @transform_0, window_bounds = array<i64: 16, 64>}, {transform_indices = @transform_1, window_bounds = array<i64: 64, 192>}, {transform_indices = @transform_2, window_bounds = array<i64: 1, 192>}, {transform_indices = @transform_3, window_bounds = array<i64: 16, 192>}]} {
    %c0_i32 = arith.constant 0 : i32
    %0 = arith.cmpi eq, %arg2, %c0_i32 : i32
    %1 = arith.extui %0 : i1 to i32
    %c0_i32_0 = arith.constant 0 : i32
    %2 = arith.cmpi ne, %1, %c0_i32_0 : i32
    scf.if %2 {
      %cst_10 = arith.constant 0.000000e+00 : f32
      %12 = vector.broadcast %cst_10 : f32 to vector<16x192xf32>
      %c0_11 = arith.constant 0 : index
      %c0_12 = arith.constant 0 : index
      %13 = vector.load %arg7[%c0_11, %c0_12] : memref<16x192xf32, #tpu.memory_space<vmem>>, vector<16x192xf32>
      tpu.vector_store %arg7[%c0_11, %c0_12], %12 {strides = array<i32>} : memref<16x192xf32, #tpu.memory_space<vmem>>, vector<16x192xf32>,
    } else {
    }
    %c0 = arith.constant 0 : index
    %c0_1 = arith.constant 0 : index
    %3 = vector.load %arg7[%c0, %c0_1] : memref<16x192xf32, #tpu.memory_space<vmem>>, vector<16x192xf32>
    %c0_2 = arith.constant 0 : index
    %c0_3 = arith.constant 0 : index
    %4 = vector.load %arg3[%c0_2, %c0_3] : memref<16x64xbf16, #tpu.memory_space<vmem>>, vector<16x64xbf16>
    %c0_4 = arith.constant 0 : index
    %c0_5 = arith.constant 0 : index
    %5 = vector.load %arg4[%c0_4, %c0_5] : memref<64x192xbf16, #tpu.memory_space<vmem>>, vector<64x192xbf16>
    %cst = arith.constant dense<0.000000e+00> : vector<16x192xf32>
    %6 = tpu.matmul %4, %5, %cst {dimension_numbers = #tpu.dot_dimension_numbers<[1], [0], [0], [1], [0, 0, 1, 1], [], []>} : vector<16x64xbf16>, vector<64x192xbf16>, vector<16x192xf32> -> vector<16x192xf32>
    %7 = arith.addf %3, %6 : vector<16x192xf32>
    %c0_6 = arith.constant 0 : index
    %c0_7 = arith.constant 0 : index
    %8 = vector.load %arg7[%c0_6, %c0_7] : memref<16x192xf32, #tpu.memory_space<vmem>>, vector<16x192xf32>
    tpu.vector_store %arg7[%c0_6, %c0_7], %7 {strides = array<i32>} : memref<16x192xf32, #tpu.memory_space<vmem>>, vector<16x192xf32>,
    %c0_i32_8 = arith.constant 0 : i32
    %9 = arith.cmpi eq, %arg2, %c0_i32_8 : i32
    %10 = arith.extui %9 : i1 to i32
    %c0_i32_9 = arith.constant 0 : i32
    %11 = arith.cmpi ne, %10, %c0_i32_9 : i32
    scf.if %11 {
      %c0_10 = arith.constant 0 : index
      %c0_11 = arith.constant 0 : index
      %12 = vector.load %arg7[%c0_10, %c0_11] : memref<16x192xf32, #tpu.memory_space<vmem>>, vector<16x192xf32>
      %c0_12 = arith.constant 0 : index
      %c0_13 = arith.constant 0 : index
      %13 = vector.load %arg5[%c0_12, %c0_13] : memref<1x192xf32, #tpu.memory_space<vmem>>, vector<1x192xf32>
      %14 = vector.broadcast %13 : vector<1x192xf32> to vector<16x192xf32>
      %15 = arith.addf %12, %14 : vector<16x192xf32>
      %16 = arith.truncf %15 : vector<16x192xf32> to vector<16x192xbf16>
      %c0_14 = arith.constant 0 : index
      %c0_15 = arith.constant 0 : index
      %17 = vector.load %arg6[%c0_14, %c0_15] : memref<16x192xbf16, #tpu.memory_space<vmem>>, vector<16x192xbf16>
      tpu.vector_store %arg6[%c0_14, %c0_15], %16 {strides = array<i32>} : memref<16x192xbf16, #tpu.memory_space<vmem>>, vector<16x192xbf16>,
    } else {
    }
    return
  }
  func.func @transform_0(%arg0: i32, %arg1: i32, %arg2: i32) -> (i32, i32) {
    %c0_i32 = arith.constant 0 : i32
    return %arg0, %arg2 : i32, i32
  }
  func.func @transform_1(%arg0: i32, %arg1: i32, %arg2: i32) -> (i32, i32) {
    %c0_i32 = arith.constant 0 : i32
    return %arg2, %arg1 : i32, i32
  }
  func.func @transform_2(%arg0: i32, %arg1: i32, %arg2: i32) -> (i32, i32) {
    %c0_i32 = arith.constant 0 : i32
    %c0_i32_0 = arith.constant 0 : i32
    return %c0_i32, %arg1 : i32, i32
  }
  func.func @transform_3(%arg0: i32, %arg1: i32, %arg2: i32) -> (i32, i32) {
    %c0_i32 = arith.constant 0 : i32
    return %arg0, %arg1 : i32, i32
  }
}

module attributes {stable_mosaic.version = 11 : i64} {
  func.func @_attn_kernel(%arg0: i32, %arg1: memref<16x8x8xbf16, #tpu.memory_space<vmem>>, %arg2: memref<16x8x8xbf16, #tpu.memory_space<vmem>>, %arg3: memref<16x8x8xbf16, #tpu.memory_space<vmem>>, %arg4: memref<16x1x8xf32, #tpu.memory_space<vmem>>, %arg5: memref<16x8x8xbf16, #tpu.memory_space<vmem>>) attributes {dimension_semantics = [#tpu.dimension_semantics<parallel>], iteration_bounds = array<i64: 1>, scalar_prefetch = 0 : i64, scratch_operands = 0 : i64, tpu.core_type = #tpu.core_type<tc>, window_params = [{transform_indices = @transform_0, window_bounds = array<i64: 16, 8, 8>}, {pipeline_mode = #tpu.pipeline_mode<synchronous>, transform_indices = @transform_1, window_bounds = array<i64: 16, 8, 8>}, {pipeline_mode = #tpu.pipeline_mode<synchronous>, transform_indices = @transform_2, window_bounds = array<i64: 16, 8, 8>}, {pipeline_mode = #tpu.pipeline_mode<synchronous>, transform_indices = @transform_3, window_bounds = array<i64: 16, 1, 8>}, {transform_indices = @transform_4, window_bounds = array<i64: 16, 8, 8>}]} {
    %c0 = arith.constant 0 : index
    %c0_0 = arith.constant 0 : index
    %c0_1 = arith.constant 0 : index
    %0 = vector.load %arg1[%c0, %c0_0, %c0_1] : memref<16x8x8xbf16, #tpu.memory_space<vmem>>, vector<16x8x8xbf16>
    %c0_2 = arith.constant 0 : index
    %c0_3 = arith.constant 0 : index
    %c0_4 = arith.constant 0 : index
    %1 = vector.load %arg2[%c0_2, %c0_3, %c0_4] : memref<16x8x8xbf16, #tpu.memory_space<vmem>>, vector<16x8x8xbf16>
    %c0_5 = arith.constant 0 : index
    %c0_6 = arith.constant 0 : index
    %c0_7 = arith.constant 0 : index
    %2 = vector.load %arg3[%c0_5, %c0_6, %c0_7] : memref<16x8x8xbf16, #tpu.memory_space<vmem>>, vector<16x8x8xbf16>
    %c0_8 = arith.constant 0 : index
    %c0_9 = arith.constant 0 : index
    %c0_10 = arith.constant 0 : index
    %3 = vector.load %arg4[%c0_8, %c0_9, %c0_10] : memref<16x1x8xf32, #tpu.memory_space<vmem>>, vector<16x1x8xf32>
    "tpu.trace_start"() <{level = 10 : i32, message = "gqd,gkd->gqk"}> : () -> ()
    %cst = arith.constant dense<0.000000e+00> : vector<16x8x8xf32>
    %4 = tpu.matmul %0, %1, %cst {dimension_numbers = #tpu.dot_dimension_numbers<[2], [2], [1], [1], [0, 0, 0, 1, 1, 1], [0], [0]>} : vector<16x8x8xbf16>, vector<16x8x8xbf16>, vector<16x8x8xf32> -> vector<16x8x8xf32>
    "tpu.trace_stop"() : () -> ()
    %cst_11 = arith.constant 0.353553385 : f32
    %5 = vector.broadcast %cst_11 : f32 to vector<16x8x8xf32>
    %6 = arith.mulf %4, %5 : vector<16x8x8xf32>
    %cst_12 = arith.constant 0.000000e+00 : f32
    %7 = vector.broadcast %cst_12 : f32 to vector<16x1x8xf32>
    %8 = arith.cmpf one, %3, %7 : vector<16x1x8xf32>
    %cst_13 = arith.constant -1.000000e+07 : f32
    %9 = vector.shape_cast %8 : vector<16x1x8xi1> to vector<16x1x8xi1>
    %10 = vector.broadcast %9 : vector<16x1x8xi1> to vector<16x8x8xi1>
    %11 = vector.broadcast %cst_13 : f32 to vector<16x8x8xf32>
    %12 = arith.select %10, %6, %11 : vector<16x8x8xi1>, vector<16x8x8xf32>
    %cst_14 = arith.constant dense<0xFF800000> : vector<16x8xf32>
    %13 = vector.multi_reduction <maximumf>, %12, %cst_14 [2] : vector<16x8x8xf32> to vector<16x8xf32>
    %14 = vector.shape_cast %13 : vector<16x8xf32> to vector<16x8x1xf32>
    %15 = vector.broadcast %14 : vector<16x8x1xf32> to vector<16x8x8xf32>
    %16 = arith.subf %12, %15 : vector<16x8x8xf32>
    %17 = math.exp %16 : vector<16x8x8xf32>
    %cst_15 = arith.constant dense<0.000000e+00> : vector<16x8xf32>
    %18 = vector.multi_reduction <add>, %17, %cst_15 [2] : vector<16x8x8xf32> to vector<16x8xf32>
    %19 = vector.shape_cast %18 : vector<16x8xf32> to vector<16x8x1xf32>
    %20 = tpu.reciprocal %19 {approx = true} : vector<16x8x1xf32> -> vector<16x8x1xf32>
    %21 = vector.broadcast %20 : vector<16x8x1xf32> to vector<16x8x8xf32>
    %22 = arith.mulf %17, %21 : vector<16x8x8xf32>
    %23 = arith.truncf %22 : vector<16x8x8xf32> to vector<16x8x8xbf16>
    "tpu.trace_start"() <{level = 10 : i32, message = "gqk,gkd->gqd"}> : () -> ()
    %cst_16 = arith.constant dense<0.000000e+00> : vector<16x8x8xf32>
    %24 = tpu.matmul %23, %2, %cst_16 {dimension_numbers = #tpu.dot_dimension_numbers<[2], [1], [1], [2], [0, 0, 0, 1, 1, 2], [0], [0]>} : vector<16x8x8xbf16>, vector<16x8x8xbf16>, vector<16x8x8xf32> -> vector<16x8x8xf32>
    "tpu.trace_stop"() : () -> ()
    %25 = arith.truncf %24 : vector<16x8x8xf32> to vector<16x8x8xbf16>
    %c0_17 = arith.constant 0 : index
    %c0_18 = arith.constant 0 : index
    %c0_19 = arith.constant 0 : index
    %26 = vector.load %arg5[%c0_17, %c0_18, %c0_19] : memref<16x8x8xbf16, #tpu.memory_space<vmem>>, vector<16x8x8xbf16>
    tpu.vector_store %arg5[%c0_17, %c0_18, %c0_19], %25 {strides = array<i32>} : memref<16x8x8xbf16, #tpu.memory_space<vmem>>, vector<16x8x8xbf16>,
    return
  }
  func.func @transform_0(%arg0: i32) -> (i32, i32, i32) {
    %c0_i32 = arith.constant 0 : i32
    %c0_i32_0 = arith.constant 0 : i32
    %c0_i32_1 = arith.constant 0 : i32
    return %c0_i32, %arg0, %c0_i32_0 : i32, i32, i32
  }
  func.func @transform_1(%arg0: i32) -> (i32, i32, i32) {
    %c0_i32 = arith.constant 0 : i32
    %c0_i32_0 = arith.constant 0 : i32
    %c0_i32_1 = arith.constant 0 : i32
    %c0_i32_2 = arith.constant 0 : i32
    return %c0_i32, %c0_i32_0, %c0_i32_1 : i32, i32, i32
  }
  func.func @transform_2(%arg0: i32) -> (i32, i32, i32) {
    %c0_i32 = arith.constant 0 : i32
    %c0_i32_0 = arith.constant 0 : i32
    %c0_i32_1 = arith.constant 0 : i32
    %c0_i32_2 = arith.constant 0 : i32
    return %c0_i32, %c0_i32_0, %c0_i32_1 : i32, i32, i32
  }
  func.func @transform_3(%arg0: i32) -> (i32, i32, i32) {
    %c0_i32 = arith.constant 0 : i32
    %c0_i32_0 = arith.constant 0 : i32
    %c0_i32_1 = arith.constant 0 : i32
    %c0_i32_2 = arith.constant 0 : i32
    return %c0_i32, %c0_i32_0, %c0_i32_1 : i32, i32, i32
  }
  func.func @transform_4(%arg0: i32) -> (i32, i32, i32) {
    %c0_i32 = arith.constant 0 : i32
    %c0_i32_0 = arith.constant 0 : i32
    %c0_i32_1 = arith.constant 0 : i32
    return %c0_i32, %arg0, %c0_i32_0 : i32, i32, i32
  }
}

module attributes {stable_mosaic.version = 11 : i64} {
  func.func @_add_ln_kernel(%arg0: i32, %arg1: memref<16x64xbf16, #tpu.memory_space<vmem>>, %arg2: memref<16x64xbf16, #tpu.memory_space<vmem>>, %arg3: memref<1x64xf32, #tpu.memory_space<vmem>>, %arg4: memref<1x64xf32, #tpu.memory_space<vmem>>, %arg5: memref<16x64xbf16, #tpu.memory_space<vmem>>) attributes {dimension_semantics = [#tpu.dimension_semantics<parallel>], iteration_bounds = array<i64: 1>, scalar_prefetch = 0 : i64, scratch_operands = 0 : i64, tpu.core_type = #tpu.core_type<tc>, window_params = [{transform_indices = @transform_0, window_bounds = array<i64: 16, 64>}, {transform_indices = @transform_1, window_bounds = array<i64: 16, 64>}, {pipeline_mode = #tpu.pipeline_mode<synchronous>, transform_indices = @transform_2, window_bounds = array<i64: 1, 64>}, {pipeline_mode = #tpu.pipeline_mode<synchronous>, transform_indices = @transform_3, window_bounds = array<i64: 1, 64>}, {transform_indices = @transform_4, window_bounds = array<i64: 16, 64>}]} {
    %c0 = arith.constant 0 : index
    %c0_0 = arith.constant 0 : index
    %0 = vector.load %arg1[%c0, %c0_0] : memref<16x64xbf16, #tpu.memory_space<vmem>>, vector<16x64xbf16>
    %1 = arith.extf %0 : vector<16x64xbf16> to vector<16x64xf32>
    %c0_1 = arith.constant 0 : index
    %c0_2 = arith.constant 0 : index
    %2 = vector.load %arg2[%c0_1, %c0_2] : memref<16x64xbf16, #tpu.memory_space<vmem>>, vector<16x64xbf16>
    %3 = arith.extf %2 : vector<16x64xbf16> to vector<16x64xf32>
    %4 = arith.addf %1, %3 : vector<16x64xf32>
    %cst = arith.constant dense<0.000000e+00> : vector<16xf32>
    %5 = vector.multi_reduction <add>, %4, %cst [1] : vector<16x64xf32> to vector<16xf32>
    %6 = vector.shape_cast %5 : vector<16xf32> to vector<16x1xf32>
    %cst_3 = arith.constant 6.400000e+01 : f32
    %7 = vector.broadcast %cst_3 : f32 to vector<16x1xf32>
    %8 = arith.divf %6, %7 : vector<16x1xf32>
    %9 = vector.broadcast %8 : vector<16x1xf32> to vector<16x64xf32>
    %10 = arith.subf %4, %9 : vector<16x64xf32>
    %11 = arith.mulf %10, %10 : vector<16x64xf32>
    %cst_4 = arith.constant dense<0.000000e+00> : vector<16xf32>
    %12 = vector.multi_reduction <add>, %11, %cst_4 [1] : vector<16x64xf32> to vector<16xf32>
    %13 = vector.shape_cast %12 : vector<16xf32> to vector<16x1xf32>
    %cst_5 = arith.constant 6.400000e+01 : f32
    %14 = vector.broadcast %cst_5 : f32 to vector<16x1xf32>
    %15 = arith.divf %13, %14 : vector<16x1xf32>
    %16 = vector.broadcast %8 : vector<16x1xf32> to vector<16x64xf32>
    %17 = arith.subf %4, %16 : vector<16x64xf32>
    %cst_6 = arith.constant 9.99999974E-6 : f32
    %18 = vector.broadcast %cst_6 : f32 to vector<16x1xf32>
    %19 = arith.addf %15, %18 : vector<16x1xf32>
    %20 = math.rsqrt %19 : vector<16x1xf32>
    %21 = vector.broadcast %20 : vector<16x1xf32> to vector<16x64xf32>
    %22 = arith.mulf %17, %21 : vector<16x64xf32>
    %c0_7 = arith.constant 0 : index
    %c0_8 = arith.constant 0 : index
    %23 = vector.load %arg3[%c0_7, %c0_8] : memref<1x64xf32, #tpu.memory_space<vmem>>, vector<1x64xf32>
    %24 = vector.broadcast %23 : vector<1x64xf32> to vector<16x64xf32>
    %25 = arith.mulf %22, %24 : vector<16x64xf32>
    %c0_9 = arith.constant 0 : index
    %c0_10 = arith.constant 0 : index
    %26 = vector.load %arg4[%c0_9, %c0_10] : memref<1x64xf32, #tpu.memory_space<vmem>>, vector<1x64xf32>
    %27 = vector.broadcast %26 : vector<1x64xf32> to vector<16x64xf32>
    %28 = arith.addf %25, %27 : vector<16x64xf32>
    %29 = arith.truncf %28 : vector<16x64xf32> to vector<16x64xbf16>
    %c0_11 = arith.constant 0 : index
    %c0_12 = arith.constant 0 : index
    %30 = vector.load %arg5[%c0_11, %c0_12] : memref<16x64xbf16, #tpu.memory_space<vmem>>, vector<16x64xbf16>
    tpu.vector_store %arg5[%c0_11, %c0_12], %29 {strides = array<i32>} : memref<16x64xbf16, #tpu.memory_space<vmem>>, vector<16x64xbf16>,
    return
  }
  func.func @transform_0(%arg0: i32) -> (i32, i32) {
    %c0_i32 = arith.constant 0 : i32
    %c0_i32_0 = arith.constant 0 : i32
    return %arg0, %c0_i32 : i32, i32
  }
  func.func @transform_1(%arg0: i32) -> (i32, i32) {
    %c0_i32 = arith.constant 0 : i32
    %c0_i32_0 = arith.constant 0 : i32
    return %arg0, %c0_i32 : i32, i32
  }
  func.func @transform_2(%arg0: i32) -> (i32, i32) {
    %c0_i32 = arith.constant 0 : i32
    %c0_i32_0 = arith.constant 0 : i32
    %c0_i32_1 = arith.constant 0 : i32
    return %c0_i32, %c0_i32_0 : i32, i32
  }
  func.func @transform_3(%arg0: i32) -> (i32, i32) {
    %c0_i32 = arith.constant 0 : i32
    %c0_i32_0 = arith.constant 0 : i32
    %c0_i32_1 = arith.constant 0 : i32
    return %c0_i32, %c0_i32_0 : i32, i32
  }
  func.func @transform_4(%arg0: i32) -> (i32, i32) {
    %c0_i32 = arith.constant 0 : i32
    %c0_i32_0 = arith.constant 0 : i32
    return %arg0, %c0_i32 : i32, i32
  }
}

module attributes {stable_mosaic.version = 11 : i64} {
  func.func @_mm_kernel(%arg0: i32, %arg1: i32, %arg2: i32, %arg3: memref<16x64xbf16, #tpu.memory_space<vmem>>, %arg4: memref<64x64xbf16, #tpu.memory_space<vmem>>, %arg5: memref<1x64xf32, #tpu.memory_space<vmem>>, %arg6: memref<16x64xbf16, #tpu.memory_space<vmem>>, %arg7: memref<16x64xf32, #tpu.memory_space<vmem>>) attributes {dimension_semantics = [#tpu.dimension_semantics<parallel>, #tpu.dimension_semantics<parallel>, #tpu.dimension_semantics<arbitrary>], iteration_bounds = array<i64: 1, 1, 1>, scalar_prefetch = 0 : i64, scratch_operands = 1 : i64, tpu.core_type = #tpu.core_type<tc>, window_params = [{transform_indices = @transform_0, window_bounds = array<i64: 16, 64>}, {transform_indices = @transform_1, window_bounds = array<i64: 64, 64>}, {transform_indices = @transform_2, window_bounds = array<i64: 1, 64>}, {transform_indices = @transform_3, window_bounds = array<i64: 16, 64>}]} {
    %c0_i32 = arith.constant 0 : i32
    %0 = arith.cmpi eq, %arg2, %c0_i32 : i32
    %1 = arith.extui %0 : i1 to i32
    %c0_i32_0 = arith.constant 0 : i32
    %2 = arith.cmpi ne, %1, %c0_i32_0 : i32
    scf.if %2 {
      %cst_10 = arith.constant 0.000000e+00 : f32
      %12 = vector.broadcast %cst_10 : f32 to vector<16x64xf32>
      %c0_11 = arith.constant 0 : index
      %c0_12 = arith.constant 0 : index
      %13 = vector.load %arg7[%c0_11, %c0_12] : memref<16x64xf32, #tpu.memory_space<vmem>>, vector<16x64xf32>
      tpu.vector_store %arg7[%c0_11, %c0_12], %12 {strides = array<i32>} : memref<16x64xf32, #tpu.memory_space<vmem>>, vector<16x64xf32>,
    } else {
    }
    %c0 = arith.constant 0 : index
    %c0_1 = arith.constant 0 : index
    %3 = vector.load %arg7[%c0, %c0_1] : memref<16x64xf32, #tpu.memory_space<vmem>>, vector<16x64xf32>
    %c0_2 = arith.constant 0 : index
    %c0_3 = arith.constant 0 : index
    %4 = vector.load %arg3[%c0_2, %c0_3] : memref<16x64xbf16, #tpu.memory_space<vmem>>, vector<16x64xbf16>
    %c0_4 = arith.constant 0 : index
    %c0_5 = arith.constant 0 : index
    %5 = vector.load %arg4[%c0_4, %c0_5] : memref<64x64xbf16, #tpu.memory_space<vmem>>, vector<64x64xbf16>
    %cst = arith.constant dense<0.000000e+00> : vector<16x64xf32>
    %6 = tpu.matmul %4, %5, %cst {dimension_numbers = #tpu.dot_dimension_numbers<[1], [0], [0], [1], [0, 0, 1, 1], [], []>} : vector<16x64xbf16>, vector<64x64xbf16>, vector<16x64xf32> -> vector<16x64xf32>
    %7 = arith.addf %3, %6 : vector<16x64xf32>
    %c0_6 = arith.constant 0 : index
    %c0_7 = arith.constant 0 : index
    %8 = vector.load %arg7[%c0_6, %c0_7] : memref<16x64xf32, #tpu.memory_space<vmem>>, vector<16x64xf32>
    tpu.vector_store %arg7[%c0_6, %c0_7], %7 {strides = array<i32>} : memref<16x64xf32, #tpu.memory_space<vmem>>, vector<16x64xf32>,
    %c0_i32_8 = arith.constant 0 : i32
    %9 = arith.cmpi eq, %arg2, %c0_i32_8 : i32
    %10 = arith.extui %9 : i1 to i32
    %c0_i32_9 = arith.constant 0 : i32
    %11 = arith.cmpi ne, %10, %c0_i32_9 : i32
    scf.if %11 {
      %c0_10 = arith.constant 0 : index
      %c0_11 = arith.constant 0 : index
      %12 = vector.load %arg7[%c0_10, %c0_11] : memref<16x64xf32, #tpu.memory_space<vmem>>, vector<16x64xf32>
      %c0_12 = arith.constant 0 : index
      %c0_13 = arith.constant 0 : index
      %13 = vector.load %arg5[%c0_12, %c0_13] : memref<1x64xf32, #tpu.memory_space<vmem>>, vector<1x64xf32>
      %14 = vector.broadcast %13 : vector<1x64xf32> to vector<16x64xf32>
      %15 = arith.addf %12, %14 : vector<16x64xf32>
      %16 = arith.truncf %15 : vector<16x64xf32> to vector<16x64xbf16>
      %c0_14 = arith.constant 0 : index
      %c0_15 = arith.constant 0 : index
      %17 = vector.load %arg6[%c0_14, %c0_15] : memref<16x64xbf16, #tpu.memory_space<vmem>>, vector<16x64xbf16>
      tpu.vector_store %arg6[%c0_14, %c0_15], %16 {strides = array<i32>} : memref<16x64xbf16, #tpu.memory_space<vmem>>, vector<16x64xbf16>,
    } else {
    }
    return
  }
  func.func @transform_0(%arg0: i32, %arg1: i32, %arg2: i32) -> (i32, i32) {
    %c0_i32 = arith.constant 0 : i32
    return %arg0, %arg2 : i32, i32
  }
  func.func @transform_1(%arg0: i32, %arg1: i32, %arg2: i32) -> (i32, i32) {
    %c0_i32 = arith.constant 0 : i32
    return %arg2, %arg1 : i32, i32
  }
  func.func @transform_2(%arg0: i32, %arg1: i32, %arg2: i32) -> (i32, i32) {
    %c0_i32 = arith.constant 0 : i32
    %c0_i32_0 = arith.constant 0 : i32
    return %c0_i32, %arg1 : i32, i32
  }
  func.func @transform_3(%arg0: i32, %arg1: i32, %arg2: i32) -> (i32, i32) {
    %c0_i32 = arith.constant 0 : i32
    return %arg0, %arg1 : i32, i32
  }
}

module attributes {stable_mosaic.version = 11 : i64} {
  func.func @_ffn_kernel(%arg0: i32, %arg1: memref<16x64xbf16, #tpu.memory_space<vmem>>, %arg2: memref<64x512xbf16, #tpu.memory_space<vmem>>, %arg3: memref<1x512xf32, #tpu.memory_space<vmem>>, %arg4: memref<512x64xbf16, #tpu.memory_space<vmem>>, %arg5: memref<1x64xf32, #tpu.memory_space<vmem>>, %arg6: memref<16x64xbf16, #tpu.memory_space<vmem>>) attributes {dimension_semantics = [#tpu.dimension_semantics<parallel>], iteration_bounds = array<i64: 1>, scalar_prefetch = 0 : i64, scratch_operands = 0 : i64, tpu.core_type = #tpu.core_type<tc>, window_params = [{transform_indices = @transform_0, window_bounds = array<i64: 16, 64>}, {pipeline_mode = #tpu.pipeline_mode<synchronous>, transform_indices = @transform_1, window_bounds = array<i64: 64, 512>}, {pipeline_mode = #tpu.pipeline_mode<synchronous>, transform_indices = @transform_2, window_bounds = array<i64: 1, 512>}, {pipeline_mode = #tpu.pipeline_mode<synchronous>, transform_indices = @transform_3, window_bounds = array<i64: 512, 64>}, {pipeline_mode = #tpu.pipeline_mode<synchronous>, transform_indices = @transform_4, window_bounds = array<i64: 1, 64>}, {transform_indices = @transform_5, window_bounds = array<i64: 16, 64>}]} {
    %c0 = arith.constant 0 : index
    %c0_0 = arith.constant 0 : index
    %0 = vector.load %arg1[%c0, %c0_0] : memref<16x64xbf16, #tpu.memory_space<vmem>>, vector<16x64xbf16>
    %c0_1 = arith.constant 0 : index
    %c0_2 = arith.constant 0 : index
    %1 = vector.load %arg2[%c0_1, %c0_2] : memref<64x512xbf16, #tpu.memory_space<vmem>>, vector<64x512xbf16>
    %cst = arith.constant dense<0.000000e+00> : vector<16x512xf32>
    %2 = tpu.matmul %0, %1, %cst {dimension_numbers = #tpu.dot_dimension_numbers<[1], [0], [0], [1], [0, 0, 1, 1], [], []>} : vector<16x64xbf16>, vector<64x512xbf16>, vector<16x512xf32> -> vector<16x512xf32>
    %c0_3 = arith.constant 0 : index
    %c0_4 = arith.constant 0 : index
    %3 = vector.load %arg3[%c0_3, %c0_4] : memref<1x512xf32, #tpu.memory_space<vmem>>, vector<1x512xf32>
    %4 = vector.broadcast %3 : vector<1x512xf32> to vector<16x512xf32>
    %5 = arith.addf %2, %4 : vector<16x512xf32>
    %cst_5 = arith.constant 0.000000e+00 : f32
    %6 = vector.broadcast %cst_5 : f32 to vector<16x512xf32>
    %7 = arith.maximumf %5, %6 : vector<16x512xf32>
    %8 = arith.truncf %7 : vector<16x512xf32> to vector<16x512xbf16>
    %c0_6 = arith.constant 0 : index
    %c0_7 = arith.constant 0 : index
    %9 = vector.load %arg4[%c0_6, %c0_7] : memref<512x64xbf16, #tpu.memory_space<vmem>>, vector<512x64xbf16>
    %cst_8 = arith.constant dense<0.000000e+00> : vector<16x64xf32>
    %10 = tpu.matmul %8, %9, %cst_8 {dimension_numbers = #tpu.dot_dimension_numbers<[1], [0], [0], [1], [0, 0, 1, 1], [], []>} : vector<16x512xbf16>, vector<512x64xbf16>, vector<16x64xf32> -> vector<16x64xf32>
    %c0_9 = arith.constant 0 : index
    %c0_10 = arith.constant 0 : index
    %11 = vector.load %arg5[%c0_9, %c0_10] : memref<1x64xf32, #tpu.memory_space<vmem>>, vector<1x64xf32>
    %12 = vector.broadcast %11 : vector<1x64xf32> to vector<16x64xf32>
    %13 = arith.addf %10, %12 : vector<16x64xf32>
    %14 = arith.truncf %13 : vector<16x64xf32> to vector<16x64xbf16>
    %c0_11 = arith.constant 0 : index
    %c0_12 = arith.constant 0 : index
    %15 = vector.load %arg6[%c0_11, %c0_12] : memref<16x64xbf16, #tpu.memory_space<vmem>>, vector<16x64xbf16>
    tpu.vector_store %arg6[%c0_11, %c0_12], %14 {strides = array<i32>} : memref<16x64xbf16, #tpu.memory_space<vmem>>, vector<16x64xbf16>,
    return
  }
  func.func @transform_0(%arg0: i32) -> (i32, i32) {
    %c0_i32 = arith.constant 0 : i32
    %c0_i32_0 = arith.constant 0 : i32
    return %arg0, %c0_i32 : i32, i32
  }
  func.func @transform_1(%arg0: i32) -> (i32, i32) {
    %c0_i32 = arith.constant 0 : i32
    %c0_i32_0 = arith.constant 0 : i32
    %c0_i32_1 = arith.constant 0 : i32
    return %c0_i32, %c0_i32_0 : i32, i32
  }
  func.func @transform_2(%arg0: i32) -> (i32, i32) {
    %c0_i32 = arith.constant 0 : i32
    %c0_i32_0 = arith.constant 0 : i32
    %c0_i32_1 = arith.constant 0 : i32
    return %c0_i32, %c0_i32_0 : i32, i32
  }
  func.func @transform_3(%arg0: i32) -> (i32, i32) {
    %c0_i32 = arith.constant 0 : i32
    %c0_i32_0 = arith.constant 0 : i32
    %c0_i32_1 = arith.constant 0 : i32
    return %c0_i32, %c0_i32_0 : i32, i32
  }
  func.func @transform_4(%arg0: i32) -> (i32, i32) {
    %c0_i32 = arith.constant 0 : i32
    %c0_i32_0 = arith.constant 0 : i32
    %c0_i32_1 = arith.constant 0 : i32
    return %c0_i32, %c0_i32_0 : i32, i32
  }
  func.func @transform_5(%arg0: i32) -> (i32, i32) {
    %c0_i32 = arith.constant 0 : i32
    %c0_i32_0 = arith.constant 0 : i32
    return %arg0, %c0_i32 : i32, i32
  }
}

module attributes {stable_mosaic.version = 11 : i64} {
  func.func @_mm_kernel(%arg0: i32, %arg1: i32, %arg2: i32, %arg3: memref<16x64xbf16, #tpu.memory_space<vmem>>, %arg4: memref<64x128xbf16, #tpu.memory_space<vmem>>, %arg5: memref<1x128xf32, #tpu.memory_space<vmem>>, %arg6: memref<16x128xbf16, #tpu.memory_space<vmem>>, %arg7: memref<16x128xf32, #tpu.memory_space<vmem>>) attributes {dimension_semantics = [#tpu.dimension_semantics<parallel>, #tpu.dimension_semantics<parallel>, #tpu.dimension_semantics<arbitrary>], iteration_bounds = array<i64: 1, 1, 1>, scalar_prefetch = 0 : i64, scratch_operands = 1 : i64, tpu.core_type = #tpu.core_type<tc>, window_params = [{transform_indices = @transform_0, window_bounds = array<i64: 16, 64>}, {transform_indices = @transform_1, window_bounds = array<i64: 64, 128>}, {transform_indices = @transform_2, window_bounds = array<i64: 1, 128>}, {transform_indices = @transform_3, window_bounds = array<i64: 16, 128>}]} {
    %c0_i32 = arith.constant 0 : i32
    %0 = arith.cmpi eq, %arg2, %c0_i32 : i32
    %1 = arith.extui %0 : i1 to i32
    %c0_i32_0 = arith.constant 0 : i32
    %2 = arith.cmpi ne, %1, %c0_i32_0 : i32
    scf.if %2 {
      %cst_10 = arith.constant 0.000000e+00 : f32
      %12 = vector.broadcast %cst_10 : f32 to vector<16x128xf32>
      %c0_11 = arith.constant 0 : index
      %c0_12 = arith.constant 0 : index
      %13 = vector.load %arg7[%c0_11, %c0_12] : memref<16x128xf32, #tpu.memory_space<vmem>>, vector<16x128xf32>
      tpu.vector_store %arg7[%c0_11, %c0_12], %12 {strides = array<i32>} : memref<16x128xf32, #tpu.memory_space<vmem>>, vector<16x128xf32>,
    } else {
    }
    %c0 = arith.constant 0 : index
    %c0_1 = arith.constant 0 : index
    %3 = vector.load %arg7[%c0, %c0_1] : memref<16x128xf32, #tpu.memory_space<vmem>>, vector<16x128xf32>
    %c0_2 = arith.constant 0 : index
    %c0_3 = arith.constant 0 : index
    %4 = vector.load %arg3[%c0_2, %c0_3] : memref<16x64xbf16, #tpu.memory_space<vmem>>, vector<16x64xbf16>
    %c0_4 = arith.constant 0 : index
    %c0_5 = arith.constant 0 : index
    %5 = vector.load %arg4[%c0_4, %c0_5] : memref<64x128xbf16, #tpu.memory_space<vmem>>, vector<64x128xbf16>
    %cst = arith.constant dense<0.000000e+00> : vector<16x128xf32>
    %6 = tpu.matmul %4, %5, %cst {dimension_numbers = #tpu.dot_dimension_numbers<[1], [0], [0], [1], [0, 0, 1, 1], [], []>} : vector<16x64xbf16>, vector<64x128xbf16>, vector<16x128xf32> -> vector<16x128xf32>
    %7 = arith.addf %3, %6 : vector<16x128xf32>
    %c0_6 = arith.constant 0 : index
    %c0_7 = arith.constant 0 : index
    %8 = vector.load %arg7[%c0_6, %c0_7] : memref<16x128xf32, #tpu.memory_space<vmem>>, vector<16x128xf32>
    tpu.vector_store %arg7[%c0_6, %c0_7], %7 {strides = array<i32>} : memref<16x128xf32, #tpu.memory_space<vmem>>, vector<16x128xf32>,
    %c0_i32_8 = arith.constant 0 : i32
    %9 = arith.cmpi eq, %arg2, %c0_i32_8 : i32
    %10 = arith.extui %9 : i1 to i32
    %c0_i32_9 = arith.constant 0 : i32
    %11 = arith.cmpi ne, %10, %c0_i32_9 : i32
    scf.if %11 {
      %c0_10 = arith.constant 0 : index
      %c0_11 = arith.constant 0 : index
      %12 = vector.load %arg7[%c0_10, %c0_11] : memref<16x128xf32, #tpu.memory_space<vmem>>, vector<16x128xf32>
      %c0_12 = arith.constant 0 : index
      %c0_13 = arith.constant 0 : index
      %13 = vector.load %arg5[%c0_12, %c0_13] : memref<1x128xf32, #tpu.memory_space<vmem>>, vector<1x128xf32>
      %14 = vector.broadcast %13 : vector<1x128xf32> to vector<16x128xf32>
      %15 = arith.addf %12, %14 : vector<16x128xf32>
      %cst_14 = arith.constant 0.000000e+00 : f32
      %16 = vector.broadcast %cst_14 : f32 to vector<16x128xf32>
      %17 = arith.maximumf %15, %16 : vector<16x128xf32>
      %18 = arith.truncf %17 : vector<16x128xf32> to vector<16x128xbf16>
      %c0_15 = arith.constant 0 : index
      %c0_16 = arith.constant 0 : index
      %19 = vector.load %arg6[%c0_15, %c0_16] : memref<16x128xbf16, #tpu.memory_space<vmem>>, vector<16x128xbf16>
      tpu.vector_store %arg6[%c0_15, %c0_16], %18 {strides = array<i32>} : memref<16x128xbf16, #tpu.memory_space<vmem>>, vector<16x128xbf16>,
    } else {
    }
    return
  }
  func.func @transform_0(%arg0: i32, %arg1: i32, %arg2: i32) -> (i32, i32) {
    %c0_i32 = arith.constant 0 : i32
    return %arg0, %arg2 : i32, i32
  }
  func.func @transform_1(%arg0: i32, %arg1: i32, %arg2: i32) -> (i32, i32) {
    %c0_i32 = arith.constant 0 : i32
    return %arg2, %arg1 : i32, i32
  }
  func.func @transform_2(%arg0: i32, %arg1: i32, %arg2: i32) -> (i32, i32) {
    %c0_i32 = arith.constant 0 : i32
    %c0_i32_0 = arith.constant 0 : i32
    return %c0_i32, %arg1 : i32, i32
  }
  func.func @transform_3(%arg0: i32, %arg1: i32, %arg2: i32) -> (i32, i32) {
    %c0_i32 = arith.constant 0 : i32
    return %arg0, %arg1 : i32, i32
  }
}

module attributes {stable_mosaic.version = 11 : i64} {
  func.func @_mm_kernel(%arg0: i32, %arg1: i32, %arg2: i32, %arg3: memref<16x64xbf16, #tpu.memory_space<vmem>>, %arg4: memref<64x64xbf16, #tpu.memory_space<vmem>>, %arg5: memref<1x64xf32, #tpu.memory_space<vmem>>, %arg6: memref<16x64xbf16, #tpu.memory_space<vmem>>, %arg7: memref<16x64xf32, #tpu.memory_space<vmem>>) attributes {dimension_semantics = [#tpu.dimension_semantics<parallel>, #tpu.dimension_semantics<parallel>, #tpu.dimension_semantics<arbitrary>], iteration_bounds = array<i64: 1, 1, 1>, scalar_prefetch = 0 : i64, scratch_operands = 1 : i64, tpu.core_type = #tpu.core_type<tc>, window_params = [{transform_indices = @transform_0, window_bounds = array<i64: 16, 64>}, {transform_indices = @transform_1, window_bounds = array<i64: 64, 64>}, {transform_indices = @transform_2, window_bounds = array<i64: 1, 64>}, {transform_indices = @transform_3, window_bounds = array<i64: 16, 64>}]} {
    %c0_i32 = arith.constant 0 : i32
    %0 = arith.cmpi eq, %arg2, %c0_i32 : i32
    %1 = arith.extui %0 : i1 to i32
    %c0_i32_0 = arith.constant 0 : i32
    %2 = arith.cmpi ne, %1, %c0_i32_0 : i32
    scf.if %2 {
      %cst_10 = arith.constant 0.000000e+00 : f32
      %12 = vector.broadcast %cst_10 : f32 to vector<16x64xf32>
      %c0_11 = arith.constant 0 : index
      %c0_12 = arith.constant 0 : index
      %13 = vector.load %arg7[%c0_11, %c0_12] : memref<16x64xf32, #tpu.memory_space<vmem>>, vector<16x64xf32>
      tpu.vector_store %arg7[%c0_11, %c0_12], %12 {strides = array<i32>} : memref<16x64xf32, #tpu.memory_space<vmem>>, vector<16x64xf32>,
    } else {
    }
    %c0 = arith.constant 0 : index
    %c0_1 = arith.constant 0 : index
    %3 = vector.load %arg7[%c0, %c0_1] : memref<16x64xf32, #tpu.memory_space<vmem>>, vector<16x64xf32>
    %c0_2 = arith.constant 0 : index
    %c0_3 = arith.constant 0 : index
    %4 = vector.load %arg3[%c0_2, %c0_3] : memref<16x64xbf16, #tpu.memory_space<vmem>>, vector<16x64xbf16>
    %c0_4 = arith.constant 0 : index
    %c0_5 = arith.constant 0 : index
    %5 = vector.load %arg4[%c0_4, %c0_5] : memref<64x64xbf16, #tpu.memory_space<vmem>>, vector<64x64xbf16>
    %cst = arith.constant dense<0.000000e+00> : vector<16x64xf32>
    %6 = tpu.matmul %4, %5, %cst {dimension_numbers = #tpu.dot_dimension_numbers<[1], [0], [0], [1], [0, 0, 1, 1], [], []>} : vector<16x64xbf16>, vector<64x64xbf16>, vector<16x64xf32> -> vector<16x64xf32>
    %7 = arith.addf %3, %6 : vector<16x64xf32>
    %c0_6 = arith.constant 0 : index
    %c0_7 = arith.constant 0 : index
    %8 = vector.load %arg7[%c0_6, %c0_7] : memref<16x64xf32, #tpu.memory_space<vmem>>, vector<16x64xf32>
    tpu.vector_store %arg7[%c0_6, %c0_7], %7 {strides = array<i32>} : memref<16x64xf32, #tpu.memory_space<vmem>>, vector<16x64xf32>,
    %c0_i32_8 = arith.constant 0 : i32
    %9 = arith.cmpi eq, %arg2, %c0_i32_8 : i32
    %10 = arith.extui %9 : i1 to i32
    %c0_i32_9 = arith.constant 0 : i32
    %11 = arith.cmpi ne, %10, %c0_i32_9 : i32
    scf.if %11 {
      %c0_10 = arith.constant 0 : index
      %c0_11 = arith.constant 0 : index
      %12 = vector.load %arg7[%c0_10, %c0_11] : memref<16x64xf32, #tpu.memory_space<vmem>>, vector<16x64xf32>
      %c0_12 = arith.constant 0 : index
      %c0_13 = arith.constant 0 : index
      %13 = vector.load %arg5[%c0_12, %c0_13] : memref<1x64xf32, #tpu.memory_space<vmem>>, vector<1x64xf32>
      %14 = vector.broadcast %13 : vector<1x64xf32> to vector<16x64xf32>
      %15 = arith.addf %12, %14 : vector<16x64xf32>
      %cst_14 = arith.constant 0.000000e+00 : f32
      %16 = vector.broadcast %cst_14 : f32 to vector<16x64xf32>
      %17 = arith.maximumf %15, %16 : vector<16x64xf32>
      %18 = arith.truncf %17 : vector<16x64xf32> to vector<16x64xbf16>
      %c0_15 = arith.constant 0 : index
      %c0_16 = arith.constant 0 : index
      %19 = vector.load %arg6[%c0_15, %c0_16] : memref<16x64xbf16, #tpu.memory_space<vmem>>, vector<16x64xbf16>
      tpu.vector_store %arg6[%c0_15, %c0_16], %18 {strides = array<i32>} : memref<16x64xbf16, #tpu.memory_space<vmem>>, vector<16x64xbf16>,
    } else {
    }
    return
  }
  func.func @transform_0(%arg0: i32, %arg1: i32, %arg2: i32) -> (i32, i32) {
    %c0_i32 = arith.constant 0 : i32
    return %arg0, %arg2 : i32, i32
  }
  func.func @transform_1(%arg0: i32, %arg1: i32, %arg2: i32) -> (i32, i32) {
    %c0_i32 = arith.constant 0 : i32
    return %arg2, %arg1 : i32, i32
  }
  func.func @transform_2(%arg0: i32, %arg1: i32, %arg2: i32) -> (i32, i32) {
    %c0_i32 = arith.constant 0 : i32
    %c0_i32_0 = arith.constant 0 : i32
    return %c0_i32, %arg1 : i32, i32
  }
  func.func @transform_3(%arg0: i32, %arg1: i32, %arg2: i32) -> (i32, i32) {
    %c0_i32 = arith.constant 0 : i32
    return %arg0, %arg1 : i32, i32
  }
}

module attributes {stable_mosaic.version = 11 : i64} {
  func.func @_mm_kernel(%arg0: i32, %arg1: i32, %arg2: i32, %arg3: memref<128x64xbf16, #tpu.memory_space<vmem>>, %arg4: memref<64x64xbf16, #tpu.memory_space<vmem>>, %arg5: memref<1x64xf32, #tpu.memory_space<vmem>>, %arg6: memref<128x64xbf16, #tpu.memory_space<vmem>>, %arg7: memref<128x64xf32, #tpu.memory_space<vmem>>) attributes {dimension_semantics = [#tpu.dimension_semantics<parallel>, #tpu.dimension_semantics<parallel>, #tpu.dimension_semantics<arbitrary>], iteration_bounds = array<i64: 4, 1, 1>, scalar_prefetch = 0 : i64, scratch_operands = 1 : i64, tpu.core_type = #tpu.core_type<tc>, window_params = [{transform_indices = @transform_0, window_bounds = array<i64: 128, 64>}, {transform_indices = @transform_1, window_bounds = array<i64: 64, 64>}, {transform_indices = @transform_2, window_bounds = array<i64: 1, 64>}, {transform_indices = @transform_3, window_bounds = array<i64: 128, 64>}]} {
    %c0_i32 = arith.constant 0 : i32
    %0 = arith.cmpi eq, %arg2, %c0_i32 : i32
    %1 = arith.extui %0 : i1 to i32
    %c0_i32_0 = arith.constant 0 : i32
    %2 = arith.cmpi ne, %1, %c0_i32_0 : i32
    scf.if %2 {
      %cst_10 = arith.constant 0.000000e+00 : f32
      %12 = vector.broadcast %cst_10 : f32 to vector<128x64xf32>
      %c0_11 = arith.constant 0 : index
      %c0_12 = arith.constant 0 : index
      %13 = vector.load %arg7[%c0_11, %c0_12] : memref<128x64xf32, #tpu.memory_space<vmem>>, vector<128x64xf32>
      tpu.vector_store %arg7[%c0_11, %c0_12], %12 {strides = array<i32>} : memref<128x64xf32, #tpu.memory_space<vmem>>, vector<128x64xf32>,
    } else {
    }
    %c0 = arith.constant 0 : index
    %c0_1 = arith.constant 0 : index
    %3 = vector.load %arg7[%c0, %c0_1] : memref<128x64xf32, #tpu.memory_space<vmem>>, vector<128x64xf32>
    %c0_2 = arith.constant 0 : index
    %c0_3 = arith.constant 0 : index
    %4 = vector.load %arg3[%c0_2, %c0_3] : memref<128x64xbf16, #tpu.memory_space<vmem>>, vector<128x64xbf16>
    %c0_4 = arith.constant 0 : index
    %c0_5 = arith.constant 0 : index
    %5 = vector.load %arg4[%c0_4, %c0_5] : memref<64x64xbf16, #tpu.memory_space<vmem>>, vector<64x64xbf16>
    %cst = arith.constant dense<0.000000e+00> : vector<128x64xf32>
    %6 = tpu.matmul %4, %5, %cst {dimension_numbers = #tpu.dot_dimension_numbers<[1], [0], [0], [1], [0, 0, 1, 1], [], []>} : vector<128x64xbf16>, vector<64x64xbf16>, vector<128x64xf32> -> vector<128x64xf32>
    %7 = arith.addf %3, %6 : vector<128x64xf32>
    %c0_6 = arith.constant 0 : index
    %c0_7 = arith.constant 0 : index
    %8 = vector.load %arg7[%c0_6, %c0_7] : memref<128x64xf32, #tpu.memory_space<vmem>>, vector<128x64xf32>
    tpu.vector_store %arg7[%c0_6, %c0_7], %7 {strides = array<i32>} : memref<128x64xf32, #tpu.memory_space<vmem>>, vector<128x64xf32>,
    %c0_i32_8 = arith.constant 0 : i32
    %9 = arith.cmpi eq, %arg2, %c0_i32_8 : i32
    %10 = arith.extui %9 : i1 to i32
    %c0_i32_9 = arith.constant 0 : i32
    %11 = arith.cmpi ne, %10, %c0_i32_9 : i32
    scf.if %11 {
      %c0_10 = arith.constant 0 : index
      %c0_11 = arith.constant 0 : index
      %12 = vector.load %arg7[%c0_10, %c0_11] : memref<128x64xf32, #tpu.memory_space<vmem>>, vector<128x64xf32>
      %c0_12 = arith.constant 0 : index
      %c0_13 = arith.constant 0 : index
      %13 = vector.load %arg5[%c0_12, %c0_13] : memref<1x64xf32, #tpu.memory_space<vmem>>, vector<1x64xf32>
      %14 = vector.broadcast %13 : vector<1x64xf32> to vector<128x64xf32>
      %15 = arith.addf %12, %14 : vector<128x64xf32>
      %cst_14 = arith.constant 0.000000e+00 : f32
      %16 = vector.broadcast %cst_14 : f32 to vector<128x64xf32>
      %17 = arith.maximumf %15, %16 : vector<128x64xf32>
      %18 = arith.truncf %17 : vector<128x64xf32> to vector<128x64xbf16>
      %c0_15 = arith.constant 0 : index
      %c0_16 = arith.constant 0 : index
      %19 = vector.load %arg6[%c0_15, %c0_16] : memref<128x64xbf16, #tpu.memory_space<vmem>>, vector<128x64xbf16>
      tpu.vector_store %arg6[%c0_15, %c0_16], %18 {strides = array<i32>} : memref<128x64xbf16, #tpu.memory_space<vmem>>, vector<128x64xbf16>,
    } else {
    }
    return
  }
  func.func @transform_0(%arg0: i32, %arg1: i32, %arg2: i32) -> (i32, i32) {
    %c0_i32 = arith.constant 0 : i32
    return %arg0, %arg2 : i32, i32
  }
  func.func @transform_1(%arg0: i32, %arg1: i32, %arg2: i32) -> (i32, i32) {
    %c0_i32 = arith.constant 0 : i32
    return %arg2, %arg1 : i32, i32
  }
  func.func @transform_2(%arg0: i32, %arg1: i32, %arg2: i32) -> (i32, i32) {
    %c0_i32 = arith.constant 0 : i32
    %c0_i32_0 = arith.constant 0 : i32
    return %c0_i32, %arg1 : i32, i32
  }
  func.func @transform_3(%arg0: i32, %arg1: i32, %arg2: i32) -> (i32, i32) {
    %c0_i32 = arith.constant 0 : i32
    return %arg0, %arg1 : i32, i32
  }
}

module attributes {stable_mosaic.version = 11 : i64} {
  func.func @_attn_kernel(%arg0: i32, %arg1: memref<2x128x64xbf16, #tpu.memory_space<vmem>>, %arg2: memref<2x8x64xbf16, #tpu.memory_space<vmem>>, %arg3: memref<2x8x64xbf16, #tpu.memory_space<vmem>>, %arg4: memref<2x1x8xf32, #tpu.memory_space<vmem>>, %arg5: memref<2x128x64xbf16, #tpu.memory_space<vmem>>) attributes {dimension_semantics = [#tpu.dimension_semantics<parallel>], iteration_bounds = array<i64: 2>, scalar_prefetch = 0 : i64, scratch_operands = 0 : i64, tpu.core_type = #tpu.core_type<tc>, window_params = [{transform_indices = @transform_0, window_bounds = array<i64: 2, 128, 64>}, {pipeline_mode = #tpu.pipeline_mode<synchronous>, transform_indices = @transform_1, window_bounds = array<i64: 2, 8, 64>}, {pipeline_mode = #tpu.pipeline_mode<synchronous>, transform_indices = @transform_2, window_bounds = array<i64: 2, 8, 64>}, {pipeline_mode = #tpu.pipeline_mode<synchronous>, transform_indices = @transform_3, window_bounds = array<i64: 2, 1, 8>}, {transform_indices = @transform_4, window_bounds = array<i64: 2, 128, 64>}]} {
    %c0 = arith.constant 0 : index
    %c0_0 = arith.constant 0 : index
    %c0_1 = arith.constant 0 : index
    %0 = vector.load %arg1[%c0, %c0_0, %c0_1] : memref<2x128x64xbf16, #tpu.memory_space<vmem>>, vector<2x128x64xbf16>
    %c0_2 = arith.constant 0 : index
    %c0_3 = arith.constant 0 : index
    %c0_4 = arith.constant 0 : index
    %1 = vector.load %arg2[%c0_2, %c0_3, %c0_4] : memref<2x8x64xbf16, #tpu.memory_space<vmem>>, vector<2x8x64xbf16>
    %c0_5 = arith.constant 0 : index
    %c0_6 = arith.constant 0 : index
    %c0_7 = arith.constant 0 : index
    %2 = vector.load %arg3[%c0_5, %c0_6, %c0_7] : memref<2x8x64xbf16, #tpu.memory_space<vmem>>, vector<2x8x64xbf16>
    %c0_8 = arith.constant 0 : index
    %c0_9 = arith.constant 0 : index
    %c0_10 = arith.constant 0 : index
    %3 = vector.load %arg4[%c0_8, %c0_9, %c0_10] : memref<2x1x8xf32, #tpu.memory_space<vmem>>, vector<2x1x8xf32>
    "tpu.trace_start"() <{level = 10 : i32, message = "gqd,gkd->gqk"}> : () -> ()
    %cst = arith.constant dense<0.000000e+00> : vector<2x128x8xf32>
    %4 = tpu.matmul %0, %1, %cst {dimension_numbers = #tpu.dot_dimension_numbers<[2], [2], [1], [1], [0, 0, 0, 1, 1, 1], [0], [0]>} : vector<2x128x64xbf16>, vector<2x8x64xbf16>, vector<2x128x8xf32> -> vector<2x128x8xf32>
    "tpu.trace_stop"() : () -> ()
    %cst_11 = arith.constant 1.250000e-01 : f32
    %5 = vector.broadcast %cst_11 : f32 to vector<2x128x8xf32>
    %6 = arith.mulf %4, %5 : vector<2x128x8xf32>
    %cst_12 = arith.constant 0.000000e+00 : f32
    %7 = vector.broadcast %cst_12 : f32 to vector<2x1x8xf32>
    %8 = arith.cmpf one, %3, %7 : vector<2x1x8xf32>
    %cst_13 = arith.constant -1.000000e+07 : f32
    %9 = vector.shape_cast %8 : vector<2x1x8xi1> to vector<2x1x8xi1>
    %10 = vector.broadcast %9 : vector<2x1x8xi1> to vector<2x128x8xi1>
    %11 = vector.broadcast %cst_13 : f32 to vector<2x128x8xf32>
    %12 = arith.select %10, %6, %11 : vector<2x128x8xi1>, vector<2x128x8xf32>
    %cst_14 = arith.constant dense<0xFF800000> : vector<2x128xf32>
    %13 = vector.multi_reduction <maximumf>, %12, %cst_14 [2] : vector<2x128x8xf32> to vector<2x128xf32>
    %14 = vector.shape_cast %13 : vector<2x128xf32> to vector<2x128x1xf32>
    %15 = vector.broadcast %14 : vector<2x128x1xf32> to vector<2x128x8xf32>
    %16 = arith.subf %12, %15 : vector<2x128x8xf32>
    %17 = math.exp %16 : vector<2x128x8xf32>
    %cst_15 = arith.constant dense<0.000000e+00> : vector<2x128xf32>
    %18 = vector.multi_reduction <add>, %17, %cst_15 [2] : vector<2x128x8xf32> to vector<2x128xf32>
    %19 = vector.shape_cast %18 : vector<2x128xf32> to vector<2x128x1xf32>
    %20 = tpu.reciprocal %19 {approx = true} : vector<2x128x1xf32> -> vector<2x128x1xf32>
    %21 = vector.broadcast %20 : vector<2x128x1xf32> to vector<2x128x8xf32>
    %22 = arith.mulf %17, %21 : vector<2x128x8xf32>
    %23 = arith.truncf %22 : vector<2x128x8xf32> to vector<2x128x8xbf16>
    "tpu.trace_start"() <{level = 10 : i32, message = "gqk,gkd->gqd"}> : () -> ()
    %cst_16 = arith.constant dense<0.000000e+00> : vector<2x128x64xf32>
    %24 = tpu.matmul %23, %2, %cst_16 {dimension_numbers = #tpu.dot_dimension_numbers<[2], [1], [1], [2], [0, 0, 0, 1, 1, 2], [0], [0]>} : vector<2x128x8xbf16>, vector<2x8x64xbf16>, vector<2x128x64xf32> -> vector<2x128x64xf32>
    "tpu.trace_stop"() : () -> ()
    %25 = arith.truncf %24 : vector<2x128x64xf32> to vector<2x128x64xbf16>
    %c0_17 = arith.constant 0 : index
    %c0_18 = arith.constant 0 : index
    %c0_19 = arith.constant 0 : index
    %26 = vector.load %arg5[%c0_17, %c0_18, %c0_19] : memref<2x128x64xbf16, #tpu.memory_space<vmem>>, vector<2x128x64xbf16>
    tpu.vector_store %arg5[%c0_17, %c0_18, %c0_19], %25 {strides = array<i32>} : memref<2x128x64xbf16, #tpu.memory_space<vmem>>, vector<2x128x64xbf16>,
    return
  }
  func.func @transform_0(%arg0: i32) -> (i32, i32, i32) {
    %c0_i32 = arith.constant 0 : i32
    %c0_i32_0 = arith.constant 0 : i32
    %c0_i32_1 = arith.constant 0 : i32
    return %c0_i32, %arg0, %c0_i32_0 : i32, i32, i32
  }
  func.func @transform_1(%arg0: i32) -> (i32, i32, i32) {
    %c0_i32 = arith.constant 0 : i32
    %c0_i32_0 = arith.constant 0 : i32
    %c0_i32_1 = arith.constant 0 : i32
    %c0_i32_2 = arith.constant 0 : i32
    return %c0_i32, %c0_i32_0, %c0_i32_1 : i32, i32, i32
  }
  func.func @transform_2(%arg0: i32) -> (i32, i32, i32) {
    %c0_i32 = arith.constant 0 : i32
    %c0_i32_0 = arith.constant 0 : i32
    %c0_i32_1 = arith.constant 0 : i32
    %c0_i32_2 = arith.constant 0 : i32
    return %c0_i32, %c0_i32_0, %c0_i32_1 : i32, i32, i32
  }
  func.func @transform_3(%arg0: i32) -> (i32, i32, i32) {
    %c0_i32 = arith.constant 0 : i32
    %c0_i32_0 = arith.constant 0 : i32
    %c0_i32_1 = arith.constant 0 : i32
    %c0_i32_2 = arith.constant 0 : i32
    return %c0_i32, %c0_i32_0, %c0_i32_1 : i32, i32, i32
  }
  func.func @transform_4(%arg0: i32) -> (i32, i32, i32) {
    %c0_i32 = arith.constant 0 : i32
    %c0_i32_0 = arith.constant 0 : i32
    %c0_i32_1 = arith.constant 0 : i32
    return %c0_i32, %arg0, %c0_i32_0 : i32, i32, i32
  }
}

module attributes {stable_mosaic.version = 11 : i64} {
  func.func @_mm2_kernel(%arg0: i32, %arg1: i32, %arg2: i32, %arg3: memref<128x64xbf16, #tpu.memory_space<vmem>>, %arg4: memref<128x64xbf16, #tpu.memory_space<vmem>>, %arg5: memref<64x16xbf16, #tpu.memory_space<vmem>>, %arg6: memref<64x16xbf16, #tpu.memory_space<vmem>>, %arg7: memref<1x16xf32, #tpu.memory_space<vmem>>, %arg8: memref<128x16xbf16, #tpu.memory_space<vmem>>, %arg9: memref<128x16xf32, #tpu.memory_space<vmem>>) attributes {dimension_semantics = [#tpu.dimension_semantics<parallel>, #tpu.dimension_semantics<parallel>, #tpu.dimension_semantics<arbitrary>], iteration_bounds = array<i64: 4, 1, 1>, scalar_prefetch = 0 : i64, scratch_operands = 1 : i64, tpu.core_type = #tpu.core_type<tc>, window_params = [{transform_indices = @transform_0, window_bounds = array<i64: 128, 64>}, {transform_indices = @transform_1, window_bounds = array<i64: 128, 64>}, {transform_indices = @transform_2, window_bounds = array<i64: 64, 16>}, {transform_indices = @transform_3, window_bounds = array<i64: 64, 16>}, {transform_indices = @transform_4, window_bounds = array<i64: 1, 16>}, {transform_indices = @transform_5, window_bounds = array<i64: 128, 16>}]} {
    %c0_i32 = arith.constant 0 : i32
    %0 = arith.cmpi eq, %arg2, %c0_i32 : i32
    %1 = arith.extui %0 : i1 to i32
    %c0_i32_0 = arith.constant 0 : i32
    %2 = arith.cmpi ne, %1, %c0_i32_0 : i32
    scf.if %2 {
      %cst_15 = arith.constant 0.000000e+00 : f32
      %16 = vector.broadcast %cst_15 : f32 to vector<128x16xf32>
      %c0_16 = arith.constant 0 : index
      %c0_17 = arith.constant 0 : index
      %17 = vector.load %arg9[%c0_16, %c0_17] : memref<128x16xf32, #tpu.memory_space<vmem>>, vector<128x16xf32>
      tpu.vector_store %arg9[%c0_16, %c0_17], %16 {strides = array<i32>} : memref<128x16xf32, #tpu.memory_space<vmem>>, vector<128x16xf32>,
    } else {
    }
    %c0 = arith.constant 0 : index
    %c0_1 = arith.constant 0 : index
    %3 = vector.load %arg3[%c0, %c0_1] : memref<128x64xbf16, #tpu.memory_space<vmem>>, vector<128x64xbf16>
    %c0_2 = arith.constant 0 : index
    %c0_3 = arith.constant 0 : index
    %4 = vector.load %arg5[%c0_2, %c0_3] : memref<64x16xbf16, #tpu.memory_space<vmem>>, vector<64x16xbf16>
    %cst = arith.constant dense<0.000000e+00> : vector<128x16xf32>
    %5 = tpu.matmul %3, %4, %cst {dimension_numbers = #tpu.dot_dimension_numbers<[1], [0], [0], [1], [0, 0, 1, 1], [], []>} : vector<128x64xbf16>, vector<64x16xbf16>, vector<128x16xf32> -> vector<128x16xf32>
    %c0_4 = arith.constant 0 : index
    %c0_5 = arith.constant 0 : index
    %6 = vector.load %arg4[%c0_4, %c0_5] : memref<128x64xbf16, #tpu.memory_space<vmem>>, vector<128x64xbf16>
    %c0_6 = arith.constant 0 : index
    %c0_7 = arith.constant 0 : index
    %7 = vector.load %arg6[%c0_6, %c0_7] : memref<64x16xbf16, #tpu.memory_space<vmem>>, vector<64x16xbf16>
    %cst_8 = arith.constant dense<0.000000e+00> : vector<128x16xf32>
    %8 = tpu.matmul %6, %7, %cst_8 {dimension_numbers = #tpu.dot_dimension_numbers<[1], [0], [0], [1], [0, 0, 1, 1], [], []>} : vector<128x64xbf16>, vector<64x16xbf16>, vector<128x16xf32> -> vector<128x16xf32>
    %9 = arith.addf %5, %8 : vector<128x16xf32>
    %c0_9 = arith.constant 0 : index
    %c0_10 = arith.constant 0 : index
    %10 = vector.load %arg9[%c0_9, %c0_10] : memref<128x16xf32, #tpu.memory_space<vmem>>, vector<128x16xf32>
    %11 = arith.addf %10, %9 : vector<128x16xf32>
    %c0_11 = arith.constant 0 : index
    %c0_12 = arith.constant 0 : index
    %12 = vector.load %arg9[%c0_11, %c0_12] : memref<128x16xf32, #tpu.memory_space<vmem>>, vector<128x16xf32>
    tpu.vector_store %arg9[%c0_11, %c0_12], %11 {strides = array<i32>} : memref<128x16xf32, #tpu.memory_space<vmem>>, vector<128x16xf32>,
    %c0_i32_13 = arith.constant 0 : i32
    %13 = arith.cmpi eq, %arg2, %c0_i32_13 : i32
    %14 = arith.extui %13 : i1 to i32
    %c0_i32_14 = arith.constant 0 : i32
    %15 = arith.cmpi ne, %14, %c0_i32_14 : i32
    scf.if %15 {
      %c0_15 = arith.constant 0 : index
      %c0_16 = arith.constant 0 : index
      %16 = vector.load %arg9[%c0_15, %c0_16] : memref<128x16xf32, #tpu.memory_space<vmem>>, vector<128x16xf32>
      %c0_17 = arith.constant 0 : index
      %c0_18 = arith.constant 0 : index
      %17 = vector.load %arg7[%c0_17, %c0_18] : memref<1x16xf32, #tpu.memory_space<vmem>>, vector<1x16xf32>
      %18 = vector.broadcast %17 : vector<1x16xf32> to vector<128x16xf32>
      %19 = arith.addf %16, %18 : vector<128x16xf32>
      %cst_19 = arith.constant 0.000000e+00 : f32
      %20 = vector.broadcast %cst_19 : f32 to vector<128x16xf32>
      %21 = arith.maximumf %19, %20 : vector<128x16xf32>
      %22 = arith.truncf %21 : vector<128x16xf32> to vector<128x16xbf16>
      %c0_20 = arith.constant 0 : index
      %c0_21 = arith.constant 0 : index
      %23 = vector.load %arg8[%c0_20, %c0_21] : memref<128x16xbf16, #tpu.memory_space<vmem>>, vector<128x16xbf16>
      tpu.vector_store %arg8[%c0_20, %c0_21], %22 {strides = array<i32>} : memref<128x16xbf16, #tpu.memory_space<vmem>>, vector<128x16xbf16>,
    } else {
    }
    return
  }
  func.func @transform_0(%arg0: i32, %arg1: i32, %arg2: i32) -> (i32, i32) {
    %c0_i32 = arith.constant 0 : i32
    return %arg0, %arg2 : i32, i32
  }
  func.func @transform_1(%arg0: i32, %arg1: i32, %arg2: i32) -> (i32, i32) {
    %c0_i32 = arith.constant 0 : i32
    return %arg0, %arg2 : i32, i32
  }
  func.func @transform_2(%arg0: i32, %arg1: i32, %arg2: i32) -> (i32, i32) {
    %c0_i32 = arith.constant 0 : i32
    return %arg2, %arg1 : i32, i32
  }
  func.func @transform_3(%arg0: i32, %arg1: i32, %arg2: i32) -> (i32, i32) {
    %c0_i32 = arith.constant 0 : i32
    return %arg2, %arg1 : i32, i32
  }
  func.func @transform_4(%arg0: i32, %arg1: i32, %arg2: i32) -> (i32, i32) {
    %c0_i32 = arith.constant 0 : i32
    %c0_i32_0 = arith.constant 0 : i32
    return %c0_i32, %arg1 : i32, i32
  }
  func.func @transform_5(%arg0: i32, %arg1: i32, %arg2: i32) -> (i32, i32) {
    %c0_i32 = arith.constant 0 : i32
    return %arg0, %arg1 : i32, i32
  }
}

</mosaic_0001>

<llo_original>
// kernel: instance_attention_forward.17
$region0: #{instance_attention_forward.17}
  #allocation0 [shape = 'u32[]', space=smem, size = 0x4, offset = 0x4, fixed_abs, tag = 'smem constant byte address 0x4 - core index']
  #allocation1 [shape = 'u32[144,128]{1,0:T(1,128)}', space=vmem, size = 0x12000, scoped, tag = 'internal scratch']
  #allocation2 [shape = 'f32[128,16]{1,0:T(8,128)}', space=vmem, size = 0x10000, scoped, tag = 'scratch operand']
  %s0 = inlined_call_operand.vmem [shape: bf16[512,162], index: 0, kind: input, shape index: {}]
  %s1 = inlined_call_operand.vmem [shape: bf16[162,16], index: 1, kind: input, shape index: {}]
  %s2 = inlined_call_operand.vmem [shape: f32[1,16], index: 2, kind: input, shape index: {}]
  %s3 = inlined_call_operand.vmem [shape: bf16[512,16], index: 3, kind: output, shape index: {}]
  %s4 = sld [smem:[#allocation0]]
  $region53: #{instance_attention_forward.17} parent=0
    _
  %s6 = ssub.s32 1, %s4
  %s7 = scalar_select 0, %s6, %s4
  loop: start=0, step=1, limit=6
  $region2: #{instance_attention_forward.17} parent=0 // loop_pre_header
    _
  $region3: #{instance_attention_forward.17} parent=0 // loop_header
    %s9 = sphi 0, %s13
    %p10 = scmp.ge.s32.totalorder %s9, 6
    %s16 = sphi 0, %s35
    %s17 = sphi 0, %s31
    %s18 = sphi 0, %s27
    %s19 = sphi 0, %s16
    %s20 = sphi 0, %s17
    %s21 = sphi 0, %s18
    %s22 = sphi 0, %s19
    %s23 = sphi 0, %s20
    %s24 = sphi 0, %s21
    %s40 = sphi 0, %s42
    %s43 = sphi 0, %s40
    %s44 = sphi 0, %s43
    %s60 = sphi 0, %s44
    %s68 = sphi 0, %s70
    %s71 = sphi 0, %s68
    %s72 = sphi 0, %s71
    %s88 = sphi 0, %s72
    %s94 = sphi 0, %s96
    %s97 = sphi 0, %s94
    %s98 = sphi 0, %s97
    %s114 = sphi 0, %s98
    %s122 = sphi 0, %s124
    %s125 = sphi 0, %s122
    %s126 = sphi 0, %s125
    %s142 = sphi 0, %s126
  $region4: #{instance_attention_forward.17} parent=0 // loop_header_branch
    %12 = sbr.rel (%p10) target = $region8
  $region5: #{instance_attention_forward.17} parent=0 // loop_body
    %s14 = ssub.s32 %s9, 1
    %s15 = ssub.s32 %s9, 2
    %s25 = sadd.s32 1, %s18
    %p26 = scmp.ge.s32.totalorder %s25, 1
    %s27 = scalar_select %p26, 0, %s25
    %s28 = sadd.s32 1, %s17
    %s29 = scalar_select %p26, %s28, %s17
    %p30 = scmp.ge.s32.totalorder %s29, 1
    %s31 = scalar_select %p30, 0, %s29
    %s32 = sadd.s32 1, %s16
    %s33 = scalar_select %p30, %s32, %s16
    %p34 = scmp.ge.s32.totalorder %s33, 4
    %s35 = scalar_select %p34, 0, %s33
    %s36 = ssub.s32 %s16, %s35
    %s37 = ssub.s32 %s18, %s27
    %s38 = sor.u32 %s36, %s37
    %p39 = scmp.eq.s32.totalorder %s38, 0
    %s41 = sadd.s32 %s40, 1
    %s42 = scalar_select %p39, %s40, %s41
    %p45 = pneg %p39
    %p46 = scmp.eq.s32.totalorder %s9, 3
    %p47 = por %p45, %p46
    %p48 = scmp.ne.s32.totalorder %s40, %s43
    %p49 = scmp.eq.s32.totalorder %s9, 0
    %p50 = por %p48, %p49
    %p51 = scmp.ne.s32.totalorder %s40, %s43
    %p52 = scmp.eq.s32.totalorder %s14, 3
    %p53 = por %p51, %p52
    %p54 = scmp.ne.s32.totalorder %s43, %s44
    %p55 = scmp.eq.s32.totalorder %s14, 0
    %p56 = por %p54, %p55
    %p57 = scmp.ne.s32.totalorder %s43, %s44
    %p58 = scmp.eq.s32.totalorder %s15, 3
    %p59 = por %p57, %p58
    %p61 = scmp.ne.s32.totalorder %s44, %s60
    %p62 = scmp.eq.s32.totalorder %s15, 0
    %p63 = por %p61, %p62
    %s64 = ssub.s32 %s18, %s27
    %s65 = ssub.s32 %s17, %s31
    %s66 = sor.u32 %s64, %s65
    %p67 = scmp.eq.s32.totalorder %s66, 0
    %s69 = sadd.s32 %s68, 1
    %s70 = scalar_select %p67, %s68, %s69
    %p73 = pneg %p67
    %p74 = scmp.eq.s32.totalorder %s9, 3
    %p75 = por %p73, %p74
    %p76 = scmp.ne.s32.totalorder %s68, %s71
    %p77 = scmp.eq.s32.totalorder %s9, 0
    %p78 = por %p76, %p77
    %p79 = scmp.ne.s32.totalorder %s68, %s71
    %p80 = scmp.eq.s32.totalorder %s14, 3
    %p81 = por %p79, %p80
    %p82 = scmp.ne.s32.totalorder %s71, %s72
    %p83 = scmp.eq.s32.totalorder %s14, 0
    %p84 = por %p82, %p83
    %p85 = scmp.ne.s32.totalorder %s71, %s72
    %p86 = scmp.eq.s32.totalorder %s15, 3
    %p87 = por %p85, %p86
    %p89 = scmp.ne.s32.totalorder %s72, %s88
    %p90 = scmp.eq.s32.totalorder %s15, 0
    %p91 = por %p89, %p90
    %s92 = ssub.s32 %s17, %s31
    %p93 = scmp.eq.s32.totalorder %s92, 0
    %s95 = sadd.s32 %s94, 1
    %s96 = scalar_select %p93, %s94, %s95
    %p99 = pneg %p93
    %p100 = scmp.eq.s32.totalorder %s9, 3
    %p101 = por %p99, %p100
    %p102 = scmp.ne.s32.totalorder %s94, %s97
    %p103 = scmp.eq.s32.totalorder %s9, 0
    %p104 = por %p102, %p103
    %p105 = scmp.ne.s32.totalorder %s94, %s97
    %p106 = scmp.eq.s32.totalorder %s14, 3
    %p107 = por %p105, %p106
    %p108 = scmp.ne.s32.totalorder %s97, %s98
    %p109 = scmp.eq.s32.totalorder %s14, 0
    %p110 = por %p108, %p109
    %p111 = scmp.ne.s32.totalorder %s97, %s98
    %p112 = scmp.eq.s32.totalorder %s15, 3
    %p113 = por %p111, %p112
    %p115 = scmp.ne.s32.totalorder %s98, %s114
    %p116 = scmp.eq.s32.totalorder %s15, 0
    %p117 = por %p115, %p116
    %s118 = ssub.s32 %s16, %s35
    %s119 = ssub.s32 %s17, %s31
    %s120 = sor.u32 %s118, %s119
    %p121 = scmp.eq.s32.totalorder %s120, 0
    %s123 = sadd.s32 %s122, 1
    %s124 = scalar_select %p121, %s122, %s123
    %p127 = pneg %p121
    %p128 = scmp.eq.s32.totalorder %s9, 3
    %p129 = por %p127, %p128
    %p130 = scmp.ne.s32.totalorder %s122, %s125
    %p131 = scmp.eq.s32.totalorder %s9, 0
    %p132 = por %p130, %p131
    %p133 = scmp.ne.s32.totalorder %s122, %s125
    %p134 = scmp.eq.s32.totalorder %s14, 3
    %p135 = por %p133, %p134
    %p136 = scmp.ne.s32.totalorder %s125, %s126
    %p137 = scmp.eq.s32.totalorder %s14, 0
    %p138 = por %p136, %p137
    %p139 = scmp.ne.s32.totalorder %s125, %s126
    %p140 = scmp.eq.s32.totalorder %s15, 3
    %p141 = por %p139, %p140
    %p143 = scmp.ne.s32.totalorder %s126, %s142
    %p144 = scmp.eq.s32.totalorder %s15, 0
    %p145 = por %p143, %p144
    %p146 = scmp.le.s32.totalorder 1, %s9
    %p147 = scmp.lt.s32.totalorder %s9, 5
    %p148 = pnand %p146, %p147
    %p149 = pneg %p148
    // Predicated region
    $region9: #{instance_attention_forward.17} parent=5 // pred_check
      _
    $region10: #{instance_attention_forward.17} parent=5 // pred_check_branch
      %151 = sbr.rel (%p148) target = $region12
    $region11: #{instance_attention_forward.17} parent=5 // pred_region
      %s152 = ssub.s32 %s9, 1
      // Predicated region
      $region13: #{instance_attention_forward.17} parent=11 // pred_check
        %p153 = pneg %p84
      $region14: #{instance_attention_forward.17} parent=11 // pred_check_branch
        %155 = sbr.rel (%p153) target = $region16
      $region15: #{instance_attention_forward.17} parent=11 // pred_region
        %s156 = smul.u32 21, %s21
        %p157 = scmp.lt.s32.totalorder %s156, 20
        %s158 = scalar_select %p157, %s156, 20
        %p159 = scmp.lt.s32.totalorder %s20, 0
        %s160 = scalar_select %p159, %s20, 0
        %s161 = sadd.s32 %s160, %s158
        %s162 = smul.addr %s161, 4
        %s163 = scalar_lea.vmem %s1, %s162
        %s164 = smul.u32 21, %s21
      $region16: #{instance_attention_forward.17} parent=11 // pred_fallthru
        _
      // Predicated region
      $region17: #{instance_attention_forward.17} parent=11 // pred_check
        %p165 = pneg %p110
      $region18: #{instance_attention_forward.17} parent=11 // pred_check_branch
        %167 = sbr.rel (%p165) target = $region20
      $region19: #{instance_attention_forward.17} parent=11 // pred_region
        %p168 = scmp.lt.s32.totalorder %s20, 0
        %s169 = scalar_select %p168, %s20, 0
        %s170 = scalar_lea.vmem %s2, %s169
      $region20: #{instance_attention_forward.17} parent=11 // pred_fallthru
        _
    $region12: #{instance_attention_forward.17} parent=5 // pred_fallthru
      _
    %p171 = scmp.lt.s32.totalorder %s9, 4
    // Predicated region
    $region21: #{instance_attention_forward.17} parent=5 // pred_check
      %p172 = pneg %p171
    $region22: #{instance_attention_forward.17} parent=5 // pred_check_branch
      %174 = sbr.rel (%p172) target = $region24
    $region23: #{instance_attention_forward.17} parent=5 // pred_region
      // Predicated region
      $region25: #{instance_attention_forward.17} parent=23 // pred_check
        %p175 = pneg %p50
      $region26: #{instance_attention_forward.17} parent=23 // pred_check_branch
        %177 = sbr.rel (%p175) target = $region28
      $region27: #{instance_attention_forward.17} parent=23 // pred_region
        %s178 = smul.u32 16, %s16
        %s179 = smul.u32 2, %s18
        %p180 = scmp.lt.s32.totalorder %s178, 63
        %s181 = scalar_select %p180, %s178, 63
        %p182 = scmp.lt.s32.totalorder %s179, 1
        %s183 = scalar_select %p182, %s179, 1
        %s184 = smul.addr %s181, 2
        %s185 = sadd.s32 %s183, %s184
        %s186 = smul.addr %s185, 4
        %s187 = scalar_lea.vmem %s0, %s186
        %s188 = smul.u32 16, %s16
        %s189 = smul.u32 2, %s18
      $region28: #{instance_attention_forward.17} parent=23 // pred_fallthru
        _
    $region24: #{instance_attention_forward.17} parent=5 // pred_fallthru
      _
    %p190 = scmp.le.s32.totalorder 1, %s9
    %p191 = scmp.lt.s32.totalorder %s9, 5
    %p192 = pnand %p190, %p191
    %p193 = pneg %p192
    // Predicated region
    $region29: #{instance_attention_forward.17} parent=5 // pred_check
      _
    $region30: #{instance_attention_forward.17} parent=5 // pred_check_branch
      %195 = sbr.rel (%p192) target = $region32
    $region31: #{instance_attention_forward.17} parent=5 // pred_region
      %s196 = ssub.s32 %s9, 1
      %s197 = smul.u32 16, %s19
      %s198 = smul.u32 2, %s21
      %p199 = scmp.lt.s32.totalorder %s197, 63
      %s200 = scalar_select %p199, %s197, 63
      %p201 = scmp.lt.s32.totalorder %s198, 1
      %s202 = scalar_select %p201, %s198, 1
      %s203 = smul.addr %s200, 2
      %s204 = sadd.s32 %s202, %s203
      %s205 = smul.addr %s204, 4
      %s206 = scalar_lea.vmem %s0, %s205
      %p207 = pneg %p56
      %p208 = pneg %p53
      %s209 = smul.u32 21, %s21
      %p210 = scmp.lt.s32.totalorder %s209, 20
      %s211 = scalar_select %p210, %s209, 20
      %p212 = scmp.lt.s32.totalorder %s20, 0
      %s213 = scalar_select %p212, %s20, 0
      %s214 = sadd.s32 %s213, %s211
      %s215 = smul.addr %s214, 4
      %s216 = scalar_lea.vmem %s1, %s215
      %p217 = pneg %p84
      %p218 = pneg %p81
      %p219 = scmp.lt.s32.totalorder %s20, 0
      %s220 = scalar_select %p219, %s20, 0
      %s221 = scalar_lea.vmem %s2, %s220
      %p222 = pneg %p110
      %p223 = pneg %p107
      %p224 = pneg %p138
      %p225 = pneg %p135
      %s226 = smul.u32 16, %s19
      %p227 = scmp.lt.s32.totalorder %s226, 63
      %s228 = scalar_select %p227, %s226, 63
      %p229 = scmp.lt.s32.totalorder %s20, 0
      %s230 = scalar_select %p229, %s20, 0
      %s231 = sadd.s32 %s230, %s228
      %s232 = smul.addr %s231, 4
      %s233 = scalar_lea.vmem %s3, %s232
      %s234 = smul.u32 16, %s19
      %s235 = smul.u32 2, %s21
      %p236 = scmp.lt.s32.totalorder %s234, 63
      %s237 = scalar_select %p236, %s234, 63
      %p238 = scmp.lt.s32.totalorder %s235, 1
      %s239 = scalar_select %p238, %s235, 1
      %s240 = smul.addr %s237, 2
      %s241 = sadd.s32 %s239, %s240
      %s242 = smul.addr %s241, 4
      %s243 = scalar_lea.vmem %s0, %s242
      %s244 = smul.u32 16, %s19
      %s245 = smul.u32 2, %s21
      %s246 = smul.u32 21, %s21
      %p247 = scmp.lt.s32.totalorder %s246, 20
      %s248 = scalar_select %p247, %s246, 20
      %p249 = scmp.lt.s32.totalorder %s20, 0
      %s250 = scalar_select %p249, %s20, 0
      %s251 = sadd.s32 %s250, %s248
      %s252 = smul.addr %s251, 4
      %s253 = scalar_lea.vmem %s1, %s252
      %s254 = smul.u32 21, %s21
      %p255 = scmp.lt.s32.totalorder %s20, 0
      %s256 = scalar_select %p255, %s20, 0
      %s257 = scalar_lea.vmem %s2, %s256
      %s258 = smul.u32 16, %s19
      %p259 = scmp.lt.s32.totalorder %s258, 63
      %s260 = scalar_select %p259, %s258, 63
      %p261 = scmp.lt.s32.totalorder %s20, 0
      %s262 = scalar_select %p261, %s20, 0
      %s263 = sadd.s32 %s262, %s260
      %s264 = smul.addr %s263, 4
      %s265 = scalar_lea.vmem %s3, %s264
      %s266 = smul.u32 16, %s19
      %p268 = scmp.eq.s32.totalorder %s21, 0
      // Predicated region
      $region33: #{instance_attention_forward.17} parent=31 // pred_check
        %p269 = pneg %p268
      $region34: #{instance_attention_forward.17} parent=31 // pred_check_branch
        %271 = sbr.rel (%p269) target = $region36
      $region35: #{instance_attention_forward.17} parent=31 // pred_region
        %vm272 = vcmask 130048
        %273 = vst.msk [vmem:[#allocation2] sm:$0xff] %vm272, 0.0
        %274 = vst.msk [vmem:[#allocation2 + $0x8] sm:$0xff] %vm272, 0.0
        %275 = vst.msk [vmem:[#allocation2 + $0x10] sm:$0xff] %vm272, 0.0
        %276 = vst.msk [vmem:[#allocation2 + $0x18] sm:$0xff] %vm272, 0.0
        %277 = vst.msk [vmem:[#allocation2 + $0x20] sm:$0xff] %vm272, 0.0
        %278 = vst.msk [vmem:[#allocation2 + $0x28] sm:$0xff] %vm272, 0.0
        %279 = vst.msk [vmem:[#allocation2 + $0x30] sm:$0xff] %vm272, 0.0
        %280 = vst.msk [vmem:[#allocation2 + $0x38] sm:$0xff] %vm272, 0.0
        %281 = vst.msk [vmem:[#allocation2 + $0x40] sm:$0xff] %vm272, 0.0
        %282 = vst.msk [vmem:[#allocation2 + $0x48] sm:$0xff] %vm272, 0.0
        %283 = vst.msk [vmem:[#allocation2 + $0x50] sm:$0xff] %vm272, 0.0
        %284 = vst.msk [vmem:[#allocation2 + $0x58] sm:$0xff] %vm272, 0.0
        %285 = vst.msk [vmem:[#allocation2 + $0x60] sm:$0xff] %vm272, 0.0
        %286 = vst.msk [vmem:[#allocation2 + $0x68] sm:$0xff] %vm272, 0.0
        %287 = vst.msk [vmem:[#allocation2 + $0x70] sm:$0xff] %vm272, 0.0
        %288 = vst.msk [vmem:[#allocation2 + $0x78] sm:$0xff] %vm272, 0.0
      $region36: #{instance_attention_forward.17} parent=31 // pred_fallthru
        _
      %v289 = vld [vmem:[#allocation2] sm:$0xff]
      %v290 = vld [vmem:[#allocation2 + $0x8] sm:$0xff]
      %v291 = vld [vmem:[#allocation2 + $0x10] sm:$0xff]
      %v292 = vld [vmem:[#allocation2 + $0x18] sm:$0xff]
      %v293 = vld [vmem:[#allocation2 + $0x20] sm:$0xff]
      %v294 = vld [vmem:[#allocation2 + $0x28] sm:$0xff]
      %v295 = vld [vmem:[#allocation2 + $0x30] sm:$0xff]
      %v296 = vld [vmem:[#allocation2 + $0x38] sm:$0xff]
      %v297 = vld [vmem:[#allocation2 + $0x40] sm:$0xff]
      %v298 = vld [vmem:[#allocation2 + $0x48] sm:$0xff]
      %v299 = vld [vmem:[#allocation2 + $0x50] sm:$0xff]
      %v300 = vld [vmem:[#allocation2 + $0x58] sm:$0xff]
      %v301 = vld [vmem:[#allocation2 + $0x60] sm:$0xff]
      %v302 = vld [vmem:[#allocation2 + $0x68] sm:$0xff]
      %v303 = vld [vmem:[#allocation2 + $0x70] sm:$0xff]
      %v304 = vld [vmem:[#allocation2 + $0x78] sm:$0xff]
      %v305 = vld [vmem:[%s243] sm:$0xff]
      %v306 = vld [vmem:[%s243 + $0x8] sm:$0xff]
      %v307 = vld [vmem:[%s243 + $0x10] sm:$0xff]
      %v308 = vld [vmem:[%s243 + $0x18] sm:$0xff]
      %v309 = vld [vmem:[%s243 + $0x20] sm:$0xff]
      %v310 = vld [vmem:[%s243 + $0x28] sm:$0xff]
      %v311 = vld [vmem:[%s243 + $0x30] sm:$0xff]
      %v312 = vld [vmem:[%s243 + $0x38] sm:$0xff]
      %v313 = vld [vmem:[%s243 + $0x40] sm:$0xff]
      %v314 = vld [vmem:[%s243 + $0x48] sm:$0xff]
      %v315 = vld [vmem:[%s243 + $0x50] sm:$0xff]
      %v316 = vld [vmem:[%s243 + $0x58] sm:$0xff]
      %v317 = vld [vmem:[%s243 + $0x60] sm:$0xff]
      %v318 = vld [vmem:[%s243 + $0x68] sm:$0xff]
      %v319 = vld [vmem:[%s243 + $0x70] sm:$0xff]
      %v320 = vld [vmem:[%s243 + $0x78] sm:$0xff]
      %v321 = vld [vmem:[%s253] sm:$0xf]
      %v322 = vld [vmem:[%s253 + $0x4] sm:$0xf]
      %v323 = vld [vmem:[%s253 + $0x8] sm:$0xf]
      %v324 = vld [vmem:[%s253 + $0xc] sm:$0xf]
      %v325 = vld [vmem:[%s253 + $0x10] sm:$0xf]
      %v326 = vld [vmem:[%s253 + $0x14] sm:$0xf]
      %v327 = vld [vmem:[%s253 + $0x18] sm:$0xf]
      %v328 = vld [vmem:[%s253 + $0x1c] sm:$0xf]
      %v329 = vld [vmem:[%s253 + $0x20] sm:$0xf]
      %v330 = vld [vmem:[%s253 + $0x24] sm:$0xf]
      %v331 = vld [vmem:[%s253 + $0x28] sm:$0xf]
      %v332 = vld [vmem:[%s253 + $0x2c] sm:$0xf]
      %v333 = vld [vmem:[%s253 + $0x30] sm:$0xf]
      %v334 = vld [vmem:[%s253 + $0x34] sm:$0xf]
      %v335 = vld [vmem:[%s253 + $0x38] sm:$0xf]
      %v336 = vld [vmem:[%s253 + $0x3c] sm:$0xf]
      %v337 = vld [vmem:[%s253 + $0x40] sm:$0xf]
      %v338 = vld [vmem:[%s253 + $0x44] sm:$0xf]
      %v339 = vld [vmem:[%s253 + $0x48] sm:$0xf]
      %v340 = vld [vmem:[%s253 + $0x4c] sm:$0xf]
      %v341 = vld [vmem:[%s253 + $0x50] sm:$0x1]
      %v358 = vunpack.c.l.b16 %v305
      %v359 = vunpack.c.h.b16 %v305
      %v360 = vunpack.c.l.b16 %v306
      %v361 = vunpack.c.h.b16 %v306
      %v362 = vunpack.c.l.b16 %v307
      %v363 = vunpack.c.h.b16 %v307
      %v364 = vunpack.c.l.b16 %v308
      %v365 = vunpack.c.h.b16 %v308
      %v366 = vunpack.c.l.b16 %v309
      %v367 = vunpack.c.h.b16 %v309
      %v368 = vunpack.c.l.b16 %v310
      %v369 = vunpack.c.h.b16 %v310
      %v370 = vunpack.c.l.b16 %v311
      %v371 = vunpack.c.h.b16 %v311
      %v372 = vunpack.c.l.b16 %v312
      %v373 = vunpack.c.h.b16 %v312
      %v374 = vunpack.c.l.b16 %v313
      %v375 = vunpack.c.h.b16 %v313
      %v376 = vunpack.c.l.b16 %v314
      %v377 = vunpack.c.h.b16 %v314
      %v378 = vunpack.c.l.b16 %v315
      %v379 = vunpack.c.h.b16 %v315
      %v380 = vunpack.c.l.b16 %v316
      %v381 = vunpack.c.h.b16 %v316
      %v382 = vunpack.c.l.b16 %v317
      %v383 = vunpack.c.h.b16 %v317
      %v384 = vunpack.c.l.b16 %v318
      %v385 = vunpack.c.h.b16 %v318
      %v386 = vunpack.c.l.b16 %v319
      %v387 = vunpack.c.h.b16 %v319
      %v388 = vunpack.c.l.b16 %v320
      %v389 = vunpack.c.h.b16 %v320
      %v390 = vpack.c.b16 %v360, %v358
      %v391 = vpack.c.b16 %v361, %v359
      %v392 = vpack.c.b16 %v364, %v362
      %v393 = vpack.c.b16 %v365, %v363
      %v394 = vpack.c.b16 %v368, %v366
      %v395 = vpack.c.b16 %v369, %v367
      %v396 = vpack.c.b16 %v372, %v370
      %v397 = vpack.c.b16 %v373, %v371
      %v398 = vpack.c.b16 %v376, %v374
      %v399 = vpack.c.b16 %v377, %v375
      %v400 = vpack.c.b16 %v380, %v378
      %v401 = vpack.c.b16 %v381, %v379
      %v402 = vpack.c.b16 %v384, %v382
      %v403 = vpack.c.b16 %v385, %v383
      %v404 = vpack.c.b16 %v388, %v386
      %v405 = vpack.c.b16 %v389, %v387
      %v435 = vunpack.c.l.b16 %v321
      %v436 = vunpack.c.l.b16 %v322
      %v437 = vunpack.c.l.b16 %v323
      %v438 = vunpack.c.l.b16 %v324
      %v439 = vunpack.c.l.b16 %v325
      %v440 = vunpack.c.l.b16 %v326
      %v441 = vunpack.c.l.b16 %v327
      %v442 = vunpack.c.l.b16 %v328
      %v443 = vunpack.c.l.b16 %v329
      %v444 = vunpack.c.l.b16 %v330
      %v445 = vunpack.c.l.b16 %v331
      %v446 = vunpack.c.l.b16 %v332
      %v447 = vunpack.c.l.b16 %v333
      %v448 = vunpack.c.l.b16 %v334
      %v449 = vunpack.c.l.b16 %v335
      %v450 = vunpack.c.l.b16 %v336
      %v451 = vunpack.c.l.b16 %v337
      %v452 = vunpack.c.l.b16 %v338
      %v453 = vunpack.c.l.b16 %v339
      %v454 = vunpack.c.l.b16 %v340
      %v455 = vunpack.c.l.b16 %v341
      %v456 = vpack.c.b16 %v436, %v435
      %v457 = vpack.c.b16 %v438, %v437
      %v458 = vpack.c.b16 %v440, %v439
      %v459 = vpack.c.b16 %v442, %v441
      %v460 = vpack.c.b16 %v444, %v443
      %v461 = vpack.c.b16 %v446, %v445
      %v462 = vpack.c.b16 %v448, %v447
      %v463 = vpack.c.b16 %v450, %v449
      %v464 = vpack.c.b16 %v452, %v451
      %v465 = vpack.c.b16 %v454, %v453
      %v466 = vpack.c.b16 %v455, %v455
      %vm477 = vcmask 277504
      %v479 = vsel %vm477, %v391, 0
      %v482 = vsel %vm477, %v393, 0
      %v485 = vsel %vm477, %v395, 0
      %v488 = vsel %vm477, %v397, 0
      %v491 = vsel %vm477, %v399, 0
      %v494 = vsel %vm477, %v401, 0
      %v497 = vsel %vm477, %v403, 0
      %v500 = vsel %vm477, %v405, 0
      %vm502 = vcmask 1040384
      %v504 = vsel %vm502, %v466, 0
      %506 = vmatprep.subr.bf16.mxu0 0
      %507 = vmatpush1.bf16.msra.mxu0 %v456
      %508 = vmatprep.subr.bf16.mxu0 0
      %509 = vmatpush1.bf16.msra.mxu0 %v457
      %510 = vmatprep.subr.bf16.mxu0 0
      %511 = vmatpush1.bf16.msra.mxu0 %v458
      %512 = vmatprep.subr.bf16.mxu0 0
      %513 = vmatpush1.bf16.msra.mxu0 %v459
      %514 = vmatprep.subr.bf16.mxu0 0
      %515 = vmatpush1.bf16.msra.mxu0 %v460
      %516 = vmatprep.subr.bf16.mxu0 0
      %517 = vmatpush1.bf16.msra.mxu0 %v461
      %518 = vmatprep.subr.bf16.mxu0 0
      %519 = vmatpush1.bf16.msra.mxu0 %v462
      %520 = vmatprep.subr.bf16.mxu0 0
      %521 = vmatpush1.bf16.msra.mxu0 %v463
      %522 = vmatprep.subr.bf16.mxu0 0
      %523 = vmatpush1.bf16.msra.mxu0 %v464
      %524 = vmatprep.subr.bf16.mxu0 0
      %525 = vmatpush1.bf16.msra.mxu0 %v465
      %526 = vmatprep.subr.bf16.mxu0 0
      %527 = vmatpush1.bf16.msra.mxu0 %v504
      %528 = vmatprep.subr.bf16.mxu0 0
      %529 = vmatpush1.bf16.msra.mxu0 0
      %530 = vmatprep.subr.bf16.mxu0 0
      %531 = vmatpush1.bf16.msra.mxu0 0
      %532 = vmatprep.subr.bf16.mxu0 0
      %533 = vmatpush1.bf16.msra.mxu0 0
      %534 = vmatprep.subr.bf16.mxu0 0
      %535 = vmatpush1.bf16.msra.mxu0 0
      %536 = vmatprep.subr.bf16.mxu0 0
      %537 = vmatpush1.bf16.msra.mxu0 0
      %538 = vmatprep.mubr.bf16.mxu0 %v479
      %539 = vmatmul.mubr.bf16.gmra.mrb[0].mxu0 %v390
      %v540 = vpop.f32.mrb[0].mxu0
      %v541 = vadd.f32 0.0, %v540
      %v542 = vpop.f32.mrb[0].mxu0
      %v543 = vpop.f32.mrb[0].mxu0
      %v544 = vadd.f32 0.0, %v543
      %v545 = vpop.f32.mrb[0].mxu0
      %546 = vmatprep.mubr.bf16.mxu0 %v482
      %547 = vmatmul.mubr.bf16.gmra.mrb[0].mxu0 %v392
      %v548 = vpop.f32.mrb[0].mxu0
      %v549 = vadd.f32 0.0, %v548
      %v550 = vpop.f32.mrb[0].mxu0
      %v551 = vpop.f32.mrb[0].mxu0
      %v552 = vadd.f32 0.0, %v551
      %v553 = vpop.f32.mrb[0].mxu0
      %554 = vmatprep.mubr.bf16.mxu0 %v485
      %555 = vmatmul.mubr.bf16.gmra.mrb[0].mxu0 %v394
      %v556 = vpop.f32.mrb[0].mxu0
      %v557 = vadd.f32 0.0, %v556
      %v558 = vpop.f32.mrb[0].mxu0
      %v559 = vpop.f32.mrb[0].mxu0
      %v560 = vadd.f32 0.0, %v559
      %v561 = vpop.f32.mrb[0].mxu0
      %562 = vmatprep.mubr.bf16.mxu0 %v488
      %563 = vmatmul.mubr.bf16.gmra.mrb[0].mxu0 %v396
      %v564 = vpop.f32.mrb[0].mxu0
      %v565 = vadd.f32 0.0, %v564
      %v566 = vpop.f32.mrb[0].mxu0
      %v567 = vpop.f32.mrb[0].mxu0
      %v568 = vadd.f32 0.0, %v567
      %v569 = vpop.f32.mrb[0].mxu0
      %570 = vmatprep.mubr.bf16.mxu0 %v491
      %571 = vmatmul.mubr.bf16.gmra.mrb[0].mxu0 %v398
      %v572 = vpop.f32.mrb[0].mxu0
      %v573 = vadd.f32 0.0, %v572
      %v574 = vpop.f32.mrb[0].mxu0
      %v575 = vpop.f32.mrb[0].mxu0
      %v576 = vadd.f32 0.0, %v575
      %v577 = vpop.f32.mrb[0].mxu0
      %578 = vmatprep.mubr.bf16.mxu0 %v494
      %579 = vmatmul.mubr.bf16.gmra.mrb[0].mxu0 %v400
      %v580 = vpop.f32.mrb[0].mxu0
      %v581 = vadd.f32 0.0, %v580
      %v582 = vpop.f32.mrb[0].mxu0
      %v583 = vpop.f32.mrb[0].mxu0
      %v584 = vadd.f32 0.0, %v583
      %v585 = vpop.f32.mrb[0].mxu0
      %586 = vmatprep.mubr.bf16.mxu0 %v497
      %587 = vmatmul.mubr.bf16.gmra.mrb[0].mxu0 %v402
      %v588 = vpop.f32.mrb[0].mxu0
      %v589 = vadd.f32 0.0, %v588
      %v590 = vpop.f32.mrb[0].mxu0
      %v591 = vpop.f32.mrb[0].mxu0
      %v592 = vadd.f32 0.0, %v591
      %v593 = vpop.f32.mrb[0].mxu0
      %594 = vmatprep.mubr.bf16.mxu0 %v500
      %595 = vmatmul.mubr.bf16.gmra.mrb[0].mxu0 %v404
      %v596 = vpop.f32.mrb[0].mxu0
      %v597 = vadd.f32 0.0, %v596
      %v598 = vpop.f32.mrb[0].mxu0
      %v599 = vpop.f32.mrb[0].mxu0
      %v600 = vadd.f32 0.0, %v599
      %v601 = vpop.f32.mrb[0].mxu0
      %602 = vdwg.mxu0
      %v603 = vadd.f32 %v289, %v541
      %v604 = vadd.f32 %v290, %v544
      %v605 = vadd.f32 %v291, %v549
      %v606 = vadd.f32 %v292, %v552
      %v607 = vadd.f32 %v293, %v557
      %v608 = vadd.f32 %v294, %v560
      %v609 = vadd.f32 %v295, %v565
      %v610 = vadd.f32 %v296, %v568
      %v611 = vadd.f32 %v297, %v573
      %v612 = vadd.f32 %v298, %v576
      %v613 = vadd.f32 %v299, %v581
      %v614 = vadd.f32 %v300, %v584
      %v615 = vadd.f32 %v301, %v589
      %v616 = vadd.f32 %v302, %v592
      %v617 = vadd.f32 %v303, %v597
      %v618 = vadd.f32 %v304, %v600
      %vm619 = vcmask 130048
      %620 = vst.msk [vmem:[#allocation2] sm:$0xff] %vm619, %v603
      %621 = vst.msk [vmem:[#allocation2 + $0x8] sm:$0xff] %vm619, %v604
      %622 = vst.msk [vmem:[#allocation2 + $0x10] sm:$0xff] %vm619, %v605
      %623 = vst.msk [vmem:[#allocation2 + $0x18] sm:$0xff] %vm619, %v606
      %624 = vst.msk [vmem:[#allocation2 + $0x20] sm:$0xff] %vm619, %v607
      %625 = vst.msk [vmem:[#allocation2 + $0x28] sm:$0xff] %vm619, %v608
      %626 = vst.msk [vmem:[#allocation2 + $0x30] sm:$0xff] %vm619, %v609
      %627 = vst.msk [vmem:[#allocation2 + $0x38] sm:$0xff] %vm619, %v610
      %628 = vst.msk [vmem:[#allocation2 + $0x40] sm:$0xff] %vm619, %v611
      %629 = vst.msk [vmem:[#allocation2 + $0x48] sm:$0xff] %vm619, %v612
      %630 = vst.msk [vmem:[#allocation2 + $0x50] sm:$0xff] %vm619, %v613
      %631 = vst.msk [vmem:[#allocation2 + $0x58] sm:$0xff] %vm619, %v614
      %632 = vst.msk [vmem:[#allocation2 + $0x60] sm:$0xff] %vm619, %v615
      %633 = vst.msk [vmem:[#allocation2 + $0x68] sm:$0xff] %vm619, %v616
      %634 = vst.msk [vmem:[#allocation2 + $0x70] sm:$0xff] %vm619, %v617
      %635 = vst.msk [vmem:[#allocation2 + $0x78] sm:$0xff] %vm619, %v618
      // Predicated region
      $region37: #{instance_attention_forward.17} parent=31 // pred_check
        %p636 = pneg %p268
      $region38: #{instance_attention_forward.17} parent=31 // pred_check_branch
        %638 = sbr.rel (%p636) target = $region40
      $region39: #{instance_attention_forward.17} parent=31 // pred_region
        %v639 = vld [vmem:[#allocation2] sm:$0xff]
        %v640 = vld [vmem:[#allocation2 + $0x8] sm:$0xff]
        %v641 = vld [vmem:[#allocation2 + $0x10] sm:$0xff]
        %v642 = vld [vmem:[#allocation2 + $0x18] sm:$0xff]
        %v643 = vld [vmem:[#allocation2 + $0x20] sm:$0xff]
        %v644 = vld [vmem:[#allocation2 + $0x28] sm:$0xff]
        %v645 = vld [vmem:[#allocation2 + $0x30] sm:$0xff]
        %v646 = vld [vmem:[#allocation2 + $0x38] sm:$0xff]
        %v647 = vld [vmem:[#allocation2 + $0x40] sm:$0xff]
        %v648 = vld [vmem:[#allocation2 + $0x48] sm:$0xff]
        %v649 = vld [vmem:[#allocation2 + $0x50] sm:$0xff]
        %v650 = vld [vmem:[#allocation2 + $0x58] sm:$0xff]
        %v651 = vld [vmem:[#allocation2 + $0x60] sm:$0xff]
        %v652 = vld [vmem:[#allocation2 + $0x68] sm:$0xff]
        %v653 = vld [vmem:[#allocation2 + $0x70] sm:$0xff]
        %v654 = vld [vmem:[#allocation2 + $0x78] sm:$0xff]
        %v655 = vld [vmem:[%s257] sm:$0x1]
        %v657 = vlaneseq
        %v658 = vshrl.u32 %v657, 7
        %v659 = vsub.s32 0, %v658
        %v660 = vrot.slane %v655, %v659
        %v662 = vadd.f32 %v639, %v660
        %v663 = vadd.f32 %v640, %v660
        %v664 = vadd.f32 %v641, %v660
        %v665 = vadd.f32 %v642, %v660
        %v666 = vadd.f32 %v643, %v660
        %v667 = vadd.f32 %v644, %v660
        %v668 = vadd.f32 %v645, %v660
        %v669 = vadd.f32 %v646, %v660
        %v670 = vadd.f32 %v647, %v660
        %v671 = vadd.f32 %v648, %v660
        %v672 = vadd.f32 %v649, %v660
        %v673 = vadd.f32 %v650, %v660
        %v674 = vadd.f32 %v651, %v660
        %v675 = vadd.f32 %v652, %v660
        %v676 = vadd.f32 %v653, %v660
        %v677 = vadd.f32 %v654, %v660
        %v678 = vmax.f32 %v662, 0.0
        %v679 = vmax.f32 %v663, 0.0
        %v680 = vmax.f32 %v664, 0.0
        %v681 = vmax.f32 %v665, 0.0
        %v682 = vmax.f32 %v666, 0.0
        %v683 = vmax.f32 %v667, 0.0
        %v684 = vmax.f32 %v668, 0.0
        %v685 = vmax.f32 %v669, 0.0
        %v686 = vmax.f32 %v670, 0.0
        %v687 = vmax.f32 %v671, 0.0
        %v688 = vmax.f32 %v672, 0.0
        %v689 = vmax.f32 %v673, 0.0
        %v690 = vmax.f32 %v674, 0.0
        %v691 = vmax.f32 %v675, 0.0
        %v692 = vmax.f32 %v676, 0.0
        %v693 = vmax.f32 %v677, 0.0
        %v694 = vpack.c.bf16 %v679, %v678
        %v695 = vpack.c.bf16 %v681, %v680
        %v696 = vpack.c.bf16 %v683, %v682
        %v697 = vpack.c.bf16 %v685, %v684
        %v698 = vpack.c.bf16 %v687, %v686
        %v699 = vpack.c.bf16 %v689, %v688
        %v700 = vpack.c.bf16 %v691, %v690
        %v701 = vpack.c.bf16 %v693, %v692
        %v710 = vunpack.c.l.b16 %v694
        %v711 = vunpack.c.h.b16 %v694
        %v712 = vunpack.c.l.b16 %v695
        %v713 = vunpack.c.h.b16 %v695
        %v714 = vunpack.c.l.b16 %v696
        %v715 = vunpack.c.h.b16 %v696
        %v716 = vunpack.c.l.b16 %v697
        %v717 = vunpack.c.h.b16 %v697
        %v718 = vunpack.c.l.b16 %v698
        %v719 = vunpack.c.h.b16 %v698
        %v720 = vunpack.c.l.b16 %v699
        %v721 = vunpack.c.h.b16 %v699
        %v722 = vunpack.c.l.b16 %v700
        %v723 = vunpack.c.h.b16 %v700
        %v724 = vunpack.c.l.b16 %v701
        %v725 = vunpack.c.h.b16 %v701
        %v726 = vpack.c.b16 %v710, %v710
        %v727 = vpack.c.b16 %v711, %v711
        %v728 = vpack.c.b16 %v712, %v712
        %v729 = vpack.c.b16 %v713, %v713
        %v730 = vpack.c.b16 %v714, %v714
        %v731 = vpack.c.b16 %v715, %v715
        %v732 = vpack.c.b16 %v716, %v716
        %v733 = vpack.c.b16 %v717, %v717
        %v734 = vpack.c.b16 %v718, %v718
        %v735 = vpack.c.b16 %v719, %v719
        %v736 = vpack.c.b16 %v720, %v720
        %v737 = vpack.c.b16 %v721, %v721
        %v738 = vpack.c.b16 %v722, %v722
        %v739 = vpack.c.b16 %v723, %v723
        %v740 = vpack.c.b16 %v724, %v724
        %v741 = vpack.c.b16 %v725, %v725
        %vm758 = vcmask 125952
        %759 = vst.msk [vmem:[%s265] sm:$0xf] %vm758, %v726
        %760 = vst.msk [vmem:[%s265 + $0x4] sm:$0xf] %vm758, %v727
        %761 = vst.msk [vmem:[%s265 + $0x8] sm:$0xf] %vm758, %v728
        %762 = vst.msk [vmem:[%s265 + $0xc] sm:$0xf] %vm758, %v729
        %763 = vst.msk [vmem:[%s265 + $0x10] sm:$0xf] %vm758, %v730
        %764 = vst.msk [vmem:[%s265 + $0x14] sm:$0xf] %vm758, %v731
        %765 = vst.msk [vmem:[%s265 + $0x18] sm:$0xf] %vm758, %v732
        %766 = vst.msk [vmem:[%s265 + $0x1c] sm:$0xf] %vm758, %v733
        %767 = vst.msk [vmem:[%s265 + $0x20] sm:$0xf] %vm758, %v734
        %768 = vst.msk [vmem:[%s265 + $0x24] sm:$0xf] %vm758, %v735
        %769 = vst.msk [vmem:[%s265 + $0x28] sm:$0xf] %vm758, %v736
        %770 = vst.msk [vmem:[%s265 + $0x2c] sm:$0xf] %vm758, %v737
        %771 = vst.msk [vmem:[%s265 + $0x30] sm:$0xf] %vm758, %v738
        %772 = vst.msk [vmem:[%s265 + $0x34] sm:$0xf] %vm758, %v739
        %773 = vst.msk [vmem:[%s265 + $0x38] sm:$0xf] %vm758, %v740
        %774 = vst.msk [vmem:[%s265 + $0x3c] sm:$0xf] %vm758, %v741
      $region40: #{instance_attention_forward.17} parent=31 // pred_fallthru
        _
      %s775 = smul.u32 16, %s19
      %p776 = scmp.lt.s32.totalorder %s775, 63
      %s777 = scalar_select %p776, %s775, 63
      %p778 = scmp.lt.s32.totalorder %s20, 0
      %s779 = scalar_select %p778, %s20, 0
      %s780 = sadd.s32 %s779, %s777
      %s781 = smul.addr %s780, 4
      %s782 = scalar_lea.vmem %s3, %s781
      // Predicated region
      $region41: #{instance_attention_forward.17} parent=31 // pred_check
        %p783 = pneg %p135
      $region42: #{instance_attention_forward.17} parent=31 // pred_check_branch
        %785 = sbr.rel (%p783) target = $region44
      $region43: #{instance_attention_forward.17} parent=31 // pred_region
        %s786 = smul.u32 16, %s19
      $region44: #{instance_attention_forward.17} parent=31 // pred_fallthru
        _
    $region32: #{instance_attention_forward.17} parent=5 // pred_fallthru
      _
    %p787 = scmp.le.s32.totalorder 2, %s9
    // Predicated region
    $region45: #{instance_attention_forward.17} parent=5 // pred_check
      %p788 = pneg %p787
    $region46: #{instance_attention_forward.17} parent=5 // pred_check_branch
      %790 = sbr.rel (%p788) target = $region48
    $region47: #{instance_attention_forward.17} parent=5 // pred_region
      %s791 = ssub.s32 %s9, 2
      // Predicated region
      $region49: #{instance_attention_forward.17} parent=47 // pred_check
        %p792 = pneg %p141
      $region50: #{instance_attention_forward.17} parent=47 // pred_check_branch
        %794 = sbr.rel (%p792) target = $region52
      $region51: #{instance_attention_forward.17} parent=47 // pred_region
        %s795 = smul.u32 16, %s22
        %p796 = scmp.lt.s32.totalorder %s795, 63
        %s797 = scalar_select %p796, %s795, 63
        %p798 = scmp.lt.s32.totalorder %s23, 0
        %s799 = scalar_select %p798, %s23, 0
        %s800 = sadd.s32 %s799, %s797
        %s801 = smul.addr %s800, 4
        %s802 = scalar_lea.vmem %s3, %s801
      $region52: #{instance_attention_forward.17} parent=47 // pred_fallthru
        _
    $region48: #{instance_attention_forward.17} parent=5 // pred_fallthru
      _
  $region6: #{instance_attention_forward.17} parent=0 // loop_footer
    %s13 = sadd.s32 1, %s9
  $region7: #{instance_attention_forward.17} parent=0 // loop_footer_branch
    %8 = sbr.rel target = $region3
  $region8: #{instance_attention_forward.17} parent=0 // loop_exit
    _

// kernel: instance_attention_forward.18
$region0: #{instance_attention_forward.18}
  #allocation0 [shape = 'u32[]', space=smem, size = 0x4, offset = 0x4, fixed_abs, tag = 'smem constant byte address 0x4 - core index']
  #allocation1 [shape = 'u32[144,128]{1,0:T(1,128)}', space=vmem, size = 0x12000, scoped, tag = 'internal scratch']
  #allocation2 [shape = 'f32[128,16]{1,0:T(8,128)}', space=vmem, size = 0x10000, scoped, tag = 'scratch operand']
  %s0 = inlined_call_operand.vmem [shape: bf16[512,144], index: 0, kind: input, shape index: {}]
  %s1 = inlined_call_operand.vmem [shape: bf16[144,16], index: 1, kind: input, shape index: {}]
  %s2 = inlined_call_operand.vmem [shape: f32[1,16], index: 2, kind: input, shape index: {}]
  %s3 = inlined_call_operand.vmem [shape: bf16[512,16], index: 3, kind: output, shape index: {}]
  %s4 = sld [smem:[#allocation0]]
  $region53: #{instance_attention_forward.18} parent=0
    _
  %s6 = ssub.s32 1, %s4
  %s7 = scalar_select 0, %s6, %s4
  loop: start=0, step=1, limit=6
  $region2: #{instance_attention_forward.18} parent=0 // loop_pre_header
    _
  $region3: #{instance_attention_forward.18} parent=0 // loop_header
    %s9 = sphi 0, %s13
    %p10 = scmp.ge.s32.totalorder %s9, 6
    %s16 = sphi 0, %s35
    %s17 = sphi 0, %s31
    %s18 = sphi 0, %s27
    %s19 = sphi 0, %s16
    %s20 = sphi 0, %s17
    %s21 = sphi 0, %s18
    %s22 = sphi 0, %s19
    %s23 = sphi 0, %s20
    %s24 = sphi 0, %s21
    %s40 = sphi 0, %s42
    %s43 = sphi 0, %s40
    %s44 = sphi 0, %s43
    %s60 = sphi 0, %s44
    %s68 = sphi 0, %s70
    %s71 = sphi 0, %s68
    %s72 = sphi 0, %s71
    %s88 = sphi 0, %s72
    %s94 = sphi 0, %s96
    %s97 = sphi 0, %s94
    %s98 = sphi 0, %s97
    %s114 = sphi 0, %s98
    %s122 = sphi 0, %s124
    %s125 = sphi 0, %s122
    %s126 = sphi 0, %s125
    %s142 = sphi 0, %s126
  $region4: #{instance_attention_forward.18} parent=0 // loop_header_branch
    %12 = sbr.rel (%p10) target = $region8
  $region5: #{instance_attention_forward.18} parent=0 // loop_body
    %s14 = ssub.s32 %s9, 1
    %s15 = ssub.s32 %s9, 2
    %s25 = sadd.s32 1, %s18
    %p26 = scmp.ge.s32.totalorder %s25, 1
    %s27 = scalar_select %p26, 0, %s25
    %s28 = sadd.s32 1, %s17
    %s29 = scalar_select %p26, %s28, %s17
    %p30 = scmp.ge.s32.totalorder %s29, 1
    %s31 = scalar_select %p30, 0, %s29
    %s32 = sadd.s32 1, %s16
    %s33 = scalar_select %p30, %s32, %s16
    %p34 = scmp.ge.s32.totalorder %s33, 4
    %s35 = scalar_select %p34, 0, %s33
    %s36 = ssub.s32 %s16, %s35
    %s37 = ssub.s32 %s18, %s27
    %s38 = sor.u32 %s36, %s37
    %p39 = scmp.eq.s32.totalorder %s38, 0
    %s41 = sadd.s32 %s40, 1
    %s42 = scalar_select %p39, %s40, %s41
    %p45 = pneg %p39
    %p46 = scmp.eq.s32.totalorder %s9, 3
    %p47 = por %p45, %p46
    %p48 = scmp.ne.s32.totalorder %s40, %s43
    %p49 = scmp.eq.s32.totalorder %s9, 0
    %p50 = por %p48, %p49
    %p51 = scmp.ne.s32.totalorder %s40, %s43
    %p52 = scmp.eq.s32.totalorder %s14, 3
    %p53 = por %p51, %p52
    %p54 = scmp.ne.s32.totalorder %s43, %s44
    %p55 = scmp.eq.s32.totalorder %s14, 0
    %p56 = por %p54, %p55
    %p57 = scmp.ne.s32.totalorder %s43, %s44
    %p58 = scmp.eq.s32.totalorder %s15, 3
    %p59 = por %p57, %p58
    %p61 = scmp.ne.s32.totalorder %s44, %s60
    %p62 = scmp.eq.s32.totalorder %s15, 0
    %p63 = por %p61, %p62
    %s64 = ssub.s32 %s18, %s27
    %s65 = ssub.s32 %s17, %s31
    %s66 = sor.u32 %s64, %s65
    %p67 = scmp.eq.s32.totalorder %s66, 0
    %s69 = sadd.s32 %s68, 1
    %s70 = scalar_select %p67, %s68, %s69
    %p73 = pneg %p67
    %p74 = scmp.eq.s32.totalorder %s9, 3
    %p75 = por %p73, %p74
    %p76 = scmp.ne.s32.totalorder %s68, %s71
    %p77 = scmp.eq.s32.totalorder %s9, 0
    %p78 = por %p76, %p77
    %p79 = scmp.ne.s32.totalorder %s68, %s71
    %p80 = scmp.eq.s32.totalorder %s14, 3
    %p81 = por %p79, %p80
    %p82 = scmp.ne.s32.totalorder %s71, %s72
    %p83 = scmp.eq.s32.totalorder %s14, 0
    %p84 = por %p82, %p83
    %p85 = scmp.ne.s32.totalorder %s71, %s72
    %p86 = scmp.eq.s32.totalorder %s15, 3
    %p87 = por %p85, %p86
    %p89 = scmp.ne.s32.totalorder %s72, %s88
    %p90 = scmp.eq.s32.totalorder %s15, 0
    %p91 = por %p89, %p90
    %s92 = ssub.s32 %s17, %s31
    %p93 = scmp.eq.s32.totalorder %s92, 0
    %s95 = sadd.s32 %s94, 1
    %s96 = scalar_select %p93, %s94, %s95
    %p99 = pneg %p93
    %p100 = scmp.eq.s32.totalorder %s9, 3
    %p101 = por %p99, %p100
    %p102 = scmp.ne.s32.totalorder %s94, %s97
    %p103 = scmp.eq.s32.totalorder %s9, 0
    %p104 = por %p102, %p103
    %p105 = scmp.ne.s32.totalorder %s94, %s97
    %p106 = scmp.eq.s32.totalorder %s14, 3
    %p107 = por %p105, %p106
    %p108 = scmp.ne.s32.totalorder %s97, %s98
    %p109 = scmp.eq.s32.totalorder %s14, 0
    %p110 = por %p108, %p109
    %p111 = scmp.ne.s32.totalorder %s97, %s98
    %p112 = scmp.eq.s32.totalorder %s15, 3
    %p113 = por %p111, %p112
    %p115 = scmp.ne.s32.totalorder %s98, %s114
    %p116 = scmp.eq.s32.totalorder %s15, 0
    %p117 = por %p115, %p116
    %s118 = ssub.s32 %s16, %s35
    %s119 = ssub.s32 %s17, %s31
    %s120 = sor.u32 %s118, %s119
    %p121 = scmp.eq.s32.totalorder %s120, 0
    %s123 = sadd.s32 %s122, 1
    %s124 = scalar_select %p121, %s122, %s123
    %p127 = pneg %p121
    %p128 = scmp.eq.s32.totalorder %s9, 3
    %p129 = por %p127, %p128
    %p130 = scmp.ne.s32.totalorder %s122, %s125
    %p131 = scmp.eq.s32.totalorder %s9, 0
    %p132 = por %p130, %p131
    %p133 = scmp.ne.s32.totalorder %s122, %s125
    %p134 = scmp.eq.s32.totalorder %s14, 3
    %p135 = por %p133, %p134
    %p136 = scmp.ne.s32.totalorder %s125, %s126
    %p137 = scmp.eq.s32.totalorder %s14, 0
    %p138 = por %p136, %p137
    %p139 = scmp.ne.s32.totalorder %s125, %s126
    %p140 = scmp.eq.s32.totalorder %s15, 3
    %p141 = por %p139, %p140
    %p143 = scmp.ne.s32.totalorder %s126, %s142
    %p144 = scmp.eq.s32.totalorder %s15, 0
    %p145 = por %p143, %p144
    %p146 = scmp.le.s32.totalorder 1, %s9
    %p147 = scmp.lt.s32.totalorder %s9, 5
    %p148 = pnand %p146, %p147
    %p149 = pneg %p148
    // Predicated region
    $region9: #{instance_attention_forward.18} parent=5 // pred_check
      _
    $region10: #{instance_attention_forward.18} parent=5 // pred_check_branch
      %151 = sbr.rel (%p148) target = $region12
    $region11: #{instance_attention_forward.18} parent=5 // pred_region
      %s152 = ssub.s32 %s9, 1
      // Predicated region
      $region13: #{instance_attention_forward.18} parent=11 // pred_check
        %p153 = pneg %p84
      $region14: #{instance_attention_forward.18} parent=11 // pred_check_branch
        %155 = sbr.rel (%p153) target = $region16
      $region15: #{instance_attention_forward.18} parent=11 // pred_region
        %s156 = smul.u32 18, %s21
        %p157 = scmp.lt.s32.totalorder %s156, 17
        %s158 = scalar_select %p157, %s156, 17
        %p159 = scmp.lt.s32.totalorder %s20, 0
        %s160 = scalar_select %p159, %s20, 0
        %s161 = sadd.s32 %s160, %s158
        %s162 = smul.addr %s161, 4
        %s163 = scalar_lea.vmem %s1, %s162
        %s164 = smul.u32 18, %s21
      $region16: #{instance_attention_forward.18} parent=11 // pred_fallthru
        _
      // Predicated region
      $region17: #{instance_attention_forward.18} parent=11 // pred_check
        %p165 = pneg %p110
      $region18: #{instance_attention_forward.18} parent=11 // pred_check_branch
        %167 = sbr.rel (%p165) target = $region20
      $region19: #{instance_attention_forward.18} parent=11 // pred_region
        %p168 = scmp.lt.s32.totalorder %s20, 0
        %s169 = scalar_select %p168, %s20, 0
        %s170 = scalar_lea.vmem %s2, %s169
      $region20: #{instance_attention_forward.18} parent=11 // pred_fallthru
        _
    $region12: #{instance_attention_forward.18} parent=5 // pred_fallthru
      _
    %p171 = scmp.lt.s32.totalorder %s9, 4
    // Predicated region
    $region21: #{instance_attention_forward.18} parent=5 // pred_check
      %p172 = pneg %p171
    $region22: #{instance_attention_forward.18} parent=5 // pred_check_branch
      %174 = sbr.rel (%p172) target = $region24
    $region23: #{instance_attention_forward.18} parent=5 // pred_region
      // Predicated region
      $region25: #{instance_attention_forward.18} parent=23 // pred_check
        %p175 = pneg %p50
      $region26: #{instance_attention_forward.18} parent=23 // pred_check_branch
        %177 = sbr.rel (%p175) target = $region28
      $region27: #{instance_attention_forward.18} parent=23 // pred_region
        %s178 = smul.u32 16, %s16
        %s179 = smul.u32 2, %s18
        %p180 = scmp.lt.s32.totalorder %s178, 63
        %s181 = scalar_select %p180, %s178, 63
        %p182 = scmp.lt.s32.totalorder %s179, 1
        %s183 = scalar_select %p182, %s179, 1
        %s184 = smul.addr %s181, 2
        %s185 = sadd.s32 %s183, %s184
        %s186 = smul.addr %s185, 4
        %s187 = scalar_lea.vmem %s0, %s186
        %s188 = smul.u32 16, %s16
        %s189 = smul.u32 2, %s18
      $region28: #{instance_attention_forward.18} parent=23 // pred_fallthru
        _
    $region24: #{instance_attention_forward.18} parent=5 // pred_fallthru
      _
    %p190 = scmp.le.s32.totalorder 1, %s9
    %p191 = scmp.lt.s32.totalorder %s9, 5
    %p192 = pnand %p190, %p191
    %p193 = pneg %p192
    // Predicated region
    $region29: #{instance_attention_forward.18} parent=5 // pred_check
      _
    $region30: #{instance_attention_forward.18} parent=5 // pred_check_branch
      %195 = sbr.rel (%p192) target = $region32
    $region31: #{instance_attention_forward.18} parent=5 // pred_region
      %s196 = ssub.s32 %s9, 1
      %s197 = smul.u32 16, %s19
      %s198 = smul.u32 2, %s21
      %p199 = scmp.lt.s32.totalorder %s197, 63
      %s200 = scalar_select %p199, %s197, 63
      %p201 = scmp.lt.s32.totalorder %s198, 1
      %s202 = scalar_select %p201, %s198, 1
      %s203 = smul.addr %s200, 2
      %s204 = sadd.s32 %s202, %s203
      %s205 = smul.addr %s204, 4
      %s206 = scalar_lea.vmem %s0, %s205
      %p207 = pneg %p56
      %p208 = pneg %p53
      %s209 = smul.u32 18, %s21
      %p210 = scmp.lt.s32.totalorder %s209, 17
      %s211 = scalar_select %p210, %s209, 17
      %p212 = scmp.lt.s32.totalorder %s20, 0
      %s213 = scalar_select %p212, %s20, 0
      %s214 = sadd.s32 %s213, %s211
      %s215 = smul.addr %s214, 4
      %s216 = scalar_lea.vmem %s1, %s215
      %p217 = pneg %p84
      %p218 = pneg %p81
      %p219 = scmp.lt.s32.totalorder %s20, 0
      %s220 = scalar_select %p219, %s20, 0
      %s221 = scalar_lea.vmem %s2, %s220
      %p222 = pneg %p110
      %p223 = pneg %p107
      %p224 = pneg %p138
      %p225 = pneg %p135
      %s226 = smul.u32 16, %s19
      %p227 = scmp.lt.s32.totalorder %s226, 63
      %s228 = scalar_select %p227, %s226, 63
      %p229 = scmp.lt.s32.totalorder %s20, 0
      %s230 = scalar_select %p229, %s20, 0
      %s231 = sadd.s32 %s230, %s228
      %s232 = smul.addr %s231, 4
      %s233 = scalar_lea.vmem %s3, %s232
      %s234 = smul.u32 16, %s19
      %s235 = smul.u32 2, %s21
      %p236 = scmp.lt.s32.totalorder %s234, 63
      %s237 = scalar_select %p236, %s234, 63
      %p238 = scmp.lt.s32.totalorder %s235, 1
      %s239 = scalar_select %p238, %s235, 1
      %s240 = smul.addr %s237, 2
      %s241 = sadd.s32 %s239, %s240
      %s242 = smul.addr %s241, 4
      %s243 = scalar_lea.vmem %s0, %s242
      %s244 = smul.u32 16, %s19
      %s245 = smul.u32 2, %s21
      %s246 = smul.u32 18, %s21
      %p247 = scmp.lt.s32.totalorder %s246, 17
      %s248 = scalar_select %p247, %s246, 17
      %p249 = scmp.lt.s32.totalorder %s20, 0
      %s250 = scalar_select %p249, %s20, 0
      %s251 = sadd.s32 %s250, %s248
      %s252 = smul.addr %s251, 4
      %s253 = scalar_lea.vmem %s1, %s252
      %s254 = smul.u32 18, %s21
      %p255 = scmp.lt.s32.totalorder %s20, 0
      %s256 = scalar_select %p255, %s20, 0
      %s257 = scalar_lea.vmem %s2, %s256
      %s258 = smul.u32 16, %s19
      %p259 = scmp.lt.s32.totalorder %s258, 63
      %s260 = scalar_select %p259, %s258, 63
      %p261 = scmp.lt.s32.totalorder %s20, 0
      %s262 = scalar_select %p261, %s20, 0
      %s263 = sadd.s32 %s262, %s260
      %s264 = smul.addr %s263, 4
      %s265 = scalar_lea.vmem %s3, %s264
      %s266 = smul.u32 16, %s19
      %p268 = scmp.eq.s32.totalorder %s21, 0
      // Predicated region
      $region33: #{instance_attention_forward.18} parent=31 // pred_check
        %p269 = pneg %p268
      $region34: #{instance_attention_forward.18} parent=31 // pred_check_branch
        %271 = sbr.rel (%p269) target = $region36
      $region35: #{instance_attention_forward.18} parent=31 // pred_region
        %vm272 = vcmask 130048
        %273 = vst.msk [vmem:[#allocation2] sm:$0xff] %vm272, 0.0
        %274 = vst.msk [vmem:[#allocation2 + $0x8] sm:$0xff] %vm272, 0.0
        %275 = vst.msk [vmem:[#allocation2 + $0x10] sm:$0xff] %vm272, 0.0
        %276 = vst.msk [vmem:[#allocation2 + $0x18] sm:$0xff] %vm272, 0.0
        %277 = vst.msk [vmem:[#allocation2 + $0x20] sm:$0xff] %vm272, 0.0
        %278 = vst.msk [vmem:[#allocation2 + $0x28] sm:$0xff] %vm272, 0.0
        %279 = vst.msk [vmem:[#allocation2 + $0x30] sm:$0xff] %vm272, 0.0
        %280 = vst.msk [vmem:[#allocation2 + $0x38] sm:$0xff] %vm272, 0.0
        %281 = vst.msk [vmem:[#allocation2 + $0x40] sm:$0xff] %vm272, 0.0
        %282 = vst.msk [vmem:[#allocation2 + $0x48] sm:$0xff] %vm272, 0.0
        %283 = vst.msk [vmem:[#allocation2 + $0x50] sm:$0xff] %vm272, 0.0
        %284 = vst.msk [vmem:[#allocation2 + $0x58] sm:$0xff] %vm272, 0.0
        %285 = vst.msk [vmem:[#allocation2 + $0x60] sm:$0xff] %vm272, 0.0
        %286 = vst.msk [vmem:[#allocation2 + $0x68] sm:$0xff] %vm272, 0.0
        %287 = vst.msk [vmem:[#allocation2 + $0x70] sm:$0xff] %vm272, 0.0
        %288 = vst.msk [vmem:[#allocation2 + $0x78] sm:$0xff] %vm272, 0.0
      $region36: #{instance_attention_forward.18} parent=31 // pred_fallthru
        _
      %v289 = vld [vmem:[#allocation2] sm:$0xff]
      %v290 = vld [vmem:[#allocation2 + $0x8] sm:$0xff]
      %v291 = vld [vmem:[#allocation2 + $0x10] sm:$0xff]
      %v292 = vld [vmem:[#allocation2 + $0x18] sm:$0xff]
      %v293 = vld [vmem:[#allocation2 + $0x20] sm:$0xff]
      %v294 = vld [vmem:[#allocation2 + $0x28] sm:$0xff]
      %v295 = vld [vmem:[#allocation2 + $0x30] sm:$0xff]
      %v296 = vld [vmem:[#allocation2 + $0x38] sm:$0xff]
      %v297 = vld [vmem:[#allocation2 + $0x40] sm:$0xff]
      %v298 = vld [vmem:[#allocation2 + $0x48] sm:$0xff]
      %v299 = vld [vmem:[#allocation2 + $0x50] sm:$0xff]
      %v300 = vld [vmem:[#allocation2 + $0x58] sm:$0xff]
      %v301 = vld [vmem:[#allocation2 + $0x60] sm:$0xff]
      %v302 = vld [vmem:[#allocation2 + $0x68] sm:$0xff]
      %v303 = vld [vmem:[#allocation2 + $0x70] sm:$0xff]
      %v304 = vld [vmem:[#allocation2 + $0x78] sm:$0xff]
      %v305 = vld [vmem:[%s243] sm:$0xff]
      %v306 = vld [vmem:[%s243 + $0x8] sm:$0xff]
      %v307 = vld [vmem:[%s243 + $0x10] sm:$0xff]
      %v308 = vld [vmem:[%s243 + $0x18] sm:$0xff]
      %v309 = vld [vmem:[%s243 + $0x20] sm:$0xff]
      %v310 = vld [vmem:[%s243 + $0x28] sm:$0xff]
      %v311 = vld [vmem:[%s243 + $0x30] sm:$0xff]
      %v312 = vld [vmem:[%s243 + $0x38] sm:$0xff]
      %v313 = vld [vmem:[%s243 + $0x40] sm:$0xff]
      %v314 = vld [vmem:[%s243 + $0x48] sm:$0xff]
      %v315 = vld [vmem:[%s243 + $0x50] sm:$0xff]
      %v316 = vld [vmem:[%s243 + $0x58] sm:$0xff]
      %v317 = vld [vmem:[%s243 + $0x60] sm:$0xff]
      %v318 = vld [vmem:[%s243 + $0x68] sm:$0xff]
      %v319 = vld [vmem:[%s243 + $0x70] sm:$0xff]
      %v320 = vld [vmem:[%s243 + $0x78] sm:$0xff]
      %v321 = vld [vmem:[%s253] sm:$0xf]
      %v322 = vld [vmem:[%s253 + $0x4] sm:$0xf]
      %v323 = vld [vmem:[%s253 + $0x8] sm:$0xf]
      %v324 = vld [vmem:[%s253 + $0xc] sm:$0xf]
      %v325 = vld [vmem:[%s253 + $0x10] sm:$0xf]
      %v326 = vld [vmem:[%s253 + $0x14] sm:$0xf]
      %v327 = vld [vmem:[%s253 + $0x18] sm:$0xf]
      %v328 = vld [vmem:[%s253 + $0x1c] sm:$0xf]
      %v329 = vld [vmem:[%s253 + $0x20] sm:$0xf]
      %v330 = vld [vmem:[%s253 + $0x24] sm:$0xf]
      %v331 = vld [vmem:[%s253 + $0x28] sm:$0xf]
      %v332 = vld [vmem:[%s253 + $0x2c] sm:$0xf]
      %v333 = vld [vmem:[%s253 + $0x30] sm:$0xf]
      %v334 = vld [vmem:[%s253 + $0x34] sm:$0xf]
      %v335 = vld [vmem:[%s253 + $0x38] sm:$0xf]
      %v336 = vld [vmem:[%s253 + $0x3c] sm:$0xf]
      %v337 = vld [vmem:[%s253 + $0x40] sm:$0xf]
      %v338 = vld [vmem:[%s253 + $0x44] sm:$0xf]
      %v355 = vunpack.c.l.b16 %v305
      %v356 = vunpack.c.h.b16 %v305
      %v357 = vunpack.c.l.b16 %v306
      %v358 = vunpack.c.h.b16 %v306
      %v359 = vunpack.c.l.b16 %v307
      %v360 = vunpack.c.h.b16 %v307
      %v361 = vunpack.c.l.b16 %v308
      %v362 = vunpack.c.h.b16 %v308
      %v363 = vunpack.c.l.b16 %v309
      %v364 = vunpack.c.h.b16 %v309
      %v365 = vunpack.c.l.b16 %v310
      %v366 = vunpack.c.h.b16 %v310
      %v367 = vunpack.c.l.b16 %v311
      %v368 = vunpack.c.h.b16 %v311
      %v369 = vunpack.c.l.b16 %v312
      %v370 = vunpack.c.h.b16 %v312
      %v371 = vunpack.c.l.b16 %v313
      %v372 = vunpack.c.h.b16 %v313
      %v373 = vunpack.c.l.b16 %v314
      %v374 = vunpack.c.h.b16 %v314
      %v375 = vunpack.c.l.b16 %v315
      %v376 = vunpack.c.h.b16 %v315
      %v377 = vunpack.c.l.b16 %v316
      %v378 = vunpack.c.h.b16 %v316
      %v379 = vunpack.c.l.b16 %v317
      %v380 = vunpack.c.h.b16 %v317
      %v381 = vunpack.c.l.b16 %v318
      %v382 = vunpack.c.h.b16 %v318
      %v383 = vunpack.c.l.b16 %v319
      %v384 = vunpack.c.h.b16 %v319
      %v385 = vunpack.c.l.b16 %v320
      %v386 = vunpack.c.h.b16 %v320
      %v387 = vpack.c.b16 %v357, %v355
      %v388 = vpack.c.b16 %v358, %v356
      %v389 = vpack.c.b16 %v361, %v359
      %v390 = vpack.c.b16 %v362, %v360
      %v391 = vpack.c.b16 %v365, %v363
      %v392 = vpack.c.b16 %v366, %v364
      %v393 = vpack.c.b16 %v369, %v367
      %v394 = vpack.c.b16 %v370, %v368
      %v395 = vpack.c.b16 %v373, %v371
      %v396 = vpack.c.b16 %v374, %v372
      %v397 = vpack.c.b16 %v377, %v375
      %v398 = vpack.c.b16 %v378, %v376
      %v399 = vpack.c.b16 %v381, %v379
      %v400 = vpack.c.b16 %v382, %v380
      %v401 = vpack.c.b16 %v385, %v383
      %v402 = vpack.c.b16 %v386, %v384
      %v429 = vunpack.c.l.b16 %v321
      %v430 = vunpack.c.l.b16 %v322
      %v431 = vunpack.c.l.b16 %v323
      %v432 = vunpack.c.l.b16 %v324
      %v433 = vunpack.c.l.b16 %v325
      %v434 = vunpack.c.l.b16 %v326
      %v435 = vunpack.c.l.b16 %v327
      %v436 = vunpack.c.l.b16 %v328
      %v437 = vunpack.c.l.b16 %v329
      %v438 = vunpack.c.l.b16 %v330
      %v439 = vunpack.c.l.b16 %v331
      %v440 = vunpack.c.l.b16 %v332
      %v441 = vunpack.c.l.b16 %v333
      %v442 = vunpack.c.l.b16 %v334
      %v443 = vunpack.c.l.b16 %v335
      %v444 = vunpack.c.l.b16 %v336
      %v445 = vunpack.c.l.b16 %v337
      %v446 = vunpack.c.l.b16 %v338
      %v447 = vpack.c.b16 %v430, %v429
      %v448 = vpack.c.b16 %v432, %v431
      %v449 = vpack.c.b16 %v434, %v433
      %v450 = vpack.c.b16 %v436, %v435
      %v451 = vpack.c.b16 %v438, %v437
      %v452 = vpack.c.b16 %v440, %v439
      %v453 = vpack.c.b16 %v442, %v441
      %v454 = vpack.c.b16 %v444, %v443
      %v455 = vpack.c.b16 %v446, %v445
      %vm465 = vcmask 130048
      %v467 = vsel %vm465, %v388, 0
      %v470 = vsel %vm465, %v390, 0
      %v473 = vsel %vm465, %v392, 0
      %v476 = vsel %vm465, %v394, 0
      %v479 = vsel %vm465, %v396, 0
      %v482 = vsel %vm465, %v398, 0
      %v485 = vsel %vm465, %v400, 0
      %v488 = vsel %vm465, %v402, 0
      %490 = vmatprep.subr.bf16.mxu0 0
      %491 = vmatpush1.bf16.msra.mxu0 %v447
      %492 = vmatprep.subr.bf16.mxu0 0
      %493 = vmatpush1.bf16.msra.mxu0 %v448
      %494 = vmatprep.subr.bf16.mxu0 0
      %495 = vmatpush1.bf16.msra.mxu0 %v449
      %496 = vmatprep.subr.bf16.mxu0 0
      %497 = vmatpush1.bf16.msra.mxu0 %v450
      %498 = vmatprep.subr.bf16.mxu0 0
      %499 = vmatpush1.bf16.msra.mxu0 %v451
      %500 = vmatprep.subr.bf16.mxu0 0
      %501 = vmatpush1.bf16.msra.mxu0 %v452
      %502 = vmatprep.subr.bf16.mxu0 0
      %503 = vmatpush1.bf16.msra.mxu0 %v453
      %504 = vmatprep.subr.bf16.mxu0 0
      %505 = vmatpush1.bf16.msra.mxu0 %v454
      %506 = vmatprep.subr.bf16.mxu0 0
      %507 = vmatpush1.bf16.msra.mxu0 %v455
      %508 = vmatprep.subr.bf16.mxu0 0
      %509 = vmatpush1.bf16.msra.mxu0 0
      %510 = vmatprep.subr.bf16.mxu0 0
      %511 = vmatpush1.bf16.msra.mxu0 0
      %512 = vmatprep.subr.bf16.mxu0 0
      %513 = vmatpush1.bf16.msra.mxu0 0
      %514 = vmatprep.subr.bf16.mxu0 0
      %515 = vmatpush1.bf16.msra.mxu0 0
      %516 = vmatprep.subr.bf16.mxu0 0
      %517 = vmatpush1.bf16.msra.mxu0 0
      %518 = vmatprep.subr.bf16.mxu0 0
      %519 = vmatpush1.bf16.msra.mxu0 0
      %520 = vmatprep.subr.bf16.mxu0 0
      %521 = vmatpush1.bf16.msra.mxu0 0
      %522 = vmatprep.mubr.bf16.mxu0 %v467
      %523 = vmatmul.mubr.bf16.gmra.mrb[0].mxu0 %v387
      %v524 = vpop.f32.mrb[0].mxu0
      %v525 = vadd.f32 0.0, %v524
      %v526 = vpop.f32.mrb[0].mxu0
      %v527 = vpop.f32.mrb[0].mxu0
      %v528 = vadd.f32 0.0, %v527
      %v529 = vpop.f32.mrb[0].mxu0
      %530 = vmatprep.mubr.bf16.mxu0 %v470
      %531 = vmatmul.mubr.bf16.gmra.mrb[0].mxu0 %v389
      %v532 = vpop.f32.mrb[0].mxu0
      %v533 = vadd.f32 0.0, %v532
      %v534 = vpop.f32.mrb[0].mxu0
      %v535 = vpop.f32.mrb[0].mxu0
      %v536 = vadd.f32 0.0, %v535
      %v537 = vpop.f32.mrb[0].mxu0
      %538 = vmatprep.mubr.bf16.mxu0 %v473
      %539 = vmatmul.mubr.bf16.gmra.mrb[0].mxu0 %v391
      %v540 = vpop.f32.mrb[0].mxu0
      %v541 = vadd.f32 0.0, %v540
      %v542 = vpop.f32.mrb[0].mxu0
      %v543 = vpop.f32.mrb[0].mxu0
      %v544 = vadd.f32 0.0, %v543
      %v545 = vpop.f32.mrb[0].mxu0
      %546 = vmatprep.mubr.bf16.mxu0 %v476
      %547 = vmatmul.mubr.bf16.gmra.mrb[0].mxu0 %v393
      %v548 = vpop.f32.mrb[0].mxu0
      %v549 = vadd.f32 0.0, %v548
      %v550 = vpop.f32.mrb[0].mxu0
      %v551 = vpop.f32.mrb[0].mxu0
      %v552 = vadd.f32 0.0, %v551
      %v553 = vpop.f32.mrb[0].mxu0
      %554 = vmatprep.mubr.bf16.mxu0 %v479
      %555 = vmatmul.mubr.bf16.gmra.mrb[0].mxu0 %v395
      %v556 = vpop.f32.mrb[0].mxu0
      %v557 = vadd.f32 0.0, %v556
      %v558 = vpop.f32.mrb[0].mxu0
      %v559 = vpop.f32.mrb[0].mxu0
      %v560 = vadd.f32 0.0, %v559
      %v561 = vpop.f32.mrb[0].mxu0
      %562 = vmatprep.mubr.bf16.mxu0 %v482
      %563 = vmatmul.mubr.bf16.gmra.mrb[0].mxu0 %v397
      %v564 = vpop.f32.mrb[0].mxu0
      %v565 = vadd.f32 0.0, %v564
      %v566 = vpop.f32.mrb[0].mxu0
      %v567 = vpop.f32.mrb[0].mxu0
      %v568 = vadd.f32 0.0, %v567
      %v569 = vpop.f32.mrb[0].mxu0
      %570 = vmatprep.mubr.bf16.mxu0 %v485
      %571 = vmatmul.mubr.bf16.gmra.mrb[0].mxu0 %v399
      %v572 = vpop.f32.mrb[0].mxu0
      %v573 = vadd.f32 0.0, %v572
      %v574 = vpop.f32.mrb[0].mxu0
      %v575 = vpop.f32.mrb[0].mxu0
      %v576 = vadd.f32 0.0, %v575
      %v577 = vpop.f32.mrb[0].mxu0
      %578 = vmatprep.mubr.bf16.mxu0 %v488
      %579 = vmatmul.mubr.bf16.gmra.mrb[0].mxu0 %v401
      %v580 = vpop.f32.mrb[0].mxu0
      %v581 = vadd.f32 0.0, %v580
      %v582 = vpop.f32.mrb[0].mxu0
      %v583 = vpop.f32.mrb[0].mxu0
      %v584 = vadd.f32 0.0, %v583
      %v585 = vpop.f32.mrb[0].mxu0
      %586 = vdwg.mxu0
      %v587 = vadd.f32 %v289, %v525
      %v588 = vadd.f32 %v290, %v528
      %v589 = vadd.f32 %v291, %v533
      %v590 = vadd.f32 %v292, %v536
      %v591 = vadd.f32 %v293, %v541
      %v592 = vadd.f32 %v294, %v544
      %v593 = vadd.f32 %v295, %v549
      %v594 = vadd.f32 %v296, %v552
      %v595 = vadd.f32 %v297, %v557
      %v596 = vadd.f32 %v298, %v560
      %v597 = vadd.f32 %v299, %v565
      %v598 = vadd.f32 %v300, %v568
      %v599 = vadd.f32 %v301, %v573
      %v600 = vadd.f32 %v302, %v576
      %v601 = vadd.f32 %v303, %v581
      %v602 = vadd.f32 %v304, %v584
      %603 = vst.msk [vmem:[#allocation2] sm:$0xff] %vm465, %v587
      %604 = vst.msk [vmem:[#allocation2 + $0x8] sm:$0xff] %vm465, %v588
      %605 = vst.msk [vmem:[#allocation2 + $0x10] sm:$0xff] %vm465, %v589
      %606 = vst.msk [vmem:[#allocation2 + $0x18] sm:$0xff] %vm465, %v590
      %607 = vst.msk [vmem:[#allocation2 + $0x20] sm:$0xff] %vm465, %v591
      %608 = vst.msk [vmem:[#allocation2 + $0x28] sm:$0xff] %vm465, %v592
      %609 = vst.msk [vmem:[#allocation2 + $0x30] sm:$0xff] %vm465, %v593
      %610 = vst.msk [vmem:[#allocation2 + $0x38] sm:$0xff] %vm465, %v594
      %611 = vst.msk [vmem:[#allocation2 + $0x40] sm:$0xff] %vm465, %v595
      %612 = vst.msk [vmem:[#allocation2 + $0x48] sm:$0xff] %vm465, %v596
      %613 = vst.msk [vmem:[#allocation2 + $0x50] sm:$0xff] %vm465, %v597
      %614 = vst.msk [vmem:[#allocation2 + $0x58] sm:$0xff] %vm465, %v598
      %615 = vst.msk [vmem:[#allocation2 + $0x60] sm:$0xff] %vm465, %v599
      %616 = vst.msk [vmem:[#allocation2 + $0x68] sm:$0xff] %vm465, %v600
      %617 = vst.msk [vmem:[#allocation2 + $0x70] sm:$0xff] %vm465, %v601
      %618 = vst.msk [vmem:[#allocation2 + $0x78] sm:$0xff] %vm465, %v602
      // Predicated region
      $region37: #{instance_attention_forward.18} parent=31 // pred_check
        %p619 = pneg %p268
      $region38: #{instance_attention_forward.18} parent=31 // pred_check_branch
        %621 = sbr.rel (%p619) target = $region40
      $region39: #{instance_attention_forward.18} parent=31 // pred_region
        %v622 = vld [vmem:[#allocation2] sm:$0xff]
        %v623 = vld [vmem:[#allocation2 + $0x8] sm:$0xff]
        %v624 = vld [vmem:[#allocation2 + $0x10] sm:$0xff]
        %v625 = vld [vmem:[#allocation2 + $0x18] sm:$0xff]
        %v626 = vld [vmem:[#allocation2 + $0x20] sm:$0xff]
        %v627 = vld [vmem:[#allocation2 + $0x28] sm:$0xff]
        %v628 = vld [vmem:[#allocation2 + $0x30] sm:$0xff]
        %v629 = vld [vmem:[#allocation2 + $0x38] sm:$0xff]
        %v630 = vld [vmem:[#allocation2 + $0x40] sm:$0xff]
        %v631 = vld [vmem:[#allocation2 + $0x48] sm:$0xff]
        %v632 = vld [vmem:[#allocation2 + $0x50] sm:$0xff]
        %v633 = vld [vmem:[#allocation2 + $0x58] sm:$0xff]
        %v634 = vld [vmem:[#allocation2 + $0x60] sm:$0xff]
        %v635 = vld [vmem:[#allocation2 + $0x68] sm:$0xff]
        %v636 = vld [vmem:[#allocation2 + $0x70] sm:$0xff]
        %v637 = vld [vmem:[#allocation2 + $0x78] sm:$0xff]
        %v638 = vld [vmem:[%s257] sm:$0x1]
        %v640 = vlaneseq
        %v641 = vshrl.u32 %v640, 7
        %v642 = vsub.s32 0, %v641
        %v643 = vrot.slane %v638, %v642
        %v645 = vadd.f32 %v622, %v643
        %v646 = vadd.f32 %v623, %v643
        %v647 = vadd.f32 %v624, %v643
        %v648 = vadd.f32 %v625, %v643
        %v649 = vadd.f32 %v626, %v643
        %v650 = vadd.f32 %v627, %v643
        %v651 = vadd.f32 %v628, %v643
        %v652 = vadd.f32 %v629, %v643
        %v653 = vadd.f32 %v630, %v643
        %v654 = vadd.f32 %v631, %v643
        %v655 = vadd.f32 %v632, %v643
        %v656 = vadd.f32 %v633, %v643
        %v657 = vadd.f32 %v634, %v643
        %v658 = vadd.f32 %v635, %v643
        %v659 = vadd.f32 %v636, %v643
        %v660 = vadd.f32 %v637, %v643
        %v661 = vmax.f32 %v645, 0.0
        %v662 = vmax.f32 %v646, 0.0
        %v663 = vmax.f32 %v647, 0.0
        %v664 = vmax.f32 %v648, 0.0
        %v665 = vmax.f32 %v649, 0.0
        %v666 = vmax.f32 %v650, 0.0
        %v667 = vmax.f32 %v651, 0.0
        %v668 = vmax.f32 %v652, 0.0
        %v669 = vmax.f32 %v653, 0.0
        %v670 = vmax.f32 %v654, 0.0
        %v671 = vmax.f32 %v655, 0.0
        %v672 = vmax.f32 %v656, 0.0
        %v673 = vmax.f32 %v657, 0.0
        %v674 = vmax.f32 %v658, 0.0
        %v675 = vmax.f32 %v659, 0.0
        %v676 = vmax.f32 %v660, 0.0
        %v677 = vpack.c.bf16 %v662, %v661
        %v678 = vpack.c.bf16 %v664, %v663
        %v679 = vpack.c.bf16 %v666, %v665
        %v680 = vpack.c.bf16 %v668, %v667
        %v681 = vpack.c.bf16 %v670, %v669
        %v682 = vpack.c.bf16 %v672, %v671
        %v683 = vpack.c.bf16 %v674, %v673
        %v684 = vpack.c.bf16 %v676, %v675
        %v693 = vunpack.c.l.b16 %v677
        %v694 = vunpack.c.h.b16 %v677
        %v695 = vunpack.c.l.b16 %v678
        %v696 = vunpack.c.h.b16 %v678
        %v697 = vunpack.c.l.b16 %v679
        %v698 = vunpack.c.h.b16 %v679
        %v699 = vunpack.c.l.b16 %v680
        %v700 = vunpack.c.h.b16 %v680
        %v701 = vunpack.c.l.b16 %v681
        %v702 = vunpack.c.h.b16 %v681
        %v703 = vunpack.c.l.b16 %v682
        %v704 = vunpack.c.h.b16 %v682
        %v705 = vunpack.c.l.b16 %v683
        %v706 = vunpack.c.h.b16 %v683
        %v707 = vunpack.c.l.b16 %v684
        %v708 = vunpack.c.h.b16 %v684
        %v709 = vpack.c.b16 %v693, %v693
        %v710 = vpack.c.b16 %v694, %v694
        %v711 = vpack.c.b16 %v695, %v695
        %v712 = vpack.c.b16 %v696, %v696
        %v713 = vpack.c.b16 %v697, %v697
        %v714 = vpack.c.b16 %v698, %v698
        %v715 = vpack.c.b16 %v699, %v699
        %v716 = vpack.c.b16 %v700, %v700
        %v717 = vpack.c.b16 %v701, %v701
        %v718 = vpack.c.b16 %v702, %v702
        %v719 = vpack.c.b16 %v703, %v703
        %v720 = vpack.c.b16 %v704, %v704
        %v721 = vpack.c.b16 %v705, %v705
        %v722 = vpack.c.b16 %v706, %v706
        %v723 = vpack.c.b16 %v707, %v707
        %v724 = vpack.c.b16 %v708, %v708
        %vm741 = vcmask 125952
        %742 = vst.msk [vmem:[%s265] sm:$0xf] %vm741, %v709
        %743 = vst.msk [vmem:[%s265 + $0x4] sm:$0xf] %vm741, %v710
        %744 = vst.msk [vmem:[%s265 + $0x8] sm:$0xf] %vm741, %v711
        %745 = vst.msk [vmem:[%s265 + $0xc] sm:$0xf] %vm741, %v712
        %746 = vst.msk [vmem:[%s265 + $0x10] sm:$0xf] %vm741, %v713
        %747 = vst.msk [vmem:[%s265 + $0x14] sm:$0xf] %vm741, %v714
        %748 = vst.msk [vmem:[%s265 + $0x18] sm:$0xf] %vm741, %v715
        %749 = vst.msk [vmem:[%s265 + $0x1c] sm:$0xf] %vm741, %v716
        %750 = vst.msk [vmem:[%s265 + $0x20] sm:$0xf] %vm741, %v717
        %751 = vst.msk [vmem:[%s265 + $0x24] sm:$0xf] %vm741, %v718
        %752 = vst.msk [vmem:[%s265 + $0x28] sm:$0xf] %vm741, %v719
        %753 = vst.msk [vmem:[%s265 + $0x2c] sm:$0xf] %vm741, %v720
        %754 = vst.msk [vmem:[%s265 + $0x30] sm:$0xf] %vm741, %v721
        %755 = vst.msk [vmem:[%s265 + $0x34] sm:$0xf] %vm741, %v722
        %756 = vst.msk [vmem:[%s265 + $0x38] sm:$0xf] %vm741, %v723
        %757 = vst.msk [vmem:[%s265 + $0x3c] sm:$0xf] %vm741, %v724
      $region40: #{instance_attention_forward.18} parent=31 // pred_fallthru
        _
      %s758 = smul.u32 16, %s19
      %p759 = scmp.lt.s32.totalorder %s758, 63
      %s760 = scalar_select %p759, %s758, 63
      %p761 = scmp.lt.s32.totalorder %s20, 0
      %s762 = scalar_select %p761, %s20, 0
      %s763 = sadd.s32 %s762, %s760
      %s764 = smul.addr %s763, 4
      %s765 = scalar_lea.vmem %s3, %s764
      // Predicated region
      $region41: #{instance_attention_forward.18} parent=31 // pred_check
        %p766 = pneg %p135
      $region42: #{instance_attention_forward.18} parent=31 // pred_check_branch
        %768 = sbr.rel (%p766) target = $region44
      $region43: #{instance_attention_forward.18} parent=31 // pred_region
        %s769 = smul.u32 16, %s19
      $region44: #{instance_attention_forward.18} parent=31 // pred_fallthru
        _
    $region32: #{instance_attention_forward.18} parent=5 // pred_fallthru
      _
    %p770 = scmp.le.s32.totalorder 2, %s9
    // Predicated region
    $region45: #{instance_attention_forward.18} parent=5 // pred_check
      %p771 = pneg %p770
    $region46: #{instance_attention_forward.18} parent=5 // pred_check_branch
      %773 = sbr.rel (%p771) target = $region48
    $region47: #{instance_attention_forward.18} parent=5 // pred_region
      %s774 = ssub.s32 %s9, 2
      // Predicated region
      $region49: #{instance_attention_forward.18} parent=47 // pred_check
        %p775 = pneg %p141
      $region50: #{instance_attention_forward.18} parent=47 // pred_check_branch
        %777 = sbr.rel (%p775) target = $region52
      $region51: #{instance_attention_forward.18} parent=47 // pred_region
        %s778 = smul.u32 16, %s22
        %p779 = scmp.lt.s32.totalorder %s778, 63
        %s780 = scalar_select %p779, %s778, 63
        %p781 = scmp.lt.s32.totalorder %s23, 0
        %s782 = scalar_select %p781, %s23, 0
        %s783 = sadd.s32 %s782, %s780
        %s784 = smul.addr %s783, 4
        %s785 = scalar_lea.vmem %s3, %s784
      $region52: #{instance_attention_forward.18} parent=47 // pred_fallthru
        _
    $region48: #{instance_attention_forward.18} parent=5 // pred_fallthru
      _
  $region6: #{instance_attention_forward.18} parent=0 // loop_footer
    %s13 = sadd.s32 1, %s9
  $region7: #{instance_attention_forward.18} parent=0 // loop_footer_branch
    %8 = sbr.rel target = $region3
  $region8: #{instance_attention_forward.18} parent=0 // loop_exit
    _

// kernel: instance_attention_forward.20
$region0: #{instance_attention_forward.20}
  #allocation0 [shape = 'u32[]', space=smem, size = 0x4, offset = 0x4, fixed_abs, tag = 'smem constant byte address 0x4 - core index']
  #allocation1 [shape = 'u32[144,128]{1,0:T(1,128)}', space=vmem, size = 0x12000, scoped, tag = 'internal scratch']
  %s0 = inlined_call_operand.vmem [shape: f32[2,2,256], index: 0, kind: input, shape index: {}]
  %s1 = inlined_call_operand.vmem [shape: bf16[2,256,64], index: 1, kind: input, shape index: {}]
  %s2 = inlined_call_operand.vmem [shape: bf16[2,2,64], index: 2, kind: output, shape index: {}]
  %s3 = sld [smem:[#allocation0]]
  $region41: #{instance_attention_forward.20} parent=0
    _
  %s5 = ssub.s32 1, %s3
  %s6 = scalar_select 0, %s5, %s3
  loop: start=0, step=1, limit=4
  $region2: #{instance_attention_forward.20} parent=0 // loop_pre_header
    _
  $region3: #{instance_attention_forward.20} parent=0 // loop_header
    %s8 = sphi 0, %s12
    %p9 = scmp.ge.s32.totalorder %s8, 4
    %s18 = sphi 0, %s20
    %s21 = sphi 0, %s18
    %s22 = sphi 0, %s21
    %s38 = sphi 0, %s22
    %s44 = sphi 0, %s46
    %s47 = sphi 0, %s44
    %s48 = sphi 0, %s47
    %s64 = sphi 0, %s48
    %s70 = sphi 0, %s72
    %s73 = sphi 0, %s70
    %s74 = sphi 0, %s73
    %s90 = sphi 0, %s74
  $region4: #{instance_attention_forward.20} parent=0 // loop_header_branch
    %11 = sbr.rel (%p9) target = $region8
  $region5: #{instance_attention_forward.20} parent=0 // loop_body
    %s13 = ssub.s32 %s8, 1
    %s14 = ssub.s32 %s8, 2
    %s15 = sadd.s32 %s8, 1
    %s16 = ssub.s32 %s8, %s15
    %p17 = scmp.eq.s32.totalorder %s16, 0
    %s19 = sadd.s32 %s18, 1
    %s20 = scalar_select %p17, %s18, %s19
    %p23 = pneg %p17
    %p24 = scmp.eq.s32.totalorder %s8, 1
    %p25 = por %p23, %p24
    %p26 = scmp.ne.s32.totalorder %s18, %s21
    %p27 = scmp.eq.s32.totalorder %s8, 0
    %p28 = por %p26, %p27
    %p29 = scmp.ne.s32.totalorder %s18, %s21
    %p30 = scmp.eq.s32.totalorder %s13, 1
    %p31 = por %p29, %p30
    %p32 = scmp.ne.s32.totalorder %s21, %s22
    %p33 = scmp.eq.s32.totalorder %s13, 0
    %p34 = por %p32, %p33
    %p35 = scmp.ne.s32.totalorder %s21, %s22
    %p36 = scmp.eq.s32.totalorder %s14, 1
    %p37 = por %p35, %p36
    %p39 = scmp.ne.s32.totalorder %s22, %s38
    %p40 = scmp.eq.s32.totalorder %s14, 0
    %p41 = por %p39, %p40
    %s42 = ssub.s32 %s8, %s15
    %p43 = scmp.eq.s32.totalorder %s42, 0
    %s45 = sadd.s32 %s44, 1
    %s46 = scalar_select %p43, %s44, %s45
    %p49 = pneg %p43
    %p50 = scmp.eq.s32.totalorder %s8, 1
    %p51 = por %p49, %p50
    %p52 = scmp.ne.s32.totalorder %s44, %s47
    %p53 = scmp.eq.s32.totalorder %s8, 0
    %p54 = por %p52, %p53
    %p55 = scmp.ne.s32.totalorder %s44, %s47
    %p56 = scmp.eq.s32.totalorder %s13, 1
    %p57 = por %p55, %p56
    %p58 = scmp.ne.s32.totalorder %s47, %s48
    %p59 = scmp.eq.s32.totalorder %s13, 0
    %p60 = por %p58, %p59
    %p61 = scmp.ne.s32.totalorder %s47, %s48
    %p62 = scmp.eq.s32.totalorder %s14, 1
    %p63 = por %p61, %p62
    %p65 = scmp.ne.s32.totalorder %s48, %s64
    %p66 = scmp.eq.s32.totalorder %s14, 0
    %p67 = por %p65, %p66
    %s68 = ssub.s32 %s8, %s15
    %p69 = scmp.eq.s32.totalorder %s68, 0
    %s71 = sadd.s32 %s70, 1
    %s72 = scalar_select %p69, %s70, %s71
    %p75 = pneg %p69
    %p76 = scmp.eq.s32.totalorder %s8, 1
    %p77 = por %p75, %p76
    %p78 = scmp.ne.s32.totalorder %s70, %s73
    %p79 = scmp.eq.s32.totalorder %s8, 0
    %p80 = por %p78, %p79
    %p81 = scmp.ne.s32.totalorder %s70, %s73
    %p82 = scmp.eq.s32.totalorder %s13, 1
    %p83 = por %p81, %p82
    %p84 = scmp.ne.s32.totalorder %s73, %s74
    %p85 = scmp.eq.s32.totalorder %s13, 0
    %p86 = por %p84, %p85
    %p87 = scmp.ne.s32.totalorder %s73, %s74
    %p88 = scmp.eq.s32.totalorder %s14, 1
    %p89 = por %p87, %p88
    %p91 = scmp.ne.s32.totalorder %s74, %s90
    %p92 = scmp.eq.s32.totalorder %s14, 0
    %p93 = por %p91, %p92
    %p94 = scmp.le.s32.totalorder 1, %s8
    %p95 = scmp.lt.s32.totalorder %s8, 3
    %p96 = pnand %p94, %p95
    %p97 = pneg %p96
    // Predicated region
    $region9: #{instance_attention_forward.20} parent=5 // pred_check
      _
    $region10: #{instance_attention_forward.20} parent=5 // pred_check_branch
      %99 = sbr.rel (%p96) target = $region12
    $region11: #{instance_attention_forward.20} parent=5 // pred_region
      %s100 = ssub.s32 %s8, 1
    $region12: #{instance_attention_forward.20} parent=5 // pred_fallthru
      _
    %p101 = scmp.lt.s32.totalorder %s8, 2
    // Predicated region
    $region13: #{instance_attention_forward.20} parent=5 // pred_check
      %p102 = pneg %p101
    $region14: #{instance_attention_forward.20} parent=5 // pred_check_branch
      %104 = sbr.rel (%p102) target = $region16
    $region15: #{instance_attention_forward.20} parent=5 // pred_region
      // Predicated region
      $region17: #{instance_attention_forward.20} parent=15 // pred_check
        %p105 = pneg %p28
      $region18: #{instance_attention_forward.20} parent=15 // pred_check_branch
        %107 = sbr.rel (%p105) target = $region20
      $region19: #{instance_attention_forward.20} parent=15 // pred_region
        %p108 = scmp.lt.s32.totalorder %s8, 1
        %s109 = scalar_select %p108, %s8, 1
        %s110 = smul.addr %s109, 2
        %s111 = smul.addr %s110, 2
        %s112 = scalar_lea.vmem %s0, %s111
      $region20: #{instance_attention_forward.20} parent=15 // pred_fallthru
        _
      // Predicated region
      $region21: #{instance_attention_forward.20} parent=15 // pred_check
        %p113 = pneg %p54
      $region22: #{instance_attention_forward.20} parent=15 // pred_check_branch
        %115 = sbr.rel (%p113) target = $region24
      $region23: #{instance_attention_forward.20} parent=15 // pred_region
        %p116 = scmp.lt.s32.totalorder %s8, 1
        %s117 = scalar_select %p116, %s8, 1
        %s118 = smul.addr %s117, 32
        %s119 = smul.addr %s118, 4
        %s120 = scalar_lea.vmem %s1, %s119
      $region24: #{instance_attention_forward.20} parent=15 // pred_fallthru
        _
    $region16: #{instance_attention_forward.20} parent=5 // pred_fallthru
      _
    %p121 = scmp.le.s32.totalorder 1, %s8
    %p122 = scmp.lt.s32.totalorder %s8, 3
    %p123 = pnand %p121, %p122
    %p124 = pneg %p123
    // Predicated region
    $region25: #{instance_attention_forward.20} parent=5 // pred_check
      _
    $region26: #{instance_attention_forward.20} parent=5 // pred_check_branch
      %126 = sbr.rel (%p123) target = $region28
    $region27: #{instance_attention_forward.20} parent=5 // pred_region
      %s127 = ssub.s32 %s8, 1
      %p128 = scmp.lt.s32.totalorder %s13, 1
      %s129 = scalar_select %p128, %s13, 1
      %s130 = smul.addr %s129, 2
      %s131 = smul.addr %s130, 2
      %s132 = scalar_lea.vmem %s0, %s131
      %p133 = pneg %p34
      %p134 = pneg %p31
      %p135 = scmp.lt.s32.totalorder %s13, 1
      %s136 = scalar_select %p135, %s13, 1
      %s137 = smul.addr %s136, 32
      %s138 = smul.addr %s137, 4
      %s139 = scalar_lea.vmem %s1, %s138
      %p140 = pneg %p60
      %p141 = pneg %p57
      %p142 = pneg %p86
      %p143 = pneg %p83
      %p144 = scmp.lt.s32.totalorder %s13, 1
      %s145 = scalar_select %p144, %s13, 1
      %s146 = scalar_lea.vmem %s2, %s145
      %p147 = scmp.lt.s32.totalorder %s13, 1
      %s148 = scalar_select %p147, %s13, 1
      %s149 = smul.addr %s148, 2
      %s150 = smul.addr %s149, 2
      %s151 = scalar_lea.vmem %s0, %s150
      %p152 = scmp.lt.s32.totalorder %s13, 1
      %s153 = scalar_select %p152, %s13, 1
      %s154 = smul.addr %s153, 32
      %s155 = smul.addr %s154, 4
      %s156 = scalar_lea.vmem %s1, %s155
      %p157 = scmp.lt.s32.totalorder %s13, 1
      %s158 = scalar_select %p157, %s13, 1
      %s159 = scalar_lea.vmem %s2, %s158
      %v161 = vld [vmem:[%s151] sm:$0xf]
      %v162 = vld [vmem:[%s156] sm:$0xf]
      %v163 = vld [vmem:[%s156 + $0x4] sm:$0xf]
      %v164 = vld [vmem:[%s156 + $0x8] sm:$0xf]
      %v165 = vld [vmem:[%s156 + $0xc] sm:$0xf]
      %v166 = vld [vmem:[%s156 + $0x10] sm:$0xf]
      %v167 = vld [vmem:[%s156 + $0x14] sm:$0xf]
      %v168 = vld [vmem:[%s156 + $0x18] sm:$0xf]
      %v169 = vld [vmem:[%s156 + $0x1c] sm:$0xf]
      %v170 = vld [vmem:[%s156 + $0x20] sm:$0xf]
      %v171 = vld [vmem:[%s156 + $0x24] sm:$0xf]
      %v172 = vld [vmem:[%s156 + $0x28] sm:$0xf]
      %v173 = vld [vmem:[%s156 + $0x2c] sm:$0xf]
      %v174 = vld [vmem:[%s156 + $0x30] sm:$0xf]
      %v175 = vld [vmem:[%s156 + $0x34] sm:$0xf]
      %v176 = vld [vmem:[%s156 + $0x38] sm:$0xf]
      %v177 = vld [vmem:[%s156 + $0x3c] sm:$0xf]
      %v178 = vld [vmem:[%s156 + $0x40] sm:$0xf]
      %v179 = vld [vmem:[%s156 + $0x44] sm:$0xf]
      %v180 = vld [vmem:[%s156 + $0x48] sm:$0xf]
      %v181 = vld [vmem:[%s156 + $0x4c] sm:$0xf]
      %v182 = vld [vmem:[%s156 + $0x50] sm:$0xf]
      %v183 = vld [vmem:[%s156 + $0x54] sm:$0xf]
      %v184 = vld [vmem:[%s156 + $0x58] sm:$0xf]
      %v185 = vld [vmem:[%s156 + $0x5c] sm:$0xf]
      %v186 = vld [vmem:[%s156 + $0x60] sm:$0xf]
      %v187 = vld [vmem:[%s156 + $0x64] sm:$0xf]
      %v188 = vld [vmem:[%s156 + $0x68] sm:$0xf]
      %v189 = vld [vmem:[%s156 + $0x6c] sm:$0xf]
      %v190 = vld [vmem:[%s156 + $0x70] sm:$0xf]
      %v191 = vld [vmem:[%s156 + $0x74] sm:$0xf]
      %v192 = vld [vmem:[%s156 + $0x78] sm:$0xf]
      %v193 = vld [vmem:[%s156 + $0x7c] sm:$0xf]
      %vm194 = vcmp.gt.f32.partialorder %v161, -0.84729785
      %v195 = vsel %vm194, %v161, -10000000.0
      %v196 = vmul.f32 %v195, 0.25
      %v197 = vmul.f32 %v196, 1.442695
      %v198 = vpow.pop %v197
      %v201 = vunpack.c.l.s4 1983009808
      %v202 = vunpack.c.0.s8 %v201
      %v203 = vlaneseq
      %v204 = vshrl.u32 %v203, 7
      %v205 = vsub.s32 %v202, %v204
      %v206 = vrot.slane %v198, %v205
      %v207 = vcombine.high %v206, %v206
      %vm210 = vcmask 1041408
      %v211 = vsel %vm210, %v206, 0.0
      %v212 = vsel %vm210, %v207, 0.0
      %v213 = vadd.f32 %v211, %v212
      %214 = vadd.xlane.f32.xlu0 %v213
      %v215 = vpop.xlane.xlu0 %214
      %v216 = vadd.f32 %v215, 1e-07
      %v217 = vrcp.pop %v216
      %v220 = vunpack.c.l.s4 269488144
      %v221 = vunpack.c.0.s8 %v220
      %v222 = vlaneseq
      %v223 = vshrl.u32 %v222, 7
      %v224 = vsub.s32 %v221, %v223
      %v225 = vrot.slane %v217, %v224
      %v227 = vmul.f32 %v198, %v225
      %v230 = vunpack.c.l.s4 1983009808
      %v231 = vunpack.c.0.s8 %v230
      %v232 = vlaneseq
      %v233 = vshrl.u32 %v232, 7
      %v234 = vsub.s32 %v231, %v233
      %v235 = vrot.slane %v227, %v234
      %v236 = vcombine.high %v235, %v235
      %v239 = vpack.c.bf16 %v235, %v235
      %v240 = vpack.c.bf16 %v236, %v236
      %v273 = vunpack.c.l.b16 %v162
      %v274 = vunpack.c.l.b16 %v163
      %v275 = vunpack.c.l.b16 %v164
      %v276 = vunpack.c.l.b16 %v165
      %v277 = vunpack.c.l.b16 %v166
      %v278 = vunpack.c.l.b16 %v167
      %v279 = vunpack.c.l.b16 %v168
      %v280 = vunpack.c.l.b16 %v169
      %v281 = vunpack.c.l.b16 %v170
      %v282 = vunpack.c.l.b16 %v171
      %v283 = vunpack.c.l.b16 %v172
      %v284 = vunpack.c.l.b16 %v173
      %v285 = vunpack.c.l.b16 %v174
      %v286 = vunpack.c.l.b16 %v175
      %v287 = vunpack.c.l.b16 %v176
      %v288 = vunpack.c.l.b16 %v177
      %v289 = vunpack.c.l.b16 %v178
      %v290 = vunpack.c.l.b16 %v179
      %v291 = vunpack.c.l.b16 %v180
      %v292 = vunpack.c.l.b16 %v181
      %v293 = vunpack.c.l.b16 %v182
      %v294 = vunpack.c.l.b16 %v183
      %v295 = vunpack.c.l.b16 %v184
      %v296 = vunpack.c.l.b16 %v185
      %v297 = vunpack.c.l.b16 %v186
      %v298 = vunpack.c.l.b16 %v187
      %v299 = vunpack.c.l.b16 %v188
      %v300 = vunpack.c.l.b16 %v189
      %v301 = vunpack.c.l.b16 %v190
      %v302 = vunpack.c.l.b16 %v191
      %v303 = vunpack.c.l.b16 %v192
      %v304 = vunpack.c.l.b16 %v193
      %v305 = vpack.c.b16 %v274, %v273
      %v306 = vpack.c.b16 %v276, %v275
      %v307 = vpack.c.b16 %v278, %v277
      %v308 = vpack.c.b16 %v280, %v279
      %v309 = vpack.c.b16 %v282, %v281
      %v310 = vpack.c.b16 %v284, %v283
      %v311 = vpack.c.b16 %v286, %v285
      %v312 = vpack.c.b16 %v288, %v287
      %v313 = vpack.c.b16 %v290, %v289
      %v314 = vpack.c.b16 %v292, %v291
      %v315 = vpack.c.b16 %v294, %v293
      %v316 = vpack.c.b16 %v296, %v295
      %v317 = vpack.c.b16 %v298, %v297
      %v318 = vpack.c.b16 %v300, %v299
      %v319 = vpack.c.b16 %v302, %v301
      %v320 = vpack.c.b16 %v304, %v303
      %337 = vmatprep.subr.bf16.mxu0 0
      %338 = vmatpush1.bf16.msra.mxu0 %v305
      %339 = vmatprep.subr.bf16.mxu0 0
      %340 = vmatpush1.bf16.msra.mxu0 %v306
      %341 = vmatprep.subr.bf16.mxu0 0
      %342 = vmatpush1.bf16.msra.mxu0 %v307
      %343 = vmatprep.subr.bf16.mxu0 0
      %344 = vmatpush1.bf16.msra.mxu0 %v308
      %345 = vmatprep.subr.bf16.mxu0 0
      %346 = vmatpush1.bf16.msra.mxu0 %v309
      %347 = vmatprep.subr.bf16.mxu0 0
      %348 = vmatpush1.bf16.msra.mxu0 %v310
      %349 = vmatprep.subr.bf16.mxu0 0
      %350 = vmatpush1.bf16.msra.mxu0 %v311
      %351 = vmatprep.subr.bf16.mxu0 0
      %352 = vmatpush1.bf16.msra.mxu0 %v312
      %353 = vmatprep.subr.bf16.mxu0 0
      %354 = vmatpush1.bf16.msra.mxu0 %v313
      %355 = vmatprep.subr.bf16.mxu0 0
      %356 = vmatpush1.bf16.msra.mxu0 %v314
      %357 = vmatprep.subr.bf16.mxu0 0
      %358 = vmatpush1.bf16.msra.mxu0 %v315
      %359 = vmatprep.subr.bf16.mxu0 0
      %360 = vmatpush1.bf16.msra.mxu0 %v316
      %361 = vmatprep.subr.bf16.mxu0 0
      %362 = vmatpush1.bf16.msra.mxu0 %v317
      %363 = vmatprep.subr.bf16.mxu0 0
      %364 = vmatpush1.bf16.msra.mxu0 %v318
      %365 = vmatprep.subr.bf16.mxu0 0
      %366 = vmatpush1.bf16.msra.mxu0 %v319
      %367 = vmatprep.subr.bf16.mxu0 0
      %368 = vmatpush1.bf16.msra.mxu0 %v320
      %369 = vmatprep.mubr.bf16.mxu0 %v240
      %370 = vmatmul.mubr.bf16.gmra.mrb[0].mxu0 %v239
      %v371 = vpop.f32.mrb[0].mxu0
      %v372 = vadd.f32 0.0, %v371
      %v373 = vpop.f32.mrb[0].mxu0
      %v374 = vpop.f32.mrb[0].mxu0
      %v375 = vpop.f32.mrb[0].mxu0
      %376 = vdwg.mxu0
      %v377 = vpack.c.bf16 %v372, %v372
      %vm378 = vcmask 516096
      %379 = vst.msk [vmem:[%s159] sm:$0x1] %vm378, %v377
      %p380 = scmp.lt.s32.totalorder %s13, 1
      %s381 = scalar_select %p380, %s13, 1
      %s382 = scalar_lea.vmem %s2, %s381
      // Predicated region
      $region29: #{instance_attention_forward.20} parent=27 // pred_check
        %p383 = pneg %p83
      $region30: #{instance_attention_forward.20} parent=27 // pred_check_branch
        %385 = sbr.rel (%p383) target = $region32
      $region31: #{instance_attention_forward.20} parent=27 // pred_region
        _
      $region32: #{instance_attention_forward.20} parent=27 // pred_fallthru
        _
    $region28: #{instance_attention_forward.20} parent=5 // pred_fallthru
      _
    %p386 = scmp.le.s32.totalorder 2, %s8
    // Predicated region
    $region33: #{instance_attention_forward.20} parent=5 // pred_check
      %p387 = pneg %p386
    $region34: #{instance_attention_forward.20} parent=5 // pred_check_branch
      %389 = sbr.rel (%p387) target = $region36
    $region35: #{instance_attention_forward.20} parent=5 // pred_region
      %s390 = ssub.s32 %s8, 2
      // Predicated region
      $region37: #{instance_attention_forward.20} parent=35 // pred_check
        %p391 = pneg %p89
      $region38: #{instance_attention_forward.20} parent=35 // pred_check_branch
        %393 = sbr.rel (%p391) target = $region40
      $region39: #{instance_attention_forward.20} parent=35 // pred_region
        %p394 = scmp.lt.s32.totalorder %s14, 1
        %s395 = scalar_select %p394, %s14, 1
        %s396 = scalar_lea.vmem %s2, %s395
      $region40: #{instance_attention_forward.20} parent=35 // pred_fallthru
        _
    $region36: #{instance_attention_forward.20} parent=5 // pred_fallthru
      _
  $region6: #{instance_attention_forward.20} parent=0 // loop_footer
    %s12 = sadd.s32 1, %s8
  $region7: #{instance_attention_forward.20} parent=0 // loop_footer_branch
    %7 = sbr.rel target = $region3
  $region8: #{instance_attention_forward.20} parent=0 // loop_exit
    _

// kernel: instance_attention_forward.19
$region0: #{instance_attention_forward.19}
  #allocation0 [shape = 'u32[]', space=smem, size = 0x4, offset = 0x4, fixed_abs, tag = 'smem constant byte address 0x4 - core index']
  #allocation1 [shape = 'u32[144,128]{1,0:T(1,128)}', space=vmem, size = 0x12000, scoped, tag = 'internal scratch']
  #allocation2 [shape = 'f32[128,64]{1,0:T(8,128)}', space=vmem, size = 0x10000, scoped, tag = 'scratch operand']
  %s0 = inlined_call_operand.vmem [shape: bf16[512,144], index: 0, kind: input, shape index: {}]
  %s1 = inlined_call_operand.vmem [shape: bf16[144,64], index: 1, kind: input, shape index: {}]
  %s2 = inlined_call_operand.vmem [shape: f32[1,64], index: 2, kind: input, shape index: {}]
  %s3 = inlined_call_operand.vmem [shape: bf16[512,64], index: 3, kind: output, shape index: {}]
  %s4 = sld [smem:[#allocation0]]
  $region53: #{instance_attention_forward.19} parent=0
    _
  %s6 = ssub.s32 1, %s4
  %s7 = scalar_select 0, %s6, %s4
  loop: start=0, step=1, limit=6
  $region2: #{instance_attention_forward.19} parent=0 // loop_pre_header
    _
  $region3: #{instance_attention_forward.19} parent=0 // loop_header
    %s9 = sphi 0, %s13
    %p10 = scmp.ge.s32.totalorder %s9, 6
    %s16 = sphi 0, %s35
    %s17 = sphi 0, %s31
    %s18 = sphi 0, %s27
    %s19 = sphi 0, %s16
    %s20 = sphi 0, %s17
    %s21 = sphi 0, %s18
    %s22 = sphi 0, %s19
    %s23 = sphi 0, %s20
    %s24 = sphi 0, %s21
    %s40 = sphi 0, %s42
    %s43 = sphi 0, %s40
    %s44 = sphi 0, %s43
    %s60 = sphi 0, %s44
    %s68 = sphi 0, %s70
    %s71 = sphi 0, %s68
    %s72 = sphi 0, %s71
    %s88 = sphi 0, %s72
    %s94 = sphi 0, %s96
    %s97 = sphi 0, %s94
    %s98 = sphi 0, %s97
    %s114 = sphi 0, %s98
    %s122 = sphi 0, %s124
    %s125 = sphi 0, %s122
    %s126 = sphi 0, %s125
    %s142 = sphi 0, %s126
  $region4: #{instance_attention_forward.19} parent=0 // loop_header_branch
    %12 = sbr.rel (%p10) target = $region8
  $region5: #{instance_attention_forward.19} parent=0 // loop_body
    %s14 = ssub.s32 %s9, 1
    %s15 = ssub.s32 %s9, 2
    %s25 = sadd.s32 1, %s18
    %p26 = scmp.ge.s32.totalorder %s25, 1
    %s27 = scalar_select %p26, 0, %s25
    %s28 = sadd.s32 1, %s17
    %s29 = scalar_select %p26, %s28, %s17
    %p30 = scmp.ge.s32.totalorder %s29, 1
    %s31 = scalar_select %p30, 0, %s29
    %s32 = sadd.s32 1, %s16
    %s33 = scalar_select %p30, %s32, %s16
    %p34 = scmp.ge.s32.totalorder %s33, 4
    %s35 = scalar_select %p34, 0, %s33
    %s36 = ssub.s32 %s16, %s35
    %s37 = ssub.s32 %s18, %s27
    %s38 = sor.u32 %s36, %s37
    %p39 = scmp.eq.s32.totalorder %s38, 0
    %s41 = sadd.s32 %s40, 1
    %s42 = scalar_select %p39, %s40, %s41
    %p45 = pneg %p39
    %p46 = scmp.eq.s32.totalorder %s9, 3
    %p47 = por %p45, %p46
    %p48 = scmp.ne.s32.totalorder %s40, %s43
    %p49 = scmp.eq.s32.totalorder %s9, 0
    %p50 = por %p48, %p49
    %p51 = scmp.ne.s32.totalorder %s40, %s43
    %p52 = scmp.eq.s32.totalorder %s14, 3
    %p53 = por %p51, %p52
    %p54 = scmp.ne.s32.totalorder %s43, %s44
    %p55 = scmp.eq.s32.totalorder %s14, 0
    %p56 = por %p54, %p55
    %p57 = scmp.ne.s32.totalorder %s43, %s44
    %p58 = scmp.eq.s32.totalorder %s15, 3
    %p59 = por %p57, %p58
    %p61 = scmp.ne.s32.totalorder %s44, %s60
    %p62 = scmp.eq.s32.totalorder %s15, 0
    %p63 = por %p61, %p62
    %s64 = ssub.s32 %s18, %s27
    %s65 = ssub.s32 %s17, %s31
    %s66 = sor.u32 %s64, %s65
    %p67 = scmp.eq.s32.totalorder %s66, 0
    %s69 = sadd.s32 %s68, 1
    %s70 = scalar_select %p67, %s68, %s69
    %p73 = pneg %p67
    %p74 = scmp.eq.s32.totalorder %s9, 3
    %p75 = por %p73, %p74
    %p76 = scmp.ne.s32.totalorder %s68, %s71
    %p77 = scmp.eq.s32.totalorder %s9, 0
    %p78 = por %p76, %p77
    %p79 = scmp.ne.s32.totalorder %s68, %s71
    %p80 = scmp.eq.s32.totalorder %s14, 3
    %p81 = por %p79, %p80
    %p82 = scmp.ne.s32.totalorder %s71, %s72
    %p83 = scmp.eq.s32.totalorder %s14, 0
    %p84 = por %p82, %p83
    %p85 = scmp.ne.s32.totalorder %s71, %s72
    %p86 = scmp.eq.s32.totalorder %s15, 3
    %p87 = por %p85, %p86
    %p89 = scmp.ne.s32.totalorder %s72, %s88
    %p90 = scmp.eq.s32.totalorder %s15, 0
    %p91 = por %p89, %p90
    %s92 = ssub.s32 %s17, %s31
    %p93 = scmp.eq.s32.totalorder %s92, 0
    %s95 = sadd.s32 %s94, 1
    %s96 = scalar_select %p93, %s94, %s95
    %p99 = pneg %p93
    %p100 = scmp.eq.s32.totalorder %s9, 3
    %p101 = por %p99, %p100
    %p102 = scmp.ne.s32.totalorder %s94, %s97
    %p103 = scmp.eq.s32.totalorder %s9, 0
    %p104 = por %p102, %p103
    %p105 = scmp.ne.s32.totalorder %s94, %s97
    %p106 = scmp.eq.s32.totalorder %s14, 3
    %p107 = por %p105, %p106
    %p108 = scmp.ne.s32.totalorder %s97, %s98
    %p109 = scmp.eq.s32.totalorder %s14, 0
    %p110 = por %p108, %p109
    %p111 = scmp.ne.s32.totalorder %s97, %s98
    %p112 = scmp.eq.s32.totalorder %s15, 3
    %p113 = por %p111, %p112
    %p115 = scmp.ne.s32.totalorder %s98, %s114
    %p116 = scmp.eq.s32.totalorder %s15, 0
    %p117 = por %p115, %p116
    %s118 = ssub.s32 %s16, %s35
    %s119 = ssub.s32 %s17, %s31
    %s120 = sor.u32 %s118, %s119
    %p121 = scmp.eq.s32.totalorder %s120, 0
    %s123 = sadd.s32 %s122, 1
    %s124 = scalar_select %p121, %s122, %s123
    %p127 = pneg %p121
    %p128 = scmp.eq.s32.totalorder %s9, 3
    %p129 = por %p127, %p128
    %p130 = scmp.ne.s32.totalorder %s122, %s125
    %p131 = scmp.eq.s32.totalorder %s9, 0
    %p132 = por %p130, %p131
    %p133 = scmp.ne.s32.totalorder %s122, %s125
    %p134 = scmp.eq.s32.totalorder %s14, 3
    %p135 = por %p133, %p134
    %p136 = scmp.ne.s32.totalorder %s125, %s126
    %p137 = scmp.eq.s32.totalorder %s14, 0
    %p138 = por %p136, %p137
    %p139 = scmp.ne.s32.totalorder %s125, %s126
    %p140 = scmp.eq.s32.totalorder %s15, 3
    %p141 = por %p139, %p140
    %p143 = scmp.ne.s32.totalorder %s126, %s142
    %p144 = scmp.eq.s32.totalorder %s15, 0
    %p145 = por %p143, %p144
    %p146 = scmp.le.s32.totalorder 1, %s9
    %p147 = scmp.lt.s32.totalorder %s9, 5
    %p148 = pnand %p146, %p147
    %p149 = pneg %p148
    // Predicated region
    $region9: #{instance_attention_forward.19} parent=5 // pred_check
      _
    $region10: #{instance_attention_forward.19} parent=5 // pred_check_branch
      %151 = sbr.rel (%p148) target = $region12
    $region11: #{instance_attention_forward.19} parent=5 // pred_region
      %s152 = ssub.s32 %s9, 1
      // Predicated region
      $region13: #{instance_attention_forward.19} parent=11 // pred_check
        %p153 = pneg %p84
      $region14: #{instance_attention_forward.19} parent=11 // pred_check_branch
        %155 = sbr.rel (%p153) target = $region16
      $region15: #{instance_attention_forward.19} parent=11 // pred_region
        %s156 = smul.u32 18, %s21
        %p157 = scmp.lt.s32.totalorder %s156, 17
        %s158 = scalar_select %p157, %s156, 17
        %p159 = scmp.lt.s32.totalorder %s20, 0
        %s160 = scalar_select %p159, %s20, 0
        %s161 = sadd.s32 %s160, %s158
        %s162 = smul.addr %s161, 4
        %s163 = scalar_lea.vmem %s1, %s162
        %s164 = smul.u32 18, %s21
      $region16: #{instance_attention_forward.19} parent=11 // pred_fallthru
        _
      // Predicated region
      $region17: #{instance_attention_forward.19} parent=11 // pred_check
        %p165 = pneg %p110
      $region18: #{instance_attention_forward.19} parent=11 // pred_check_branch
        %167 = sbr.rel (%p165) target = $region20
      $region19: #{instance_attention_forward.19} parent=11 // pred_region
        %p168 = scmp.lt.s32.totalorder %s20, 0
        %s169 = scalar_select %p168, %s20, 0
        %s170 = scalar_lea.vmem %s2, %s169
      $region20: #{instance_attention_forward.19} parent=11 // pred_fallthru
        _
    $region12: #{instance_attention_forward.19} parent=5 // pred_fallthru
      _
    %p171 = scmp.lt.s32.totalorder %s9, 4
    // Predicated region
    $region21: #{instance_attention_forward.19} parent=5 // pred_check
      %p172 = pneg %p171
    $region22: #{instance_attention_forward.19} parent=5 // pred_check_branch
      %174 = sbr.rel (%p172) target = $region24
    $region23: #{instance_attention_forward.19} parent=5 // pred_region
      // Predicated region
      $region25: #{instance_attention_forward.19} parent=23 // pred_check
        %p175 = pneg %p50
      $region26: #{instance_attention_forward.19} parent=23 // pred_check_branch
        %177 = sbr.rel (%p175) target = $region28
      $region27: #{instance_attention_forward.19} parent=23 // pred_region
        %s178 = smul.u32 16, %s16
        %s179 = smul.u32 2, %s18
        %p180 = scmp.lt.s32.totalorder %s178, 63
        %s181 = scalar_select %p180, %s178, 63
        %p182 = scmp.lt.s32.totalorder %s179, 1
        %s183 = scalar_select %p182, %s179, 1
        %s184 = smul.addr %s181, 2
        %s185 = sadd.s32 %s183, %s184
        %s186 = smul.addr %s185, 4
        %s187 = scalar_lea.vmem %s0, %s186
        %s188 = smul.u32 16, %s16
        %s189 = smul.u32 2, %s18
      $region28: #{instance_attention_forward.19} parent=23 // pred_fallthru
        _
    $region24: #{instance_attention_forward.19} parent=5 // pred_fallthru
      _
    %p190 = scmp.le.s32.totalorder 1, %s9
    %p191 = scmp.lt.s32.totalorder %s9, 5
    %p192 = pnand %p190, %p191
    %p193 = pneg %p192
    // Predicated region
    $region29: #{instance_attention_forward.19} parent=5 // pred_check
      _
    $region30: #{instance_attention_forward.19} parent=5 // pred_check_branch
      %195 = sbr.rel (%p192) target = $region32
    $region31: #{instance_attention_forward.19} parent=5 // pred_region
      %s196 = ssub.s32 %s9, 1
      %s197 = smul.u32 16, %s19
      %s198 = smul.u32 2, %s21
      %p199 = scmp.lt.s32.totalorder %s197, 63
      %s200 = scalar_select %p199, %s197, 63
      %p201 = scmp.lt.s32.totalorder %s198, 1
      %s202 = scalar_select %p201, %s198, 1
      %s203 = smul.addr %s200, 2
      %s204 = sadd.s32 %s202, %s203
      %s205 = smul.addr %s204, 4
      %s206 = scalar_lea.vmem %s0, %s205
      %p207 = pneg %p56
      %p208 = pneg %p53
      %s209 = smul.u32 18, %s21
      %p210 = scmp.lt.s32.totalorder %s209, 17
      %s211 = scalar_select %p210, %s209, 17
      %p212 = scmp.lt.s32.totalorder %s20, 0
      %s213 = scalar_select %p212, %s20, 0
      %s214 = sadd.s32 %s213, %s211
      %s215 = smul.addr %s214, 4
      %s216 = scalar_lea.vmem %s1, %s215
      %p217 = pneg %p84
      %p218 = pneg %p81
      %p219 = scmp.lt.s32.totalorder %s20, 0
      %s220 = scalar_select %p219, %s20, 0
      %s221 = scalar_lea.vmem %s2, %s220
      %p222 = pneg %p110
      %p223 = pneg %p107
      %p224 = pneg %p138
      %p225 = pneg %p135
      %s226 = smul.u32 16, %s19
      %p227 = scmp.lt.s32.totalorder %s226, 63
      %s228 = scalar_select %p227, %s226, 63
      %p229 = scmp.lt.s32.totalorder %s20, 0
      %s230 = scalar_select %p229, %s20, 0
      %s231 = sadd.s32 %s230, %s228
      %s232 = smul.addr %s231, 4
      %s233 = scalar_lea.vmem %s3, %s232
      %s234 = smul.u32 16, %s19
      %s235 = smul.u32 2, %s21
      %p236 = scmp.lt.s32.totalorder %s234, 63
      %s237 = scalar_select %p236, %s234, 63
      %p238 = scmp.lt.s32.totalorder %s235, 1
      %s239 = scalar_select %p238, %s235, 1
      %s240 = smul.addr %s237, 2
      %s241 = sadd.s32 %s239, %s240
      %s242 = smul.addr %s241, 4
      %s243 = scalar_lea.vmem %s0, %s242
      %s244 = smul.u32 16, %s19
      %s245 = smul.u32 2, %s21
      %s246 = smul.u32 18, %s21
      %p247 = scmp.lt.s32.totalorder %s246, 17
      %s248 = scalar_select %p247, %s246, 17
      %p249 = scmp.lt.s32.totalorder %s20, 0
      %s250 = scalar_select %p249, %s20, 0
      %s251 = sadd.s32 %s250, %s248
      %s252 = smul.addr %s251, 4
      %s253 = scalar_lea.vmem %s1, %s252
      %s254 = smul.u32 18, %s21
      %p255 = scmp.lt.s32.totalorder %s20, 0
      %s256 = scalar_select %p255, %s20, 0
      %s257 = scalar_lea.vmem %s2, %s256
      %s258 = smul.u32 16, %s19
      %p259 = scmp.lt.s32.totalorder %s258, 63
      %s260 = scalar_select %p259, %s258, 63
      %p261 = scmp.lt.s32.totalorder %s20, 0
      %s262 = scalar_select %p261, %s20, 0
      %s263 = sadd.s32 %s262, %s260
      %s264 = smul.addr %s263, 4
      %s265 = scalar_lea.vmem %s3, %s264
      %s266 = smul.u32 16, %s19
      %p268 = scmp.eq.s32.totalorder %s21, 0
      // Predicated region
      $region33: #{instance_attention_forward.19} parent=31 // pred_check
        %p269 = pneg %p268
      $region34: #{instance_attention_forward.19} parent=31 // pred_check_branch
        %271 = sbr.rel (%p269) target = $region36
      $region35: #{instance_attention_forward.19} parent=31 // pred_region
        %vm272 = vcmask 523264
        %273 = vst.msk [vmem:[#allocation2] sm:$0xff] %vm272, 0.0
        %274 = vst.msk [vmem:[#allocation2 + $0x8] sm:$0xff] %vm272, 0.0
        %275 = vst.msk [vmem:[#allocation2 + $0x10] sm:$0xff] %vm272, 0.0
        %276 = vst.msk [vmem:[#allocation2 + $0x18] sm:$0xff] %vm272, 0.0
        %277 = vst.msk [vmem:[#allocation2 + $0x20] sm:$0xff] %vm272, 0.0
        %278 = vst.msk [vmem:[#allocation2 + $0x28] sm:$0xff] %vm272, 0.0
        %279 = vst.msk [vmem:[#allocation2 + $0x30] sm:$0xff] %vm272, 0.0
        %280 = vst.msk [vmem:[#allocation2 + $0x38] sm:$0xff] %vm272, 0.0
        %281 = vst.msk [vmem:[#allocation2 + $0x40] sm:$0xff] %vm272, 0.0
        %282 = vst.msk [vmem:[#allocation2 + $0x48] sm:$0xff] %vm272, 0.0
        %283 = vst.msk [vmem:[#allocation2 + $0x50] sm:$0xff] %vm272, 0.0
        %284 = vst.msk [vmem:[#allocation2 + $0x58] sm:$0xff] %vm272, 0.0
        %285 = vst.msk [vmem:[#allocation2 + $0x60] sm:$0xff] %vm272, 0.0
        %286 = vst.msk [vmem:[#allocation2 + $0x68] sm:$0xff] %vm272, 0.0
        %287 = vst.msk [vmem:[#allocation2 + $0x70] sm:$0xff] %vm272, 0.0
        %288 = vst.msk [vmem:[#allocation2 + $0x78] sm:$0xff] %vm272, 0.0
      $region36: #{instance_attention_forward.19} parent=31 // pred_fallthru
        _
      %v289 = vld [vmem:[#allocation2] sm:$0xff]
      %v290 = vld [vmem:[#allocation2 + $0x8] sm:$0xff]
      %v291 = vld [vmem:[#allocation2 + $0x10] sm:$0xff]
      %v292 = vld [vmem:[#allocation2 + $0x18] sm:$0xff]
      %v293 = vld [vmem:[#allocation2 + $0x20] sm:$0xff]
      %v294 = vld [vmem:[#allocation2 + $0x28] sm:$0xff]
      %v295 = vld [vmem:[#allocation2 + $0x30] sm:$0xff]
      %v296 = vld [vmem:[#allocation2 + $0x38] sm:$0xff]
      %v297 = vld [vmem:[#allocation2 + $0x40] sm:$0xff]
      %v298 = vld [vmem:[#allocation2 + $0x48] sm:$0xff]
      %v299 = vld [vmem:[#allocation2 + $0x50] sm:$0xff]
      %v300 = vld [vmem:[#allocation2 + $0x58] sm:$0xff]
      %v301 = vld [vmem:[#allocation2 + $0x60] sm:$0xff]
      %v302 = vld [vmem:[#allocation2 + $0x68] sm:$0xff]
      %v303 = vld [vmem:[#allocation2 + $0x70] sm:$0xff]
      %v304 = vld [vmem:[#allocation2 + $0x78] sm:$0xff]
      %v305 = vld [vmem:[%s243] sm:$0xff]
      %v306 = vld [vmem:[%s243 + $0x8] sm:$0xff]
      %v307 = vld [vmem:[%s243 + $0x10] sm:$0xff]
      %v308 = vld [vmem:[%s243 + $0x18] sm:$0xff]
      %v309 = vld [vmem:[%s243 + $0x20] sm:$0xff]
      %v310 = vld [vmem:[%s243 + $0x28] sm:$0xff]
      %v311 = vld [vmem:[%s243 + $0x30] sm:$0xff]
      %v312 = vld [vmem:[%s243 + $0x38] sm:$0xff]
      %v313 = vld [vmem:[%s243 + $0x40] sm:$0xff]
      %v314 = vld [vmem:[%s243 + $0x48] sm:$0xff]
      %v315 = vld [vmem:[%s243 + $0x50] sm:$0xff]
      %v316 = vld [vmem:[%s243 + $0x58] sm:$0xff]
      %v317 = vld [vmem:[%s243 + $0x60] sm:$0xff]
      %v318 = vld [vmem:[%s243 + $0x68] sm:$0xff]
      %v319 = vld [vmem:[%s243 + $0x70] sm:$0xff]
      %v320 = vld [vmem:[%s243 + $0x78] sm:$0xff]
      %v321 = vld [vmem:[%s253] sm:$0xf]
      %v322 = vld [vmem:[%s253 + $0x4] sm:$0xf]
      %v323 = vld [vmem:[%s253 + $0x8] sm:$0xf]
      %v324 = vld [vmem:[%s253 + $0xc] sm:$0xf]
      %v325 = vld [vmem:[%s253 + $0x10] sm:$0xf]
      %v326 = vld [vmem:[%s253 + $0x14] sm:$0xf]
      %v327 = vld [vmem:[%s253 + $0x18] sm:$0xf]
      %v328 = vld [vmem:[%s253 + $0x1c] sm:$0xf]
      %v329 = vld [vmem:[%s253 + $0x20] sm:$0xf]
      %v330 = vld [vmem:[%s253 + $0x24] sm:$0xf]
      %v331 = vld [vmem:[%s253 + $0x28] sm:$0xf]
      %v332 = vld [vmem:[%s253 + $0x2c] sm:$0xf]
      %v333 = vld [vmem:[%s253 + $0x30] sm:$0xf]
      %v334 = vld [vmem:[%s253 + $0x34] sm:$0xf]
      %v335 = vld [vmem:[%s253 + $0x38] sm:$0xf]
      %v336 = vld [vmem:[%s253 + $0x3c] sm:$0xf]
      %v337 = vld [vmem:[%s253 + $0x40] sm:$0xf]
      %v338 = vld [vmem:[%s253 + $0x44] sm:$0xf]
      %v355 = vunpack.c.l.b16 %v305
      %v356 = vunpack.c.h.b16 %v305
      %v357 = vunpack.c.l.b16 %v306
      %v358 = vunpack.c.h.b16 %v306
      %v359 = vunpack.c.l.b16 %v307
      %v360 = vunpack.c.h.b16 %v307
      %v361 = vunpack.c.l.b16 %v308
      %v362 = vunpack.c.h.b16 %v308
      %v363 = vunpack.c.l.b16 %v309
      %v364 = vunpack.c.h.b16 %v309
      %v365 = vunpack.c.l.b16 %v310
      %v366 = vunpack.c.h.b16 %v310
      %v367 = vunpack.c.l.b16 %v311
      %v368 = vunpack.c.h.b16 %v311
      %v369 = vunpack.c.l.b16 %v312
      %v370 = vunpack.c.h.b16 %v312
      %v371 = vunpack.c.l.b16 %v313
      %v372 = vunpack.c.h.b16 %v313
      %v373 = vunpack.c.l.b16 %v314
      %v374 = vunpack.c.h.b16 %v314
      %v375 = vunpack.c.l.b16 %v315
      %v376 = vunpack.c.h.b16 %v315
      %v377 = vunpack.c.l.b16 %v316
      %v378 = vunpack.c.h.b16 %v316
      %v379 = vunpack.c.l.b16 %v317
      %v380 = vunpack.c.h.b16 %v317
      %v381 = vunpack.c.l.b16 %v318
      %v382 = vunpack.c.h.b16 %v318
      %v383 = vunpack.c.l.b16 %v319
      %v384 = vunpack.c.h.b16 %v319
      %v385 = vunpack.c.l.b16 %v320
      %v386 = vunpack.c.h.b16 %v320
      %v387 = vpack.c.b16 %v357, %v355
      %v388 = vpack.c.b16 %v358, %v356
      %v389 = vpack.c.b16 %v361, %v359
      %v390 = vpack.c.b16 %v362, %v360
      %v391 = vpack.c.b16 %v365, %v363
      %v392 = vpack.c.b16 %v366, %v364
      %v393 = vpack.c.b16 %v369, %v367
      %v394 = vpack.c.b16 %v370, %v368
      %v395 = vpack.c.b16 %v373, %v371
      %v396 = vpack.c.b16 %v374, %v372
      %v397 = vpack.c.b16 %v377, %v375
      %v398 = vpack.c.b16 %v378, %v376
      %v399 = vpack.c.b16 %v381, %v379
      %v400 = vpack.c.b16 %v382, %v380
      %v401 = vpack.c.b16 %v385, %v383
      %v402 = vpack.c.b16 %v386, %v384
      %v429 = vunpack.c.l.b16 %v321
      %v430 = vunpack.c.l.b16 %v322
      %v431 = vunpack.c.l.b16 %v323
      %v432 = vunpack.c.l.b16 %v324
      %v433 = vunpack.c.l.b16 %v325
      %v434 = vunpack.c.l.b16 %v326
      %v435 = vunpack.c.l.b16 %v327
      %v436 = vunpack.c.l.b16 %v328
      %v437 = vunpack.c.l.b16 %v329
      %v438 = vunpack.c.l.b16 %v330
      %v439 = vunpack.c.l.b16 %v331
      %v440 = vunpack.c.l.b16 %v332
      %v441 = vunpack.c.l.b16 %v333
      %v442 = vunpack.c.l.b16 %v334
      %v443 = vunpack.c.l.b16 %v335
      %v444 = vunpack.c.l.b16 %v336
      %v445 = vunpack.c.l.b16 %v337
      %v446 = vunpack.c.l.b16 %v338
      %v447 = vpack.c.b16 %v430, %v429
      %v448 = vpack.c.b16 %v432, %v431
      %v449 = vpack.c.b16 %v434, %v433
      %v450 = vpack.c.b16 %v436, %v435
      %v451 = vpack.c.b16 %v438, %v437
      %v452 = vpack.c.b16 %v440, %v439
      %v453 = vpack.c.b16 %v442, %v441
      %v454 = vpack.c.b16 %v444, %v443
      %v455 = vpack.c.b16 %v446, %v445
      %vm465 = vcmask 130048
      %v467 = vsel %vm465, %v388, 0
      %v470 = vsel %vm465, %v390, 0
      %v473 = vsel %vm465, %v392, 0
      %v476 = vsel %vm465, %v394, 0
      %v479 = vsel %vm465, %v396, 0
      %v482 = vsel %vm465, %v398, 0
      %v485 = vsel %vm465, %v400, 0
      %v488 = vsel %vm465, %v402, 0
      %490 = vmatprep.subr.bf16.mxu0 0
      %491 = vmatpush1.bf16.msra.mxu0 %v447
      %492 = vmatprep.subr.bf16.mxu0 0
      %493 = vmatpush1.bf16.msra.mxu0 %v448
      %494 = vmatprep.subr.bf16.mxu0 0
      %495 = vmatpush1.bf16.msra.mxu0 %v449
      %496 = vmatprep.subr.bf16.mxu0 0
      %497 = vmatpush1.bf16.msra.mxu0 %v450
      %498 = vmatprep.subr.bf16.mxu0 0
      %499 = vmatpush1.bf16.msra.mxu0 %v451
      %500 = vmatprep.subr.bf16.mxu0 0
      %501 = vmatpush1.bf16.msra.mxu0 %v452
      %502 = vmatprep.subr.bf16.mxu0 0
      %503 = vmatpush1.bf16.msra.mxu0 %v453
      %504 = vmatprep.subr.bf16.mxu0 0
      %505 = vmatpush1.bf16.msra.mxu0 %v454
      %506 = vmatprep.subr.bf16.mxu0 0
      %507 = vmatpush1.bf16.msra.mxu0 %v455
      %508 = vmatprep.subr.bf16.mxu0 0
      %509 = vmatpush1.bf16.msra.mxu0 0
      %510 = vmatprep.subr.bf16.mxu0 0
      %511 = vmatpush1.bf16.msra.mxu0 0
      %512 = vmatprep.subr.bf16.mxu0 0
      %513 = vmatpush1.bf16.msra.mxu0 0
      %514 = vmatprep.subr.bf16.mxu0 0
      %515 = vmatpush1.bf16.msra.mxu0 0
      %516 = vmatprep.subr.bf16.mxu0 0
      %517 = vmatpush1.bf16.msra.mxu0 0
      %518 = vmatprep.subr.bf16.mxu0 0
      %519 = vmatpush1.bf16.msra.mxu0 0
      %520 = vmatprep.subr.bf16.mxu0 0
      %521 = vmatpush1.bf16.msra.mxu0 0
      %522 = vmatprep.mubr.bf16.mxu0 %v467
      %523 = vmatmul.mubr.bf16.gmra.mrb[0].mxu0 %v387
      %v524 = vpop.f32.mrb[0].mxu0
      %v525 = vadd.f32 0.0, %v524
      %v526 = vpop.f32.mrb[0].mxu0
      %v527 = vpop.f32.mrb[0].mxu0
      %v528 = vadd.f32 0.0, %v527
      %v529 = vpop.f32.mrb[0].mxu0
      %530 = vmatprep.mubr.bf16.mxu0 %v470
      %531 = vmatmul.mubr.bf16.gmra.mrb[0].mxu0 %v389
      %v532 = vpop.f32.mrb[0].mxu0
      %v533 = vadd.f32 0.0, %v532
      %v534 = vpop.f32.mrb[0].mxu0
      %v535 = vpop.f32.mrb[0].mxu0
      %v536 = vadd.f32 0.0, %v535
      %v537 = vpop.f32.mrb[0].mxu0
      %538 = vmatprep.mubr.bf16.mxu0 %v473
      %539 = vmatmul.mubr.bf16.gmra.mrb[0].mxu0 %v391
      %v540 = vpop.f32.mrb[0].mxu0
      %v541 = vadd.f32 0.0, %v540
      %v542 = vpop.f32.mrb[0].mxu0
      %v543 = vpop.f32.mrb[0].mxu0
      %v544 = vadd.f32 0.0, %v543
      %v545 = vpop.f32.mrb[0].mxu0
      %546 = vmatprep.mubr.bf16.mxu0 %v476
      %547 = vmatmul.mubr.bf16.gmra.mrb[0].mxu0 %v393
      %v548 = vpop.f32.mrb[0].mxu0
      %v549 = vadd.f32 0.0, %v548
      %v550 = vpop.f32.mrb[0].mxu0
      %v551 = vpop.f32.mrb[0].mxu0
      %v552 = vadd.f32 0.0, %v551
      %v553 = vpop.f32.mrb[0].mxu0
      %554 = vmatprep.mubr.bf16.mxu0 %v479
      %555 = vmatmul.mubr.bf16.gmra.mrb[0].mxu0 %v395
      %v556 = vpop.f32.mrb[0].mxu0
      %v557 = vadd.f32 0.0, %v556
      %v558 = vpop.f32.mrb[0].mxu0
      %v559 = vpop.f32.mrb[0].mxu0
      %v560 = vadd.f32 0.0, %v559
      %v561 = vpop.f32.mrb[0].mxu0
      %562 = vmatprep.mubr.bf16.mxu0 %v482
      %563 = vmatmul.mubr.bf16.gmra.mrb[0].mxu0 %v397
      %v564 = vpop.f32.mrb[0].mxu0
      %v565 = vadd.f32 0.0, %v564
      %v566 = vpop.f32.mrb[0].mxu0
      %v567 = vpop.f32.mrb[0].mxu0
      %v568 = vadd.f32 0.0, %v567
      %v569 = vpop.f32.mrb[0].mxu0
      %570 = vmatprep.mubr.bf16.mxu0 %v485
      %571 = vmatmul.mubr.bf16.gmra.mrb[0].mxu0 %v399
      %v572 = vpop.f32.mrb[0].mxu0
      %v573 = vadd.f32 0.0, %v572
      %v574 = vpop.f32.mrb[0].mxu0
      %v575 = vpop.f32.mrb[0].mxu0
      %v576 = vadd.f32 0.0, %v575
      %v577 = vpop.f32.mrb[0].mxu0
      %578 = vmatprep.mubr.bf16.mxu0 %v488
      %579 = vmatmul.mubr.bf16.gmra.mrb[0].mxu0 %v401
      %v580 = vpop.f32.mrb[0].mxu0
      %v581 = vadd.f32 0.0, %v580
      %v582 = vpop.f32.mrb[0].mxu0
      %v583 = vpop.f32.mrb[0].mxu0
      %v584 = vadd.f32 0.0, %v583
      %v585 = vpop.f32.mrb[0].mxu0
      %586 = vdwg.mxu0
      %v587 = vadd.f32 %v289, %v525
      %v588 = vadd.f32 %v290, %v528
      %v589 = vadd.f32 %v291, %v533
      %v590 = vadd.f32 %v292, %v536
      %v591 = vadd.f32 %v293, %v541
      %v592 = vadd.f32 %v294, %v544
      %v593 = vadd.f32 %v295, %v549
      %v594 = vadd.f32 %v296, %v552
      %v595 = vadd.f32 %v297, %v557
      %v596 = vadd.f32 %v298, %v560
      %v597 = vadd.f32 %v299, %v565
      %v598 = vadd.f32 %v300, %v568
      %v599 = vadd.f32 %v301, %v573
      %v600 = vadd.f32 %v302, %v576
      %v601 = vadd.f32 %v303, %v581
      %v602 = vadd.f32 %v304, %v584
      %vm603 = vcmask 523264
      %604 = vst.msk [vmem:[#allocation2] sm:$0xff] %vm603, %v587
      %605 = vst.msk [vmem:[#allocation2 + $0x8] sm:$0xff] %vm603, %v588
      %606 = vst.msk [vmem:[#allocation2 + $0x10] sm:$0xff] %vm603, %v589
      %607 = vst.msk [vmem:[#allocation2 + $0x18] sm:$0xff] %vm603, %v590
      %608 = vst.msk [vmem:[#allocation2 + $0x20] sm:$0xff] %vm603, %v591
      %609 = vst.msk [vmem:[#allocation2 + $0x28] sm:$0xff] %vm603, %v592
      %610 = vst.msk [vmem:[#allocation2 + $0x30] sm:$0xff] %vm603, %v593
      %611 = vst.msk [vmem:[#allocation2 + $0x38] sm:$0xff] %vm603, %v594
      %612 = vst.msk [vmem:[#allocation2 + $0x40] sm:$0xff] %vm603, %v595
      %613 = vst.msk [vmem:[#allocation2 + $0x48] sm:$0xff] %vm603, %v596
      %614 = vst.msk [vmem:[#allocation2 + $0x50] sm:$0xff] %vm603, %v597
      %615 = vst.msk [vmem:[#allocation2 + $0x58] sm:$0xff] %vm603, %v598
      %616 = vst.msk [vmem:[#allocation2 + $0x60] sm:$0xff] %vm603, %v599
      %617 = vst.msk [vmem:[#allocation2 + $0x68] sm:$0xff] %vm603, %v600
      %618 = vst.msk [vmem:[#allocation2 + $0x70] sm:$0xff] %vm603, %v601
      %619 = vst.msk [vmem:[#allocation2 + $0x78] sm:$0xff] %vm603, %v602
      // Predicated region
      $region37: #{instance_attention_forward.19} parent=31 // pred_check
        %p620 = pneg %p268
      $region38: #{instance_attention_forward.19} parent=31 // pred_check_branch
        %622 = sbr.rel (%p620) target = $region40
      $region39: #{instance_attention_forward.19} parent=31 // pred_region
        %v623 = vld [vmem:[#allocation2] sm:$0xff]
        %v624 = vld [vmem:[#allocation2 + $0x8] sm:$0xff]
        %v625 = vld [vmem:[#allocation2 + $0x10] sm:$0xff]
        %v626 = vld [vmem:[#allocation2 + $0x18] sm:$0xff]
        %v627 = vld [vmem:[#allocation2 + $0x20] sm:$0xff]
        %v628 = vld [vmem:[#allocation2 + $0x28] sm:$0xff]
        %v629 = vld [vmem:[#allocation2 + $0x30] sm:$0xff]
        %v630 = vld [vmem:[#allocation2 + $0x38] sm:$0xff]
        %v631 = vld [vmem:[#allocation2 + $0x40] sm:$0xff]
        %v632 = vld [vmem:[#allocation2 + $0x48] sm:$0xff]
        %v633 = vld [vmem:[#allocation2 + $0x50] sm:$0xff]
        %v634 = vld [vmem:[#allocation2 + $0x58] sm:$0xff]
        %v635 = vld [vmem:[#allocation2 + $0x60] sm:$0xff]
        %v636 = vld [vmem:[#allocation2 + $0x68] sm:$0xff]
        %v637 = vld [vmem:[#allocation2 + $0x70] sm:$0xff]
        %v638 = vld [vmem:[#allocation2 + $0x78] sm:$0xff]
        %v639 = vld [vmem:[%s257] sm:$0x1]
        %v641 = vlaneseq
        %v642 = vshrl.u32 %v641, 7
        %v643 = vsub.s32 0, %v642
        %v644 = vrot.slane %v639, %v643
        %v646 = vadd.f32 %v623, %v644
        %v647 = vadd.f32 %v624, %v644
        %v648 = vadd.f32 %v625, %v644
        %v649 = vadd.f32 %v626, %v644
        %v650 = vadd.f32 %v627, %v644
        %v651 = vadd.f32 %v628, %v644
        %v652 = vadd.f32 %v629, %v644
        %v653 = vadd.f32 %v630, %v644
        %v654 = vadd.f32 %v631, %v644
        %v655 = vadd.f32 %v632, %v644
        %v656 = vadd.f32 %v633, %v644
        %v657 = vadd.f32 %v634, %v644
        %v658 = vadd.f32 %v635, %v644
        %v659 = vadd.f32 %v636, %v644
        %v660 = vadd.f32 %v637, %v644
        %v661 = vadd.f32 %v638, %v644
        %v662 = vpack.c.bf16 %v647, %v646
        %v663 = vpack.c.bf16 %v649, %v648
        %v664 = vpack.c.bf16 %v651, %v650
        %v665 = vpack.c.bf16 %v653, %v652
        %v666 = vpack.c.bf16 %v655, %v654
        %v667 = vpack.c.bf16 %v657, %v656
        %v668 = vpack.c.bf16 %v659, %v658
        %v669 = vpack.c.bf16 %v661, %v660
        %v678 = vunpack.c.l.b16 %v662
        %v679 = vunpack.c.h.b16 %v662
        %v680 = vunpack.c.l.b16 %v663
        %v681 = vunpack.c.h.b16 %v663
        %v682 = vunpack.c.l.b16 %v664
        %v683 = vunpack.c.h.b16 %v664
        %v684 = vunpack.c.l.b16 %v665
        %v685 = vunpack.c.h.b16 %v665
        %v686 = vunpack.c.l.b16 %v666
        %v687 = vunpack.c.h.b16 %v666
        %v688 = vunpack.c.l.b16 %v667
        %v689 = vunpack.c.h.b16 %v667
        %v690 = vunpack.c.l.b16 %v668
        %v691 = vunpack.c.h.b16 %v668
        %v692 = vunpack.c.l.b16 %v669
        %v693 = vunpack.c.h.b16 %v669
        %v694 = vpack.c.b16 %v678, %v678
        %v695 = vpack.c.b16 %v679, %v679
        %v696 = vpack.c.b16 %v680, %v680
        %v697 = vpack.c.b16 %v681, %v681
        %v698 = vpack.c.b16 %v682, %v682
        %v699 = vpack.c.b16 %v683, %v683
        %v700 = vpack.c.b16 %v684, %v684
        %v701 = vpack.c.b16 %v685, %v685
        %v702 = vpack.c.b16 %v686, %v686
        %v703 = vpack.c.b16 %v687, %v687
        %v704 = vpack.c.b16 %v688, %v688
        %v705 = vpack.c.b16 %v689, %v689
        %v706 = vpack.c.b16 %v690, %v690
        %v707 = vpack.c.b16 %v691, %v691
        %v708 = vpack.c.b16 %v692, %v692
        %v709 = vpack.c.b16 %v693, %v693
        %vm726 = vcmask 519168
        %727 = vst.msk [vmem:[%s265] sm:$0xf] %vm726, %v694
        %728 = vst.msk [vmem:[%s265 + $0x4] sm:$0xf] %vm726, %v695
        %729 = vst.msk [vmem:[%s265 + $0x8] sm:$0xf] %vm726, %v696
        %730 = vst.msk [vmem:[%s265 + $0xc] sm:$0xf] %vm726, %v697
        %731 = vst.msk [vmem:[%s265 + $0x10] sm:$0xf] %vm726, %v698
        %732 = vst.msk [vmem:[%s265 + $0x14] sm:$0xf] %vm726, %v699
        %733 = vst.msk [vmem:[%s265 + $0x18] sm:$0xf] %vm726, %v700
        %734 = vst.msk [vmem:[%s265 + $0x1c] sm:$0xf] %vm726, %v701
        %735 = vst.msk [vmem:[%s265 + $0x20] sm:$0xf] %vm726, %v702
        %736 = vst.msk [vmem:[%s265 + $0x24] sm:$0xf] %vm726, %v703
        %737 = vst.msk [vmem:[%s265 + $0x28] sm:$0xf] %vm726, %v704
        %738 = vst.msk [vmem:[%s265 + $0x2c] sm:$0xf] %vm726, %v705
        %739 = vst.msk [vmem:[%s265 + $0x30] sm:$0xf] %vm726, %v706
        %740 = vst.msk [vmem:[%s265 + $0x34] sm:$0xf] %vm726, %v707
        %741 = vst.msk [vmem:[%s265 + $0x38] sm:$0xf] %vm726, %v708
        %742 = vst.msk [vmem:[%s265 + $0x3c] sm:$0xf] %vm726, %v709
      $region40: #{instance_attention_forward.19} parent=31 // pred_fallthru
        _
      %s743 = smul.u32 16, %s19
      %p744 = scmp.lt.s32.totalorder %s743, 63
      %s745 = scalar_select %p744, %s743, 63
      %p746 = scmp.lt.s32.totalorder %s20, 0
      %s747 = scalar_select %p746, %s20, 0
      %s748 = sadd.s32 %s747, %s745
      %s749 = smul.addr %s748, 4
      %s750 = scalar_lea.vmem %s3, %s749
      // Predicated region
      $region41: #{instance_attention_forward.19} parent=31 // pred_check
        %p751 = pneg %p135
      $region42: #{instance_attention_forward.19} parent=31 // pred_check_branch
        %753 = sbr.rel (%p751) target = $region44
      $region43: #{instance_attention_forward.19} parent=31 // pred_region
        %s754 = smul.u32 16, %s19
      $region44: #{instance_attention_forward.19} parent=31 // pred_fallthru
        _
    $region32: #{instance_attention_forward.19} parent=5 // pred_fallthru
      _
    %p755 = scmp.le.s32.totalorder 2, %s9
    // Predicated region
    $region45: #{instance_attention_forward.19} parent=5 // pred_check
      %p756 = pneg %p755
    $region46: #{instance_attention_forward.19} parent=5 // pred_check_branch
      %758 = sbr.rel (%p756) target = $region48
    $region47: #{instance_attention_forward.19} parent=5 // pred_region
      %s759 = ssub.s32 %s9, 2
      // Predicated region
      $region49: #{instance_attention_forward.19} parent=47 // pred_check
        %p760 = pneg %p141
      $region50: #{instance_attention_forward.19} parent=47 // pred_check_branch
        %762 = sbr.rel (%p760) target = $region52
      $region51: #{instance_attention_forward.19} parent=47 // pred_region
        %s763 = smul.u32 16, %s22
        %p764 = scmp.lt.s32.totalorder %s763, 63
        %s765 = scalar_select %p764, %s763, 63
        %p766 = scmp.lt.s32.totalorder %s23, 0
        %s767 = scalar_select %p766, %s23, 0
        %s768 = sadd.s32 %s767, %s765
        %s769 = smul.addr %s768, 4
        %s770 = scalar_lea.vmem %s3, %s769
      $region52: #{instance_attention_forward.19} parent=47 // pred_fallthru
        _
    $region48: #{instance_attention_forward.19} parent=5 // pred_fallthru
      _
  $region6: #{instance_attention_forward.19} parent=0 // loop_footer
    %s13 = sadd.s32 1, %s9
  $region7: #{instance_attention_forward.19} parent=0 // loop_footer_branch
    %8 = sbr.rel target = $region3
  $region8: #{instance_attention_forward.19} parent=0 // loop_exit
    _

// kernel: instance_attention_forward.21
$region0: #{instance_attention_forward.21}
  #allocation0 [shape = 'u32[]', space=smem, size = 0x4, offset = 0x4, fixed_abs, tag = 'smem constant byte address 0x4 - core index']
  #allocation1 [shape = 'u32[144,128]{1,0:T(1,128)}', space=vmem, size = 0x12000, scoped, tag = 'internal scratch']
  #allocation2 [shape = 'f32[16,192]{1,0:T(8,128)}', space=vmem, size = 0x4000, scoped, tag = 'scratch operand']
  %s0 = inlined_call_operand.vmem [shape: bf16[16,64], index: 0, kind: input, shape index: {}]
  %s1 = inlined_call_operand.vmem [shape: bf16[64,192], index: 1, kind: input, shape index: {}]
  %s2 = inlined_call_operand.vmem [shape: f32[1,192], index: 2, kind: input, shape index: {}]
  %s3 = inlined_call_operand.vmem [shape: bf16[16,192], index: 3, kind: output, shape index: {}]
  %s4 = sld [smem:[#allocation0]]
  $region30: #{instance_attention_forward.21} parent=0
    _
  %s6 = ssub.s32 1, %s4
  %s7 = scalar_select 0, %s6, %s4
  // Predicated region
  $region2: #{instance_attention_forward.21} parent=0 // pred_check
    _
  $region3: #{instance_attention_forward.21} parent=0 // pred_check_branch
    %9 = sbr.rel (0) target = $region5
  $region4: #{instance_attention_forward.21} parent=0 // pred_region
    _
  $region5: #{instance_attention_forward.21} parent=0 // pred_fallthru
    _
  // Predicated region
  $region6: #{instance_attention_forward.21} parent=0 // pred_check
    _
  $region7: #{instance_attention_forward.21} parent=0 // pred_check_branch
    %11 = sbr.rel (0) target = $region9
  $region8: #{instance_attention_forward.21} parent=0 // pred_region
    _
  $region9: #{instance_attention_forward.21} parent=0 // pred_fallthru
    _
  // Predicated region
  $region10: #{instance_attention_forward.21} parent=0 // pred_check
    _
  $region11: #{instance_attention_forward.21} parent=0 // pred_check_branch
    %13 = sbr.rel (0) target = $region13
  $region12: #{instance_attention_forward.21} parent=0 // pred_region
    _
  $region13: #{instance_attention_forward.21} parent=0 // pred_fallthru
    _
  %p15 = scmp.eq.s32.totalorder 0, 0
  // Predicated region
  $region14: #{instance_attention_forward.21} parent=0 // pred_check
    %p16 = pneg %p15
  $region15: #{instance_attention_forward.21} parent=0 // pred_check_branch
    %18 = sbr.rel (%p16) target = $region17
  $region16: #{instance_attention_forward.21} parent=0 // pred_region
    %19 = vst [vmem:[#allocation2] sm:$0xff] 0.0
    %vm20 = vcmask 523264
    %21 = vst.msk [vmem:[#allocation2 + $0x8] sm:$0xff] %vm20, 0.0
    %22 = vst [vmem:[#allocation2 + $0x10] sm:$0xff] 0.0
    %23 = vst.msk [vmem:[#allocation2 + $0x18] sm:$0xff] %vm20, 0.0
  $region17: #{instance_attention_forward.21} parent=0 // pred_fallthru
    _
  %v24 = vld [vmem:[#allocation2] sm:$0xff]
  %v25 = vld [vmem:[#allocation2 + $0x8] sm:$0xff]
  %v26 = vld [vmem:[#allocation2 + $0x10] sm:$0xff]
  %v27 = vld [vmem:[#allocation2 + $0x18] sm:$0xff]
  %v28 = vld [vmem:[%s0] sm:$0xf]
  %v29 = vld [vmem:[%s0 + $0x4] sm:$0xf]
  %v30 = vld [vmem:[%s1] sm:$0xff]
  %v31 = vld [vmem:[%s1 + $0x8] sm:$0xff]
  %v32 = vld [vmem:[%s1 + $0x10] sm:$0xff]
  %v33 = vld [vmem:[%s1 + $0x18] sm:$0xff]
  %v34 = vld [vmem:[%s1 + $0x20] sm:$0xff]
  %v35 = vld [vmem:[%s1 + $0x28] sm:$0xff]
  %v36 = vld [vmem:[%s1 + $0x30] sm:$0xff]
  %v37 = vld [vmem:[%s1 + $0x38] sm:$0xff]
  %v40 = vunpack.c.l.b16 %v28
  %v41 = vunpack.c.l.b16 %v29
  %v42 = vpack.c.b16 %v41, %v40
  %v51 = vunpack.c.l.b16 %v30
  %v52 = vunpack.c.h.b16 %v30
  %v53 = vunpack.c.l.b16 %v31
  %v54 = vunpack.c.h.b16 %v31
  %v55 = vunpack.c.l.b16 %v32
  %v56 = vunpack.c.h.b16 %v32
  %v57 = vunpack.c.l.b16 %v33
  %v58 = vunpack.c.h.b16 %v33
  %v59 = vunpack.c.l.b16 %v34
  %v60 = vunpack.c.h.b16 %v34
  %v61 = vunpack.c.l.b16 %v35
  %v62 = vunpack.c.h.b16 %v35
  %v63 = vunpack.c.l.b16 %v36
  %v64 = vunpack.c.h.b16 %v36
  %v65 = vunpack.c.l.b16 %v37
  %v66 = vunpack.c.h.b16 %v37
  %v67 = vpack.c.b16 %v53, %v51
  %v68 = vpack.c.b16 %v54, %v52
  %v69 = vpack.c.b16 %v57, %v55
  %v70 = vpack.c.b16 %v58, %v56
  %v71 = vpack.c.b16 %v61, %v59
  %v72 = vpack.c.b16 %v62, %v60
  %v73 = vpack.c.b16 %v65, %v63
  %v74 = vpack.c.b16 %v66, %v64
  %vm83 = vcmask 523264
  %v85 = vsel %vm83, %v42, 0
  %87 = vmatprep.subr.bf16.mxu0 %v68
  %88 = vmatpush1.bf16.msra.mxu0 %v67
  %89 = vmatprep.subr.bf16.mxu0 %v70
  %90 = vmatpush1.bf16.msra.mxu0 %v69
  %91 = vmatprep.subr.bf16.mxu0 %v72
  %92 = vmatpush1.bf16.msra.mxu0 %v71
  %93 = vmatprep.subr.bf16.mxu0 %v74
  %94 = vmatpush1.bf16.msra.mxu0 %v73
  %95 = vmatprep.subr.bf16.mxu0 0
  %96 = vmatpush1.bf16.msra.mxu0 0
  %97 = vmatprep.subr.bf16.mxu0 0
  %98 = vmatpush1.bf16.msra.mxu0 0
  %99 = vmatprep.subr.bf16.mxu0 0
  %100 = vmatpush1.bf16.msra.mxu0 0
  %101 = vmatprep.subr.bf16.mxu0 0
  %102 = vmatpush1.bf16.msra.mxu0 0
  %103 = vmatprep.subr.bf16.mxu0 0
  %104 = vmatpush1.bf16.msra.mxu0 0
  %105 = vmatprep.subr.bf16.mxu0 0
  %106 = vmatpush1.bf16.msra.mxu0 0
  %107 = vmatprep.subr.bf16.mxu0 0
  %108 = vmatpush1.bf16.msra.mxu0 0
  %109 = vmatprep.subr.bf16.mxu0 0
  %110 = vmatpush1.bf16.msra.mxu0 0
  %111 = vmatprep.subr.bf16.mxu0 0
  %112 = vmatpush1.bf16.msra.mxu0 0
  %113 = vmatprep.subr.bf16.mxu0 0
  %114 = vmatpush1.bf16.msra.mxu0 0
  %115 = vmatprep.subr.bf16.mxu0 0
  %116 = vmatpush1.bf16.msra.mxu0 0
  %117 = vmatprep.subr.bf16.mxu0 0
  %118 = vmatpush1.bf16.msra.mxu0 0
  %119 = vmatprep.mubr.bf16.mxu0 0
  %120 = vmatmul.mubr.bf16.gmra.mrb[0].mxu0 %v85
  %v121 = vpop.f32.mrb[0].mxu0
  %v122 = vadd.f32 0.0, %v121
  %v123 = vpop.f32.mrb[0].mxu0
  %v124 = vadd.f32 0.0, %v123
  %v125 = vpop.f32.mrb[0].mxu0
  %v126 = vadd.f32 0.0, %v125
  %v127 = vpop.f32.mrb[0].mxu0
  %v128 = vadd.f32 0.0, %v127
  %129 = vdwg.mxu0
  %v130 = vadd.f32 %v24, %v122
  %v131 = vadd.f32 %v25, %v124
  %v132 = vadd.f32 %v26, %v126
  %v133 = vadd.f32 %v27, %v128
  %134 = vst [vmem:[#allocation2] sm:$0xff] %v130
  %135 = vst.msk [vmem:[#allocation2 + $0x8] sm:$0xff] %vm83, %v131
  %136 = vst [vmem:[#allocation2 + $0x10] sm:$0xff] %v132
  %137 = vst.msk [vmem:[#allocation2 + $0x18] sm:$0xff] %vm83, %v133
  // Predicated region
  $region18: #{instance_attention_forward.21} parent=0 // pred_check
    %p138 = pneg %p15
  $region19: #{instance_attention_forward.21} parent=0 // pred_check_branch
    %140 = sbr.rel (%p138) target = $region21
  $region20: #{instance_attention_forward.21} parent=0 // pred_region
    %v141 = vld [vmem:[#allocation2] sm:$0xff]
    %v142 = vld [vmem:[#allocation2 + $0x8] sm:$0xff]
    %v143 = vld [vmem:[#allocation2 + $0x10] sm:$0xff]
    %v144 = vld [vmem:[#allocation2 + $0x18] sm:$0xff]
    %v145 = vld [vmem:[%s2] sm:$0x3]
    %v147 = vlaneseq
    %v148 = vshrl.u32 %v147, 7
    %v149 = vsub.s32 0, %v148
    %v150 = vrot.slane %v145, %v149
    %v151 = vlaneseq
    %v152 = vshrl.u32 %v151, 7
    %v153 = vsub.s32 1, %v152
    %v154 = vrot.slane %v145, %v153
    %v157 = vadd.f32 %v141, %v150
    %v158 = vadd.f32 %v142, %v154
    %v159 = vadd.f32 %v143, %v150
    %v160 = vadd.f32 %v144, %v154
    %v161 = vpack.c.bf16 %v159, %v157
    %v162 = vpack.c.bf16 %v160, %v158
    %v165 = vunpack.c.l.b16 %v161
    %v166 = vunpack.c.l.b16 %v162
    %v167 = vunpack.c.h.b16 %v161
    %v168 = vunpack.c.h.b16 %v162
    %v169 = vpack.c.b16 %v166, %v165
    %v170 = vpack.c.b16 %v168, %v167
    %vm173 = vcmask 1043456
    %vm174 = vcmask 523268
    %vm175 = vmor %vm174, %vm173
    %176 = vst.msk [vmem:[%s3] sm:$0xff] %vm175, %v169
    %177 = vst.msk [vmem:[%s3 + $0x8] sm:$0xff] %vm175, %v170
  $region21: #{instance_attention_forward.21} parent=0 // pred_fallthru
    _
  // Predicated region
  $region22: #{instance_attention_forward.21} parent=0 // pred_check
    _
  $region23: #{instance_attention_forward.21} parent=0 // pred_check_branch
    %179 = sbr.rel (0) target = $region25
  $region24: #{instance_attention_forward.21} parent=0 // pred_region
    _
  $region25: #{instance_attention_forward.21} parent=0 // pred_fallthru
    _
  // Predicated region
  $region26: #{instance_attention_forward.21} parent=0 // pred_check
    _
  $region27: #{instance_attention_forward.21} parent=0 // pred_check_branch
    %181 = sbr.rel (0) target = $region29
  $region28: #{instance_attention_forward.21} parent=0 // pred_region
    _
  $region29: #{instance_attention_forward.21} parent=0 // pred_fallthru
    _

// kernel: instance_attention_forward.24
$region0: #{instance_attention_forward.24}
  #allocation0 [shape = 'u32[]', space=smem, size = 0x4, offset = 0x4, fixed_abs, tag = 'smem constant byte address 0x4 - core index']
  #allocation1 [shape = 'u32[144,128]{1,0:T(1,128)}', space=vmem, size = 0x12000, scoped, tag = 'internal scratch']
  %s0 = inlined_call_operand.vmem [shape: bf16[16,64], index: 0, kind: input, shape index: {}]
  %s1 = inlined_call_operand.vmem [shape: bf16[16,64], index: 1, kind: input, shape index: {}]
  %s2 = inlined_call_operand.vmem [shape: f32[1,64], index: 2, kind: input, shape index: {}]
  %s3 = inlined_call_operand.vmem [shape: f32[1,64], index: 3, kind: input, shape index: {}]
  %s4 = inlined_call_operand.vmem [shape: bf16[16,64], index: 4, kind: output, shape index: {}]
  %s5 = sld [smem:[#allocation0]]
  $region26: #{instance_attention_forward.24} parent=0
    _
  %s7 = ssub.s32 1, %s5
  %s8 = scalar_select 0, %s7, %s5
  // Predicated region
  $region2: #{instance_attention_forward.24} parent=0 // pred_check
    _
  $region3: #{instance_attention_forward.24} parent=0 // pred_check_branch
    %10 = sbr.rel (0) target = $region5
  $region4: #{instance_attention_forward.24} parent=0 // pred_region
    _
  $region5: #{instance_attention_forward.24} parent=0 // pred_fallthru
    _
  // Predicated region
  $region6: #{instance_attention_forward.24} parent=0 // pred_check
    _
  $region7: #{instance_attention_forward.24} parent=0 // pred_check_branch
    %12 = sbr.rel (0) target = $region9
  $region8: #{instance_attention_forward.24} parent=0 // pred_region
    _
  $region9: #{instance_attention_forward.24} parent=0 // pred_fallthru
    _
  // Predicated region
  $region10: #{instance_attention_forward.24} parent=0 // pred_check
    _
  $region11: #{instance_attention_forward.24} parent=0 // pred_check_branch
    %14 = sbr.rel (0) target = $region13
  $region12: #{instance_attention_forward.24} parent=0 // pred_region
    _
  $region13: #{instance_attention_forward.24} parent=0 // pred_fallthru
    _
  // Predicated region
  $region14: #{instance_attention_forward.24} parent=0 // pred_check
    _
  $region15: #{instance_attention_forward.24} parent=0 // pred_check_branch
    %16 = sbr.rel (0) target = $region17
  $region16: #{instance_attention_forward.24} parent=0 // pred_region
    _
  $region17: #{instance_attention_forward.24} parent=0 // pred_fallthru
    _
  %v17 = vld [vmem:[%s0] sm:$0xf]
  %v18 = vld [vmem:[%s0 + $0x4] sm:$0xf]
  %v19 = vunpack.c.l.bf16 %v17
  %v20 = vunpack.c.l.bf16 %v18
  %v21 = vld [vmem:[%s1] sm:$0xf]
  %v22 = vld [vmem:[%s1 + $0x4] sm:$0xf]
  %v23 = vunpack.c.l.bf16 %v21
  %v24 = vunpack.c.l.bf16 %v22
  %v25 = vadd.f32 %v19, %v23
  %v26 = vadd.f32 %v20, %v24
  %vm27 = vcmask 523264
  %v28 = vsel %vm27, %v25, 0.0
  %29 = vadd.xlane.f32.xlu0 %v28
  %v30 = vpop.xlane.xlu0 %29
  %v31 = vsel %vm27, %v26, 0.0
  %32 = vadd.xlane.f32.xlu0 %v31
  %v33 = vpop.xlane.xlu0 %32
  %v34 = vrcp.pop 64.0
  %v35 = vmul.f32 %v30, %v34
  %v36 = vmul.f32 %v33, %v34
  %v37 = vsub.f32 %v25, %v35
  %v38 = vsub.f32 %v26, %v36
  %v39 = vmul.f32 %v37, %v37
  %v40 = vmul.f32 %v38, %v38
  %v41 = vsel %vm27, %v39, 0.0
  %42 = vadd.xlane.f32.xlu0 %v41
  %v43 = vpop.xlane.xlu0 %42
  %v44 = vsel %vm27, %v40, 0.0
  %45 = vadd.xlane.f32.xlu0 %v44
  %v46 = vpop.xlane.xlu0 %45
  %v47 = vmul.f32 %v43, %v34
  %v48 = vmul.f32 %v46, %v34
  %v49 = vadd.f32 %v47, 1e-05
  %v50 = vadd.f32 %v48, 1e-05
  %v51 = vrsqrt.pop %v49
  %v52 = vrsqrt.pop %v50
  %v53 = vmul.f32 %v37, %v51
  %v54 = vmul.f32 %v38, %v52
  %v55 = vld [vmem:[%s2] sm:$0x1]
  %v57 = vlaneseq
  %v58 = vshrl.u32 %v57, 7
  %v59 = vsub.s32 0, %v58
  %v60 = vrot.slane %v55, %v59
  %v62 = vmul.f32 %v53, %v60
  %v63 = vmul.f32 %v54, %v60
  %v64 = vld [vmem:[%s3] sm:$0x1]
  %v66 = vlaneseq
  %v67 = vshrl.u32 %v66, 7
  %v68 = vsub.s32 0, %v67
  %v69 = vrot.slane %v64, %v68
  %v71 = vadd.f32 %v62, %v69
  %v72 = vadd.f32 %v63, %v69
  %v73 = vpack.c.bf16 %v72, %v71
  %v75 = vunpack.c.l.b16 %v73
  %v76 = vunpack.c.h.b16 %v73
  %v77 = vpack.c.b16 %v75, %v75
  %v78 = vpack.c.b16 %v76, %v76
  %vm81 = vcmask 519168
  %82 = vst.msk [vmem:[%s4] sm:$0xf] %vm81, %v77
  %83 = vst.msk [vmem:[%s4 + $0x4] sm:$0xf] %vm81, %v78
  // Predicated region
  $region18: #{instance_attention_forward.24} parent=0 // pred_check
    _
  $region19: #{instance_attention_forward.24} parent=0 // pred_check_branch
    %85 = sbr.rel (0) target = $region21
  $region20: #{instance_attention_forward.24} parent=0 // pred_region
    _
  $region21: #{instance_attention_forward.24} parent=0 // pred_fallthru
    _
  // Predicated region
  $region22: #{instance_attention_forward.24} parent=0 // pred_check
    _
  $region23: #{instance_attention_forward.24} parent=0 // pred_check_branch
    %87 = sbr.rel (0) target = $region25
  $region24: #{instance_attention_forward.24} parent=0 // pred_region
    _
  $region25: #{instance_attention_forward.24} parent=0 // pred_fallthru
    _

// kernel: instance_attention_forward.23
$region0: #{instance_attention_forward.23}
  #allocation0 [shape = 'u32[]', space=smem, size = 0x4, offset = 0x4, fixed_abs, tag = 'smem constant byte address 0x4 - core index']
  #allocation1 [shape = 'u32[144,128]{1,0:T(1,128)}', space=vmem, size = 0x12000, scoped, tag = 'internal scratch']
  #allocation2 [shape = 'f32[16,64]{1,0:T(8,128)}', space=vmem, size = 0x2000, scoped, tag = 'scratch operand']
  %s0 = inlined_call_operand.vmem [shape: bf16[16,64], index: 0, kind: input, shape index: {}]
  %s1 = inlined_call_operand.vmem [shape: bf16[64,64], index: 1, kind: input, shape index: {}]
  %s2 = inlined_call_operand.vmem [shape: f32[1,64], index: 2, kind: input, shape index: {}]
  %s3 = inlined_call_operand.vmem [shape: bf16[16,64], index: 3, kind: output, shape index: {}]
  %s4 = sld [smem:[#allocation0]]
  $region30: #{instance_attention_forward.23} parent=0
    _
  %s6 = ssub.s32 1, %s4
  %s7 = scalar_select 0, %s6, %s4
  // Predicated region
  $region2: #{instance_attention_forward.23} parent=0 // pred_check
    _
  $region3: #{instance_attention_forward.23} parent=0 // pred_check_branch
    %9 = sbr.rel (0) target = $region5
  $region4: #{instance_attention_forward.23} parent=0 // pred_region
    _
  $region5: #{instance_attention_forward.23} parent=0 // pred_fallthru
    _
  // Predicated region
  $region6: #{instance_attention_forward.23} parent=0 // pred_check
    _
  $region7: #{instance_attention_forward.23} parent=0 // pred_check_branch
    %11 = sbr.rel (0) target = $region9
  $region8: #{instance_attention_forward.23} parent=0 // pred_region
    _
  $region9: #{instance_attention_forward.23} parent=0 // pred_fallthru
    _
  // Predicated region
  $region10: #{instance_attention_forward.23} parent=0 // pred_check
    _
  $region11: #{instance_attention_forward.23} parent=0 // pred_check_branch
    %13 = sbr.rel (0) target = $region13
  $region12: #{instance_attention_forward.23} parent=0 // pred_region
    _
  $region13: #{instance_attention_forward.23} parent=0 // pred_fallthru
    _
  %p15 = scmp.eq.s32.totalorder 0, 0
  // Predicated region
  $region14: #{instance_attention_forward.23} parent=0 // pred_check
    %p16 = pneg %p15
  $region15: #{instance_attention_forward.23} parent=0 // pred_check_branch
    %18 = sbr.rel (%p16) target = $region17
  $region16: #{instance_attention_forward.23} parent=0 // pred_region
    %vm19 = vcmask 523264
    %20 = vst.msk [vmem:[#allocation2] sm:$0xff] %vm19, 0.0
    %21 = vst.msk [vmem:[#allocation2 + $0x8] sm:$0xff] %vm19, 0.0
  $region17: #{instance_attention_forward.23} parent=0 // pred_fallthru
    _
  %v22 = vld [vmem:[#allocation2] sm:$0xff]
  %v23 = vld [vmem:[#allocation2 + $0x8] sm:$0xff]
  %v24 = vld [vmem:[%s0] sm:$0xf]
  %v25 = vld [vmem:[%s0 + $0x4] sm:$0xf]
  %v26 = vld [vmem:[%s1] sm:$0xf]
  %v27 = vld [vmem:[%s1 + $0x4] sm:$0xf]
  %v28 = vld [vmem:[%s1 + $0x8] sm:$0xf]
  %v29 = vld [vmem:[%s1 + $0xc] sm:$0xf]
  %v30 = vld [vmem:[%s1 + $0x10] sm:$0xf]
  %v31 = vld [vmem:[%s1 + $0x14] sm:$0xf]
  %v32 = vld [vmem:[%s1 + $0x18] sm:$0xf]
  %v33 = vld [vmem:[%s1 + $0x1c] sm:$0xf]
  %v36 = vunpack.c.l.b16 %v24
  %v37 = vunpack.c.l.b16 %v25
  %v38 = vpack.c.b16 %v37, %v36
  %v47 = vunpack.c.l.b16 %v26
  %v48 = vunpack.c.l.b16 %v27
  %v49 = vunpack.c.l.b16 %v28
  %v50 = vunpack.c.l.b16 %v29
  %v51 = vunpack.c.l.b16 %v30
  %v52 = vunpack.c.l.b16 %v31
  %v53 = vunpack.c.l.b16 %v32
  %v54 = vunpack.c.l.b16 %v33
  %v55 = vpack.c.b16 %v48, %v47
  %v56 = vpack.c.b16 %v50, %v49
  %v57 = vpack.c.b16 %v52, %v51
  %v58 = vpack.c.b16 %v54, %v53
  %vm63 = vcmask 523264
  %v65 = vsel %vm63, %v38, 0
  %67 = vmatprep.subr.bf16.mxu0 0
  %68 = vmatpush1.bf16.msra.mxu0 %v55
  %69 = vmatprep.subr.bf16.mxu0 0
  %70 = vmatpush1.bf16.msra.mxu0 %v56
  %71 = vmatprep.subr.bf16.mxu0 0
  %72 = vmatpush1.bf16.msra.mxu0 %v57
  %73 = vmatprep.subr.bf16.mxu0 0
  %74 = vmatpush1.bf16.msra.mxu0 %v58
  %75 = vmatprep.subr.bf16.mxu0 0
  %76 = vmatpush1.bf16.msra.mxu0 0
  %77 = vmatprep.subr.bf16.mxu0 0
  %78 = vmatpush1.bf16.msra.mxu0 0
  %79 = vmatprep.subr.bf16.mxu0 0
  %80 = vmatpush1.bf16.msra.mxu0 0
  %81 = vmatprep.subr.bf16.mxu0 0
  %82 = vmatpush1.bf16.msra.mxu0 0
  %83 = vmatprep.subr.bf16.mxu0 0
  %84 = vmatpush1.bf16.msra.mxu0 0
  %85 = vmatprep.subr.bf16.mxu0 0
  %86 = vmatpush1.bf16.msra.mxu0 0
  %87 = vmatprep.subr.bf16.mxu0 0
  %88 = vmatpush1.bf16.msra.mxu0 0
  %89 = vmatprep.subr.bf16.mxu0 0
  %90 = vmatpush1.bf16.msra.mxu0 0
  %91 = vmatprep.subr.bf16.mxu0 0
  %92 = vmatpush1.bf16.msra.mxu0 0
  %93 = vmatprep.subr.bf16.mxu0 0
  %94 = vmatpush1.bf16.msra.mxu0 0
  %95 = vmatprep.subr.bf16.mxu0 0
  %96 = vmatpush1.bf16.msra.mxu0 0
  %97 = vmatprep.subr.bf16.mxu0 0
  %98 = vmatpush1.bf16.msra.mxu0 0
  %99 = vmatprep.mubr.bf16.mxu0 0
  %100 = vmatmul.mubr.bf16.gmra.mrb[0].mxu0 %v65
  %v101 = vpop.f32.mrb[0].mxu0
  %v102 = vadd.f32 0.0, %v101
  %v103 = vpop.f32.mrb[0].mxu0
  %v104 = vpop.f32.mrb[0].mxu0
  %v105 = vadd.f32 0.0, %v104
  %v106 = vpop.f32.mrb[0].mxu0
  %107 = vdwg.mxu0
  %v108 = vadd.f32 %v22, %v102
  %v109 = vadd.f32 %v23, %v105
  %110 = vst.msk [vmem:[#allocation2] sm:$0xff] %vm63, %v108
  %111 = vst.msk [vmem:[#allocation2 + $0x8] sm:$0xff] %vm63, %v109
  // Predicated region
  $region18: #{instance_attention_forward.23} parent=0 // pred_check
    %p112 = pneg %p15
  $region19: #{instance_attention_forward.23} parent=0 // pred_check_branch
    %114 = sbr.rel (%p112) target = $region21
  $region20: #{instance_attention_forward.23} parent=0 // pred_region
    %v115 = vld [vmem:[#allocation2] sm:$0xff]
    %v116 = vld [vmem:[#allocation2 + $0x8] sm:$0xff]
    %v117 = vld [vmem:[%s2] sm:$0x1]
    %v119 = vlaneseq
    %v120 = vshrl.u32 %v119, 7
    %v121 = vsub.s32 0, %v120
    %v122 = vrot.slane %v117, %v121
    %v124 = vadd.f32 %v115, %v122
    %v125 = vadd.f32 %v116, %v122
    %v126 = vpack.c.bf16 %v125, %v124
    %v128 = vunpack.c.l.b16 %v126
    %v129 = vunpack.c.h.b16 %v126
    %v130 = vpack.c.b16 %v128, %v128
    %v131 = vpack.c.b16 %v129, %v129
    %vm134 = vcmask 519168
    %135 = vst.msk [vmem:[%s3] sm:$0xf] %vm134, %v130
    %136 = vst.msk [vmem:[%s3 + $0x4] sm:$0xf] %vm134, %v131
  $region21: #{instance_attention_forward.23} parent=0 // pred_fallthru
    _
  // Predicated region
  $region22: #{instance_attention_forward.23} parent=0 // pred_check
    _
  $region23: #{instance_attention_forward.23} parent=0 // pred_check_branch
    %138 = sbr.rel (0) target = $region25
  $region24: #{instance_attention_forward.23} parent=0 // pred_region
    _
  $region25: #{instance_attention_forward.23} parent=0 // pred_fallthru
    _
  // Predicated region
  $region26: #{instance_attention_forward.23} parent=0 // pred_check
    _
  $region27: #{instance_attention_forward.23} parent=0 // pred_check_branch
    %140 = sbr.rel (0) target = $region29
  $region28: #{instance_attention_forward.23} parent=0 // pred_region
    _
  $region29: #{instance_attention_forward.23} parent=0 // pred_fallthru
    _

// kernel: instance_attention_forward.29
$region0: #{instance_attention_forward.29}
  #allocation0 [shape = 'u32[]', space=smem, size = 0x4, offset = 0x4, fixed_abs, tag = 'smem constant byte address 0x4 - core index']
  #allocation1 [shape = 'u32[144,128]{1,0:T(1,128)}', space=vmem, size = 0x12000, scoped, tag = 'internal scratch']
  #allocation2 [shape = 'f32[16,128]{1,0:T(8,128)}', space=vmem, size = 0x2000, scoped, tag = 'scratch operand']
  %s0 = inlined_call_operand.vmem [shape: bf16[16,64], index: 0, kind: input, shape index: {}]
  %s1 = inlined_call_operand.vmem [shape: bf16[64,128], index: 1, kind: input, shape index: {}]
  %s2 = inlined_call_operand.vmem [shape: f32[1,128], index: 2, kind: input, shape index: {}]
  %s3 = inlined_call_operand.vmem [shape: bf16[16,128], index: 3, kind: output, shape index: {}]
  %s4 = sld [smem:[#allocation0]]
  $region30: #{instance_attention_forward.29} parent=0
    _
  %s6 = ssub.s32 1, %s4
  %s7 = scalar_select 0, %s6, %s4
  // Predicated region
  $region2: #{instance_attention_forward.29} parent=0 // pred_check
    _
  $region3: #{instance_attention_forward.29} parent=0 // pred_check_branch
    %9 = sbr.rel (0) target = $region5
  $region4: #{instance_attention_forward.29} parent=0 // pred_region
    _
  $region5: #{instance_attention_forward.29} parent=0 // pred_fallthru
    _
  // Predicated region
  $region6: #{instance_attention_forward.29} parent=0 // pred_check
    _
  $region7: #{instance_attention_forward.29} parent=0 // pred_check_branch
    %11 = sbr.rel (0) target = $region9
  $region8: #{instance_attention_forward.29} parent=0 // pred_region
    _
  $region9: #{instance_attention_forward.29} parent=0 // pred_fallthru
    _
  // Predicated region
  $region10: #{instance_attention_forward.29} parent=0 // pred_check
    _
  $region11: #{instance_attention_forward.29} parent=0 // pred_check_branch
    %13 = sbr.rel (0) target = $region13
  $region12: #{instance_attention_forward.29} parent=0 // pred_region
    _
  $region13: #{instance_attention_forward.29} parent=0 // pred_fallthru
    _
  %p15 = scmp.eq.s32.totalorder 0, 0
  // Predicated region
  $region14: #{instance_attention_forward.29} parent=0 // pred_check
    %p16 = pneg %p15
  $region15: #{instance_attention_forward.29} parent=0 // pred_check_branch
    %18 = sbr.rel (%p16) target = $region17
  $region16: #{instance_attention_forward.29} parent=0 // pred_region
    %19 = vst [vmem:[#allocation2] sm:$0xff] 0.0
    %20 = vst [vmem:[#allocation2 + $0x8] sm:$0xff] 0.0
  $region17: #{instance_attention_forward.29} parent=0 // pred_fallthru
    _
  %v21 = vld [vmem:[#allocation2] sm:$0xff]
  %v22 = vld [vmem:[#allocation2 + $0x8] sm:$0xff]
  %v23 = vld [vmem:[%s0] sm:$0xf]
  %v24 = vld [vmem:[%s0 + $0x4] sm:$0xf]
  %v25 = vld [vmem:[%s1] sm:$0xf]
  %v26 = vld [vmem:[%s1 + $0x4] sm:$0xf]
  %v27 = vld [vmem:[%s1 + $0x8] sm:$0xf]
  %v28 = vld [vmem:[%s1 + $0xc] sm:$0xf]
  %v29 = vld [vmem:[%s1 + $0x10] sm:$0xf]
  %v30 = vld [vmem:[%s1 + $0x14] sm:$0xf]
  %v31 = vld [vmem:[%s1 + $0x18] sm:$0xf]
  %v32 = vld [vmem:[%s1 + $0x1c] sm:$0xf]
  %v35 = vunpack.c.l.b16 %v23
  %v36 = vunpack.c.l.b16 %v24
  %v37 = vpack.c.b16 %v36, %v35
  %v46 = vunpack.c.l.b16 %v25
  %v47 = vunpack.c.l.b16 %v26
  %v48 = vunpack.c.l.b16 %v27
  %v49 = vunpack.c.l.b16 %v28
  %v50 = vunpack.c.l.b16 %v29
  %v51 = vunpack.c.l.b16 %v30
  %v52 = vunpack.c.l.b16 %v31
  %v53 = vunpack.c.l.b16 %v32
  %v54 = vpack.c.b16 %v47, %v46
  %v55 = vpack.c.b16 %v49, %v48
  %v56 = vpack.c.b16 %v51, %v50
  %v57 = vpack.c.b16 %v53, %v52
  %vm62 = vcmask 523264
  %v64 = vsel %vm62, %v37, 0
  %66 = vmatprep.subr.bf16.mxu0 0
  %67 = vmatpush1.bf16.msra.mxu0 %v54
  %68 = vmatprep.subr.bf16.mxu0 0
  %69 = vmatpush1.bf16.msra.mxu0 %v55
  %70 = vmatprep.subr.bf16.mxu0 0
  %71 = vmatpush1.bf16.msra.mxu0 %v56
  %72 = vmatprep.subr.bf16.mxu0 0
  %73 = vmatpush1.bf16.msra.mxu0 %v57
  %74 = vmatprep.subr.bf16.mxu0 0
  %75 = vmatpush1.bf16.msra.mxu0 0
  %76 = vmatprep.subr.bf16.mxu0 0
  %77 = vmatpush1.bf16.msra.mxu0 0
  %78 = vmatprep.subr.bf16.mxu0 0
  %79 = vmatpush1.bf16.msra.mxu0 0
  %80 = vmatprep.subr.bf16.mxu0 0
  %81 = vmatpush1.bf16.msra.mxu0 0
  %82 = vmatprep.subr.bf16.mxu0 0
  %83 = vmatpush1.bf16.msra.mxu0 0
  %84 = vmatprep.subr.bf16.mxu0 0
  %85 = vmatpush1.bf16.msra.mxu0 0
  %86 = vmatprep.subr.bf16.mxu0 0
  %87 = vmatpush1.bf16.msra.mxu0 0
  %88 = vmatprep.subr.bf16.mxu0 0
  %89 = vmatpush1.bf16.msra.mxu0 0
  %90 = vmatprep.subr.bf16.mxu0 0
  %91 = vmatpush1.bf16.msra.mxu0 0
  %92 = vmatprep.subr.bf16.mxu0 0
  %93 = vmatpush1.bf16.msra.mxu0 0
  %94 = vmatprep.subr.bf16.mxu0 0
  %95 = vmatpush1.bf16.msra.mxu0 0
  %96 = vmatprep.subr.bf16.mxu0 0
  %97 = vmatpush1.bf16.msra.mxu0 0
  %98 = vmatprep.mubr.bf16.mxu0 0
  %99 = vmatmul.mubr.bf16.gmra.mrb[0].mxu0 %v64
  %v100 = vpop.f32.mrb[0].mxu0
  %v101 = vadd.f32 0.0, %v100
  %v102 = vpop.f32.mrb[0].mxu0
  %v103 = vpop.f32.mrb[0].mxu0
  %v104 = vadd.f32 0.0, %v103
  %v105 = vpop.f32.mrb[0].mxu0
  %106 = vdwg.mxu0
  %v107 = vadd.f32 %v21, %v101
  %v108 = vadd.f32 %v22, %v104
  %109 = vst [vmem:[#allocation2] sm:$0xff] %v107
  %110 = vst [vmem:[#allocation2 + $0x8] sm:$0xff] %v108
  // Predicated region
  $region18: #{instance_attention_forward.29} parent=0 // pred_check
    %p111 = pneg %p15
  $region19: #{instance_attention_forward.29} parent=0 // pred_check_branch
    %113 = sbr.rel (%p111) target = $region21
  $region20: #{instance_attention_forward.29} parent=0 // pred_region
    %v114 = vld [vmem:[#allocation2] sm:$0xff]
    %v115 = vld [vmem:[#allocation2 + $0x8] sm:$0xff]
    %v116 = vld [vmem:[%s2] sm:$0x1]
    %v118 = vlaneseq
    %v119 = vshrl.u32 %v118, 7
    %v120 = vsub.s32 0, %v119
    %v121 = vrot.slane %v116, %v120
    %v123 = vadd.f32 %v114, %v121
    %v124 = vadd.f32 %v115, %v121
    %v125 = vmax.f32 %v123, 0.0
    %v126 = vmax.f32 %v124, 0.0
    %v127 = vpack.c.bf16 %v126, %v125
    %v129 = vunpack.c.l.b16 %v127
    %v130 = vunpack.c.h.b16 %v127
    %v131 = vpack.c.b16 %v129, %v129
    %v132 = vpack.c.b16 %v130, %v130
    %135 = vst [vmem:[%s3] sm:$0xf] %v131
    %136 = vst [vmem:[%s3 + $0x4] sm:$0xf] %v132
  $region21: #{instance_attention_forward.29} parent=0 // pred_fallthru
    _
  // Predicated region
  $region22: #{instance_attention_forward.29} parent=0 // pred_check
    _
  $region23: #{instance_attention_forward.29} parent=0 // pred_check_branch
    %138 = sbr.rel (0) target = $region25
  $region24: #{instance_attention_forward.29} parent=0 // pred_region
    _
  $region25: #{instance_attention_forward.29} parent=0 // pred_fallthru
    _
  // Predicated region
  $region26: #{instance_attention_forward.29} parent=0 // pred_check
    _
  $region27: #{instance_attention_forward.29} parent=0 // pred_check_branch
    %140 = sbr.rel (0) target = $region29
  $region28: #{instance_attention_forward.29} parent=0 // pred_region
    _
  $region29: #{instance_attention_forward.29} parent=0 // pred_fallthru
    _

// kernel: instance_attention_forward.25
$region0: #{instance_attention_forward.25}
  #allocation0 [shape = 'u32[]', space=smem, size = 0x4, offset = 0x4, fixed_abs, tag = 'smem constant byte address 0x4 - core index']
  #allocation1 [shape = 'u32[144,128]{1,0:T(1,128)}', space=vmem, size = 0x12000, scoped, tag = 'internal scratch']
  %s0 = inlined_call_operand.vmem [shape: bf16[16,64], index: 0, kind: input, shape index: {}]
  %s1 = inlined_call_operand.vmem [shape: bf16[64,512], index: 1, kind: input, shape index: {}]
  %s2 = inlined_call_operand.vmem [shape: f32[1,512], index: 2, kind: input, shape index: {}]
  %s3 = inlined_call_operand.vmem [shape: bf16[512,64], index: 3, kind: input, shape index: {}]
  %s4 = inlined_call_operand.vmem [shape: f32[1,64], index: 4, kind: input, shape index: {}]
  %s5 = inlined_call_operand.vmem [shape: bf16[16,64], index: 5, kind: output, shape index: {}]
  %s6 = sld [smem:[#allocation0]]
  $region30: #{instance_attention_forward.25} parent=0
    _
  %s8 = ssub.s32 1, %s6
  %s9 = scalar_select 0, %s8, %s6
  // Predicated region
  $region2: #{instance_attention_forward.25} parent=0 // pred_check
    _
  $region3: #{instance_attention_forward.25} parent=0 // pred_check_branch
    %11 = sbr.rel (0) target = $region5
  $region4: #{instance_attention_forward.25} parent=0 // pred_region
    _
  $region5: #{instance_attention_forward.25} parent=0 // pred_fallthru
    _
  // Predicated region
  $region6: #{instance_attention_forward.25} parent=0 // pred_check
    _
  $region7: #{instance_attention_forward.25} parent=0 // pred_check_branch
    %13 = sbr.rel (0) target = $region9
  $region8: #{instance_attention_forward.25} parent=0 // pred_region
    _
  $region9: #{instance_attention_forward.25} parent=0 // pred_fallthru
    _
  // Predicated region
  $region10: #{instance_attention_forward.25} parent=0 // pred_check
    _
  $region11: #{instance_attention_forward.25} parent=0 // pred_check_branch
    %15 = sbr.rel (0) target = $region13
  $region12: #{instance_attention_forward.25} parent=0 // pred_region
    _
  $region13: #{instance_attention_forward.25} parent=0 // pred_fallthru
    _
  // Predicated region
  $region14: #{instance_attention_forward.25} parent=0 // pred_check
    _
  $region15: #{instance_attention_forward.25} parent=0 // pred_check_branch
    %17 = sbr.rel (0) target = $region17
  $region16: #{instance_attention_forward.25} parent=0 // pred_region
    _
  $region17: #{instance_attention_forward.25} parent=0 // pred_fallthru
    _
  // Predicated region
  $region18: #{instance_attention_forward.25} parent=0 // pred_check
    _
  $region19: #{instance_attention_forward.25} parent=0 // pred_check_branch
    %19 = sbr.rel (0) target = $region21
  $region20: #{instance_attention_forward.25} parent=0 // pred_region
    _
  $region21: #{instance_attention_forward.25} parent=0 // pred_fallthru
    _
  %v21 = vld [vmem:[%s0] sm:$0xf]
  %v22 = vld [vmem:[%s0 + $0x4] sm:$0xf]
  %v23 = vld [vmem:[%s1] sm:$0xff]
  %v24 = vld [vmem:[%s1 + $0x8] sm:$0xff]
  %v25 = vld [vmem:[%s1 + $0x10] sm:$0xff]
  %v26 = vld [vmem:[%s1 + $0x18] sm:$0xff]
  %v27 = vld [vmem:[%s1 + $0x20] sm:$0xff]
  %v28 = vld [vmem:[%s1 + $0x28] sm:$0xff]
  %v29 = vld [vmem:[%s1 + $0x30] sm:$0xff]
  %v30 = vld [vmem:[%s1 + $0x38] sm:$0xff]
  %v31 = vld [vmem:[%s1 + $0x40] sm:$0xff]
  %v32 = vld [vmem:[%s1 + $0x48] sm:$0xff]
  %v33 = vld [vmem:[%s1 + $0x50] sm:$0xff]
  %v34 = vld [vmem:[%s1 + $0x58] sm:$0xff]
  %v35 = vld [vmem:[%s1 + $0x60] sm:$0xff]
  %v36 = vld [vmem:[%s1 + $0x68] sm:$0xff]
  %v37 = vld [vmem:[%s1 + $0x70] sm:$0xff]
  %v38 = vld [vmem:[%s1 + $0x78] sm:$0xff]
  %v39 = vld [vmem:[%s2] sm:$0xf]
  %v41 = vlaneseq
  %v42 = vshrl.u32 %v41, 7
  %v43 = vsub.s32 0, %v42
  %v44 = vrot.slane %v39, %v43
  %v45 = vlaneseq
  %v46 = vshrl.u32 %v45, 7
  %v47 = vsub.s32 1, %v46
  %v48 = vrot.slane %v39, %v47
  %v49 = vlaneseq
  %v50 = vshrl.u32 %v49, 7
  %v51 = vsub.s32 2, %v50
  %v52 = vrot.slane %v39, %v51
  %v53 = vlaneseq
  %v54 = vshrl.u32 %v53, 7
  %v55 = vsub.s32 3, %v54
  %v56 = vrot.slane %v39, %v55
  %v63 = vunpack.c.l.b16 %v21
  %v64 = vunpack.c.l.b16 %v22
  %v65 = vpack.c.b16 %v64, %v63
  %v82 = vunpack.c.l.b16 %v23
  %v83 = vunpack.c.h.b16 %v23
  %v84 = vunpack.c.l.b16 %v24
  %v85 = vunpack.c.h.b16 %v24
  %v86 = vunpack.c.l.b16 %v25
  %v87 = vunpack.c.h.b16 %v25
  %v88 = vunpack.c.l.b16 %v26
  %v89 = vunpack.c.h.b16 %v26
  %v90 = vunpack.c.l.b16 %v27
  %v91 = vunpack.c.h.b16 %v27
  %v92 = vunpack.c.l.b16 %v28
  %v93 = vunpack.c.h.b16 %v28
  %v94 = vunpack.c.l.b16 %v29
  %v95 = vunpack.c.h.b16 %v29
  %v96 = vunpack.c.l.b16 %v30
  %v97 = vunpack.c.h.b16 %v30
  %v98 = vunpack.c.l.b16 %v31
  %v99 = vunpack.c.h.b16 %v31
  %v100 = vunpack.c.l.b16 %v32
  %v101 = vunpack.c.h.b16 %v32
  %v102 = vunpack.c.l.b16 %v33
  %v103 = vunpack.c.h.b16 %v33
  %v104 = vunpack.c.l.b16 %v34
  %v105 = vunpack.c.h.b16 %v34
  %v106 = vunpack.c.l.b16 %v35
  %v107 = vunpack.c.h.b16 %v35
  %v108 = vunpack.c.l.b16 %v36
  %v109 = vunpack.c.h.b16 %v36
  %v110 = vunpack.c.l.b16 %v37
  %v111 = vunpack.c.h.b16 %v37
  %v112 = vunpack.c.l.b16 %v38
  %v113 = vunpack.c.h.b16 %v38
  %v114 = vpack.c.b16 %v86, %v82
  %v115 = vpack.c.b16 %v87, %v83
  %v116 = vpack.c.b16 %v88, %v84
  %v117 = vpack.c.b16 %v89, %v85
  %v118 = vpack.c.b16 %v94, %v90
  %v119 = vpack.c.b16 %v95, %v91
  %v120 = vpack.c.b16 %v96, %v92
  %v121 = vpack.c.b16 %v97, %v93
  %v122 = vpack.c.b16 %v102, %v98
  %v123 = vpack.c.b16 %v103, %v99
  %v124 = vpack.c.b16 %v104, %v100
  %v125 = vpack.c.b16 %v105, %v101
  %v126 = vpack.c.b16 %v110, %v106
  %v127 = vpack.c.b16 %v111, %v107
  %v128 = vpack.c.b16 %v112, %v108
  %v129 = vpack.c.b16 %v113, %v109
  %vm146 = vcmask 523264
  %v148 = vsel %vm146, %v65, 0
  %150 = vmatprep.subr.bf16.mxu0 %v115
  %151 = vmatpush1.bf16.msra.mxu0 %v114
  %152 = vmatprep.subr.bf16.mxu0 %v119
  %153 = vmatpush1.bf16.msra.mxu0 %v118
  %154 = vmatprep.subr.bf16.mxu0 %v123
  %155 = vmatpush1.bf16.msra.mxu0 %v122
  %156 = vmatprep.subr.bf16.mxu0 %v127
  %157 = vmatpush1.bf16.msra.mxu0 %v126
  %158 = vmatprep.subr.bf16.mxu0 0
  %159 = vmatpush1.bf16.msra.mxu0 0
  %160 = vmatprep.subr.bf16.mxu0 0
  %161 = vmatpush1.bf16.msra.mxu0 0
  %162 = vmatprep.subr.bf16.mxu0 0
  %163 = vmatpush1.bf16.msra.mxu0 0
  %164 = vmatprep.subr.bf16.mxu0 0
  %165 = vmatpush1.bf16.msra.mxu0 0
  %166 = vmatprep.subr.bf16.mxu0 0
  %167 = vmatpush1.bf16.msra.mxu0 0
  %168 = vmatprep.subr.bf16.mxu0 0
  %169 = vmatpush1.bf16.msra.mxu0 0
  %170 = vmatprep.subr.bf16.mxu0 0
  %171 = vmatpush1.bf16.msra.mxu0 0
  %172 = vmatprep.subr.bf16.mxu0 0
  %173 = vmatpush1.bf16.msra.mxu0 0
  %174 = vmatprep.subr.bf16.mxu0 0
  %175 = vmatpush1.bf16.msra.mxu0 0
  %176 = vmatprep.subr.bf16.mxu0 0
  %177 = vmatpush1.bf16.msra.mxu0 0
  %178 = vmatprep.subr.bf16.mxu0 0
  %179 = vmatpush1.bf16.msra.mxu0 0
  %180 = vmatprep.subr.bf16.mxu0 0
  %181 = vmatpush1.bf16.msra.mxu0 0
  %182 = vmatprep.mubr.bf16.mxu0 0
  %183 = vmatmul.mubr.bf16.gmra.mrb[0].mxu0 %v148
  %v184 = vpop.f32.mrb[0].mxu0
  %v185 = vadd.f32 %v44, %v184
  %v186 = vpop.f32.mrb[0].mxu0
  %v187 = vadd.f32 %v48, %v186
  %v188 = vpop.f32.mrb[0].mxu0
  %v189 = vadd.f32 %v44, %v188
  %v190 = vpop.f32.mrb[0].mxu0
  %v191 = vadd.f32 %v48, %v190
  %192 = vdwg.mxu0
  %193 = vmatprep.subr.bf16.mxu0 %v117
  %194 = vmatpush1.bf16.msra.mxu0 %v116
  %195 = vmatprep.subr.bf16.mxu0 %v121
  %196 = vmatpush1.bf16.msra.mxu0 %v120
  %197 = vmatprep.subr.bf16.mxu0 %v125
  %198 = vmatpush1.bf16.msra.mxu0 %v124
  %199 = vmatprep.subr.bf16.mxu0 %v129
  %200 = vmatpush1.bf16.msra.mxu0 %v128
  %201 = vmatprep.subr.bf16.mxu0 0
  %202 = vmatpush1.bf16.msra.mxu0 0
  %203 = vmatprep.subr.bf16.mxu0 0
  %204 = vmatpush1.bf16.msra.mxu0 0
  %205 = vmatprep.subr.bf16.mxu0 0
  %206 = vmatpush1.bf16.msra.mxu0 0
  %207 = vmatprep.subr.bf16.mxu0 0
  %208 = vmatpush1.bf16.msra.mxu0 0
  %209 = vmatprep.subr.bf16.mxu0 0
  %210 = vmatpush1.bf16.msra.mxu0 0
  %211 = vmatprep.subr.bf16.mxu0 0
  %212 = vmatpush1.bf16.msra.mxu0 0
  %213 = vmatprep.subr.bf16.mxu0 0
  %214 = vmatpush1.bf16.msra.mxu0 0
  %215 = vmatprep.subr.bf16.mxu0 0
  %216 = vmatpush1.bf16.msra.mxu0 0
  %217 = vmatprep.subr.bf16.mxu0 0
  %218 = vmatpush1.bf16.msra.mxu0 0
  %219 = vmatprep.subr.bf16.mxu0 0
  %220 = vmatpush1.bf16.msra.mxu0 0
  %221 = vmatprep.subr.bf16.mxu0 0
  %222 = vmatpush1.bf16.msra.mxu0 0
  %223 = vmatprep.subr.bf16.mxu0 0
  %224 = vmatpush1.bf16.msra.mxu0 0
  %225 = vmatprep.mubr.bf16.mxu0 0
  %226 = vmatmul.mubr.bf16.gmra.mrb[0].mxu0 %v148
  %v227 = vpop.f32.mrb[0].mxu0
  %v228 = vadd.f32 %v52, %v227
  %v229 = vpop.f32.mrb[0].mxu0
  %v230 = vadd.f32 %v56, %v229
  %v231 = vpop.f32.mrb[0].mxu0
  %v232 = vadd.f32 %v52, %v231
  %v233 = vpop.f32.mrb[0].mxu0
  %v234 = vadd.f32 %v56, %v233
  %235 = vdwg.mxu0
  %v236 = vmax.f32 %v185, 0.0
  %v237 = vmax.f32 %v187, 0.0
  %v238 = vmax.f32 %v228, 0.0
  %v239 = vmax.f32 %v230, 0.0
  %v240 = vmax.f32 %v189, 0.0
  %v241 = vmax.f32 %v191, 0.0
  %v242 = vmax.f32 %v232, 0.0
  %v243 = vmax.f32 %v234, 0.0
  %v244 = vpack.c.bf16 %v240, %v236
  %v245 = vpack.c.bf16 %v241, %v237
  %v246 = vpack.c.bf16 %v242, %v238
  %v247 = vpack.c.bf16 %v243, %v239
  %v248 = vld [vmem:[%s3] sm:$0xf]
  %v249 = vld [vmem:[%s3 + $0x4] sm:$0xf]
  %v250 = vld [vmem:[%s3 + $0x8] sm:$0xf]
  %v251 = vld [vmem:[%s3 + $0xc] sm:$0xf]
  %v252 = vld [vmem:[%s3 + $0x10] sm:$0xf]
  %v253 = vld [vmem:[%s3 + $0x14] sm:$0xf]
  %v254 = vld [vmem:[%s3 + $0x18] sm:$0xf]
  %v255 = vld [vmem:[%s3 + $0x1c] sm:$0xf]
  %v256 = vld [vmem:[%s3 + $0x20] sm:$0xf]
  %v257 = vld [vmem:[%s3 + $0x24] sm:$0xf]
  %v258 = vld [vmem:[%s3 + $0x28] sm:$0xf]
  %v259 = vld [vmem:[%s3 + $0x2c] sm:$0xf]
  %v260 = vld [vmem:[%s3 + $0x30] sm:$0xf]
  %v261 = vld [vmem:[%s3 + $0x34] sm:$0xf]
  %v262 = vld [vmem:[%s3 + $0x38] sm:$0xf]
  %v263 = vld [vmem:[%s3 + $0x3c] sm:$0xf]
  %v264 = vld [vmem:[%s3 + $0x40] sm:$0xf]
  %v265 = vld [vmem:[%s3 + $0x44] sm:$0xf]
  %v266 = vld [vmem:[%s3 + $0x48] sm:$0xf]
  %v267 = vld [vmem:[%s3 + $0x4c] sm:$0xf]
  %v268 = vld [vmem:[%s3 + $0x50] sm:$0xf]
  %v269 = vld [vmem:[%s3 + $0x54] sm:$0xf]
  %v270 = vld [vmem:[%s3 + $0x58] sm:$0xf]
  %v271 = vld [vmem:[%s3 + $0x5c] sm:$0xf]
  %v272 = vld [vmem:[%s3 + $0x60] sm:$0xf]
  %v273 = vld [vmem:[%s3 + $0x64] sm:$0xf]
  %v274 = vld [vmem:[%s3 + $0x68] sm:$0xf]
  %v275 = vld [vmem:[%s3 + $0x6c] sm:$0xf]
  %v276 = vld [vmem:[%s3 + $0x70] sm:$0xf]
  %v277 = vld [vmem:[%s3 + $0x74] sm:$0xf]
  %v278 = vld [vmem:[%s3 + $0x78] sm:$0xf]
  %v279 = vld [vmem:[%s3 + $0x7c] sm:$0xf]
  %v280 = vld [vmem:[%s3 + $0x80] sm:$0xf]
  %v281 = vld [vmem:[%s3 + $0x84] sm:$0xf]
  %v282 = vld [vmem:[%s3 + $0x88] sm:$0xf]
  %v283 = vld [vmem:[%s3 + $0x8c] sm:$0xf]
  %v284 = vld [vmem:[%s3 + $0x90] sm:$0xf]
  %v285 = vld [vmem:[%s3 + $0x94] sm:$0xf]
  %v286 = vld [vmem:[%s3 + $0x98] sm:$0xf]
  %v287 = vld [vmem:[%s3 + $0x9c] sm:$0xf]
  %v288 = vld [vmem:[%s3 + $0xa0] sm:$0xf]
  %v289 = vld [vmem:[%s3 + $0xa4] sm:$0xf]
  %v290 = vld [vmem:[%s3 + $0xa8] sm:$0xf]
  %v291 = vld [vmem:[%s3 + $0xac] sm:$0xf]
  %v292 = vld [vmem:[%s3 + $0xb0] sm:$0xf]
  %v293 = vld [vmem:[%s3 + $0xb4] sm:$0xf]
  %v294 = vld [vmem:[%s3 + $0xb8] sm:$0xf]
  %v295 = vld [vmem:[%s3 + $0xbc] sm:$0xf]
  %v296 = vld [vmem:[%s3 + $0xc0] sm:$0xf]
  %v297 = vld [vmem:[%s3 + $0xc4] sm:$0xf]
  %v298 = vld [vmem:[%s3 + $0xc8] sm:$0xf]
  %v299 = vld [vmem:[%s3 + $0xcc] sm:$0xf]
  %v300 = vld [vmem:[%s3 + $0xd0] sm:$0xf]
  %v301 = vld [vmem:[%s3 + $0xd4] sm:$0xf]
  %v302 = vld [vmem:[%s3 + $0xd8] sm:$0xf]
  %v303 = vld [vmem:[%s3 + $0xdc] sm:$0xf]
  %v304 = vld [vmem:[%s3 + $0xe0] sm:$0xf]
  %v305 = vld [vmem:[%s3 + $0xe4] sm:$0xf]
  %v306 = vld [vmem:[%s3 + $0xe8] sm:$0xf]
  %v307 = vld [vmem:[%s3 + $0xec] sm:$0xf]
  %v308 = vld [vmem:[%s3 + $0xf0] sm:$0xf]
  %v309 = vld [vmem:[%s3 + $0xf4] sm:$0xf]
  %v310 = vld [vmem:[%s3 + $0xf8] sm:$0xf]
  %v311 = vld [vmem:[%s3 + $0xfc] sm:$0xf]
  %v312 = vld [vmem:[%s4] sm:$0x1]
  %v314 = vlaneseq
  %v315 = vshrl.u32 %v314, 7
  %v316 = vsub.s32 0, %v315
  %v317 = vrot.slane %v312, %v316
  %v383 = vunpack.c.l.b16 %v248
  %v384 = vunpack.c.l.b16 %v249
  %v385 = vunpack.c.l.b16 %v250
  %v386 = vunpack.c.l.b16 %v251
  %v387 = vunpack.c.l.b16 %v252
  %v388 = vunpack.c.l.b16 %v253
  %v389 = vunpack.c.l.b16 %v254
  %v390 = vunpack.c.l.b16 %v255
  %v391 = vunpack.c.l.b16 %v256
  %v392 = vunpack.c.l.b16 %v257
  %v393 = vunpack.c.l.b16 %v258
  %v394 = vunpack.c.l.b16 %v259
  %v395 = vunpack.c.l.b16 %v260
  %v396 = vunpack.c.l.b16 %v261
  %v397 = vunpack.c.l.b16 %v262
  %v398 = vunpack.c.l.b16 %v263
  %v399 = vunpack.c.l.b16 %v264
  %v400 = vunpack.c.l.b16 %v265
  %v401 = vunpack.c.l.b16 %v266
  %v402 = vunpack.c.l.b16 %v267
  %v403 = vunpack.c.l.b16 %v268
  %v404 = vunpack.c.l.b16 %v269
  %v405 = vunpack.c.l.b16 %v270
  %v406 = vunpack.c.l.b16 %v271
  %v407 = vunpack.c.l.b16 %v272
  %v408 = vunpack.c.l.b16 %v273
  %v409 = vunpack.c.l.b16 %v274
  %v410 = vunpack.c.l.b16 %v275
  %v411 = vunpack.c.l.b16 %v276
  %v412 = vunpack.c.l.b16 %v277
  %v413 = vunpack.c.l.b16 %v278
  %v414 = vunpack.c.l.b16 %v279
  %v415 = vunpack.c.l.b16 %v280
  %v416 = vunpack.c.l.b16 %v281
  %v417 = vunpack.c.l.b16 %v282
  %v418 = vunpack.c.l.b16 %v283
  %v419 = vunpack.c.l.b16 %v284
  %v420 = vunpack.c.l.b16 %v285
  %v421 = vunpack.c.l.b16 %v286
  %v422 = vunpack.c.l.b16 %v287
  %v423 = vunpack.c.l.b16 %v288
  %v424 = vunpack.c.l.b16 %v289
  %v425 = vunpack.c.l.b16 %v290
  %v426 = vunpack.c.l.b16 %v291
  %v427 = vunpack.c.l.b16 %v292
  %v428 = vunpack.c.l.b16 %v293
  %v429 = vunpack.c.l.b16 %v294
  %v430 = vunpack.c.l.b16 %v295
  %v431 = vunpack.c.l.b16 %v296
  %v432 = vunpack.c.l.b16 %v297
  %v433 = vunpack.c.l.b16 %v298
  %v434 = vunpack.c.l.b16 %v299
  %v435 = vunpack.c.l.b16 %v300
  %v436 = vunpack.c.l.b16 %v301
  %v437 = vunpack.c.l.b16 %v302
  %v438 = vunpack.c.l.b16 %v303
  %v439 = vunpack.c.l.b16 %v304
  %v440 = vunpack.c.l.b16 %v305
  %v441 = vunpack.c.l.b16 %v306
  %v442 = vunpack.c.l.b16 %v307
  %v443 = vunpack.c.l.b16 %v308
  %v444 = vunpack.c.l.b16 %v309
  %v445 = vunpack.c.l.b16 %v310
  %v446 = vunpack.c.l.b16 %v311
  %v447 = vpack.c.b16 %v384, %v383
  %v448 = vpack.c.b16 %v386, %v385
  %v449 = vpack.c.b16 %v388, %v387
  %v450 = vpack.c.b16 %v390, %v389
  %v451 = vpack.c.b16 %v392, %v391
  %v452 = vpack.c.b16 %v394, %v393
  %v453 = vpack.c.b16 %v396, %v395
  %v454 = vpack.c.b16 %v398, %v397
  %v455 = vpack.c.b16 %v400, %v399
  %v456 = vpack.c.b16 %v402, %v401
  %v457 = vpack.c.b16 %v404, %v403
  %v458 = vpack.c.b16 %v406, %v405
  %v459 = vpack.c.b16 %v408, %v407
  %v460 = vpack.c.b16 %v410, %v409
  %v461 = vpack.c.b16 %v412, %v411
  %v462 = vpack.c.b16 %v414, %v413
  %v463 = vpack.c.b16 %v416, %v415
  %v464 = vpack.c.b16 %v418, %v417
  %v465 = vpack.c.b16 %v420, %v419
  %v466 = vpack.c.b16 %v422, %v421
  %v467 = vpack.c.b16 %v424, %v423
  %v468 = vpack.c.b16 %v426, %v425
  %v469 = vpack.c.b16 %v428, %v427
  %v470 = vpack.c.b16 %v430, %v429
  %v471 = vpack.c.b16 %v432, %v431
  %v472 = vpack.c.b16 %v434, %v433
  %v473 = vpack.c.b16 %v436, %v435
  %v474 = vpack.c.b16 %v438, %v437
  %v475 = vpack.c.b16 %v440, %v439
  %v476 = vpack.c.b16 %v442, %v441
  %v477 = vpack.c.b16 %v444, %v443
  %v478 = vpack.c.b16 %v446, %v445
  %511 = vmatprep.subr.bf16.mxu0 0
  %512 = vmatpush1.bf16.msra.mxu0 %v447
  %513 = vmatprep.subr.bf16.mxu0 0
  %514 = vmatpush1.bf16.msra.mxu0 %v448
  %515 = vmatprep.subr.bf16.mxu0 0
  %516 = vmatpush1.bf16.msra.mxu0 %v449
  %517 = vmatprep.subr.bf16.mxu0 0
  %518 = vmatpush1.bf16.msra.mxu0 %v450
  %519 = vmatprep.subr.bf16.mxu0 0
  %520 = vmatpush1.bf16.msra.mxu0 %v451
  %521 = vmatprep.subr.bf16.mxu0 0
  %522 = vmatpush1.bf16.msra.mxu0 %v452
  %523 = vmatprep.subr.bf16.mxu0 0
  %524 = vmatpush1.bf16.msra.mxu0 %v453
  %525 = vmatprep.subr.bf16.mxu0 0
  %526 = vmatpush1.bf16.msra.mxu0 %v454
  %527 = vmatprep.subr.bf16.mxu0 0
  %528 = vmatpush1.bf16.msra.mxu0 %v455
  %529 = vmatprep.subr.bf16.mxu0 0
  %530 = vmatpush1.bf16.msra.mxu0 %v456
  %531 = vmatprep.subr.bf16.mxu0 0
  %532 = vmatpush1.bf16.msra.mxu0 %v457
  %533 = vmatprep.subr.bf16.mxu0 0
  %534 = vmatpush1.bf16.msra.mxu0 %v458
  %535 = vmatprep.subr.bf16.mxu0 0
  %536 = vmatpush1.bf16.msra.mxu0 %v459
  %537 = vmatprep.subr.bf16.mxu0 0
  %538 = vmatpush1.bf16.msra.mxu0 %v460
  %539 = vmatprep.subr.bf16.mxu0 0
  %540 = vmatpush1.bf16.msra.mxu0 %v461
  %541 = vmatprep.subr.bf16.mxu0 0
  %542 = vmatpush1.bf16.msra.mxu0 %v462
  %543 = vmatprep.mubr.bf16.mxu0 %v245
  %544 = vmatmul.mubr.bf16.gmra.mrb[0].mxu0 %v244
  %v545 = vpop.f32.mrb[0].mxu0
  %v546 = vadd.f32 %v317, %v545
  %v547 = vpop.f32.mrb[0].mxu0
  %v548 = vpop.f32.mrb[0].mxu0
  %v549 = vadd.f32 %v317, %v548
  %v550 = vpop.f32.mrb[0].mxu0
  %551 = vdwg.mxu0
  %552 = vmatprep.subr.bf16.mxu0 0
  %553 = vmatpush1.bf16.msra.mxu0 %v463
  %554 = vmatprep.subr.bf16.mxu0 0
  %555 = vmatpush1.bf16.msra.mxu0 %v464
  %556 = vmatprep.subr.bf16.mxu0 0
  %557 = vmatpush1.bf16.msra.mxu0 %v465
  %558 = vmatprep.subr.bf16.mxu0 0
  %559 = vmatpush1.bf16.msra.mxu0 %v466
  %560 = vmatprep.subr.bf16.mxu0 0
  %561 = vmatpush1.bf16.msra.mxu0 %v467
  %562 = vmatprep.subr.bf16.mxu0 0
  %563 = vmatpush1.bf16.msra.mxu0 %v468
  %564 = vmatprep.subr.bf16.mxu0 0
  %565 = vmatpush1.bf16.msra.mxu0 %v469
  %566 = vmatprep.subr.bf16.mxu0 0
  %567 = vmatpush1.bf16.msra.mxu0 %v470
  %568 = vmatprep.subr.bf16.mxu0 0
  %569 = vmatpush1.bf16.msra.mxu0 %v471
  %570 = vmatprep.subr.bf16.mxu0 0
  %571 = vmatpush1.bf16.msra.mxu0 %v472
  %572 = vmatprep.subr.bf16.mxu0 0
  %573 = vmatpush1.bf16.msra.mxu0 %v473
  %574 = vmatprep.subr.bf16.mxu0 0
  %575 = vmatpush1.bf16.msra.mxu0 %v474
  %576 = vmatprep.subr.bf16.mxu0 0
  %577 = vmatpush1.bf16.msra.mxu0 %v475
  %578 = vmatprep.subr.bf16.mxu0 0
  %579 = vmatpush1.bf16.msra.mxu0 %v476
  %580 = vmatprep.subr.bf16.mxu0 0
  %581 = vmatpush1.bf16.msra.mxu0 %v477
  %582 = vmatprep.subr.bf16.mxu0 0
  %583 = vmatpush1.bf16.msra.mxu0 %v478
  %584 = vmatprep.mubr.bf16.mxu0 %v247
  %585 = vmatmul.mubr.bf16.gmra.mrb[0].mxu0 %v246
  %v586 = vpop.f32.mrb[0].mxu0
  %v587 = vadd.f32 %v546, %v586
  %v588 = vpop.f32.mrb[0].mxu0
  %v589 = vpop.f32.mrb[0].mxu0
  %v590 = vadd.f32 %v549, %v589
  %v591 = vpop.f32.mrb[0].mxu0
  %592 = vdwg.mxu0
  %v593 = vpack.c.bf16 %v590, %v587
  %v595 = vunpack.c.l.b16 %v593
  %v596 = vunpack.c.h.b16 %v593
  %v597 = vpack.c.b16 %v595, %v595
  %v598 = vpack.c.b16 %v596, %v596
  %vm601 = vcmask 519168
  %602 = vst.msk [vmem:[%s5] sm:$0xf] %vm601, %v597
  %603 = vst.msk [vmem:[%s5 + $0x4] sm:$0xf] %vm601, %v598
  // Predicated region
  $region22: #{instance_attention_forward.25} parent=0 // pred_check
    _
  $region23: #{instance_attention_forward.25} parent=0 // pred_check_branch
    %605 = sbr.rel (0) target = $region25
  $region24: #{instance_attention_forward.25} parent=0 // pred_region
    _
  $region25: #{instance_attention_forward.25} parent=0 // pred_fallthru
    _
  // Predicated region
  $region26: #{instance_attention_forward.25} parent=0 // pred_check
    _
  $region27: #{instance_attention_forward.25} parent=0 // pred_check_branch
    %607 = sbr.rel (0) target = $region29
  $region28: #{instance_attention_forward.25} parent=0 // pred_region
    _
  $region29: #{instance_attention_forward.25} parent=0 // pred_fallthru
    _

// kernel: instance_attention_forward.22
$region0: #{instance_attention_forward.22}
  #allocation0 [shape = 'u32[]', space=smem, size = 0x4, offset = 0x4, fixed_abs, tag = 'smem constant byte address 0x4 - core index']
  #allocation1 [shape = 'u32[144,128]{1,0:T(1,128)}', space=vmem, size = 0x12000, scoped, tag = 'internal scratch']
  %s0 = inlined_call_operand.vmem [shape: bf16[16,8,8], index: 0, kind: input, shape index: {}]
  %s1 = inlined_call_operand.vmem [shape: bf16[16,8,8], index: 1, kind: input, shape index: {}]
  %s2 = inlined_call_operand.vmem [shape: bf16[16,8,8], index: 2, kind: input, shape index: {}]
  %s3 = inlined_call_operand.vmem [shape: f32[16,1,8], index: 3, kind: input, shape index: {}]
  %s4 = inlined_call_operand.vmem [shape: bf16[16,8,8], index: 4, kind: output, shape index: {}]
  %s5 = sld [smem:[#allocation0]]
  $region26: #{instance_attention_forward.22} parent=0
    _
  %s7 = ssub.s32 1, %s5
  %s8 = scalar_select 0, %s7, %s5
  // Predicated region
  $region2: #{instance_attention_forward.22} parent=0 // pred_check
    _
  $region3: #{instance_attention_forward.22} parent=0 // pred_check_branch
    %10 = sbr.rel (0) target = $region5
  $region4: #{instance_attention_forward.22} parent=0 // pred_region
    _
  $region5: #{instance_attention_forward.22} parent=0 // pred_fallthru
    _
  // Predicated region
  $region6: #{instance_attention_forward.22} parent=0 // pred_check
    _
  $region7: #{instance_attention_forward.22} parent=0 // pred_check_branch
    %12 = sbr.rel (0) target = $region9
  $region8: #{instance_attention_forward.22} parent=0 // pred_region
    _
  $region9: #{instance_attention_forward.22} parent=0 // pred_fallthru
    _
  // Predicated region
  $region10: #{instance_attention_forward.22} parent=0 // pred_check
    _
  $region11: #{instance_attention_forward.22} parent=0 // pred_check_branch
    %14 = sbr.rel (0) target = $region13
  $region12: #{instance_attention_forward.22} parent=0 // pred_region
    _
  $region13: #{instance_attention_forward.22} parent=0 // pred_fallthru
    _
  // Predicated region
  $region14: #{instance_attention_forward.22} parent=0 // pred_check
    _
  $region15: #{instance_attention_forward.22} parent=0 // pred_check_branch
    %16 = sbr.rel (0) target = $region17
  $region16: #{instance_attention_forward.22} parent=0 // pred_region
    _
  $region17: #{instance_attention_forward.22} parent=0 // pred_fallthru
    _
  %v18 = vld [vmem:[%s0] sm:$0xf]
  %v19 = vld [vmem:[%s0 + $0x4] sm:$0xf]
  %v20 = vld [vmem:[%s0 + $0x8] sm:$0xf]
  %v21 = vld [vmem:[%s0 + $0xc] sm:$0xf]
  %v22 = vld [vmem:[%s0 + $0x10] sm:$0xf]
  %v23 = vld [vmem:[%s0 + $0x14] sm:$0xf]
  %v24 = vld [vmem:[%s0 + $0x18] sm:$0xf]
  %v25 = vld [vmem:[%s0 + $0x1c] sm:$0xf]
  %v26 = vld [vmem:[%s0 + $0x20] sm:$0xf]
  %v27 = vld [vmem:[%s0 + $0x24] sm:$0xf]
  %v28 = vld [vmem:[%s0 + $0x28] sm:$0xf]
  %v29 = vld [vmem:[%s0 + $0x2c] sm:$0xf]
  %v30 = vld [vmem:[%s0 + $0x30] sm:$0xf]
  %v31 = vld [vmem:[%s0 + $0x34] sm:$0xf]
  %v32 = vld [vmem:[%s0 + $0x38] sm:$0xf]
  %v33 = vld [vmem:[%s0 + $0x3c] sm:$0xf]
  %v34 = vld [vmem:[%s1] sm:$0xf]
  %v35 = vld [vmem:[%s1 + $0x4] sm:$0xf]
  %v36 = vld [vmem:[%s1 + $0x8] sm:$0xf]
  %v37 = vld [vmem:[%s1 + $0xc] sm:$0xf]
  %v38 = vld [vmem:[%s1 + $0x10] sm:$0xf]
  %v39 = vld [vmem:[%s1 + $0x14] sm:$0xf]
  %v40 = vld [vmem:[%s1 + $0x18] sm:$0xf]
  %v41 = vld [vmem:[%s1 + $0x1c] sm:$0xf]
  %v42 = vld [vmem:[%s1 + $0x20] sm:$0xf]
  %v43 = vld [vmem:[%s1 + $0x24] sm:$0xf]
  %v44 = vld [vmem:[%s1 + $0x28] sm:$0xf]
  %v45 = vld [vmem:[%s1 + $0x2c] sm:$0xf]
  %v46 = vld [vmem:[%s1 + $0x30] sm:$0xf]
  %v47 = vld [vmem:[%s1 + $0x34] sm:$0xf]
  %v48 = vld [vmem:[%s1 + $0x38] sm:$0xf]
  %v49 = vld [vmem:[%s1 + $0x3c] sm:$0xf]
  %v50 = vld [vmem:[%s2] sm:$0xf]
  %v51 = vld [vmem:[%s2 + $0x4] sm:$0xf]
  %v52 = vld [vmem:[%s2 + $0x8] sm:$0xf]
  %v53 = vld [vmem:[%s2 + $0xc] sm:$0xf]
  %v54 = vld [vmem:[%s2 + $0x10] sm:$0xf]
  %v55 = vld [vmem:[%s2 + $0x14] sm:$0xf]
  %v56 = vld [vmem:[%s2 + $0x18] sm:$0xf]
  %v57 = vld [vmem:[%s2 + $0x1c] sm:$0xf]
  %v58 = vld [vmem:[%s2 + $0x20] sm:$0xf]
  %v59 = vld [vmem:[%s2 + $0x24] sm:$0xf]
  %v60 = vld [vmem:[%s2 + $0x28] sm:$0xf]
  %v61 = vld [vmem:[%s2 + $0x2c] sm:$0xf]
  %v62 = vld [vmem:[%s2 + $0x30] sm:$0xf]
  %v63 = vld [vmem:[%s2 + $0x34] sm:$0xf]
  %v64 = vld [vmem:[%s2 + $0x38] sm:$0xf]
  %v65 = vld [vmem:[%s2 + $0x3c] sm:$0xf]
  %v66 = vld [vmem:[%s3] sm:$0x1]
  %v67 = vld [vmem:[%s3 + $0x1] sm:$0x1]
  %v68 = vld [vmem:[%s3 + $0x2] sm:$0x1]
  %v69 = vld [vmem:[%s3 + $0x3] sm:$0x1]
  %v70 = vld [vmem:[%s3 + $0x4] sm:$0x1]
  %v71 = vld [vmem:[%s3 + $0x5] sm:$0x1]
  %v72 = vld [vmem:[%s3 + $0x6] sm:$0x1]
  %v73 = vld [vmem:[%s3 + $0x7] sm:$0x1]
  %v74 = vld [vmem:[%s3 + $0x8] sm:$0x1]
  %v75 = vld [vmem:[%s3 + $0x9] sm:$0x1]
  %v76 = vld [vmem:[%s3 + $0xa] sm:$0x1]
  %v77 = vld [vmem:[%s3 + $0xb] sm:$0x1]
  %v78 = vld [vmem:[%s3 + $0xc] sm:$0x1]
  %v79 = vld [vmem:[%s3 + $0xd] sm:$0x1]
  %v80 = vld [vmem:[%s3 + $0xe] sm:$0x1]
  %v81 = vld [vmem:[%s3 + $0xf] sm:$0x1]
  %vm82 = vcmask 64512
  %v84 = vsel %vm82, %v18, 0
  %v87 = vsel %vm82, %v34, 0
  %89 = vmatprep.subr.bf16.mxu0 0
  %90 = vmatpush1.bf16.xpose.msra.mxu0 %v87
  %91 = vmatprep.subr.bf16.mxu0 0
  %92 = vmatpush1.bf16.xpose.msra.mxu0 0
  %93 = vmatprep.subr.bf16.mxu0 0
  %94 = vmatpush1.bf16.xpose.msra.mxu0 0
  %95 = vmatprep.subr.bf16.mxu0 0
  %96 = vmatpush1.bf16.xpose.msra.mxu0 0
  %97 = vmatprep.subr.bf16.mxu0 0
  %98 = vmatpush1.bf16.xpose.msra.mxu0 0
  %99 = vmatprep.subr.bf16.mxu0 0
  %100 = vmatpush1.bf16.xpose.msra.mxu0 0
  %101 = vmatprep.subr.bf16.mxu0 0
  %102 = vmatpush1.bf16.xpose.msra.mxu0 0
  %103 = vmatprep.subr.bf16.mxu0 0
  %104 = vmatpush1.bf16.xpose.msra.mxu0 0
  %105 = vmatprep.subr.bf16.mxu0 0
  %106 = vmatpush1.bf16.xpose.msra.mxu0 0
  %107 = vmatprep.subr.bf16.mxu0 0
  %108 = vmatpush1.bf16.xpose.msra.mxu0 0
  %109 = vmatprep.subr.bf16.mxu0 0
  %110 = vmatpush1.bf16.xpose.msra.mxu0 0
  %111 = vmatprep.subr.bf16.mxu0 0
  %112 = vmatpush1.bf16.xpose.msra.mxu0 0
  %113 = vmatprep.subr.bf16.mxu0 0
  %114 = vmatpush1.bf16.xpose.msra.mxu0 0
  %115 = vmatprep.subr.bf16.mxu0 0
  %116 = vmatpush1.bf16.xpose.msra.mxu0 0
  %117 = vmatprep.subr.bf16.mxu0 0
  %118 = vmatpush1.bf16.xpose.msra.mxu0 0
  %119 = vmatprep.subr.bf16.mxu0 0
  %120 = vmatpush1.bf16.xpose.msra.mxu0 0
  %121 = vmatprep.mubr.bf16.mxu0 0
  %122 = vmatmul.mubr.bf16.gmra.mrb[0].mxu0 %v84
  %v123 = vpop.f32.mrb[0].mxu0
  %v124 = vadd.f32 0.0, %v123
  %v125 = vpop.f32.mrb[0].mxu0
  %v126 = vpop.f32.mrb[0].mxu0
  %v127 = vpop.f32.mrb[0].mxu0
  %128 = vdwg.mxu0
  %v130 = vsel %vm82, %v19, 0
  %v133 = vsel %vm82, %v35, 0
  %135 = vmatprep.subr.bf16.mxu0 0
  %136 = vmatpush1.bf16.xpose.msra.mxu0 %v133
  %137 = vmatprep.subr.bf16.mxu0 0
  %138 = vmatpush1.bf16.xpose.msra.mxu0 0
  %139 = vmatprep.subr.bf16.mxu0 0
  %140 = vmatpush1.bf16.xpose.msra.mxu0 0
  %141 = vmatprep.subr.bf16.mxu0 0
  %142 = vmatpush1.bf16.xpose.msra.mxu0 0
  %143 = vmatprep.subr.bf16.mxu0 0
  %144 = vmatpush1.bf16.xpose.msra.mxu0 0
  %145 = vmatprep.subr.bf16.mxu0 0
  %146 = vmatpush1.bf16.xpose.msra.mxu0 0
  %147 = vmatprep.subr.bf16.mxu0 0
  %148 = vmatpush1.bf16.xpose.msra.mxu0 0
  %149 = vmatprep.subr.bf16.mxu0 0
  %150 = vmatpush1.bf16.xpose.msra.mxu0 0
  %151 = vmatprep.subr.bf16.mxu0 0
  %152 = vmatpush1.bf16.xpose.msra.mxu0 0
  %153 = vmatprep.subr.bf16.mxu0 0
  %154 = vmatpush1.bf16.xpose.msra.mxu0 0
  %155 = vmatprep.subr.bf16.mxu0 0
  %156 = vmatpush1.bf16.xpose.msra.mxu0 0
  %157 = vmatprep.subr.bf16.mxu0 0
  %158 = vmatpush1.bf16.xpose.msra.mxu0 0
  %159 = vmatprep.subr.bf16.mxu0 0
  %160 = vmatpush1.bf16.xpose.msra.mxu0 0
  %161 = vmatprep.subr.bf16.mxu0 0
  %162 = vmatpush1.bf16.xpose.msra.mxu0 0
  %163 = vmatprep.subr.bf16.mxu0 0
  %164 = vmatpush1.bf16.xpose.msra.mxu0 0
  %165 = vmatprep.subr.bf16.mxu0 0
  %166 = vmatpush1.bf16.xpose.msra.mxu0 0
  %167 = vmatprep.mubr.bf16.mxu0 0
  %168 = vmatmul.mubr.bf16.gmra.mrb[0].mxu0 %v130
  %v169 = vpop.f32.mrb[0].mxu0
  %v170 = vadd.f32 0.0, %v169
  %v171 = vpop.f32.mrb[0].mxu0
  %v172 = vpop.f32.mrb[0].mxu0
  %v173 = vpop.f32.mrb[0].mxu0
  %174 = vdwg.mxu0
  %v176 = vsel %vm82, %v20, 0
  %v179 = vsel %vm82, %v36, 0
  %181 = vmatprep.subr.bf16.mxu0 0
  %182 = vmatpush1.bf16.xpose.msra.mxu0 %v179
  %183 = vmatprep.subr.bf16.mxu0 0
  %184 = vmatpush1.bf16.xpose.msra.mxu0 0
  %185 = vmatprep.subr.bf16.mxu0 0
  %186 = vmatpush1.bf16.xpose.msra.mxu0 0
  %187 = vmatprep.subr.bf16.mxu0 0
  %188 = vmatpush1.bf16.xpose.msra.mxu0 0
  %189 = vmatprep.subr.bf16.mxu0 0
  %190 = vmatpush1.bf16.xpose.msra.mxu0 0
  %191 = vmatprep.subr.bf16.mxu0 0
  %192 = vmatpush1.bf16.xpose.msra.mxu0 0
  %193 = vmatprep.subr.bf16.mxu0 0
  %194 = vmatpush1.bf16.xpose.msra.mxu0 0
  %195 = vmatprep.subr.bf16.mxu0 0
  %196 = vmatpush1.bf16.xpose.msra.mxu0 0
  %197 = vmatprep.subr.bf16.mxu0 0
  %198 = vmatpush1.bf16.xpose.msra.mxu0 0
  %199 = vmatprep.subr.bf16.mxu0 0
  %200 = vmatpush1.bf16.xpose.msra.mxu0 0
  %201 = vmatprep.subr.bf16.mxu0 0
  %202 = vmatpush1.bf16.xpose.msra.mxu0 0
  %203 = vmatprep.subr.bf16.mxu0 0
  %204 = vmatpush1.bf16.xpose.msra.mxu0 0
  %205 = vmatprep.subr.bf16.mxu0 0
  %206 = vmatpush1.bf16.xpose.msra.mxu0 0
  %207 = vmatprep.subr.bf16.mxu0 0
  %208 = vmatpush1.bf16.xpose.msra.mxu0 0
  %209 = vmatprep.subr.bf16.mxu0 0
  %210 = vmatpush1.bf16.xpose.msra.mxu0 0
  %211 = vmatprep.subr.bf16.mxu0 0
  %212 = vmatpush1.bf16.xpose.msra.mxu0 0
  %213 = vmatprep.mubr.bf16.mxu0 0
  %214 = vmatmul.mubr.bf16.gmra.mrb[0].mxu0 %v176
  %v215 = vpop.f32.mrb[0].mxu0
  %v216 = vadd.f32 0.0, %v215
  %v217 = vpop.f32.mrb[0].mxu0
  %v218 = vpop.f32.mrb[0].mxu0
  %v219 = vpop.f32.mrb[0].mxu0
  %220 = vdwg.mxu0
  %v222 = vsel %vm82, %v21, 0
  %v225 = vsel %vm82, %v37, 0
  %227 = vmatprep.subr.bf16.mxu0 0
  %228 = vmatpush1.bf16.xpose.msra.mxu0 %v225
  %229 = vmatprep.subr.bf16.mxu0 0
  %230 = vmatpush1.bf16.xpose.msra.mxu0 0
  %231 = vmatprep.subr.bf16.mxu0 0
  %232 = vmatpush1.bf16.xpose.msra.mxu0 0
  %233 = vmatprep.subr.bf16.mxu0 0
  %234 = vmatpush1.bf16.xpose.msra.mxu0 0
  %235 = vmatprep.subr.bf16.mxu0 0
  %236 = vmatpush1.bf16.xpose.msra.mxu0 0
  %237 = vmatprep.subr.bf16.mxu0 0
  %238 = vmatpush1.bf16.xpose.msra.mxu0 0
  %239 = vmatprep.subr.bf16.mxu0 0
  %240 = vmatpush1.bf16.xpose.msra.mxu0 0
  %241 = vmatprep.subr.bf16.mxu0 0
  %242 = vmatpush1.bf16.xpose.msra.mxu0 0
  %243 = vmatprep.subr.bf16.mxu0 0
  %244 = vmatpush1.bf16.xpose.msra.mxu0 0
  %245 = vmatprep.subr.bf16.mxu0 0
  %246 = vmatpush1.bf16.xpose.msra.mxu0 0
  %247 = vmatprep.subr.bf16.mxu0 0
  %248 = vmatpush1.bf16.xpose.msra.mxu0 0
  %249 = vmatprep.subr.bf16.mxu0 0
  %250 = vmatpush1.bf16.xpose.msra.mxu0 0
  %251 = vmatprep.subr.bf16.mxu0 0
  %252 = vmatpush1.bf16.xpose.msra.mxu0 0
  %253 = vmatprep.subr.bf16.mxu0 0
  %254 = vmatpush1.bf16.xpose.msra.mxu0 0
  %255 = vmatprep.subr.bf16.mxu0 0
  %256 = vmatpush1.bf16.xpose.msra.mxu0 0
  %257 = vmatprep.subr.bf16.mxu0 0
  %258 = vmatpush1.bf16.xpose.msra.mxu0 0
  %259 = vmatprep.mubr.bf16.mxu0 0
  %260 = vmatmul.mubr.bf16.gmra.mrb[0].mxu0 %v222
  %v261 = vpop.f32.mrb[0].mxu0
  %v262 = vadd.f32 0.0, %v261
  %v263 = vpop.f32.mrb[0].mxu0
  %v264 = vpop.f32.mrb[0].mxu0
  %v265 = vpop.f32.mrb[0].mxu0
  %266 = vdwg.mxu0
  %v268 = vsel %vm82, %v22, 0
  %v271 = vsel %vm82, %v38, 0
  %273 = vmatprep.subr.bf16.mxu0 0
  %274 = vmatpush1.bf16.xpose.msra.mxu0 %v271
  %275 = vmatprep.subr.bf16.mxu0 0
  %276 = vmatpush1.bf16.xpose.msra.mxu0 0
  %277 = vmatprep.subr.bf16.mxu0 0
  %278 = vmatpush1.bf16.xpose.msra.mxu0 0
  %279 = vmatprep.subr.bf16.mxu0 0
  %280 = vmatpush1.bf16.xpose.msra.mxu0 0
  %281 = vmatprep.subr.bf16.mxu0 0
  %282 = vmatpush1.bf16.xpose.msra.mxu0 0
  %283 = vmatprep.subr.bf16.mxu0 0
  %284 = vmatpush1.bf16.xpose.msra.mxu0 0
  %285 = vmatprep.subr.bf16.mxu0 0
  %286 = vmatpush1.bf16.xpose.msra.mxu0 0
  %287 = vmatprep.subr.bf16.mxu0 0
  %288 = vmatpush1.bf16.xpose.msra.mxu0 0
  %289 = vmatprep.subr.bf16.mxu0 0
  %290 = vmatpush1.bf16.xpose.msra.mxu0 0
  %291 = vmatprep.subr.bf16.mxu0 0
  %292 = vmatpush1.bf16.xpose.msra.mxu0 0
  %293 = vmatprep.subr.bf16.mxu0 0
  %294 = vmatpush1.bf16.xpose.msra.mxu0 0
  %295 = vmatprep.subr.bf16.mxu0 0
  %296 = vmatpush1.bf16.xpose.msra.mxu0 0
  %297 = vmatprep.subr.bf16.mxu0 0
  %298 = vmatpush1.bf16.xpose.msra.mxu0 0
  %299 = vmatprep.subr.bf16.mxu0 0
  %300 = vmatpush1.bf16.xpose.msra.mxu0 0
  %301 = vmatprep.subr.bf16.mxu0 0
  %302 = vmatpush1.bf16.xpose.msra.mxu0 0
  %303 = vmatprep.subr.bf16.mxu0 0
  %304 = vmatpush1.bf16.xpose.msra.mxu0 0
  %305 = vmatprep.mubr.bf16.mxu0 0
  %306 = vmatmul.mubr.bf16.gmra.mrb[0].mxu0 %v268
  %v307 = vpop.f32.mrb[0].mxu0
  %v308 = vadd.f32 0.0, %v307
  %v309 = vpop.f32.mrb[0].mxu0
  %v310 = vpop.f32.mrb[0].mxu0
  %v311 = vpop.f32.mrb[0].mxu0
  %312 = vdwg.mxu0
  %v314 = vsel %vm82, %v23, 0
  %v317 = vsel %vm82, %v39, 0
  %319 = vmatprep.subr.bf16.mxu0 0
  %320 = vmatpush1.bf16.xpose.msra.mxu0 %v317
  %321 = vmatprep.subr.bf16.mxu0 0
  %322 = vmatpush1.bf16.xpose.msra.mxu0 0
  %323 = vmatprep.subr.bf16.mxu0 0
  %324 = vmatpush1.bf16.xpose.msra.mxu0 0
  %325 = vmatprep.subr.bf16.mxu0 0
  %326 = vmatpush1.bf16.xpose.msra.mxu0 0
  %327 = vmatprep.subr.bf16.mxu0 0
  %328 = vmatpush1.bf16.xpose.msra.mxu0 0
  %329 = vmatprep.subr.bf16.mxu0 0
  %330 = vmatpush1.bf16.xpose.msra.mxu0 0
  %331 = vmatprep.subr.bf16.mxu0 0
  %332 = vmatpush1.bf16.xpose.msra.mxu0 0
  %333 = vmatprep.subr.bf16.mxu0 0
  %334 = vmatpush1.bf16.xpose.msra.mxu0 0
  %335 = vmatprep.subr.bf16.mxu0 0
  %336 = vmatpush1.bf16.xpose.msra.mxu0 0
  %337 = vmatprep.subr.bf16.mxu0 0
  %338 = vmatpush1.bf16.xpose.msra.mxu0 0
  %339 = vmatprep.subr.bf16.mxu0 0
  %340 = vmatpush1.bf16.xpose.msra.mxu0 0
  %341 = vmatprep.subr.bf16.mxu0 0
  %342 = vmatpush1.bf16.xpose.msra.mxu0 0
  %343 = vmatprep.subr.bf16.mxu0 0
  %344 = vmatpush1.bf16.xpose.msra.mxu0 0
  %345 = vmatprep.subr.bf16.mxu0 0
  %346 = vmatpush1.bf16.xpose.msra.mxu0 0
  %347 = vmatprep.subr.bf16.mxu0 0
  %348 = vmatpush1.bf16.xpose.msra.mxu0 0
  %349 = vmatprep.subr.bf16.mxu0 0
  %350 = vmatpush1.bf16.xpose.msra.mxu0 0
  %351 = vmatprep.mubr.bf16.mxu0 0
  %352 = vmatmul.mubr.bf16.gmra.mrb[0].mxu0 %v314
  %v353 = vpop.f32.mrb[0].mxu0
  %v354 = vadd.f32 0.0, %v353
  %v355 = vpop.f32.mrb[0].mxu0
  %v356 = vpop.f32.mrb[0].mxu0
  %v357 = vpop.f32.mrb[0].mxu0
  %358 = vdwg.mxu0
  %v360 = vsel %vm82, %v24, 0
  %v363 = vsel %vm82, %v40, 0
  %365 = vmatprep.subr.bf16.mxu0 0
  %366 = vmatpush1.bf16.xpose.msra.mxu0 %v363
  %367 = vmatprep.subr.bf16.mxu0 0
  %368 = vmatpush1.bf16.xpose.msra.mxu0 0
  %369 = vmatprep.subr.bf16.mxu0 0
  %370 = vmatpush1.bf16.xpose.msra.mxu0 0
  %371 = vmatprep.subr.bf16.mxu0 0
  %372 = vmatpush1.bf16.xpose.msra.mxu0 0
  %373 = vmatprep.subr.bf16.mxu0 0
  %374 = vmatpush1.bf16.xpose.msra.mxu0 0
  %375 = vmatprep.subr.bf16.mxu0 0
  %376 = vmatpush1.bf16.xpose.msra.mxu0 0
  %377 = vmatprep.subr.bf16.mxu0 0
  %378 = vmatpush1.bf16.xpose.msra.mxu0 0
  %379 = vmatprep.subr.bf16.mxu0 0
  %380 = vmatpush1.bf16.xpose.msra.mxu0 0
  %381 = vmatprep.subr.bf16.mxu0 0
  %382 = vmatpush1.bf16.xpose.msra.mxu0 0
  %383 = vmatprep.subr.bf16.mxu0 0
  %384 = vmatpush1.bf16.xpose.msra.mxu0 0
  %385 = vmatprep.subr.bf16.mxu0 0
  %386 = vmatpush1.bf16.xpose.msra.mxu0 0
  %387 = vmatprep.subr.bf16.mxu0 0
  %388 = vmatpush1.bf16.xpose.msra.mxu0 0
  %389 = vmatprep.subr.bf16.mxu0 0
  %390 = vmatpush1.bf16.xpose.msra.mxu0 0
  %391 = vmatprep.subr.bf16.mxu0 0
  %392 = vmatpush1.bf16.xpose.msra.mxu0 0
  %393 = vmatprep.subr.bf16.mxu0 0
  %394 = vmatpush1.bf16.xpose.msra.mxu0 0
  %395 = vmatprep.subr.bf16.mxu0 0
  %396 = vmatpush1.bf16.xpose.msra.mxu0 0
  %397 = vmatprep.mubr.bf16.mxu0 0
  %398 = vmatmul.mubr.bf16.gmra.mrb[0].mxu0 %v360
  %v399 = vpop.f32.mrb[0].mxu0
  %v400 = vadd.f32 0.0, %v399
  %v401 = vpop.f32.mrb[0].mxu0
  %v402 = vpop.f32.mrb[0].mxu0
  %v403 = vpop.f32.mrb[0].mxu0
  %404 = vdwg.mxu0
  %v406 = vsel %vm82, %v25, 0
  %v409 = vsel %vm82, %v41, 0
  %411 = vmatprep.subr.bf16.mxu0 0
  %412 = vmatpush1.bf16.xpose.msra.mxu0 %v409
  %413 = vmatprep.subr.bf16.mxu0 0
  %414 = vmatpush1.bf16.xpose.msra.mxu0 0
  %415 = vmatprep.subr.bf16.mxu0 0
  %416 = vmatpush1.bf16.xpose.msra.mxu0 0
  %417 = vmatprep.subr.bf16.mxu0 0
  %418 = vmatpush1.bf16.xpose.msra.mxu0 0
  %419 = vmatprep.subr.bf16.mxu0 0
  %420 = vmatpush1.bf16.xpose.msra.mxu0 0
  %421 = vmatprep.subr.bf16.mxu0 0
  %422 = vmatpush1.bf16.xpose.msra.mxu0 0
  %423 = vmatprep.subr.bf16.mxu0 0
  %424 = vmatpush1.bf16.xpose.msra.mxu0 0
  %425 = vmatprep.subr.bf16.mxu0 0
  %426 = vmatpush1.bf16.xpose.msra.mxu0 0
  %427 = vmatprep.subr.bf16.mxu0 0
  %428 = vmatpush1.bf16.xpose.msra.mxu0 0
  %429 = vmatprep.subr.bf16.mxu0 0
  %430 = vmatpush1.bf16.xpose.msra.mxu0 0
  %431 = vmatprep.subr.bf16.mxu0 0
  %432 = vmatpush1.bf16.xpose.msra.mxu0 0
  %433 = vmatprep.subr.bf16.mxu0 0
  %434 = vmatpush1.bf16.xpose.msra.mxu0 0
  %435 = vmatprep.subr.bf16.mxu0 0
  %436 = vmatpush1.bf16.xpose.msra.mxu0 0
  %437 = vmatprep.subr.bf16.mxu0 0
  %438 = vmatpush1.bf16.xpose.msra.mxu0 0
  %439 = vmatprep.subr.bf16.mxu0 0
  %440 = vmatpush1.bf16.xpose.msra.mxu0 0
  %441 = vmatprep.subr.bf16.mxu0 0
  %442 = vmatpush1.bf16.xpose.msra.mxu0 0
  %443 = vmatprep.mubr.bf16.mxu0 0
  %444 = vmatmul.mubr.bf16.gmra.mrb[0].mxu0 %v406
  %v445 = vpop.f32.mrb[0].mxu0
  %v446 = vadd.f32 0.0, %v445
  %v447 = vpop.f32.mrb[0].mxu0
  %v448 = vpop.f32.mrb[0].mxu0
  %v449 = vpop.f32.mrb[0].mxu0
  %450 = vdwg.mxu0
  %v452 = vsel %vm82, %v26, 0
  %v455 = vsel %vm82, %v42, 0
  %457 = vmatprep.subr.bf16.mxu0 0
  %458 = vmatpush1.bf16.xpose.msra.mxu0 %v455
  %459 = vmatprep.subr.bf16.mxu0 0
  %460 = vmatpush1.bf16.xpose.msra.mxu0 0
  %461 = vmatprep.subr.bf16.mxu0 0
  %462 = vmatpush1.bf16.xpose.msra.mxu0 0
  %463 = vmatprep.subr.bf16.mxu0 0
  %464 = vmatpush1.bf16.xpose.msra.mxu0 0
  %465 = vmatprep.subr.bf16.mxu0 0
  %466 = vmatpush1.bf16.xpose.msra.mxu0 0
  %467 = vmatprep.subr.bf16.mxu0 0
  %468 = vmatpush1.bf16.xpose.msra.mxu0 0
  %469 = vmatprep.subr.bf16.mxu0 0
  %470 = vmatpush1.bf16.xpose.msra.mxu0 0
  %471 = vmatprep.subr.bf16.mxu0 0
  %472 = vmatpush1.bf16.xpose.msra.mxu0 0
  %473 = vmatprep.subr.bf16.mxu0 0
  %474 = vmatpush1.bf16.xpose.msra.mxu0 0
  %475 = vmatprep.subr.bf16.mxu0 0
  %476 = vmatpush1.bf16.xpose.msra.mxu0 0
  %477 = vmatprep.subr.bf16.mxu0 0
  %478 = vmatpush1.bf16.xpose.msra.mxu0 0
  %479 = vmatprep.subr.bf16.mxu0 0
  %480 = vmatpush1.bf16.xpose.msra.mxu0 0
  %481 = vmatprep.subr.bf16.mxu0 0
  %482 = vmatpush1.bf16.xpose.msra.mxu0 0
  %483 = vmatprep.subr.bf16.mxu0 0
  %484 = vmatpush1.bf16.xpose.msra.mxu0 0
  %485 = vmatprep.subr.bf16.mxu0 0
  %486 = vmatpush1.bf16.xpose.msra.mxu0 0
  %487 = vmatprep.subr.bf16.mxu0 0
  %488 = vmatpush1.bf16.xpose.msra.mxu0 0
  %489 = vmatprep.mubr.bf16.mxu0 0
  %490 = vmatmul.mubr.bf16.gmra.mrb[0].mxu0 %v452
  %v491 = vpop.f32.mrb[0].mxu0
  %v492 = vadd.f32 0.0, %v491
  %v493 = vpop.f32.mrb[0].mxu0
  %v494 = vpop.f32.mrb[0].mxu0
  %v495 = vpop.f32.mrb[0].mxu0
  %496 = vdwg.mxu0
  %v498 = vsel %vm82, %v27, 0
  %v501 = vsel %vm82, %v43, 0
  %503 = vmatprep.subr.bf16.mxu0 0
  %504 = vmatpush1.bf16.xpose.msra.mxu0 %v501
  %505 = vmatprep.subr.bf16.mxu0 0
  %506 = vmatpush1.bf16.xpose.msra.mxu0 0
  %507 = vmatprep.subr.bf16.mxu0 0
  %508 = vmatpush1.bf16.xpose.msra.mxu0 0
  %509 = vmatprep.subr.bf16.mxu0 0
  %510 = vmatpush1.bf16.xpose.msra.mxu0 0
  %511 = vmatprep.subr.bf16.mxu0 0
  %512 = vmatpush1.bf16.xpose.msra.mxu0 0
  %513 = vmatprep.subr.bf16.mxu0 0
  %514 = vmatpush1.bf16.xpose.msra.mxu0 0
  %515 = vmatprep.subr.bf16.mxu0 0
  %516 = vmatpush1.bf16.xpose.msra.mxu0 0
  %517 = vmatprep.subr.bf16.mxu0 0
  %518 = vmatpush1.bf16.xpose.msra.mxu0 0
  %519 = vmatprep.subr.bf16.mxu0 0
  %520 = vmatpush1.bf16.xpose.msra.mxu0 0
  %521 = vmatprep.subr.bf16.mxu0 0
  %522 = vmatpush1.bf16.xpose.msra.mxu0 0
  %523 = vmatprep.subr.bf16.mxu0 0
  %524 = vmatpush1.bf16.xpose.msra.mxu0 0
  %525 = vmatprep.subr.bf16.mxu0 0
  %526 = vmatpush1.bf16.xpose.msra.mxu0 0
  %527 = vmatprep.subr.bf16.mxu0 0
  %528 = vmatpush1.bf16.xpose.msra.mxu0 0
  %529 = vmatprep.subr.bf16.mxu0 0
  %530 = vmatpush1.bf16.xpose.msra.mxu0 0
  %531 = vmatprep.subr.bf16.mxu0 0
  %532 = vmatpush1.bf16.xpose.msra.mxu0 0
  %533 = vmatprep.subr.bf16.mxu0 0
  %534 = vmatpush1.bf16.xpose.msra.mxu0 0
  %535 = vmatprep.mubr.bf16.mxu0 0
  %536 = vmatmul.mubr.bf16.gmra.mrb[0].mxu0 %v498
  %v537 = vpop.f32.mrb[0].mxu0
  %v538 = vadd.f32 0.0, %v537
  %v539 = vpop.f32.mrb[0].mxu0
  %v540 = vpop.f32.mrb[0].mxu0
  %v541 = vpop.f32.mrb[0].mxu0
  %542 = vdwg.mxu0
  %v544 = vsel %vm82, %v28, 0
  %v547 = vsel %vm82, %v44, 0
  %549 = vmatprep.subr.bf16.mxu0 0
  %550 = vmatpush1.bf16.xpose.msra.mxu0 %v547
  %551 = vmatprep.subr.bf16.mxu0 0
  %552 = vmatpush1.bf16.xpose.msra.mxu0 0
  %553 = vmatprep.subr.bf16.mxu0 0
  %554 = vmatpush1.bf16.xpose.msra.mxu0 0
  %555 = vmatprep.subr.bf16.mxu0 0
  %556 = vmatpush1.bf16.xpose.msra.mxu0 0
  %557 = vmatprep.subr.bf16.mxu0 0
  %558 = vmatpush1.bf16.xpose.msra.mxu0 0
  %559 = vmatprep.subr.bf16.mxu0 0
  %560 = vmatpush1.bf16.xpose.msra.mxu0 0
  %561 = vmatprep.subr.bf16.mxu0 0
  %562 = vmatpush1.bf16.xpose.msra.mxu0 0
  %563 = vmatprep.subr.bf16.mxu0 0
  %564 = vmatpush1.bf16.xpose.msra.mxu0 0
  %565 = vmatprep.subr.bf16.mxu0 0
  %566 = vmatpush1.bf16.xpose.msra.mxu0 0
  %567 = vmatprep.subr.bf16.mxu0 0
  %568 = vmatpush1.bf16.xpose.msra.mxu0 0
  %569 = vmatprep.subr.bf16.mxu0 0
  %570 = vmatpush1.bf16.xpose.msra.mxu0 0
  %571 = vmatprep.subr.bf16.mxu0 0
  %572 = vmatpush1.bf16.xpose.msra.mxu0 0
  %573 = vmatprep.subr.bf16.mxu0 0
  %574 = vmatpush1.bf16.xpose.msra.mxu0 0
  %575 = vmatprep.subr.bf16.mxu0 0
  %576 = vmatpush1.bf16.xpose.msra.mxu0 0
  %577 = vmatprep.subr.bf16.mxu0 0
  %578 = vmatpush1.bf16.xpose.msra.mxu0 0
  %579 = vmatprep.subr.bf16.mxu0 0
  %580 = vmatpush1.bf16.xpose.msra.mxu0 0
  %581 = vmatprep.mubr.bf16.mxu0 0
  %582 = vmatmul.mubr.bf16.gmra.mrb[0].mxu0 %v544
  %v583 = vpop.f32.mrb[0].mxu0
  %v584 = vadd.f32 0.0, %v583
  %v585 = vpop.f32.mrb[0].mxu0
  %v586 = vpop.f32.mrb[0].mxu0
  %v587 = vpop.f32.mrb[0].mxu0
  %588 = vdwg.mxu0
  %v590 = vsel %vm82, %v29, 0
  %v593 = vsel %vm82, %v45, 0
  %595 = vmatprep.subr.bf16.mxu0 0
  %596 = vmatpush1.bf16.xpose.msra.mxu0 %v593
  %597 = vmatprep.subr.bf16.mxu0 0
  %598 = vmatpush1.bf16.xpose.msra.mxu0 0
  %599 = vmatprep.subr.bf16.mxu0 0
  %600 = vmatpush1.bf16.xpose.msra.mxu0 0
  %601 = vmatprep.subr.bf16.mxu0 0
  %602 = vmatpush1.bf16.xpose.msra.mxu0 0
  %603 = vmatprep.subr.bf16.mxu0 0
  %604 = vmatpush1.bf16.xpose.msra.mxu0 0
  %605 = vmatprep.subr.bf16.mxu0 0
  %606 = vmatpush1.bf16.xpose.msra.mxu0 0
  %607 = vmatprep.subr.bf16.mxu0 0
  %608 = vmatpush1.bf16.xpose.msra.mxu0 0
  %609 = vmatprep.subr.bf16.mxu0 0
  %610 = vmatpush1.bf16.xpose.msra.mxu0 0
  %611 = vmatprep.subr.bf16.mxu0 0
  %612 = vmatpush1.bf16.xpose.msra.mxu0 0
  %613 = vmatprep.subr.bf16.mxu0 0
  %614 = vmatpush1.bf16.xpose.msra.mxu0 0
  %615 = vmatprep.subr.bf16.mxu0 0
  %616 = vmatpush1.bf16.xpose.msra.mxu0 0
  %617 = vmatprep.subr.bf16.mxu0 0
  %618 = vmatpush1.bf16.xpose.msra.mxu0 0
  %619 = vmatprep.subr.bf16.mxu0 0
  %620 = vmatpush1.bf16.xpose.msra.mxu0 0
  %621 = vmatprep.subr.bf16.mxu0 0
  %622 = vmatpush1.bf16.xpose.msra.mxu0 0
  %623 = vmatprep.subr.bf16.mxu0 0
  %624 = vmatpush1.bf16.xpose.msra.mxu0 0
  %625 = vmatprep.subr.bf16.mxu0 0
  %626 = vmatpush1.bf16.xpose.msra.mxu0 0
  %627 = vmatprep.mubr.bf16.mxu0 0
  %628 = vmatmul.mubr.bf16.gmra.mrb[0].mxu0 %v590
  %v629 = vpop.f32.mrb[0].mxu0
  %v630 = vadd.f32 0.0, %v629
  %v631 = vpop.f32.mrb[0].mxu0
  %v632 = vpop.f32.mrb[0].mxu0
  %v633 = vpop.f32.mrb[0].mxu0
  %634 = vdwg.mxu0
  %v636 = vsel %vm82, %v30, 0
  %v639 = vsel %vm82, %v46, 0
  %641 = vmatprep.subr.bf16.mxu0 0
  %642 = vmatpush1.bf16.xpose.msra.mxu0 %v639
  %643 = vmatprep.subr.bf16.mxu0 0
  %644 = vmatpush1.bf16.xpose.msra.mxu0 0
  %645 = vmatprep.subr.bf16.mxu0 0
  %646 = vmatpush1.bf16.xpose.msra.mxu0 0
  %647 = vmatprep.subr.bf16.mxu0 0
  %648 = vmatpush1.bf16.xpose.msra.mxu0 0
  %649 = vmatprep.subr.bf16.mxu0 0
  %650 = vmatpush1.bf16.xpose.msra.mxu0 0
  %651 = vmatprep.subr.bf16.mxu0 0
  %652 = vmatpush1.bf16.xpose.msra.mxu0 0
  %653 = vmatprep.subr.bf16.mxu0 0
  %654 = vmatpush1.bf16.xpose.msra.mxu0 0
  %655 = vmatprep.subr.bf16.mxu0 0
  %656 = vmatpush1.bf16.xpose.msra.mxu0 0
  %657 = vmatprep.subr.bf16.mxu0 0
  %658 = vmatpush1.bf16.xpose.msra.mxu0 0
  %659 = vmatprep.subr.bf16.mxu0 0
  %660 = vmatpush1.bf16.xpose.msra.mxu0 0
  %661 = vmatprep.subr.bf16.mxu0 0
  %662 = vmatpush1.bf16.xpose.msra.mxu0 0
  %663 = vmatprep.subr.bf16.mxu0 0
  %664 = vmatpush1.bf16.xpose.msra.mxu0 0
  %665 = vmatprep.subr.bf16.mxu0 0
  %666 = vmatpush1.bf16.xpose.msra.mxu0 0
  %667 = vmatprep.subr.bf16.mxu0 0
  %668 = vmatpush1.bf16.xpose.msra.mxu0 0
  %669 = vmatprep.subr.bf16.mxu0 0
  %670 = vmatpush1.bf16.xpose.msra.mxu0 0
  %671 = vmatprep.subr.bf16.mxu0 0
  %672 = vmatpush1.bf16.xpose.msra.mxu0 0
  %673 = vmatprep.mubr.bf16.mxu0 0
  %674 = vmatmul.mubr.bf16.gmra.mrb[0].mxu0 %v636
  %v675 = vpop.f32.mrb[0].mxu0
  %v676 = vadd.f32 0.0, %v675
  %v677 = vpop.f32.mrb[0].mxu0
  %v678 = vpop.f32.mrb[0].mxu0
  %v679 = vpop.f32.mrb[0].mxu0
  %680 = vdwg.mxu0
  %v682 = vsel %vm82, %v31, 0
  %v685 = vsel %vm82, %v47, 0
  %687 = vmatprep.subr.bf16.mxu0 0
  %688 = vmatpush1.bf16.xpose.msra.mxu0 %v685
  %689 = vmatprep.subr.bf16.mxu0 0
  %690 = vmatpush1.bf16.xpose.msra.mxu0 0
  %691 = vmatprep.subr.bf16.mxu0 0
  %692 = vmatpush1.bf16.xpose.msra.mxu0 0
  %693 = vmatprep.subr.bf16.mxu0 0
  %694 = vmatpush1.bf16.xpose.msra.mxu0 0
  %695 = vmatprep.subr.bf16.mxu0 0
  %696 = vmatpush1.bf16.xpose.msra.mxu0 0
  %697 = vmatprep.subr.bf16.mxu0 0
  %698 = vmatpush1.bf16.xpose.msra.mxu0 0
  %699 = vmatprep.subr.bf16.mxu0 0
  %700 = vmatpush1.bf16.xpose.msra.mxu0 0
  %701 = vmatprep.subr.bf16.mxu0 0
  %702 = vmatpush1.bf16.xpose.msra.mxu0 0
  %703 = vmatprep.subr.bf16.mxu0 0
  %704 = vmatpush1.bf16.xpose.msra.mxu0 0
  %705 = vmatprep.subr.bf16.mxu0 0
  %706 = vmatpush1.bf16.xpose.msra.mxu0 0
  %707 = vmatprep.subr.bf16.mxu0 0
  %708 = vmatpush1.bf16.xpose.msra.mxu0 0
  %709 = vmatprep.subr.bf16.mxu0 0
  %710 = vmatpush1.bf16.xpose.msra.mxu0 0
  %711 = vmatprep.subr.bf16.mxu0 0
  %712 = vmatpush1.bf16.xpose.msra.mxu0 0
  %713 = vmatprep.subr.bf16.mxu0 0
  %714 = vmatpush1.bf16.xpose.msra.mxu0 0
  %715 = vmatprep.subr.bf16.mxu0 0
  %716 = vmatpush1.bf16.xpose.msra.mxu0 0
  %717 = vmatprep.subr.bf16.mxu0 0
  %718 = vmatpush1.bf16.xpose.msra.mxu0 0
  %719 = vmatprep.mubr.bf16.mxu0 0
  %720 = vmatmul.mubr.bf16.gmra.mrb[0].mxu0 %v682
  %v721 = vpop.f32.mrb[0].mxu0
  %v722 = vadd.f32 0.0, %v721
  %v723 = vpop.f32.mrb[0].mxu0
  %v724 = vpop.f32.mrb[0].mxu0
  %v725 = vpop.f32.mrb[0].mxu0
  %726 = vdwg.mxu0
  %v728 = vsel %vm82, %v32, 0
  %v731 = vsel %vm82, %v48, 0
  %733 = vmatprep.subr.bf16.mxu0 0
  %734 = vmatpush1.bf16.xpose.msra.mxu0 %v731
  %735 = vmatprep.subr.bf16.mxu0 0
  %736 = vmatpush1.bf16.xpose.msra.mxu0 0
  %737 = vmatprep.subr.bf16.mxu0 0
  %738 = vmatpush1.bf16.xpose.msra.mxu0 0
  %739 = vmatprep.subr.bf16.mxu0 0
  %740 = vmatpush1.bf16.xpose.msra.mxu0 0
  %741 = vmatprep.subr.bf16.mxu0 0
  %742 = vmatpush1.bf16.xpose.msra.mxu0 0
  %743 = vmatprep.subr.bf16.mxu0 0
  %744 = vmatpush1.bf16.xpose.msra.mxu0 0
  %745 = vmatprep.subr.bf16.mxu0 0
  %746 = vmatpush1.bf16.xpose.msra.mxu0 0
  %747 = vmatprep.subr.bf16.mxu0 0
  %748 = vmatpush1.bf16.xpose.msra.mxu0 0
  %749 = vmatprep.subr.bf16.mxu0 0
  %750 = vmatpush1.bf16.xpose.msra.mxu0 0
  %751 = vmatprep.subr.bf16.mxu0 0
  %752 = vmatpush1.bf16.xpose.msra.mxu0 0
  %753 = vmatprep.subr.bf16.mxu0 0
  %754 = vmatpush1.bf16.xpose.msra.mxu0 0
  %755 = vmatprep.subr.bf16.mxu0 0
  %756 = vmatpush1.bf16.xpose.msra.mxu0 0
  %757 = vmatprep.subr.bf16.mxu0 0
  %758 = vmatpush1.bf16.xpose.msra.mxu0 0
  %759 = vmatprep.subr.bf16.mxu0 0
  %760 = vmatpush1.bf16.xpose.msra.mxu0 0
  %761 = vmatprep.subr.bf16.mxu0 0
  %762 = vmatpush1.bf16.xpose.msra.mxu0 0
  %763 = vmatprep.subr.bf16.mxu0 0
  %764 = vmatpush1.bf16.xpose.msra.mxu0 0
  %765 = vmatprep.mubr.bf16.mxu0 0
  %766 = vmatmul.mubr.bf16.gmra.mrb[0].mxu0 %v728
  %v767 = vpop.f32.mrb[0].mxu0
  %v768 = vadd.f32 0.0, %v767
  %v769 = vpop.f32.mrb[0].mxu0
  %v770 = vpop.f32.mrb[0].mxu0
  %v771 = vpop.f32.mrb[0].mxu0
  %772 = vdwg.mxu0
  %v774 = vsel %vm82, %v33, 0
  %v777 = vsel %vm82, %v49, 0
  %779 = vmatprep.subr.bf16.mxu0 0
  %780 = vmatpush1.bf16.xpose.msra.mxu0 %v777
  %781 = vmatprep.subr.bf16.mxu0 0
  %782 = vmatpush1.bf16.xpose.msra.mxu0 0
  %783 = vmatprep.subr.bf16.mxu0 0
  %784 = vmatpush1.bf16.xpose.msra.mxu0 0
  %785 = vmatprep.subr.bf16.mxu0 0
  %786 = vmatpush1.bf16.xpose.msra.mxu0 0
  %787 = vmatprep.subr.bf16.mxu0 0
  %788 = vmatpush1.bf16.xpose.msra.mxu0 0
  %789 = vmatprep.subr.bf16.mxu0 0
  %790 = vmatpush1.bf16.xpose.msra.mxu0 0
  %791 = vmatprep.subr.bf16.mxu0 0
  %792 = vmatpush1.bf16.xpose.msra.mxu0 0
  %793 = vmatprep.subr.bf16.mxu0 0
  %794 = vmatpush1.bf16.xpose.msra.mxu0 0
  %795 = vmatprep.subr.bf16.mxu0 0
  %796 = vmatpush1.bf16.xpose.msra.mxu0 0
  %797 = vmatprep.subr.bf16.mxu0 0
  %798 = vmatpush1.bf16.xpose.msra.mxu0 0
  %799 = vmatprep.subr.bf16.mxu0 0
  %800 = vmatpush1.bf16.xpose.msra.mxu0 0
  %801 = vmatprep.subr.bf16.mxu0 0
  %802 = vmatpush1.bf16.xpose.msra.mxu0 0
  %803 = vmatprep.subr.bf16.mxu0 0
  %804 = vmatpush1.bf16.xpose.msra.mxu0 0
  %805 = vmatprep.subr.bf16.mxu0 0
  %806 = vmatpush1.bf16.xpose.msra.mxu0 0
  %807 = vmatprep.subr.bf16.mxu0 0
  %808 = vmatpush1.bf16.xpose.msra.mxu0 0
  %809 = vmatprep.subr.bf16.mxu0 0
  %810 = vmatpush1.bf16.xpose.msra.mxu0 0
  %811 = vmatprep.mubr.bf16.mxu0 0
  %812 = vmatmul.mubr.bf16.gmra.mrb[0].mxu0 %v774
  %v813 = vpop.f32.mrb[0].mxu0
  %v814 = vadd.f32 0.0, %v813
  %v815 = vpop.f32.mrb[0].mxu0
  %v816 = vpop.f32.mrb[0].mxu0
  %v817 = vpop.f32.mrb[0].mxu0
  %818 = vdwg.mxu0
  %v819 = vmul.f32 %v124, 0.35355338
  %v820 = vmul.f32 %v170, 0.35355338
  %v821 = vmul.f32 %v216, 0.35355338
  %v822 = vmul.f32 %v262, 0.35355338
  %v823 = vmul.f32 %v308, 0.35355338
  %v824 = vmul.f32 %v354, 0.35355338
  %v825 = vmul.f32 %v400, 0.35355338
  %v826 = vmul.f32 %v446, 0.35355338
  %v827 = vmul.f32 %v492, 0.35355338
  %v828 = vmul.f32 %v538, 0.35355338
  %v829 = vmul.f32 %v584, 0.35355338
  %v830 = vmul.f32 %v630, 0.35355338
  %v831 = vmul.f32 %v676, 0.35355338
  %v832 = vmul.f32 %v722, 0.35355338
  %v833 = vmul.f32 %v768, 0.35355338
  %v834 = vmul.f32 %v814, 0.35355338
  %vm835 = vcmp.ne.f32.partialorder %v66, 0.0
  %vm836 = vcmp.ne.f32.partialorder %v67, 0.0
  %vm837 = vcmp.ne.f32.partialorder %v68, 0.0
  %vm838 = vcmp.ne.f32.partialorder %v69, 0.0
  %vm839 = vcmp.ne.f32.partialorder %v70, 0.0
  %vm840 = vcmp.ne.f32.partialorder %v71, 0.0
  %vm841 = vcmp.ne.f32.partialorder %v72, 0.0
  %vm842 = vcmp.ne.f32.partialorder %v73, 0.0
  %vm843 = vcmp.ne.f32.partialorder %v74, 0.0
  %vm844 = vcmp.ne.f32.partialorder %v75, 0.0
  %vm845 = vcmp.ne.f32.partialorder %v76, 0.0
  %vm846 = vcmp.ne.f32.partialorder %v77, 0.0
  %vm847 = vcmp.ne.f32.partialorder %v78, 0.0
  %vm848 = vcmp.ne.f32.partialorder %v79, 0.0
  %vm849 = vcmp.ne.f32.partialorder %v80, 0.0
  %vm850 = vcmp.ne.f32.partialorder %v81, 0.0
  %v851 = vsel %vm835, 1, 0
  %v852 = vsel %vm836, 1, 0
  %v853 = vsel %vm837, 1, 0
  %v854 = vsel %vm838, 1, 0
  %v855 = vsel %vm839, 1, 0
  %v856 = vsel %vm840, 1, 0
  %v857 = vsel %vm841, 1, 0
  %v858 = vsel %vm842, 1, 0
  %v859 = vsel %vm843, 1, 0
  %v860 = vsel %vm844, 1, 0
  %v861 = vsel %vm845, 1, 0
  %v862 = vsel %vm846, 1, 0
  %v863 = vsel %vm847, 1, 0
  %v864 = vsel %vm848, 1, 0
  %v865 = vsel %vm849, 1, 0
  %v866 = vsel %vm850, 1, 0
  %v867 = vlaneseq
  %v868 = vshrl.u32 %v867, 7
  %v869 = vsub.s32 0, %v868
  %v870 = vrot.slane %v851, %v869
  %v871 = vlaneseq
  %v872 = vshrl.u32 %v871, 7
  %v873 = vsub.s32 0, %v872
  %v874 = vrot.slane %v852, %v873
  %v875 = vlaneseq
  %v876 = vshrl.u32 %v875, 7
  %v877 = vsub.s32 0, %v876
  %v878 = vrot.slane %v853, %v877
  %v879 = vlaneseq
  %v880 = vshrl.u32 %v879, 7
  %v881 = vsub.s32 0, %v880
  %v882 = vrot.slane %v854, %v881
  %v883 = vlaneseq
  %v884 = vshrl.u32 %v883, 7
  %v885 = vsub.s32 0, %v884
  %v886 = vrot.slane %v855, %v885
  %v887 = vlaneseq
  %v888 = vshrl.u32 %v887, 7
  %v889 = vsub.s32 0, %v888
  %v890 = vrot.slane %v856, %v889
  %v891 = vlaneseq
  %v892 = vshrl.u32 %v891, 7
  %v893 = vsub.s32 0, %v892
  %v894 = vrot.slane %v857, %v893
  %v895 = vlaneseq
  %v896 = vshrl.u32 %v895, 7
  %v897 = vsub.s32 0, %v896
  %v898 = vrot.slane %v858, %v897
  %v899 = vlaneseq
  %v900 = vshrl.u32 %v899, 7
  %v901 = vsub.s32 0, %v900
  %v902 = vrot.slane %v859, %v901
  %v903 = vlaneseq
  %v904 = vshrl.u32 %v903, 7
  %v905 = vsub.s32 0, %v904
  %v906 = vrot.slane %v860, %v905
  %v907 = vlaneseq
  %v908 = vshrl.u32 %v907, 7
  %v909 = vsub.s32 0, %v908
  %v910 = vrot.slane %v861, %v909
  %v911 = vlaneseq
  %v912 = vshrl.u32 %v911, 7
  %v913 = vsub.s32 0, %v912
  %v914 = vrot.slane %v862, %v913
  %v915 = vlaneseq
  %v916 = vshrl.u32 %v915, 7
  %v917 = vsub.s32 0, %v916
  %v918 = vrot.slane %v863, %v917
  %v919 = vlaneseq
  %v920 = vshrl.u32 %v919, 7
  %v921 = vsub.s32 0, %v920
  %v922 = vrot.slane %v864, %v921
  %v923 = vlaneseq
  %v924 = vshrl.u32 %v923, 7
  %v925 = vsub.s32 0, %v924
  %v926 = vrot.slane %v865, %v925
  %v927 = vlaneseq
  %v928 = vshrl.u32 %v927, 7
  %v929 = vsub.s32 0, %v928
  %v930 = vrot.slane %v866, %v929
  %vm931 = vcmp.eq.s32.totalorder %v870, 1
  %vm932 = vcmp.eq.s32.totalorder %v874, 1
  %vm933 = vcmp.eq.s32.totalorder %v878, 1
  %vm934 = vcmp.eq.s32.totalorder %v882, 1
  %vm935 = vcmp.eq.s32.totalorder %v886, 1
  %vm936 = vcmp.eq.s32.totalorder %v890, 1
  %vm937 = vcmp.eq.s32.totalorder %v894, 1
  %vm938 = vcmp.eq.s32.totalorder %v898, 1
  %vm939 = vcmp.eq.s32.totalorder %v902, 1
  %vm940 = vcmp.eq.s32.totalorder %v906, 1
  %vm941 = vcmp.eq.s32.totalorder %v910, 1
  %vm942 = vcmp.eq.s32.totalorder %v914, 1
  %vm943 = vcmp.eq.s32.totalorder %v918, 1
  %vm944 = vcmp.eq.s32.totalorder %v922, 1
  %vm945 = vcmp.eq.s32.totalorder %v926, 1
  %vm946 = vcmp.eq.s32.totalorder %v930, 1
  %v947 = vsel %vm931, %v819, -10000000.0
  %v948 = vsel %vm932, %v820, -10000000.0
  %v949 = vsel %vm933, %v821, -10000000.0
  %v950 = vsel %vm934, %v822, -10000000.0
  %v951 = vsel %vm935, %v823, -10000000.0
  %v952 = vsel %vm936, %v824, -10000000.0
  %v953 = vsel %vm937, %v825, -10000000.0
  %v954 = vsel %vm938, %v826, -10000000.0
  %v955 = vsel %vm939, %v827, -10000000.0
  %v956 = vsel %vm940, %v828, -10000000.0
  %v957 = vsel %vm941, %v829, -10000000.0
  %v958 = vsel %vm942, %v830, -10000000.0
  %v959 = vsel %vm943, %v831, -10000000.0
  %v960 = vsel %vm944, %v832, -10000000.0
  %v961 = vsel %vm945, %v833, -10000000.0
  %v962 = vsel %vm946, %v834, -10000000.0
  %v963 = vsel %vm82, %v947, -inf
  %964 = vmax.xlane.f32.xlu0 %v963
  %v965 = vpop.xlane.xlu0 %964
  %v966 = vsel %vm82, %v948, -inf
  %967 = vmax.xlane.f32.xlu0 %v966
  %v968 = vpop.xlane.xlu0 %967
  %v969 = vsel %vm82, %v949, -inf
  %970 = vmax.xlane.f32.xlu0 %v969
  %v971 = vpop.xlane.xlu0 %970
  %v972 = vsel %vm82, %v950, -inf
  %973 = vmax.xlane.f32.xlu0 %v972
  %v974 = vpop.xlane.xlu0 %973
  %v975 = vsel %vm82, %v951, -inf
  %976 = vmax.xlane.f32.xlu0 %v975
  %v977 = vpop.xlane.xlu0 %976
  %v978 = vsel %vm82, %v952, -inf
  %979 = vmax.xlane.f32.xlu0 %v978
  %v980 = vpop.xlane.xlu0 %979
  %v981 = vsel %vm82, %v953, -inf
  %982 = vmax.xlane.f32.xlu0 %v981
  %v983 = vpop.xlane.xlu0 %982
  %v984 = vsel %vm82, %v954, -inf
  %985 = vmax.xlane.f32.xlu0 %v984
  %v986 = vpop.xlane.xlu0 %985
  %v987 = vsel %vm82, %v955, -inf
  %988 = vmax.xlane.f32.xlu0 %v987
  %v989 = vpop.xlane.xlu0 %988
  %v990 = vsel %vm82, %v956, -inf
  %991 = vmax.xlane.f32.xlu0 %v990
  %v992 = vpop.xlane.xlu0 %991
  %v993 = vsel %vm82, %v957, -inf
  %994 = vmax.xlane.f32.xlu0 %v993
  %v995 = vpop.xlane.xlu0 %994
  %v996 = vsel %vm82, %v958, -inf
  %997 = vmax.xlane.f32.xlu0 %v996
  %v998 = vpop.xlane.xlu0 %997
  %v999 = vsel %vm82, %v959, -inf
  %1000 = vmax.xlane.f32.xlu0 %v999
  %v1001 = vpop.xlane.xlu0 %1000
  %v1002 = vsel %vm82, %v960, -inf
  %1003 = vmax.xlane.f32.xlu0 %v1002
  %v1004 = vpop.xlane.xlu0 %1003
  %v1005 = vsel %vm82, %v961, -inf
  %1006 = vmax.xlane.f32.xlu0 %v1005
  %v1007 = vpop.xlane.xlu0 %1006
  %v1008 = vsel %vm82, %v962, -inf
  %1009 = vmax.xlane.f32.xlu0 %v1008
  %v1010 = vpop.xlane.xlu0 %1009
  %v1011 = vsub.f32 %v947, %v965
  %v1012 = vsub.f32 %v948, %v968
  %v1013 = vsub.f32 %v949, %v971
  %v1014 = vsub.f32 %v950, %v974
  %v1015 = vsub.f32 %v951, %v977
  %v1016 = vsub.f32 %v952, %v980
  %v1017 = vsub.f32 %v953, %v983
  %v1018 = vsub.f32 %v954, %v986
  %v1019 = vsub.f32 %v955, %v989
  %v1020 = vsub.f32 %v956, %v992
  %v1021 = vsub.f32 %v957, %v995
  %v1022 = vsub.f32 %v958, %v998
  %v1023 = vsub.f32 %v959, %v1001
  %v1024 = vsub.f32 %v960, %v1004
  %v1025 = vsub.f32 %v961, %v1007
  %v1026 = vsub.f32 %v962, %v1010
  %v1027 = vmul.f32 %v1011, 1.442695
  %v1028 = vpow.pop %v1027
  %v1029 = vmul.f32 %v1012, 1.442695
  %v1030 = vpow.pop %v1029
  %v1031 = vmul.f32 %v1013, 1.442695
  %v1032 = vpow.pop %v1031
  %v1033 = vmul.f32 %v1014, 1.442695
  %v1034 = vpow.pop %v1033
  %v1035 = vmul.f32 %v1015, 1.442695
  %v1036 = vpow.pop %v1035
  %v1037 = vmul.f32 %v1016, 1.442695
  %v1038 = vpow.pop %v1037
  %v1039 = vmul.f32 %v1017, 1.442695
  %v1040 = vpow.pop %v1039
  %v1041 = vmul.f32 %v1018, 1.442695
  %v1042 = vpow.pop %v1041
  %v1043 = vmul.f32 %v1019, 1.442695
  %v1044 = vpow.pop %v1043
  %v1045 = vmul.f32 %v1020, 1.442695
  %v1046 = vpow.pop %v1045
  %v1047 = vmul.f32 %v1021, 1.442695
  %v1048 = vpow.pop %v1047
  %v1049 = vmul.f32 %v1022, 1.442695
  %v1050 = vpow.pop %v1049
  %v1051 = vmul.f32 %v1023, 1.442695
  %v1052 = vpow.pop %v1051
  %v1053 = vmul.f32 %v1024, 1.442695
  %v1054 = vpow.pop %v1053
  %v1055 = vmul.f32 %v1025, 1.442695
  %v1056 = vpow.pop %v1055
  %v1057 = vmul.f32 %v1026, 1.442695
  %v1058 = vpow.pop %v1057
  %v1059 = vsel %vm82, %v1028, 0.0
  %1060 = vadd.xlane.f32.xlu0 %v1059
  %v1061 = vpop.xlane.xlu0 %1060
  %v1062 = vsel %vm82, %v1030, 0.0
  %1063 = vadd.xlane.f32.xlu0 %v1062
  %v1064 = vpop.xlane.xlu0 %1063
  %v1065 = vsel %vm82, %v1032, 0.0
  %1066 = vadd.xlane.f32.xlu0 %v1065
  %v1067 = vpop.xlane.xlu0 %1066
  %v1068 = vsel %vm82, %v1034, 0.0
  %1069 = vadd.xlane.f32.xlu0 %v1068
  %v1070 = vpop.xlane.xlu0 %1069
  %v1071 = vsel %vm82, %v1036, 0.0
  %1072 = vadd.xlane.f32.xlu0 %v1071
  %v1073 = vpop.xlane.xlu0 %1072
  %v1074 = vsel %vm82, %v1038, 0.0
  %1075 = vadd.xlane.f32.xlu0 %v1074
  %v1076 = vpop.xlane.xlu0 %1075
  %v1077 = vsel %vm82, %v1040, 0.0
  %1078 = vadd.xlane.f32.xlu0 %v1077
  %v1079 = vpop.xlane.xlu0 %1078
  %v1080 = vsel %vm82, %v1042, 0.0
  %1081 = vadd.xlane.f32.xlu0 %v1080
  %v1082 = vpop.xlane.xlu0 %1081
  %v1083 = vsel %vm82, %v1044, 0.0
  %1084 = vadd.xlane.f32.xlu0 %v1083
  %v1085 = vpop.xlane.xlu0 %1084
  %v1086 = vsel %vm82, %v1046, 0.0
  %1087 = vadd.xlane.f32.xlu0 %v1086
  %v1088 = vpop.xlane.xlu0 %1087
  %v1089 = vsel %vm82, %v1048, 0.0
  %1090 = vadd.xlane.f32.xlu0 %v1089
  %v1091 = vpop.xlane.xlu0 %1090
  %v1092 = vsel %vm82, %v1050, 0.0
  %1093 = vadd.xlane.f32.xlu0 %v1092
  %v1094 = vpop.xlane.xlu0 %1093
  %v1095 = vsel %vm82, %v1052, 0.0
  %1096 = vadd.xlane.f32.xlu0 %v1095
  %v1097 = vpop.xlane.xlu0 %1096
  %v1098 = vsel %vm82, %v1054, 0.0
  %1099 = vadd.xlane.f32.xlu0 %v1098
  %v1100 = vpop.xlane.xlu0 %1099
  %v1101 = vsel %vm82, %v1056, 0.0
  %1102 = vadd.xlane.f32.xlu0 %v1101
  %v1103 = vpop.xlane.xlu0 %1102
  %v1104 = vsel %vm82, %v1058, 0.0
  %1105 = vadd.xlane.f32.xlu0 %v1104
  %v1106 = vpop.xlane.xlu0 %1105
  %v1107 = vrcp.pop %v1061
  %v1108 = vrcp.pop %v1064
  %v1109 = vrcp.pop %v1067
  %v1110 = vrcp.pop %v1070
  %v1111 = vrcp.pop %v1073
  %v1112 = vrcp.pop %v1076
  %v1113 = vrcp.pop %v1079
  %v1114 = vrcp.pop %v1082
  %v1115 = vrcp.pop %v1085
  %v1116 = vrcp.pop %v1088
  %v1117 = vrcp.pop %v1091
  %v1118 = vrcp.pop %v1094
  %v1119 = vrcp.pop %v1097
  %v1120 = vrcp.pop %v1100
  %v1121 = vrcp.pop %v1103
  %v1122 = vrcp.pop %v1106
  %v1123 = vmul.f32 %v1028, %v1107
  %v1124 = vmul.f32 %v1030, %v1108
  %v1125 = vmul.f32 %v1032, %v1109
  %v1126 = vmul.f32 %v1034, %v1110
  %v1127 = vmul.f32 %v1036, %v1111
  %v1128 = vmul.f32 %v1038, %v1112
  %v1129 = vmul.f32 %v1040, %v1113
  %v1130 = vmul.f32 %v1042, %v1114
  %v1131 = vmul.f32 %v1044, %v1115
  %v1132 = vmul.f32 %v1046, %v1116
  %v1133 = vmul.f32 %v1048, %v1117
  %v1134 = vmul.f32 %v1050, %v1118
  %v1135 = vmul.f32 %v1052, %v1119
  %v1136 = vmul.f32 %v1054, %v1120
  %v1137 = vmul.f32 %v1056, %v1121
  %v1138 = vmul.f32 %v1058, %v1122
  %v1139 = vpack.c.bf16 %v1123, %v1123
  %v1140 = vpack.c.bf16 %v1124, %v1124
  %v1141 = vpack.c.bf16 %v1125, %v1125
  %v1142 = vpack.c.bf16 %v1126, %v1126
  %v1143 = vpack.c.bf16 %v1127, %v1127
  %v1144 = vpack.c.bf16 %v1128, %v1128
  %v1145 = vpack.c.bf16 %v1129, %v1129
  %v1146 = vpack.c.bf16 %v1130, %v1130
  %v1147 = vpack.c.bf16 %v1131, %v1131
  %v1148 = vpack.c.bf16 %v1132, %v1132
  %v1149 = vpack.c.bf16 %v1133, %v1133
  %v1150 = vpack.c.bf16 %v1134, %v1134
  %v1151 = vpack.c.bf16 %v1135, %v1135
  %v1152 = vpack.c.bf16 %v1136, %v1136
  %v1153 = vpack.c.bf16 %v1137, %v1137
  %v1154 = vpack.c.bf16 %v1138, %v1138
  %v1156 = vsel %vm82, %v1139, 0
  %vm1158 = vcmask 1043456
  %v1160 = vsel %vm1158, %v50, 0
  %1162 = vmatprep.subr.bf16.mxu0 0
  %1163 = vmatpush1.bf16.msra.mxu0 %v1160
  %1164 = vmatprep.subr.bf16.mxu0 0
  %1165 = vmatpush1.bf16.msra.mxu0 0
  %1166 = vmatprep.subr.bf16.mxu0 0
  %1167 = vmatpush1.bf16.msra.mxu0 0
  %1168 = vmatprep.subr.bf16.mxu0 0
  %1169 = vmatpush1.bf16.msra.mxu0 0
  %1170 = vmatprep.subr.bf16.mxu0 0
  %1171 = vmatpush1.bf16.msra.mxu0 0
  %1172 = vmatprep.subr.bf16.mxu0 0
  %1173 = vmatpush1.bf16.msra.mxu0 0
  %1174 = vmatprep.subr.bf16.mxu0 0
  %1175 = vmatpush1.bf16.msra.mxu0 0
  %1176 = vmatprep.subr.bf16.mxu0 0
  %1177 = vmatpush1.bf16.msra.mxu0 0
  %1178 = vmatprep.subr.bf16.mxu0 0
  %1179 = vmatpush1.bf16.msra.mxu0 0
  %1180 = vmatprep.subr.bf16.mxu0 0
  %1181 = vmatpush1.bf16.msra.mxu0 0
  %1182 = vmatprep.subr.bf16.mxu0 0
  %1183 = vmatpush1.bf16.msra.mxu0 0
  %1184 = vmatprep.subr.bf16.mxu0 0
  %1185 = vmatpush1.bf16.msra.mxu0 0
  %1186 = vmatprep.subr.bf16.mxu0 0
  %1187 = vmatpush1.bf16.msra.mxu0 0
  %1188 = vmatprep.subr.bf16.mxu0 0
  %1189 = vmatpush1.bf16.msra.mxu0 0
  %1190 = vmatprep.subr.bf16.mxu0 0
  %1191 = vmatpush1.bf16.msra.mxu0 0
  %1192 = vmatprep.subr.bf16.mxu0 0
  %1193 = vmatpush1.bf16.msra.mxu0 0
  %1194 = vmatprep.mubr.bf16.mxu0 0
  %1195 = vmatmul.mubr.bf16.gmra.mrb[0].mxu0 %v1156
  %v1196 = vpop.f32.mrb[0].mxu0
  %v1197 = vadd.f32 0.0, %v1196
  %v1198 = vpop.f32.mrb[0].mxu0
  %v1199 = vpop.f32.mrb[0].mxu0
  %v1200 = vpop.f32.mrb[0].mxu0
  %1201 = vdwg.mxu0
  %v1203 = vsel %vm82, %v1140, 0
  %v1206 = vsel %vm1158, %v51, 0
  %1208 = vmatprep.subr.bf16.mxu0 0
  %1209 = vmatpush1.bf16.msra.mxu0 %v1206
  %1210 = vmatprep.subr.bf16.mxu0 0
  %1211 = vmatpush1.bf16.msra.mxu0 0
  %1212 = vmatprep.subr.bf16.mxu0 0
  %1213 = vmatpush1.bf16.msra.mxu0 0
  %1214 = vmatprep.subr.bf16.mxu0 0
  %1215 = vmatpush1.bf16.msra.mxu0 0
  %1216 = vmatprep.subr.bf16.mxu0 0
  %1217 = vmatpush1.bf16.msra.mxu0 0
  %1218 = vmatprep.subr.bf16.mxu0 0
  %1219 = vmatpush1.bf16.msra.mxu0 0
  %1220 = vmatprep.subr.bf16.mxu0 0
  %1221 = vmatpush1.bf16.msra.mxu0 0
  %1222 = vmatprep.subr.bf16.mxu0 0
  %1223 = vmatpush1.bf16.msra.mxu0 0
  %1224 = vmatprep.subr.bf16.mxu0 0
  %1225 = vmatpush1.bf16.msra.mxu0 0
  %1226 = vmatprep.subr.bf16.mxu0 0
  %1227 = vmatpush1.bf16.msra.mxu0 0
  %1228 = vmatprep.subr.bf16.mxu0 0
  %1229 = vmatpush1.bf16.msra.mxu0 0
  %1230 = vmatprep.subr.bf16.mxu0 0
  %1231 = vmatpush1.bf16.msra.mxu0 0
  %1232 = vmatprep.subr.bf16.mxu0 0
  %1233 = vmatpush1.bf16.msra.mxu0 0
  %1234 = vmatprep.subr.bf16.mxu0 0
  %1235 = vmatpush1.bf16.msra.mxu0 0
  %1236 = vmatprep.subr.bf16.mxu0 0
  %1237 = vmatpush1.bf16.msra.mxu0 0
  %1238 = vmatprep.subr.bf16.mxu0 0
  %1239 = vmatpush1.bf16.msra.mxu0 0
  %1240 = vmatprep.mubr.bf16.mxu0 0
  %1241 = vmatmul.mubr.bf16.gmra.mrb[0].mxu0 %v1203
  %v1242 = vpop.f32.mrb[0].mxu0
  %v1243 = vadd.f32 0.0, %v1242
  %v1244 = vpop.f32.mrb[0].mxu0
  %v1245 = vpop.f32.mrb[0].mxu0
  %v1246 = vpop.f32.mrb[0].mxu0
  %1247 = vdwg.mxu0
  %v1249 = vsel %vm82, %v1141, 0
  %v1252 = vsel %vm1158, %v52, 0
  %1254 = vmatprep.subr.bf16.mxu0 0
  %1255 = vmatpush1.bf16.msra.mxu0 %v1252
  %1256 = vmatprep.subr.bf16.mxu0 0
  %1257 = vmatpush1.bf16.msra.mxu0 0
  %1258 = vmatprep.subr.bf16.mxu0 0
  %1259 = vmatpush1.bf16.msra.mxu0 0
  %1260 = vmatprep.subr.bf16.mxu0 0
  %1261 = vmatpush1.bf16.msra.mxu0 0
  %1262 = vmatprep.subr.bf16.mxu0 0
  %1263 = vmatpush1.bf16.msra.mxu0 0
  %1264 = vmatprep.subr.bf16.mxu0 0
  %1265 = vmatpush1.bf16.msra.mxu0 0
  %1266 = vmatprep.subr.bf16.mxu0 0
  %1267 = vmatpush1.bf16.msra.mxu0 0
  %1268 = vmatprep.subr.bf16.mxu0 0
  %1269 = vmatpush1.bf16.msra.mxu0 0
  %1270 = vmatprep.subr.bf16.mxu0 0
  %1271 = vmatpush1.bf16.msra.mxu0 0
  %1272 = vmatprep.subr.bf16.mxu0 0
  %1273 = vmatpush1.bf16.msra.mxu0 0
  %1274 = vmatprep.subr.bf16.mxu0 0
  %1275 = vmatpush1.bf16.msra.mxu0 0
  %1276 = vmatprep.subr.bf16.mxu0 0
  %1277 = vmatpush1.bf16.msra.mxu0 0
  %1278 = vmatprep.subr.bf16.mxu0 0
  %1279 = vmatpush1.bf16.msra.mxu0 0
  %1280 = vmatprep.subr.bf16.mxu0 0
  %1281 = vmatpush1.bf16.msra.mxu0 0
  %1282 = vmatprep.subr.bf16.mxu0 0
  %1283 = vmatpush1.bf16.msra.mxu0 0
  %1284 = vmatprep.subr.bf16.mxu0 0
  %1285 = vmatpush1.bf16.msra.mxu0 0
  %1286 = vmatprep.mubr.bf16.mxu0 0
  %1287 = vmatmul.mubr.bf16.gmra.mrb[0].mxu0 %v1249
  %v1288 = vpop.f32.mrb[0].mxu0
  %v1289 = vadd.f32 0.0, %v1288
  %v1290 = vpop.f32.mrb[0].mxu0
  %v1291 = vpop.f32.mrb[0].mxu0
  %v1292 = vpop.f32.mrb[0].mxu0
  %1293 = vdwg.mxu0
  %v1295 = vsel %vm82, %v1142, 0
  %v1298 = vsel %vm1158, %v53, 0
  %1300 = vmatprep.subr.bf16.mxu0 0
  %1301 = vmatpush1.bf16.msra.mxu0 %v1298
  %1302 = vmatprep.subr.bf16.mxu0 0
  %1303 = vmatpush1.bf16.msra.mxu0 0
  %1304 = vmatprep.subr.bf16.mxu0 0
  %1305 = vmatpush1.bf16.msra.mxu0 0
  %1306 = vmatprep.subr.bf16.mxu0 0
  %1307 = vmatpush1.bf16.msra.mxu0 0
  %1308 = vmatprep.subr.bf16.mxu0 0
  %1309 = vmatpush1.bf16.msra.mxu0 0
  %1310 = vmatprep.subr.bf16.mxu0 0
  %1311 = vmatpush1.bf16.msra.mxu0 0
  %1312 = vmatprep.subr.bf16.mxu0 0
  %1313 = vmatpush1.bf16.msra.mxu0 0
  %1314 = vmatprep.subr.bf16.mxu0 0
  %1315 = vmatpush1.bf16.msra.mxu0 0
  %1316 = vmatprep.subr.bf16.mxu0 0
  %1317 = vmatpush1.bf16.msra.mxu0 0
  %1318 = vmatprep.subr.bf16.mxu0 0
  %1319 = vmatpush1.bf16.msra.mxu0 0
  %1320 = vmatprep.subr.bf16.mxu0 0
  %1321 = vmatpush1.bf16.msra.mxu0 0
  %1322 = vmatprep.subr.bf16.mxu0 0
  %1323 = vmatpush1.bf16.msra.mxu0 0
  %1324 = vmatprep.subr.bf16.mxu0 0
  %1325 = vmatpush1.bf16.msra.mxu0 0
  %1326 = vmatprep.subr.bf16.mxu0 0
  %1327 = vmatpush1.bf16.msra.mxu0 0
  %1328 = vmatprep.subr.bf16.mxu0 0
  %1329 = vmatpush1.bf16.msra.mxu0 0
  %1330 = vmatprep.subr.bf16.mxu0 0
  %1331 = vmatpush1.bf16.msra.mxu0 0
  %1332 = vmatprep.mubr.bf16.mxu0 0
  %1333 = vmatmul.mubr.bf16.gmra.mrb[0].mxu0 %v1295
  %v1334 = vpop.f32.mrb[0].mxu0
  %v1335 = vadd.f32 0.0, %v1334
  %v1336 = vpop.f32.mrb[0].mxu0
  %v1337 = vpop.f32.mrb[0].mxu0
  %v1338 = vpop.f32.mrb[0].mxu0
  %1339 = vdwg.mxu0
  %v1341 = vsel %vm82, %v1143, 0
  %v1344 = vsel %vm1158, %v54, 0
  %1346 = vmatprep.subr.bf16.mxu0 0
  %1347 = vmatpush1.bf16.msra.mxu0 %v1344
  %1348 = vmatprep.subr.bf16.mxu0 0
  %1349 = vmatpush1.bf16.msra.mxu0 0
  %1350 = vmatprep.subr.bf16.mxu0 0
  %1351 = vmatpush1.bf16.msra.mxu0 0
  %1352 = vmatprep.subr.bf16.mxu0 0
  %1353 = vmatpush1.bf16.msra.mxu0 0
  %1354 = vmatprep.subr.bf16.mxu0 0
  %1355 = vmatpush1.bf16.msra.mxu0 0
  %1356 = vmatprep.subr.bf16.mxu0 0
  %1357 = vmatpush1.bf16.msra.mxu0 0
  %1358 = vmatprep.subr.bf16.mxu0 0
  %1359 = vmatpush1.bf16.msra.mxu0 0
  %1360 = vmatprep.subr.bf16.mxu0 0
  %1361 = vmatpush1.bf16.msra.mxu0 0
  %1362 = vmatprep.subr.bf16.mxu0 0
  %1363 = vmatpush1.bf16.msra.mxu0 0
  %1364 = vmatprep.subr.bf16.mxu0 0
  %1365 = vmatpush1.bf16.msra.mxu0 0
  %1366 = vmatprep.subr.bf16.mxu0 0
  %1367 = vmatpush1.bf16.msra.mxu0 0
  %1368 = vmatprep.subr.bf16.mxu0 0
  %1369 = vmatpush1.bf16.msra.mxu0 0
  %1370 = vmatprep.subr.bf16.mxu0 0
  %1371 = vmatpush1.bf16.msra.mxu0 0
  %1372 = vmatprep.subr.bf16.mxu0 0
  %1373 = vmatpush1.bf16.msra.mxu0 0
  %1374 = vmatprep.subr.bf16.mxu0 0
  %1375 = vmatpush1.bf16.msra.mxu0 0
  %1376 = vmatprep.subr.bf16.mxu0 0
  %1377 = vmatpush1.bf16.msra.mxu0 0
  %1378 = vmatprep.mubr.bf16.mxu0 0
  %1379 = vmatmul.mubr.bf16.gmra.mrb[0].mxu0 %v1341
  %v1380 = vpop.f32.mrb[0].mxu0
  %v1381 = vadd.f32 0.0, %v1380
  %v1382 = vpop.f32.mrb[0].mxu0
  %v1383 = vpop.f32.mrb[0].mxu0
  %v1384 = vpop.f32.mrb[0].mxu0
  %1385 = vdwg.mxu0
  %v1387 = vsel %vm82, %v1144, 0
  %v1390 = vsel %vm1158, %v55, 0
  %1392 = vmatprep.subr.bf16.mxu0 0
  %1393 = vmatpush1.bf16.msra.mxu0 %v1390
  %1394 = vmatprep.subr.bf16.mxu0 0
  %1395 = vmatpush1.bf16.msra.mxu0 0
  %1396 = vmatprep.subr.bf16.mxu0 0
  %1397 = vmatpush1.bf16.msra.mxu0 0
  %1398 = vmatprep.subr.bf16.mxu0 0
  %1399 = vmatpush1.bf16.msra.mxu0 0
  %1400 = vmatprep.subr.bf16.mxu0 0
  %1401 = vmatpush1.bf16.msra.mxu0 0
  %1402 = vmatprep.subr.bf16.mxu0 0
  %1403 = vmatpush1.bf16.msra.mxu0 0
  %1404 = vmatprep.subr.bf16.mxu0 0
  %1405 = vmatpush1.bf16.msra.mxu0 0
  %1406 = vmatprep.subr.bf16.mxu0 0
  %1407 = vmatpush1.bf16.msra.mxu0 0
  %1408 = vmatprep.subr.bf16.mxu0 0
  %1409 = vmatpush1.bf16.msra.mxu0 0
  %1410 = vmatprep.subr.bf16.mxu0 0
  %1411 = vmatpush1.bf16.msra.mxu0 0
  %1412 = vmatprep.subr.bf16.mxu0 0
  %1413 = vmatpush1.bf16.msra.mxu0 0
  %1414 = vmatprep.subr.bf16.mxu0 0
  %1415 = vmatpush1.bf16.msra.mxu0 0
  %1416 = vmatprep.subr.bf16.mxu0 0
  %1417 = vmatpush1.bf16.msra.mxu0 0
  %1418 = vmatprep.subr.bf16.mxu0 0
  %1419 = vmatpush1.bf16.msra.mxu0 0
  %1420 = vmatprep.subr.bf16.mxu0 0
  %1421 = vmatpush1.bf16.msra.mxu0 0
  %1422 = vmatprep.subr.bf16.mxu0 0
  %1423 = vmatpush1.bf16.msra.mxu0 0
  %1424 = vmatprep.mubr.bf16.mxu0 0
  %1425 = vmatmul.mubr.bf16.gmra.mrb[0].mxu0 %v1387
  %v1426 = vpop.f32.mrb[0].mxu0
  %v1427 = vadd.f32 0.0, %v1426
  %v1428 = vpop.f32.mrb[0].mxu0
  %v1429 = vpop.f32.mrb[0].mxu0
  %v1430 = vpop.f32.mrb[0].mxu0
  %1431 = vdwg.mxu0
  %v1433 = vsel %vm82, %v1145, 0
  %v1436 = vsel %vm1158, %v56, 0
  %1438 = vmatprep.subr.bf16.mxu0 0
  %1439 = vmatpush1.bf16.msra.mxu0 %v1436
  %1440 = vmatprep.subr.bf16.mxu0 0
  %1441 = vmatpush1.bf16.msra.mxu0 0
  %1442 = vmatprep.subr.bf16.mxu0 0
  %1443 = vmatpush1.bf16.msra.mxu0 0
  %1444 = vmatprep.subr.bf16.mxu0 0
  %1445 = vmatpush1.bf16.msra.mxu0 0
  %1446 = vmatprep.subr.bf16.mxu0 0
  %1447 = vmatpush1.bf16.msra.mxu0 0
  %1448 = vmatprep.subr.bf16.mxu0 0
  %1449 = vmatpush1.bf16.msra.mxu0 0
  %1450 = vmatprep.subr.bf16.mxu0 0
  %1451 = vmatpush1.bf16.msra.mxu0 0
  %1452 = vmatprep.subr.bf16.mxu0 0
  %1453 = vmatpush1.bf16.msra.mxu0 0
  %1454 = vmatprep.subr.bf16.mxu0 0
  %1455 = vmatpush1.bf16.msra.mxu0 0
  %1456 = vmatprep.subr.bf16.mxu0 0
  %1457 = vmatpush1.bf16.msra.mxu0 0
  %1458 = vmatprep.subr.bf16.mxu0 0
  %1459 = vmatpush1.bf16.msra.mxu0 0
  %1460 = vmatprep.subr.bf16.mxu0 0
  %1461 = vmatpush1.bf16.msra.mxu0 0
  %1462 = vmatprep.subr.bf16.mxu0 0
  %1463 = vmatpush1.bf16.msra.mxu0 0
  %1464 = vmatprep.subr.bf16.mxu0 0
  %1465 = vmatpush1.bf16.msra.mxu0 0
  %1466 = vmatprep.subr.bf16.mxu0 0
  %1467 = vmatpush1.bf16.msra.mxu0 0
  %1468 = vmatprep.subr.bf16.mxu0 0
  %1469 = vmatpush1.bf16.msra.mxu0 0
  %1470 = vmatprep.mubr.bf16.mxu0 0
  %1471 = vmatmul.mubr.bf16.gmra.mrb[0].mxu0 %v1433
  %v1472 = vpop.f32.mrb[0].mxu0
  %v1473 = vadd.f32 0.0, %v1472
  %v1474 = vpop.f32.mrb[0].mxu0
  %v1475 = vpop.f32.mrb[0].mxu0
  %v1476 = vpop.f32.mrb[0].mxu0
  %1477 = vdwg.mxu0
  %v1479 = vsel %vm82, %v1146, 0
  %v1482 = vsel %vm1158, %v57, 0
  %1484 = vmatprep.subr.bf16.mxu0 0
  %1485 = vmatpush1.bf16.msra.mxu0 %v1482
  %1486 = vmatprep.subr.bf16.mxu0 0
  %1487 = vmatpush1.bf16.msra.mxu0 0
  %1488 = vmatprep.subr.bf16.mxu0 0
  %1489 = vmatpush1.bf16.msra.mxu0 0
  %1490 = vmatprep.subr.bf16.mxu0 0
  %1491 = vmatpush1.bf16.msra.mxu0 0
  %1492 = vmatprep.subr.bf16.mxu0 0
  %1493 = vmatpush1.bf16.msra.mxu0 0
  %1494 = vmatprep.subr.bf16.mxu0 0
  %1495 = vmatpush1.bf16.msra.mxu0 0
  %1496 = vmatprep.subr.bf16.mxu0 0
  %1497 = vmatpush1.bf16.msra.mxu0 0
  %1498 = vmatprep.subr.bf16.mxu0 0
  %1499 = vmatpush1.bf16.msra.mxu0 0
  %1500 = vmatprep.subr.bf16.mxu0 0
  %1501 = vmatpush1.bf16.msra.mxu0 0
  %1502 = vmatprep.subr.bf16.mxu0 0
  %1503 = vmatpush1.bf16.msra.mxu0 0
  %1504 = vmatprep.subr.bf16.mxu0 0
  %1505 = vmatpush1.bf16.msra.mxu0 0
  %1506 = vmatprep.subr.bf16.mxu0 0
  %1507 = vmatpush1.bf16.msra.mxu0 0
  %1508 = vmatprep.subr.bf16.mxu0 0
  %1509 = vmatpush1.bf16.msra.mxu0 0
  %1510 = vmatprep.subr.bf16.mxu0 0
  %1511 = vmatpush1.bf16.msra.mxu0 0
  %1512 = vmatprep.subr.bf16.mxu0 0
  %1513 = vmatpush1.bf16.msra.mxu0 0
  %1514 = vmatprep.subr.bf16.mxu0 0
  %1515 = vmatpush1.bf16.msra.mxu0 0
  %1516 = vmatprep.mubr.bf16.mxu0 0
  %1517 = vmatmul.mubr.bf16.gmra.mrb[0].mxu0 %v1479
  %v1518 = vpop.f32.mrb[0].mxu0
  %v1519 = vadd.f32 0.0, %v1518
  %v1520 = vpop.f32.mrb[0].mxu0
  %v1521 = vpop.f32.mrb[0].mxu0
  %v1522 = vpop.f32.mrb[0].mxu0
  %1523 = vdwg.mxu0
  %v1525 = vsel %vm82, %v1147, 0
  %v1528 = vsel %vm1158, %v58, 0
  %1530 = vmatprep.subr.bf16.mxu0 0
  %1531 = vmatpush1.bf16.msra.mxu0 %v1528
  %1532 = vmatprep.subr.bf16.mxu0 0
  %1533 = vmatpush1.bf16.msra.mxu0 0
  %1534 = vmatprep.subr.bf16.mxu0 0
  %1535 = vmatpush1.bf16.msra.mxu0 0
  %1536 = vmatprep.subr.bf16.mxu0 0
  %1537 = vmatpush1.bf16.msra.mxu0 0
  %1538 = vmatprep.subr.bf16.mxu0 0
  %1539 = vmatpush1.bf16.msra.mxu0 0
  %1540 = vmatprep.subr.bf16.mxu0 0
  %1541 = vmatpush1.bf16.msra.mxu0 0
  %1542 = vmatprep.subr.bf16.mxu0 0
  %1543 = vmatpush1.bf16.msra.mxu0 0
  %1544 = vmatprep.subr.bf16.mxu0 0
  %1545 = vmatpush1.bf16.msra.mxu0 0
  %1546 = vmatprep.subr.bf16.mxu0 0
  %1547 = vmatpush1.bf16.msra.mxu0 0
  %1548 = vmatprep.subr.bf16.mxu0 0
  %1549 = vmatpush1.bf16.msra.mxu0 0
  %1550 = vmatprep.subr.bf16.mxu0 0
  %1551 = vmatpush1.bf16.msra.mxu0 0
  %1552 = vmatprep.subr.bf16.mxu0 0
  %1553 = vmatpush1.bf16.msra.mxu0 0
  %1554 = vmatprep.subr.bf16.mxu0 0
  %1555 = vmatpush1.bf16.msra.mxu0 0
  %1556 = vmatprep.subr.bf16.mxu0 0
  %1557 = vmatpush1.bf16.msra.mxu0 0
  %1558 = vmatprep.subr.bf16.mxu0 0
  %1559 = vmatpush1.bf16.msra.mxu0 0
  %1560 = vmatprep.subr.bf16.mxu0 0
  %1561 = vmatpush1.bf16.msra.mxu0 0
  %1562 = vmatprep.mubr.bf16.mxu0 0
  %1563 = vmatmul.mubr.bf16.gmra.mrb[0].mxu0 %v1525
  %v1564 = vpop.f32.mrb[0].mxu0
  %v1565 = vadd.f32 0.0, %v1564
  %v1566 = vpop.f32.mrb[0].mxu0
  %v1567 = vpop.f32.mrb[0].mxu0
  %v1568 = vpop.f32.mrb[0].mxu0
  %1569 = vdwg.mxu0
  %v1571 = vsel %vm82, %v1148, 0
  %v1574 = vsel %vm1158, %v59, 0
  %1576 = vmatprep.subr.bf16.mxu0 0
  %1577 = vmatpush1.bf16.msra.mxu0 %v1574
  %1578 = vmatprep.subr.bf16.mxu0 0
  %1579 = vmatpush1.bf16.msra.mxu0 0
  %1580 = vmatprep.subr.bf16.mxu0 0
  %1581 = vmatpush1.bf16.msra.mxu0 0
  %1582 = vmatprep.subr.bf16.mxu0 0
  %1583 = vmatpush1.bf16.msra.mxu0 0
  %1584 = vmatprep.subr.bf16.mxu0 0
  %1585 = vmatpush1.bf16.msra.mxu0 0
  %1586 = vmatprep.subr.bf16.mxu0 0
  %1587 = vmatpush1.bf16.msra.mxu0 0
  %1588 = vmatprep.subr.bf16.mxu0 0
  %1589 = vmatpush1.bf16.msra.mxu0 0
  %1590 = vmatprep.subr.bf16.mxu0 0
  %1591 = vmatpush1.bf16.msra.mxu0 0
  %1592 = vmatprep.subr.bf16.mxu0 0
  %1593 = vmatpush1.bf16.msra.mxu0 0
  %1594 = vmatprep.subr.bf16.mxu0 0
  %1595 = vmatpush1.bf16.msra.mxu0 0
  %1596 = vmatprep.subr.bf16.mxu0 0
  %1597 = vmatpush1.bf16.msra.mxu0 0
  %1598 = vmatprep.subr.bf16.mxu0 0
  %1599 = vmatpush1.bf16.msra.mxu0 0
  %1600 = vmatprep.subr.bf16.mxu0 0
  %1601 = vmatpush1.bf16.msra.mxu0 0
  %1602 = vmatprep.subr.bf16.mxu0 0
  %1603 = vmatpush1.bf16.msra.mxu0 0
  %1604 = vmatprep.subr.bf16.mxu0 0
  %1605 = vmatpush1.bf16.msra.mxu0 0
  %1606 = vmatprep.subr.bf16.mxu0 0
  %1607 = vmatpush1.bf16.msra.mxu0 0
  %1608 = vmatprep.mubr.bf16.mxu0 0
  %1609 = vmatmul.mubr.bf16.gmra.mrb[0].mxu0 %v1571
  %v1610 = vpop.f32.mrb[0].mxu0
  %v1611 = vadd.f32 0.0, %v1610
  %v1612 = vpop.f32.mrb[0].mxu0
  %v1613 = vpop.f32.mrb[0].mxu0
  %v1614 = vpop.f32.mrb[0].mxu0
  %1615 = vdwg.mxu0
  %v1617 = vsel %vm82, %v1149, 0
  %v1620 = vsel %vm1158, %v60, 0
  %1622 = vmatprep.subr.bf16.mxu0 0
  %1623 = vmatpush1.bf16.msra.mxu0 %v1620
  %1624 = vmatprep.subr.bf16.mxu0 0
  %1625 = vmatpush1.bf16.msra.mxu0 0
  %1626 = vmatprep.subr.bf16.mxu0 0
  %1627 = vmatpush1.bf16.msra.mxu0 0
  %1628 = vmatprep.subr.bf16.mxu0 0
  %1629 = vmatpush1.bf16.msra.mxu0 0
  %1630 = vmatprep.subr.bf16.mxu0 0
  %1631 = vmatpush1.bf16.msra.mxu0 0
  %1632 = vmatprep.subr.bf16.mxu0 0
  %1633 = vmatpush1.bf16.msra.mxu0 0
  %1634 = vmatprep.subr.bf16.mxu0 0
  %1635 = vmatpush1.bf16.msra.mxu0 0
  %1636 = vmatprep.subr.bf16.mxu0 0
  %1637 = vmatpush1.bf16.msra.mxu0 0
  %1638 = vmatprep.subr.bf16.mxu0 0
  %1639 = vmatpush1.bf16.msra.mxu0 0
  %1640 = vmatprep.subr.bf16.mxu0 0
  %1641 = vmatpush1.bf16.msra.mxu0 0
  %1642 = vmatprep.subr.bf16.mxu0 0
  %1643 = vmatpush1.bf16.msra.mxu0 0
  %1644 = vmatprep.subr.bf16.mxu0 0
  %1645 = vmatpush1.bf16.msra.mxu0 0
  %1646 = vmatprep.subr.bf16.mxu0 0
  %1647 = vmatpush1.bf16.msra.mxu0 0
  %1648 = vmatprep.subr.bf16.mxu0 0
  %1649 = vmatpush1.bf16.msra.mxu0 0
  %1650 = vmatprep.subr.bf16.mxu0 0
  %1651 = vmatpush1.bf16.msra.mxu0 0
  %1652 = vmatprep.subr.bf16.mxu0 0
  %1653 = vmatpush1.bf16.msra.mxu0 0
  %1654 = vmatprep.mubr.bf16.mxu0 0
  %1655 = vmatmul.mubr.bf16.gmra.mrb[0].mxu0 %v1617
  %v1656 = vpop.f32.mrb[0].mxu0
  %v1657 = vadd.f32 0.0, %v1656
  %v1658 = vpop.f32.mrb[0].mxu0
  %v1659 = vpop.f32.mrb[0].mxu0
  %v1660 = vpop.f32.mrb[0].mxu0
  %1661 = vdwg.mxu0
  %v1663 = vsel %vm82, %v1150, 0
  %v1666 = vsel %vm1158, %v61, 0
  %1668 = vmatprep.subr.bf16.mxu0 0
  %1669 = vmatpush1.bf16.msra.mxu0 %v1666
  %1670 = vmatprep.subr.bf16.mxu0 0
  %1671 = vmatpush1.bf16.msra.mxu0 0
  %1672 = vmatprep.subr.bf16.mxu0 0
  %1673 = vmatpush1.bf16.msra.mxu0 0
  %1674 = vmatprep.subr.bf16.mxu0 0
  %1675 = vmatpush1.bf16.msra.mxu0 0
  %1676 = vmatprep.subr.bf16.mxu0 0
  %1677 = vmatpush1.bf16.msra.mxu0 0
  %1678 = vmatprep.subr.bf16.mxu0 0
  %1679 = vmatpush1.bf16.msra.mxu0 0
  %1680 = vmatprep.subr.bf16.mxu0 0
  %1681 = vmatpush1.bf16.msra.mxu0 0
  %1682 = vmatprep.subr.bf16.mxu0 0
  %1683 = vmatpush1.bf16.msra.mxu0 0
  %1684 = vmatprep.subr.bf16.mxu0 0
  %1685 = vmatpush1.bf16.msra.mxu0 0
  %1686 = vmatprep.subr.bf16.mxu0 0
  %1687 = vmatpush1.bf16.msra.mxu0 0
  %1688 = vmatprep.subr.bf16.mxu0 0
  %1689 = vmatpush1.bf16.msra.mxu0 0
  %1690 = vmatprep.subr.bf16.mxu0 0
  %1691 = vmatpush1.bf16.msra.mxu0 0
  %1692 = vmatprep.subr.bf16.mxu0 0
  %1693 = vmatpush1.bf16.msra.mxu0 0
  %1694 = vmatprep.subr.bf16.mxu0 0
  %1695 = vmatpush1.bf16.msra.mxu0 0
  %1696 = vmatprep.subr.bf16.mxu0 0
  %1697 = vmatpush1.bf16.msra.mxu0 0
  %1698 = vmatprep.subr.bf16.mxu0 0
  %1699 = vmatpush1.bf16.msra.mxu0 0
  %1700 = vmatprep.mubr.bf16.mxu0 0
  %1701 = vmatmul.mubr.bf16.gmra.mrb[0].mxu0 %v1663
  %v1702 = vpop.f32.mrb[0].mxu0
  %v1703 = vadd.f32 0.0, %v1702
  %v1704 = vpop.f32.mrb[0].mxu0
  %v1705 = vpop.f32.mrb[0].mxu0
  %v1706 = vpop.f32.mrb[0].mxu0
  %1707 = vdwg.mxu0
  %v1709 = vsel %vm82, %v1151, 0
  %v1712 = vsel %vm1158, %v62, 0
  %1714 = vmatprep.subr.bf16.mxu0 0
  %1715 = vmatpush1.bf16.msra.mxu0 %v1712
  %1716 = vmatprep.subr.bf16.mxu0 0
  %1717 = vmatpush1.bf16.msra.mxu0 0
  %1718 = vmatprep.subr.bf16.mxu0 0
  %1719 = vmatpush1.bf16.msra.mxu0 0
  %1720 = vmatprep.subr.bf16.mxu0 0
  %1721 = vmatpush1.bf16.msra.mxu0 0
  %1722 = vmatprep.subr.bf16.mxu0 0
  %1723 = vmatpush1.bf16.msra.mxu0 0
  %1724 = vmatprep.subr.bf16.mxu0 0
  %1725 = vmatpush1.bf16.msra.mxu0 0
  %1726 = vmatprep.subr.bf16.mxu0 0
  %1727 = vmatpush1.bf16.msra.mxu0 0
  %1728 = vmatprep.subr.bf16.mxu0 0
  %1729 = vmatpush1.bf16.msra.mxu0 0
  %1730 = vmatprep.subr.bf16.mxu0 0
  %1731 = vmatpush1.bf16.msra.mxu0 0
  %1732 = vmatprep.subr.bf16.mxu0 0
  %1733 = vmatpush1.bf16.msra.mxu0 0
  %1734 = vmatprep.subr.bf16.mxu0 0
  %1735 = vmatpush1.bf16.msra.mxu0 0
  %1736 = vmatprep.subr.bf16.mxu0 0
  %1737 = vmatpush1.bf16.msra.mxu0 0
  %1738 = vmatprep.subr.bf16.mxu0 0
  %1739 = vmatpush1.bf16.msra.mxu0 0
  %1740 = vmatprep.subr.bf16.mxu0 0
  %1741 = vmatpush1.bf16.msra.mxu0 0
  %1742 = vmatprep.subr.bf16.mxu0 0
  %1743 = vmatpush1.bf16.msra.mxu0 0
  %1744 = vmatprep.subr.bf16.mxu0 0
  %1745 = vmatpush1.bf16.msra.mxu0 0
  %1746 = vmatprep.mubr.bf16.mxu0 0
  %1747 = vmatmul.mubr.bf16.gmra.mrb[0].mxu0 %v1709
  %v1748 = vpop.f32.mrb[0].mxu0
  %v1749 = vadd.f32 0.0, %v1748
  %v1750 = vpop.f32.mrb[0].mxu0
  %v1751 = vpop.f32.mrb[0].mxu0
  %v1752 = vpop.f32.mrb[0].mxu0
  %1753 = vdwg.mxu0
  %v1755 = vsel %vm82, %v1152, 0
  %v1758 = vsel %vm1158, %v63, 0
  %1760 = vmatprep.subr.bf16.mxu0 0
  %1761 = vmatpush1.bf16.msra.mxu0 %v1758
  %1762 = vmatprep.subr.bf16.mxu0 0
  %1763 = vmatpush1.bf16.msra.mxu0 0
  %1764 = vmatprep.subr.bf16.mxu0 0
  %1765 = vmatpush1.bf16.msra.mxu0 0
  %1766 = vmatprep.subr.bf16.mxu0 0
  %1767 = vmatpush1.bf16.msra.mxu0 0
  %1768 = vmatprep.subr.bf16.mxu0 0
  %1769 = vmatpush1.bf16.msra.mxu0 0
  %1770 = vmatprep.subr.bf16.mxu0 0
  %1771 = vmatpush1.bf16.msra.mxu0 0
  %1772 = vmatprep.subr.bf16.mxu0 0
  %1773 = vmatpush1.bf16.msra.mxu0 0
  %1774 = vmatprep.subr.bf16.mxu0 0
  %1775 = vmatpush1.bf16.msra.mxu0 0
  %1776 = vmatprep.subr.bf16.mxu0 0
  %1777 = vmatpush1.bf16.msra.mxu0 0
  %1778 = vmatprep.subr.bf16.mxu0 0
  %1779 = vmatpush1.bf16.msra.mxu0 0
  %1780 = vmatprep.subr.bf16.mxu0 0
  %1781 = vmatpush1.bf16.msra.mxu0 0
  %1782 = vmatprep.subr.bf16.mxu0 0
  %1783 = vmatpush1.bf16.msra.mxu0 0
  %1784 = vmatprep.subr.bf16.mxu0 0
  %1785 = vmatpush1.bf16.msra.mxu0 0
  %1786 = vmatprep.subr.bf16.mxu0 0
  %1787 = vmatpush1.bf16.msra.mxu0 0
  %1788 = vmatprep.subr.bf16.mxu0 0
  %1789 = vmatpush1.bf16.msra.mxu0 0
  %1790 = vmatprep.subr.bf16.mxu0 0
  %1791 = vmatpush1.bf16.msra.mxu0 0
  %1792 = vmatprep.mubr.bf16.mxu0 0
  %1793 = vmatmul.mubr.bf16.gmra.mrb[0].mxu0 %v1755
  %v1794 = vpop.f32.mrb[0].mxu0
  %v1795 = vadd.f32 0.0, %v1794
  %v1796 = vpop.f32.mrb[0].mxu0
  %v1797 = vpop.f32.mrb[0].mxu0
  %v1798 = vpop.f32.mrb[0].mxu0
  %1799 = vdwg.mxu0
  %v1801 = vsel %vm82, %v1153, 0
  %v1804 = vsel %vm1158, %v64, 0
  %1806 = vmatprep.subr.bf16.mxu0 0
  %1807 = vmatpush1.bf16.msra.mxu0 %v1804
  %1808 = vmatprep.subr.bf16.mxu0 0
  %1809 = vmatpush1.bf16.msra.mxu0 0
  %1810 = vmatprep.subr.bf16.mxu0 0
  %1811 = vmatpush1.bf16.msra.mxu0 0
  %1812 = vmatprep.subr.bf16.mxu0 0
  %1813 = vmatpush1.bf16.msra.mxu0 0
  %1814 = vmatprep.subr.bf16.mxu0 0
  %1815 = vmatpush1.bf16.msra.mxu0 0
  %1816 = vmatprep.subr.bf16.mxu0 0
  %1817 = vmatpush1.bf16.msra.mxu0 0
  %1818 = vmatprep.subr.bf16.mxu0 0
  %1819 = vmatpush1.bf16.msra.mxu0 0
  %1820 = vmatprep.subr.bf16.mxu0 0
  %1821 = vmatpush1.bf16.msra.mxu0 0
  %1822 = vmatprep.subr.bf16.mxu0 0
  %1823 = vmatpush1.bf16.msra.mxu0 0
  %1824 = vmatprep.subr.bf16.mxu0 0
  %1825 = vmatpush1.bf16.msra.mxu0 0
  %1826 = vmatprep.subr.bf16.mxu0 0
  %1827 = vmatpush1.bf16.msra.mxu0 0
  %1828 = vmatprep.subr.bf16.mxu0 0
  %1829 = vmatpush1.bf16.msra.mxu0 0
  %1830 = vmatprep.subr.bf16.mxu0 0
  %1831 = vmatpush1.bf16.msra.mxu0 0
  %1832 = vmatprep.subr.bf16.mxu0 0
  %1833 = vmatpush1.bf16.msra.mxu0 0
  %1834 = vmatprep.subr.bf16.mxu0 0
  %1835 = vmatpush1.bf16.msra.mxu0 0
  %1836 = vmatprep.subr.bf16.mxu0 0
  %1837 = vmatpush1.bf16.msra.mxu0 0
  %1838 = vmatprep.mubr.bf16.mxu0 0
  %1839 = vmatmul.mubr.bf16.gmra.mrb[0].mxu0 %v1801
  %v1840 = vpop.f32.mrb[0].mxu0
  %v1841 = vadd.f32 0.0, %v1840
  %v1842 = vpop.f32.mrb[0].mxu0
  %v1843 = vpop.f32.mrb[0].mxu0
  %v1844 = vpop.f32.mrb[0].mxu0
  %1845 = vdwg.mxu0
  %v1847 = vsel %vm82, %v1154, 0
  %v1850 = vsel %vm1158, %v65, 0
  %1852 = vmatprep.subr.bf16.mxu0 0
  %1853 = vmatpush1.bf16.msra.mxu0 %v1850
  %1854 = vmatprep.subr.bf16.mxu0 0
  %1855 = vmatpush1.bf16.msra.mxu0 0
  %1856 = vmatprep.subr.bf16.mxu0 0
  %1857 = vmatpush1.bf16.msra.mxu0 0
  %1858 = vmatprep.subr.bf16.mxu0 0
  %1859 = vmatpush1.bf16.msra.mxu0 0
  %1860 = vmatprep.subr.bf16.mxu0 0
  %1861 = vmatpush1.bf16.msra.mxu0 0
  %1862 = vmatprep.subr.bf16.mxu0 0
  %1863 = vmatpush1.bf16.msra.mxu0 0
  %1864 = vmatprep.subr.bf16.mxu0 0
  %1865 = vmatpush1.bf16.msra.mxu0 0
  %1866 = vmatprep.subr.bf16.mxu0 0
  %1867 = vmatpush1.bf16.msra.mxu0 0
  %1868 = vmatprep.subr.bf16.mxu0 0
  %1869 = vmatpush1.bf16.msra.mxu0 0
  %1870 = vmatprep.subr.bf16.mxu0 0
  %1871 = vmatpush1.bf16.msra.mxu0 0
  %1872 = vmatprep.subr.bf16.mxu0 0
  %1873 = vmatpush1.bf16.msra.mxu0 0
  %1874 = vmatprep.subr.bf16.mxu0 0
  %1875 = vmatpush1.bf16.msra.mxu0 0
  %1876 = vmatprep.subr.bf16.mxu0 0
  %1877 = vmatpush1.bf16.msra.mxu0 0
  %1878 = vmatprep.subr.bf16.mxu0 0
  %1879 = vmatpush1.bf16.msra.mxu0 0
  %1880 = vmatprep.subr.bf16.mxu0 0
  %1881 = vmatpush1.bf16.msra.mxu0 0
  %1882 = vmatprep.subr.bf16.mxu0 0
  %1883 = vmatpush1.bf16.msra.mxu0 0
  %1884 = vmatprep.mubr.bf16.mxu0 0
  %1885 = vmatmul.mubr.bf16.gmra.mrb[0].mxu0 %v1847
  %v1886 = vpop.f32.mrb[0].mxu0
  %v1887 = vadd.f32 0.0, %v1886
  %v1888 = vpop.f32.mrb[0].mxu0
  %v1889 = vpop.f32.mrb[0].mxu0
  %v1890 = vpop.f32.mrb[0].mxu0
  %1891 = vdwg.mxu0
  %v1892 = vpack.c.bf16 %v1197, %v1197
  %v1893 = vpack.c.bf16 %v1243, %v1243
  %v1894 = vpack.c.bf16 %v1289, %v1289
  %v1895 = vpack.c.bf16 %v1335, %v1335
  %v1896 = vpack.c.bf16 %v1381, %v1381
  %v1897 = vpack.c.bf16 %v1427, %v1427
  %v1898 = vpack.c.bf16 %v1473, %v1473
  %v1899 = vpack.c.bf16 %v1519, %v1519
  %v1900 = vpack.c.bf16 %v1565, %v1565
  %v1901 = vpack.c.bf16 %v1611, %v1611
  %v1902 = vpack.c.bf16 %v1657, %v1657
  %v1903 = vpack.c.bf16 %v1703, %v1703
  %v1904 = vpack.c.bf16 %v1749, %v1749
  %v1905 = vpack.c.bf16 %v1795, %v1795
  %v1906 = vpack.c.bf16 %v1841, %v1841
  %v1907 = vpack.c.bf16 %v1887, %v1887
  %vm1908 = vcmask 60416
  %1909 = vst.msk [vmem:[%s4] sm:$0xf] %vm1908, %v1892
  %1910 = vst.msk [vmem:[%s4 + $0x4] sm:$0xf] %vm1908, %v1893
  %1911 = vst.msk [vmem:[%s4 + $0x8] sm:$0xf] %vm1908, %v1894
  %1912 = vst.msk [vmem:[%s4 + $0xc] sm:$0xf] %vm1908, %v1895
  %1913 = vst.msk [vmem:[%s4 + $0x10] sm:$0xf] %vm1908, %v1896
  %1914 = vst.msk [vmem:[%s4 + $0x14] sm:$0xf] %vm1908, %v1897
  %1915 = vst.msk [vmem:[%s4 + $0x18] sm:$0xf] %vm1908, %v1898
  %1916 = vst.msk [vmem:[%s4 + $0x1c] sm:$0xf] %vm1908, %v1899
  %1917 = vst.msk [vmem:[%s4 + $0x20] sm:$0xf] %vm1908, %v1900
  %1918 = vst.msk [vmem:[%s4 + $0x24] sm:$0xf] %vm1908, %v1901
  %1919 = vst.msk [vmem:[%s4 + $0x28] sm:$0xf] %vm1908, %v1902
  %1920 = vst.msk [vmem:[%s4 + $0x2c] sm:$0xf] %vm1908, %v1903
  %1921 = vst.msk [vmem:[%s4 + $0x30] sm:$0xf] %vm1908, %v1904
  %1922 = vst.msk [vmem:[%s4 + $0x34] sm:$0xf] %vm1908, %v1905
  %1923 = vst.msk [vmem:[%s4 + $0x38] sm:$0xf] %vm1908, %v1906
  %1924 = vst.msk [vmem:[%s4 + $0x3c] sm:$0xf] %vm1908, %v1907
  // Predicated region
  $region18: #{instance_attention_forward.22} parent=0 // pred_check
    _
  $region19: #{instance_attention_forward.22} parent=0 // pred_check_branch
    %1926 = sbr.rel (0) target = $region21
  $region20: #{instance_attention_forward.22} parent=0 // pred_region
    _
  $region21: #{instance_attention_forward.22} parent=0 // pred_fallthru
    _
  // Predicated region
  $region22: #{instance_attention_forward.22} parent=0 // pred_check
    _
  $region23: #{instance_attention_forward.22} parent=0 // pred_check_branch
    %1928 = sbr.rel (0) target = $region25
  $region24: #{instance_attention_forward.22} parent=0 // pred_region
    _
  $region25: #{instance_attention_forward.22} parent=0 // pred_fallthru
    _

// kernel: instance_attention_forward.30
$region0: #{instance_attention_forward.30}
  #allocation0 [shape = 'u32[]', space=smem, size = 0x4, offset = 0x4, fixed_abs, tag = 'smem constant byte address 0x4 - core index']
  #allocation1 [shape = 'u32[144,128]{1,0:T(1,128)}', space=vmem, size = 0x12000, scoped, tag = 'internal scratch']
  #allocation2 [shape = 'f32[16,64]{1,0:T(8,128)}', space=vmem, size = 0x2000, scoped, tag = 'scratch operand']
  %s0 = inlined_call_operand.vmem [shape: bf16[16,64], index: 0, kind: input, shape index: {}]
  %s1 = inlined_call_operand.vmem [shape: bf16[64,64], index: 1, kind: input, shape index: {}]
  %s2 = inlined_call_operand.vmem [shape: f32[1,64], index: 2, kind: input, shape index: {}]
  %s3 = inlined_call_operand.vmem [shape: bf16[16,64], index: 3, kind: output, shape index: {}]
  %s4 = sld [smem:[#allocation0]]
  $region30: #{instance_attention_forward.30} parent=0
    _
  %s6 = ssub.s32 1, %s4
  %s7 = scalar_select 0, %s6, %s4
  // Predicated region
  $region2: #{instance_attention_forward.30} parent=0 // pred_check
    _
  $region3: #{instance_attention_forward.30} parent=0 // pred_check_branch
    %9 = sbr.rel (0) target = $region5
  $region4: #{instance_attention_forward.30} parent=0 // pred_region
    _
  $region5: #{instance_attention_forward.30} parent=0 // pred_fallthru
    _
  // Predicated region
  $region6: #{instance_attention_forward.30} parent=0 // pred_check
    _
  $region7: #{instance_attention_forward.30} parent=0 // pred_check_branch
    %11 = sbr.rel (0) target = $region9
  $region8: #{instance_attention_forward.30} parent=0 // pred_region
    _
  $region9: #{instance_attention_forward.30} parent=0 // pred_fallthru
    _
  // Predicated region
  $region10: #{instance_attention_forward.30} parent=0 // pred_check
    _
  $region11: #{instance_attention_forward.30} parent=0 // pred_check_branch
    %13 = sbr.rel (0) target = $region13
  $region12: #{instance_attention_forward.30} parent=0 // pred_region
    _
  $region13: #{instance_attention_forward.30} parent=0 // pred_fallthru
    _
  %p15 = scmp.eq.s32.totalorder 0, 0
  // Predicated region
  $region14: #{instance_attention_forward.30} parent=0 // pred_check
    %p16 = pneg %p15
  $region15: #{instance_attention_forward.30} parent=0 // pred_check_branch
    %18 = sbr.rel (%p16) target = $region17
  $region16: #{instance_attention_forward.30} parent=0 // pred_region
    %vm19 = vcmask 523264
    %20 = vst.msk [vmem:[#allocation2] sm:$0xff] %vm19, 0.0
    %21 = vst.msk [vmem:[#allocation2 + $0x8] sm:$0xff] %vm19, 0.0
  $region17: #{instance_attention_forward.30} parent=0 // pred_fallthru
    _
  %v22 = vld [vmem:[#allocation2] sm:$0xff]
  %v23 = vld [vmem:[#allocation2 + $0x8] sm:$0xff]
  %v24 = vld [vmem:[%s0] sm:$0xf]
  %v25 = vld [vmem:[%s0 + $0x4] sm:$0xf]
  %v26 = vld [vmem:[%s1] sm:$0xf]
  %v27 = vld [vmem:[%s1 + $0x4] sm:$0xf]
  %v28 = vld [vmem:[%s1 + $0x8] sm:$0xf]
  %v29 = vld [vmem:[%s1 + $0xc] sm:$0xf]
  %v30 = vld [vmem:[%s1 + $0x10] sm:$0xf]
  %v31 = vld [vmem:[%s1 + $0x14] sm:$0xf]
  %v32 = vld [vmem:[%s1 + $0x18] sm:$0xf]
  %v33 = vld [vmem:[%s1 + $0x1c] sm:$0xf]
  %v36 = vunpack.c.l.b16 %v24
  %v37 = vunpack.c.l.b16 %v25
  %v38 = vpack.c.b16 %v37, %v36
  %v47 = vunpack.c.l.b16 %v26
  %v48 = vunpack.c.l.b16 %v27
  %v49 = vunpack.c.l.b16 %v28
  %v50 = vunpack.c.l.b16 %v29
  %v51 = vunpack.c.l.b16 %v30
  %v52 = vunpack.c.l.b16 %v31
  %v53 = vunpack.c.l.b16 %v32
  %v54 = vunpack.c.l.b16 %v33
  %v55 = vpack.c.b16 %v48, %v47
  %v56 = vpack.c.b16 %v50, %v49
  %v57 = vpack.c.b16 %v52, %v51
  %v58 = vpack.c.b16 %v54, %v53
  %vm63 = vcmask 523264
  %v65 = vsel %vm63, %v38, 0
  %67 = vmatprep.subr.bf16.mxu0 0
  %68 = vmatpush1.bf16.msra.mxu0 %v55
  %69 = vmatprep.subr.bf16.mxu0 0
  %70 = vmatpush1.bf16.msra.mxu0 %v56
  %71 = vmatprep.subr.bf16.mxu0 0
  %72 = vmatpush1.bf16.msra.mxu0 %v57
  %73 = vmatprep.subr.bf16.mxu0 0
  %74 = vmatpush1.bf16.msra.mxu0 %v58
  %75 = vmatprep.subr.bf16.mxu0 0
  %76 = vmatpush1.bf16.msra.mxu0 0
  %77 = vmatprep.subr.bf16.mxu0 0
  %78 = vmatpush1.bf16.msra.mxu0 0
  %79 = vmatprep.subr.bf16.mxu0 0
  %80 = vmatpush1.bf16.msra.mxu0 0
  %81 = vmatprep.subr.bf16.mxu0 0
  %82 = vmatpush1.bf16.msra.mxu0 0
  %83 = vmatprep.subr.bf16.mxu0 0
  %84 = vmatpush1.bf16.msra.mxu0 0
  %85 = vmatprep.subr.bf16.mxu0 0
  %86 = vmatpush1.bf16.msra.mxu0 0
  %87 = vmatprep.subr.bf16.mxu0 0
  %88 = vmatpush1.bf16.msra.mxu0 0
  %89 = vmatprep.subr.bf16.mxu0 0
  %90 = vmatpush1.bf16.msra.mxu0 0
  %91 = vmatprep.subr.bf16.mxu0 0
  %92 = vmatpush1.bf16.msra.mxu0 0
  %93 = vmatprep.subr.bf16.mxu0 0
  %94 = vmatpush1.bf16.msra.mxu0 0
  %95 = vmatprep.subr.bf16.mxu0 0
  %96 = vmatpush1.bf16.msra.mxu0 0
  %97 = vmatprep.subr.bf16.mxu0 0
  %98 = vmatpush1.bf16.msra.mxu0 0
  %99 = vmatprep.mubr.bf16.mxu0 0
  %100 = vmatmul.mubr.bf16.gmra.mrb[0].mxu0 %v65
  %v101 = vpop.f32.mrb[0].mxu0
  %v102 = vadd.f32 0.0, %v101
  %v103 = vpop.f32.mrb[0].mxu0
  %v104 = vpop.f32.mrb[0].mxu0
  %v105 = vadd.f32 0.0, %v104
  %v106 = vpop.f32.mrb[0].mxu0
  %107 = vdwg.mxu0
  %v108 = vadd.f32 %v22, %v102
  %v109 = vadd.f32 %v23, %v105
  %110 = vst.msk [vmem:[#allocation2] sm:$0xff] %vm63, %v108
  %111 = vst.msk [vmem:[#allocation2 + $0x8] sm:$0xff] %vm63, %v109
  // Predicated region
  $region18: #{instance_attention_forward.30} parent=0 // pred_check
    %p112 = pneg %p15
  $region19: #{instance_attention_forward.30} parent=0 // pred_check_branch
    %114 = sbr.rel (%p112) target = $region21
  $region20: #{instance_attention_forward.30} parent=0 // pred_region
    %v115 = vld [vmem:[#allocation2] sm:$0xff]
    %v116 = vld [vmem:[#allocation2 + $0x8] sm:$0xff]
    %v117 = vld [vmem:[%s2] sm:$0x1]
    %v119 = vlaneseq
    %v120 = vshrl.u32 %v119, 7
    %v121 = vsub.s32 0, %v120
    %v122 = vrot.slane %v117, %v121
    %v124 = vadd.f32 %v115, %v122
    %v125 = vadd.f32 %v116, %v122
    %v126 = vmax.f32 %v124, 0.0
    %v127 = vmax.f32 %v125, 0.0
    %v128 = vpack.c.bf16 %v127, %v126
    %v130 = vunpack.c.l.b16 %v128
    %v131 = vunpack.c.h.b16 %v128
    %v132 = vpack.c.b16 %v130, %v130
    %v133 = vpack.c.b16 %v131, %v131
    %vm136 = vcmask 519168
    %137 = vst.msk [vmem:[%s3] sm:$0xf] %vm136, %v132
    %138 = vst.msk [vmem:[%s3 + $0x4] sm:$0xf] %vm136, %v133
  $region21: #{instance_attention_forward.30} parent=0 // pred_fallthru
    _
  // Predicated region
  $region22: #{instance_attention_forward.30} parent=0 // pred_check
    _
  $region23: #{instance_attention_forward.30} parent=0 // pred_check_branch
    %140 = sbr.rel (0) target = $region25
  $region24: #{instance_attention_forward.30} parent=0 // pred_region
    _
  $region25: #{instance_attention_forward.30} parent=0 // pred_fallthru
    _
  // Predicated region
  $region26: #{instance_attention_forward.30} parent=0 // pred_check
    _
  $region27: #{instance_attention_forward.30} parent=0 // pred_check_branch
    %142 = sbr.rel (0) target = $region29
  $region28: #{instance_attention_forward.30} parent=0 // pred_region
    _
  $region29: #{instance_attention_forward.30} parent=0 // pred_fallthru
    _

// kernel: instance_attention_forward.27
$region0: #{instance_attention_forward.27}
  #allocation0 [shape = 'u32[]', space=smem, size = 0x4, offset = 0x4, fixed_abs, tag = 'smem constant byte address 0x4 - core index']
  #allocation1 [shape = 'u32[144,128]{1,0:T(1,128)}', space=vmem, size = 0x12000, scoped, tag = 'internal scratch']
  #allocation2 [shape = 'f32[128,64]{1,0:T(8,128)}', space=vmem, size = 0x10000, scoped, tag = 'scratch operand']
  %s0 = inlined_call_operand.vmem [shape: bf16[512,64], index: 0, kind: input, shape index: {}]
  %s1 = inlined_call_operand.vmem [shape: bf16[64,64], index: 1, kind: input, shape index: {}]
  %s2 = inlined_call_operand.vmem [shape: f32[1,64], index: 2, kind: input, shape index: {}]
  %s3 = inlined_call_operand.vmem [shape: bf16[512,64], index: 3, kind: output, shape index: {}]
  %s4 = sld [smem:[#allocation0]]
  $region53: #{instance_attention_forward.27} parent=0
    _
  %s6 = ssub.s32 1, %s4
  %s7 = scalar_select 0, %s6, %s4
  loop: start=0, step=1, limit=6
  $region2: #{instance_attention_forward.27} parent=0 // loop_pre_header
    _
  $region3: #{instance_attention_forward.27} parent=0 // loop_header
    %s9 = sphi 0, %s13
    %p10 = scmp.ge.s32.totalorder %s9, 6
    %s16 = sphi 0, %s35
    %s17 = sphi 0, %s31
    %s18 = sphi 0, %s27
    %s19 = sphi 0, %s16
    %s20 = sphi 0, %s17
    %s21 = sphi 0, %s18
    %s22 = sphi 0, %s19
    %s23 = sphi 0, %s20
    %s24 = sphi 0, %s21
    %s40 = sphi 0, %s42
    %s43 = sphi 0, %s40
    %s44 = sphi 0, %s43
    %s60 = sphi 0, %s44
    %s68 = sphi 0, %s70
    %s71 = sphi 0, %s68
    %s72 = sphi 0, %s71
    %s88 = sphi 0, %s72
    %s94 = sphi 0, %s96
    %s97 = sphi 0, %s94
    %s98 = sphi 0, %s97
    %s114 = sphi 0, %s98
    %s122 = sphi 0, %s124
    %s125 = sphi 0, %s122
    %s126 = sphi 0, %s125
    %s142 = sphi 0, %s126
  $region4: #{instance_attention_forward.27} parent=0 // loop_header_branch
    %12 = sbr.rel (%p10) target = $region8
  $region5: #{instance_attention_forward.27} parent=0 // loop_body
    %s14 = ssub.s32 %s9, 1
    %s15 = ssub.s32 %s9, 2
    %s25 = sadd.s32 1, %s18
    %p26 = scmp.ge.s32.totalorder %s25, 1
    %s27 = scalar_select %p26, 0, %s25
    %s28 = sadd.s32 1, %s17
    %s29 = scalar_select %p26, %s28, %s17
    %p30 = scmp.ge.s32.totalorder %s29, 1
    %s31 = scalar_select %p30, 0, %s29
    %s32 = sadd.s32 1, %s16
    %s33 = scalar_select %p30, %s32, %s16
    %p34 = scmp.ge.s32.totalorder %s33, 4
    %s35 = scalar_select %p34, 0, %s33
    %s36 = ssub.s32 %s16, %s35
    %s37 = ssub.s32 %s18, %s27
    %s38 = sor.u32 %s36, %s37
    %p39 = scmp.eq.s32.totalorder %s38, 0
    %s41 = sadd.s32 %s40, 1
    %s42 = scalar_select %p39, %s40, %s41
    %p45 = pneg %p39
    %p46 = scmp.eq.s32.totalorder %s9, 3
    %p47 = por %p45, %p46
    %p48 = scmp.ne.s32.totalorder %s40, %s43
    %p49 = scmp.eq.s32.totalorder %s9, 0
    %p50 = por %p48, %p49
    %p51 = scmp.ne.s32.totalorder %s40, %s43
    %p52 = scmp.eq.s32.totalorder %s14, 3
    %p53 = por %p51, %p52
    %p54 = scmp.ne.s32.totalorder %s43, %s44
    %p55 = scmp.eq.s32.totalorder %s14, 0
    %p56 = por %p54, %p55
    %p57 = scmp.ne.s32.totalorder %s43, %s44
    %p58 = scmp.eq.s32.totalorder %s15, 3
    %p59 = por %p57, %p58
    %p61 = scmp.ne.s32.totalorder %s44, %s60
    %p62 = scmp.eq.s32.totalorder %s15, 0
    %p63 = por %p61, %p62
    %s64 = ssub.s32 %s18, %s27
    %s65 = ssub.s32 %s17, %s31
    %s66 = sor.u32 %s64, %s65
    %p67 = scmp.eq.s32.totalorder %s66, 0
    %s69 = sadd.s32 %s68, 1
    %s70 = scalar_select %p67, %s68, %s69
    %p73 = pneg %p67
    %p74 = scmp.eq.s32.totalorder %s9, 3
    %p75 = por %p73, %p74
    %p76 = scmp.ne.s32.totalorder %s68, %s71
    %p77 = scmp.eq.s32.totalorder %s9, 0
    %p78 = por %p76, %p77
    %p79 = scmp.ne.s32.totalorder %s68, %s71
    %p80 = scmp.eq.s32.totalorder %s14, 3
    %p81 = por %p79, %p80
    %p82 = scmp.ne.s32.totalorder %s71, %s72
    %p83 = scmp.eq.s32.totalorder %s14, 0
    %p84 = por %p82, %p83
    %p85 = scmp.ne.s32.totalorder %s71, %s72
    %p86 = scmp.eq.s32.totalorder %s15, 3
    %p87 = por %p85, %p86
    %p89 = scmp.ne.s32.totalorder %s72, %s88
    %p90 = scmp.eq.s32.totalorder %s15, 0
    %p91 = por %p89, %p90
    %s92 = ssub.s32 %s17, %s31
    %p93 = scmp.eq.s32.totalorder %s92, 0
    %s95 = sadd.s32 %s94, 1
    %s96 = scalar_select %p93, %s94, %s95
    %p99 = pneg %p93
    %p100 = scmp.eq.s32.totalorder %s9, 3
    %p101 = por %p99, %p100
    %p102 = scmp.ne.s32.totalorder %s94, %s97
    %p103 = scmp.eq.s32.totalorder %s9, 0
    %p104 = por %p102, %p103
    %p105 = scmp.ne.s32.totalorder %s94, %s97
    %p106 = scmp.eq.s32.totalorder %s14, 3
    %p107 = por %p105, %p106
    %p108 = scmp.ne.s32.totalorder %s97, %s98
    %p109 = scmp.eq.s32.totalorder %s14, 0
    %p110 = por %p108, %p109
    %p111 = scmp.ne.s32.totalorder %s97, %s98
    %p112 = scmp.eq.s32.totalorder %s15, 3
    %p113 = por %p111, %p112
    %p115 = scmp.ne.s32.totalorder %s98, %s114
    %p116 = scmp.eq.s32.totalorder %s15, 0
    %p117 = por %p115, %p116
    %s118 = ssub.s32 %s16, %s35
    %s119 = ssub.s32 %s17, %s31
    %s120 = sor.u32 %s118, %s119
    %p121 = scmp.eq.s32.totalorder %s120, 0
    %s123 = sadd.s32 %s122, 1
    %s124 = scalar_select %p121, %s122, %s123
    %p127 = pneg %p121
    %p128 = scmp.eq.s32.totalorder %s9, 3
    %p129 = por %p127, %p128
    %p130 = scmp.ne.s32.totalorder %s122, %s125
    %p131 = scmp.eq.s32.totalorder %s9, 0
    %p132 = por %p130, %p131
    %p133 = scmp.ne.s32.totalorder %s122, %s125
    %p134 = scmp.eq.s32.totalorder %s14, 3
    %p135 = por %p133, %p134
    %p136 = scmp.ne.s32.totalorder %s125, %s126
    %p137 = scmp.eq.s32.totalorder %s14, 0
    %p138 = por %p136, %p137
    %p139 = scmp.ne.s32.totalorder %s125, %s126
    %p140 = scmp.eq.s32.totalorder %s15, 3
    %p141 = por %p139, %p140
    %p143 = scmp.ne.s32.totalorder %s126, %s142
    %p144 = scmp.eq.s32.totalorder %s15, 0
    %p145 = por %p143, %p144
    %p146 = scmp.le.s32.totalorder 1, %s9
    %p147 = scmp.lt.s32.totalorder %s9, 5
    %p148 = pnand %p146, %p147
    %p149 = pneg %p148
    // Predicated region
    $region9: #{instance_attention_forward.27} parent=5 // pred_check
      _
    $region10: #{instance_attention_forward.27} parent=5 // pred_check_branch
      %151 = sbr.rel (%p148) target = $region12
    $region11: #{instance_attention_forward.27} parent=5 // pred_region
      %s152 = ssub.s32 %s9, 1
      // Predicated region
      $region13: #{instance_attention_forward.27} parent=11 // pred_check
        %p153 = pneg %p84
      $region14: #{instance_attention_forward.27} parent=11 // pred_check_branch
        %155 = sbr.rel (%p153) target = $region16
      $region15: #{instance_attention_forward.27} parent=11 // pred_region
        %s156 = smul.u32 8, %s21
        %p157 = scmp.lt.s32.totalorder %s156, 7
        %s158 = scalar_select %p157, %s156, 7
        %p159 = scmp.lt.s32.totalorder %s20, 0
        %s160 = scalar_select %p159, %s20, 0
        %s161 = sadd.s32 %s160, %s158
        %s162 = smul.addr %s161, 4
        %s163 = scalar_lea.vmem %s1, %s162
        %s164 = smul.u32 8, %s21
      $region16: #{instance_attention_forward.27} parent=11 // pred_fallthru
        _
      // Predicated region
      $region17: #{instance_attention_forward.27} parent=11 // pred_check
        %p165 = pneg %p110
      $region18: #{instance_attention_forward.27} parent=11 // pred_check_branch
        %167 = sbr.rel (%p165) target = $region20
      $region19: #{instance_attention_forward.27} parent=11 // pred_region
        %p168 = scmp.lt.s32.totalorder %s20, 0
        %s169 = scalar_select %p168, %s20, 0
        %s170 = scalar_lea.vmem %s2, %s169
      $region20: #{instance_attention_forward.27} parent=11 // pred_fallthru
        _
    $region12: #{instance_attention_forward.27} parent=5 // pred_fallthru
      _
    %p171 = scmp.lt.s32.totalorder %s9, 4
    // Predicated region
    $region21: #{instance_attention_forward.27} parent=5 // pred_check
      %p172 = pneg %p171
    $region22: #{instance_attention_forward.27} parent=5 // pred_check_branch
      %174 = sbr.rel (%p172) target = $region24
    $region23: #{instance_attention_forward.27} parent=5 // pred_region
      // Predicated region
      $region25: #{instance_attention_forward.27} parent=23 // pred_check
        %p175 = pneg %p50
      $region26: #{instance_attention_forward.27} parent=23 // pred_check_branch
        %177 = sbr.rel (%p175) target = $region28
      $region27: #{instance_attention_forward.27} parent=23 // pred_region
        %s178 = smul.u32 16, %s16
        %p179 = scmp.lt.s32.totalorder %s178, 63
        %s180 = scalar_select %p179, %s178, 63
        %p181 = scmp.lt.s32.totalorder %s18, 0
        %s182 = scalar_select %p181, %s18, 0
        %s183 = sadd.s32 %s182, %s180
        %s184 = smul.addr %s183, 4
        %s185 = scalar_lea.vmem %s0, %s184
        %s186 = smul.u32 16, %s16
      $region28: #{instance_attention_forward.27} parent=23 // pred_fallthru
        _
    $region24: #{instance_attention_forward.27} parent=5 // pred_fallthru
      _
    %p187 = scmp.le.s32.totalorder 1, %s9
    %p188 = scmp.lt.s32.totalorder %s9, 5
    %p189 = pnand %p187, %p188
    %p190 = pneg %p189
    // Predicated region
    $region29: #{instance_attention_forward.27} parent=5 // pred_check
      _
    $region30: #{instance_attention_forward.27} parent=5 // pred_check_branch
      %192 = sbr.rel (%p189) target = $region32
    $region31: #{instance_attention_forward.27} parent=5 // pred_region
      %s193 = ssub.s32 %s9, 1
      %s194 = smul.u32 16, %s19
      %p195 = scmp.lt.s32.totalorder %s194, 63
      %s196 = scalar_select %p195, %s194, 63
      %p197 = scmp.lt.s32.totalorder %s21, 0
      %s198 = scalar_select %p197, %s21, 0
      %s199 = sadd.s32 %s198, %s196
      %s200 = smul.addr %s199, 4
      %s201 = scalar_lea.vmem %s0, %s200
      %p202 = pneg %p56
      %p203 = pneg %p53
      %s204 = smul.u32 8, %s21
      %p205 = scmp.lt.s32.totalorder %s204, 7
      %s206 = scalar_select %p205, %s204, 7
      %p207 = scmp.lt.s32.totalorder %s20, 0
      %s208 = scalar_select %p207, %s20, 0
      %s209 = sadd.s32 %s208, %s206
      %s210 = smul.addr %s209, 4
      %s211 = scalar_lea.vmem %s1, %s210
      %p212 = pneg %p84
      %p213 = pneg %p81
      %p214 = scmp.lt.s32.totalorder %s20, 0
      %s215 = scalar_select %p214, %s20, 0
      %s216 = scalar_lea.vmem %s2, %s215
      %p217 = pneg %p110
      %p218 = pneg %p107
      %p219 = pneg %p138
      %p220 = pneg %p135
      %s221 = smul.u32 16, %s19
      %p222 = scmp.lt.s32.totalorder %s221, 63
      %s223 = scalar_select %p222, %s221, 63
      %p224 = scmp.lt.s32.totalorder %s20, 0
      %s225 = scalar_select %p224, %s20, 0
      %s226 = sadd.s32 %s225, %s223
      %s227 = smul.addr %s226, 4
      %s228 = scalar_lea.vmem %s3, %s227
      %s229 = smul.u32 16, %s19
      %p230 = scmp.lt.s32.totalorder %s229, 63
      %s231 = scalar_select %p230, %s229, 63
      %p232 = scmp.lt.s32.totalorder %s21, 0
      %s233 = scalar_select %p232, %s21, 0
      %s234 = sadd.s32 %s233, %s231
      %s235 = smul.addr %s234, 4
      %s236 = scalar_lea.vmem %s0, %s235
      %s237 = smul.u32 16, %s19
      %s238 = smul.u32 8, %s21
      %p239 = scmp.lt.s32.totalorder %s238, 7
      %s240 = scalar_select %p239, %s238, 7
      %p241 = scmp.lt.s32.totalorder %s20, 0
      %s242 = scalar_select %p241, %s20, 0
      %s243 = sadd.s32 %s242, %s240
      %s244 = smul.addr %s243, 4
      %s245 = scalar_lea.vmem %s1, %s244
      %s246 = smul.u32 8, %s21
      %p247 = scmp.lt.s32.totalorder %s20, 0
      %s248 = scalar_select %p247, %s20, 0
      %s249 = scalar_lea.vmem %s2, %s248
      %s250 = smul.u32 16, %s19
      %p251 = scmp.lt.s32.totalorder %s250, 63
      %s252 = scalar_select %p251, %s250, 63
      %p253 = scmp.lt.s32.totalorder %s20, 0
      %s254 = scalar_select %p253, %s20, 0
      %s255 = sadd.s32 %s254, %s252
      %s256 = smul.addr %s255, 4
      %s257 = scalar_lea.vmem %s3, %s256
      %s258 = smul.u32 16, %s19
      %p260 = scmp.eq.s32.totalorder %s21, 0
      // Predicated region
      $region33: #{instance_attention_forward.27} parent=31 // pred_check
        %p261 = pneg %p260
      $region34: #{instance_attention_forward.27} parent=31 // pred_check_branch
        %263 = sbr.rel (%p261) target = $region36
      $region35: #{instance_attention_forward.27} parent=31 // pred_region
        %vm264 = vcmask 523264
        %265 = vst.msk [vmem:[#allocation2] sm:$0xff] %vm264, 0.0
        %266 = vst.msk [vmem:[#allocation2 + $0x8] sm:$0xff] %vm264, 0.0
        %267 = vst.msk [vmem:[#allocation2 + $0x10] sm:$0xff] %vm264, 0.0
        %268 = vst.msk [vmem:[#allocation2 + $0x18] sm:$0xff] %vm264, 0.0
        %269 = vst.msk [vmem:[#allocation2 + $0x20] sm:$0xff] %vm264, 0.0
        %270 = vst.msk [vmem:[#allocation2 + $0x28] sm:$0xff] %vm264, 0.0
        %271 = vst.msk [vmem:[#allocation2 + $0x30] sm:$0xff] %vm264, 0.0
        %272 = vst.msk [vmem:[#allocation2 + $0x38] sm:$0xff] %vm264, 0.0
        %273 = vst.msk [vmem:[#allocation2 + $0x40] sm:$0xff] %vm264, 0.0
        %274 = vst.msk [vmem:[#allocation2 + $0x48] sm:$0xff] %vm264, 0.0
        %275 = vst.msk [vmem:[#allocation2 + $0x50] sm:$0xff] %vm264, 0.0
        %276 = vst.msk [vmem:[#allocation2 + $0x58] sm:$0xff] %vm264, 0.0
        %277 = vst.msk [vmem:[#allocation2 + $0x60] sm:$0xff] %vm264, 0.0
        %278 = vst.msk [vmem:[#allocation2 + $0x68] sm:$0xff] %vm264, 0.0
        %279 = vst.msk [vmem:[#allocation2 + $0x70] sm:$0xff] %vm264, 0.0
        %280 = vst.msk [vmem:[#allocation2 + $0x78] sm:$0xff] %vm264, 0.0
      $region36: #{instance_attention_forward.27} parent=31 // pred_fallthru
        _
      %v281 = vld [vmem:[#allocation2] sm:$0xff]
      %v282 = vld [vmem:[#allocation2 + $0x8] sm:$0xff]
      %v283 = vld [vmem:[#allocation2 + $0x10] sm:$0xff]
      %v284 = vld [vmem:[#allocation2 + $0x18] sm:$0xff]
      %v285 = vld [vmem:[#allocation2 + $0x20] sm:$0xff]
      %v286 = vld [vmem:[#allocation2 + $0x28] sm:$0xff]
      %v287 = vld [vmem:[#allocation2 + $0x30] sm:$0xff]
      %v288 = vld [vmem:[#allocation2 + $0x38] sm:$0xff]
      %v289 = vld [vmem:[#allocation2 + $0x40] sm:$0xff]
      %v290 = vld [vmem:[#allocation2 + $0x48] sm:$0xff]
      %v291 = vld [vmem:[#allocation2 + $0x50] sm:$0xff]
      %v292 = vld [vmem:[#allocation2 + $0x58] sm:$0xff]
      %v293 = vld [vmem:[#allocation2 + $0x60] sm:$0xff]
      %v294 = vld [vmem:[#allocation2 + $0x68] sm:$0xff]
      %v295 = vld [vmem:[#allocation2 + $0x70] sm:$0xff]
      %v296 = vld [vmem:[#allocation2 + $0x78] sm:$0xff]
      %v297 = vld [vmem:[%s236] sm:$0xf]
      %v298 = vld [vmem:[%s236 + $0x4] sm:$0xf]
      %v299 = vld [vmem:[%s236 + $0x8] sm:$0xf]
      %v300 = vld [vmem:[%s236 + $0xc] sm:$0xf]
      %v301 = vld [vmem:[%s236 + $0x10] sm:$0xf]
      %v302 = vld [vmem:[%s236 + $0x14] sm:$0xf]
      %v303 = vld [vmem:[%s236 + $0x18] sm:$0xf]
      %v304 = vld [vmem:[%s236 + $0x1c] sm:$0xf]
      %v305 = vld [vmem:[%s236 + $0x20] sm:$0xf]
      %v306 = vld [vmem:[%s236 + $0x24] sm:$0xf]
      %v307 = vld [vmem:[%s236 + $0x28] sm:$0xf]
      %v308 = vld [vmem:[%s236 + $0x2c] sm:$0xf]
      %v309 = vld [vmem:[%s236 + $0x30] sm:$0xf]
      %v310 = vld [vmem:[%s236 + $0x34] sm:$0xf]
      %v311 = vld [vmem:[%s236 + $0x38] sm:$0xf]
      %v312 = vld [vmem:[%s236 + $0x3c] sm:$0xf]
      %v313 = vld [vmem:[%s245] sm:$0xf]
      %v314 = vld [vmem:[%s245 + $0x4] sm:$0xf]
      %v315 = vld [vmem:[%s245 + $0x8] sm:$0xf]
      %v316 = vld [vmem:[%s245 + $0xc] sm:$0xf]
      %v317 = vld [vmem:[%s245 + $0x10] sm:$0xf]
      %v318 = vld [vmem:[%s245 + $0x14] sm:$0xf]
      %v319 = vld [vmem:[%s245 + $0x18] sm:$0xf]
      %v320 = vld [vmem:[%s245 + $0x1c] sm:$0xf]
      %v337 = vunpack.c.l.b16 %v297
      %v338 = vunpack.c.l.b16 %v298
      %v339 = vunpack.c.l.b16 %v299
      %v340 = vunpack.c.l.b16 %v300
      %v341 = vunpack.c.l.b16 %v301
      %v342 = vunpack.c.l.b16 %v302
      %v343 = vunpack.c.l.b16 %v303
      %v344 = vunpack.c.l.b16 %v304
      %v345 = vunpack.c.l.b16 %v305
      %v346 = vunpack.c.l.b16 %v306
      %v347 = vunpack.c.l.b16 %v307
      %v348 = vunpack.c.l.b16 %v308
      %v349 = vunpack.c.l.b16 %v309
      %v350 = vunpack.c.l.b16 %v310
      %v351 = vunpack.c.l.b16 %v311
      %v352 = vunpack.c.l.b16 %v312
      %v353 = vpack.c.b16 %v338, %v337
      %v354 = vpack.c.b16 %v340, %v339
      %v355 = vpack.c.b16 %v342, %v341
      %v356 = vpack.c.b16 %v344, %v343
      %v357 = vpack.c.b16 %v346, %v345
      %v358 = vpack.c.b16 %v348, %v347
      %v359 = vpack.c.b16 %v350, %v349
      %v360 = vpack.c.b16 %v352, %v351
      %v369 = vunpack.c.l.b16 %v313
      %v370 = vunpack.c.l.b16 %v314
      %v371 = vunpack.c.l.b16 %v315
      %v372 = vunpack.c.l.b16 %v316
      %v373 = vunpack.c.l.b16 %v317
      %v374 = vunpack.c.l.b16 %v318
      %v375 = vunpack.c.l.b16 %v319
      %v376 = vunpack.c.l.b16 %v320
      %v377 = vpack.c.b16 %v370, %v369
      %v378 = vpack.c.b16 %v372, %v371
      %v379 = vpack.c.b16 %v374, %v373
      %v380 = vpack.c.b16 %v376, %v375
      %vm385 = vcmask 523264
      %v387 = vsel %vm385, %v353, 0
      %v390 = vsel %vm385, %v354, 0
      %v393 = vsel %vm385, %v355, 0
      %v396 = vsel %vm385, %v356, 0
      %v399 = vsel %vm385, %v357, 0
      %v402 = vsel %vm385, %v358, 0
      %v405 = vsel %vm385, %v359, 0
      %v408 = vsel %vm385, %v360, 0
      %410 = vmatprep.subr.bf16.mxu0 0
      %411 = vmatpush1.bf16.msra.mxu0 %v377
      %412 = vmatprep.subr.bf16.mxu0 0
      %413 = vmatpush1.bf16.msra.mxu0 %v378
      %414 = vmatprep.subr.bf16.mxu0 0
      %415 = vmatpush1.bf16.msra.mxu0 %v379
      %416 = vmatprep.subr.bf16.mxu0 0
      %417 = vmatpush1.bf16.msra.mxu0 %v380
      %418 = vmatprep.subr.bf16.mxu0 0
      %419 = vmatpush1.bf16.msra.mxu0 0
      %420 = vmatprep.subr.bf16.mxu0 0
      %421 = vmatpush1.bf16.msra.mxu0 0
      %422 = vmatprep.subr.bf16.mxu0 0
      %423 = vmatpush1.bf16.msra.mxu0 0
      %424 = vmatprep.subr.bf16.mxu0 0
      %425 = vmatpush1.bf16.msra.mxu0 0
      %426 = vmatprep.subr.bf16.mxu0 0
      %427 = vmatpush1.bf16.msra.mxu0 0
      %428 = vmatprep.subr.bf16.mxu0 0
      %429 = vmatpush1.bf16.msra.mxu0 0
      %430 = vmatprep.subr.bf16.mxu0 0
      %431 = vmatpush1.bf16.msra.mxu0 0
      %432 = vmatprep.subr.bf16.mxu0 0
      %433 = vmatpush1.bf16.msra.mxu0 0
      %434 = vmatprep.subr.bf16.mxu0 0
      %435 = vmatpush1.bf16.msra.mxu0 0
      %436 = vmatprep.subr.bf16.mxu0 0
      %437 = vmatpush1.bf16.msra.mxu0 0
      %438 = vmatprep.subr.bf16.mxu0 0
      %439 = vmatpush1.bf16.msra.mxu0 0
      %440 = vmatprep.subr.bf16.mxu0 0
      %441 = vmatpush1.bf16.msra.mxu0 0
      %442 = vmatprep.mubr.bf16.mxu0 0
      %443 = vmatmul.mubr.bf16.gmra.mrb[0].mxu0 %v387
      %v444 = vpop.f32.mrb[0].mxu0
      %v445 = vadd.f32 0.0, %v444
      %v446 = vpop.f32.mrb[0].mxu0
      %v447 = vpop.f32.mrb[0].mxu0
      %v448 = vadd.f32 0.0, %v447
      %v449 = vpop.f32.mrb[0].mxu0
      %450 = vmatprep.mubr.bf16.mxu0 0
      %451 = vmatmul.mubr.bf16.gmra.mrb[0].mxu0 %v390
      %v452 = vpop.f32.mrb[0].mxu0
      %v453 = vadd.f32 0.0, %v452
      %v454 = vpop.f32.mrb[0].mxu0
      %v455 = vpop.f32.mrb[0].mxu0
      %v456 = vadd.f32 0.0, %v455
      %v457 = vpop.f32.mrb[0].mxu0
      %458 = vmatprep.mubr.bf16.mxu0 0
      %459 = vmatmul.mubr.bf16.gmra.mrb[0].mxu0 %v393
      %v460 = vpop.f32.mrb[0].mxu0
      %v461 = vadd.f32 0.0, %v460
      %v462 = vpop.f32.mrb[0].mxu0
      %v463 = vpop.f32.mrb[0].mxu0
      %v464 = vadd.f32 0.0, %v463
      %v465 = vpop.f32.mrb[0].mxu0
      %466 = vmatprep.mubr.bf16.mxu0 0
      %467 = vmatmul.mubr.bf16.gmra.mrb[0].mxu0 %v396
      %v468 = vpop.f32.mrb[0].mxu0
      %v469 = vadd.f32 0.0, %v468
      %v470 = vpop.f32.mrb[0].mxu0
      %v471 = vpop.f32.mrb[0].mxu0
      %v472 = vadd.f32 0.0, %v471
      %v473 = vpop.f32.mrb[0].mxu0
      %474 = vmatprep.mubr.bf16.mxu0 0
      %475 = vmatmul.mubr.bf16.gmra.mrb[0].mxu0 %v399
      %v476 = vpop.f32.mrb[0].mxu0
      %v477 = vadd.f32 0.0, %v476
      %v478 = vpop.f32.mrb[0].mxu0
      %v479 = vpop.f32.mrb[0].mxu0
      %v480 = vadd.f32 0.0, %v479
      %v481 = vpop.f32.mrb[0].mxu0
      %482 = vmatprep.mubr.bf16.mxu0 0
      %483 = vmatmul.mubr.bf16.gmra.mrb[0].mxu0 %v402
      %v484 = vpop.f32.mrb[0].mxu0
      %v485 = vadd.f32 0.0, %v484
      %v486 = vpop.f32.mrb[0].mxu0
      %v487 = vpop.f32.mrb[0].mxu0
      %v488 = vadd.f32 0.0, %v487
      %v489 = vpop.f32.mrb[0].mxu0
      %490 = vmatprep.mubr.bf16.mxu0 0
      %491 = vmatmul.mubr.bf16.gmra.mrb[0].mxu0 %v405
      %v492 = vpop.f32.mrb[0].mxu0
      %v493 = vadd.f32 0.0, %v492
      %v494 = vpop.f32.mrb[0].mxu0
      %v495 = vpop.f32.mrb[0].mxu0
      %v496 = vadd.f32 0.0, %v495
      %v497 = vpop.f32.mrb[0].mxu0
      %498 = vmatprep.mubr.bf16.mxu0 0
      %499 = vmatmul.mubr.bf16.gmra.mrb[0].mxu0 %v408
      %v500 = vpop.f32.mrb[0].mxu0
      %v501 = vadd.f32 0.0, %v500
      %v502 = vpop.f32.mrb[0].mxu0
      %v503 = vpop.f32.mrb[0].mxu0
      %v504 = vadd.f32 0.0, %v503
      %v505 = vpop.f32.mrb[0].mxu0
      %506 = vdwg.mxu0
      %v507 = vadd.f32 %v281, %v445
      %v508 = vadd.f32 %v282, %v448
      %v509 = vadd.f32 %v283, %v453
      %v510 = vadd.f32 %v284, %v456
      %v511 = vadd.f32 %v285, %v461
      %v512 = vadd.f32 %v286, %v464
      %v513 = vadd.f32 %v287, %v469
      %v514 = vadd.f32 %v288, %v472
      %v515 = vadd.f32 %v289, %v477
      %v516 = vadd.f32 %v290, %v480
      %v517 = vadd.f32 %v291, %v485
      %v518 = vadd.f32 %v292, %v488
      %v519 = vadd.f32 %v293, %v493
      %v520 = vadd.f32 %v294, %v496
      %v521 = vadd.f32 %v295, %v501
      %v522 = vadd.f32 %v296, %v504
      %523 = vst.msk [vmem:[#allocation2] sm:$0xff] %vm385, %v507
      %524 = vst.msk [vmem:[#allocation2 + $0x8] sm:$0xff] %vm385, %v508
      %525 = vst.msk [vmem:[#allocation2 + $0x10] sm:$0xff] %vm385, %v509
      %526 = vst.msk [vmem:[#allocation2 + $0x18] sm:$0xff] %vm385, %v510
      %527 = vst.msk [vmem:[#allocation2 + $0x20] sm:$0xff] %vm385, %v511
      %528 = vst.msk [vmem:[#allocation2 + $0x28] sm:$0xff] %vm385, %v512
      %529 = vst.msk [vmem:[#allocation2 + $0x30] sm:$0xff] %vm385, %v513
      %530 = vst.msk [vmem:[#allocation2 + $0x38] sm:$0xff] %vm385, %v514
      %531 = vst.msk [vmem:[#allocation2 + $0x40] sm:$0xff] %vm385, %v515
      %532 = vst.msk [vmem:[#allocation2 + $0x48] sm:$0xff] %vm385, %v516
      %533 = vst.msk [vmem:[#allocation2 + $0x50] sm:$0xff] %vm385, %v517
      %534 = vst.msk [vmem:[#allocation2 + $0x58] sm:$0xff] %vm385, %v518
      %535 = vst.msk [vmem:[#allocation2 + $0x60] sm:$0xff] %vm385, %v519
      %536 = vst.msk [vmem:[#allocation2 + $0x68] sm:$0xff] %vm385, %v520
      %537 = vst.msk [vmem:[#allocation2 + $0x70] sm:$0xff] %vm385, %v521
      %538 = vst.msk [vmem:[#allocation2 + $0x78] sm:$0xff] %vm385, %v522
      // Predicated region
      $region37: #{instance_attention_forward.27} parent=31 // pred_check
        %p539 = pneg %p260
      $region38: #{instance_attention_forward.27} parent=31 // pred_check_branch
        %541 = sbr.rel (%p539) target = $region40
      $region39: #{instance_attention_forward.27} parent=31 // pred_region
        %v542 = vld [vmem:[#allocation2] sm:$0xff]
        %v543 = vld [vmem:[#allocation2 + $0x8] sm:$0xff]
        %v544 = vld [vmem:[#allocation2 + $0x10] sm:$0xff]
        %v545 = vld [vmem:[#allocation2 + $0x18] sm:$0xff]
        %v546 = vld [vmem:[#allocation2 + $0x20] sm:$0xff]
        %v547 = vld [vmem:[#allocation2 + $0x28] sm:$0xff]
        %v548 = vld [vmem:[#allocation2 + $0x30] sm:$0xff]
        %v549 = vld [vmem:[#allocation2 + $0x38] sm:$0xff]
        %v550 = vld [vmem:[#allocation2 + $0x40] sm:$0xff]
        %v551 = vld [vmem:[#allocation2 + $0x48] sm:$0xff]
        %v552 = vld [vmem:[#allocation2 + $0x50] sm:$0xff]
        %v553 = vld [vmem:[#allocation2 + $0x58] sm:$0xff]
        %v554 = vld [vmem:[#allocation2 + $0x60] sm:$0xff]
        %v555 = vld [vmem:[#allocation2 + $0x68] sm:$0xff]
        %v556 = vld [vmem:[#allocation2 + $0x70] sm:$0xff]
        %v557 = vld [vmem:[#allocation2 + $0x78] sm:$0xff]
        %v558 = vld [vmem:[%s249] sm:$0x1]
        %v560 = vlaneseq
        %v561 = vshrl.u32 %v560, 7
        %v562 = vsub.s32 0, %v561
        %v563 = vrot.slane %v558, %v562
        %v565 = vadd.f32 %v542, %v563
        %v566 = vadd.f32 %v543, %v563
        %v567 = vadd.f32 %v544, %v563
        %v568 = vadd.f32 %v545, %v563
        %v569 = vadd.f32 %v546, %v563
        %v570 = vadd.f32 %v547, %v563
        %v571 = vadd.f32 %v548, %v563
        %v572 = vadd.f32 %v549, %v563
        %v573 = vadd.f32 %v550, %v563
        %v574 = vadd.f32 %v551, %v563
        %v575 = vadd.f32 %v552, %v563
        %v576 = vadd.f32 %v553, %v563
        %v577 = vadd.f32 %v554, %v563
        %v578 = vadd.f32 %v555, %v563
        %v579 = vadd.f32 %v556, %v563
        %v580 = vadd.f32 %v557, %v563
        %v581 = vmax.f32 %v565, 0.0
        %v582 = vmax.f32 %v566, 0.0
        %v583 = vmax.f32 %v567, 0.0
        %v584 = vmax.f32 %v568, 0.0
        %v585 = vmax.f32 %v569, 0.0
        %v586 = vmax.f32 %v570, 0.0
        %v587 = vmax.f32 %v571, 0.0
        %v588 = vmax.f32 %v572, 0.0
        %v589 = vmax.f32 %v573, 0.0
        %v590 = vmax.f32 %v574, 0.0
        %v591 = vmax.f32 %v575, 0.0
        %v592 = vmax.f32 %v576, 0.0
        %v593 = vmax.f32 %v577, 0.0
        %v594 = vmax.f32 %v578, 0.0
        %v595 = vmax.f32 %v579, 0.0
        %v596 = vmax.f32 %v580, 0.0
        %v597 = vpack.c.bf16 %v582, %v581
        %v598 = vpack.c.bf16 %v584, %v583
        %v599 = vpack.c.bf16 %v586, %v585
        %v600 = vpack.c.bf16 %v588, %v587
        %v601 = vpack.c.bf16 %v590, %v589
        %v602 = vpack.c.bf16 %v592, %v591
        %v603 = vpack.c.bf16 %v594, %v593
        %v604 = vpack.c.bf16 %v596, %v595
        %v613 = vunpack.c.l.b16 %v597
        %v614 = vunpack.c.h.b16 %v597
        %v615 = vunpack.c.l.b16 %v598
        %v616 = vunpack.c.h.b16 %v598
        %v617 = vunpack.c.l.b16 %v599
        %v618 = vunpack.c.h.b16 %v599
        %v619 = vunpack.c.l.b16 %v600
        %v620 = vunpack.c.h.b16 %v600
        %v621 = vunpack.c.l.b16 %v601
        %v622 = vunpack.c.h.b16 %v601
        %v623 = vunpack.c.l.b16 %v602
        %v624 = vunpack.c.h.b16 %v602
        %v625 = vunpack.c.l.b16 %v603
        %v626 = vunpack.c.h.b16 %v603
        %v627 = vunpack.c.l.b16 %v604
        %v628 = vunpack.c.h.b16 %v604
        %v629 = vpack.c.b16 %v613, %v613
        %v630 = vpack.c.b16 %v614, %v614
        %v631 = vpack.c.b16 %v615, %v615
        %v632 = vpack.c.b16 %v616, %v616
        %v633 = vpack.c.b16 %v617, %v617
        %v634 = vpack.c.b16 %v618, %v618
        %v635 = vpack.c.b16 %v619, %v619
        %v636 = vpack.c.b16 %v620, %v620
        %v637 = vpack.c.b16 %v621, %v621
        %v638 = vpack.c.b16 %v622, %v622
        %v639 = vpack.c.b16 %v623, %v623
        %v640 = vpack.c.b16 %v624, %v624
        %v641 = vpack.c.b16 %v625, %v625
        %v642 = vpack.c.b16 %v626, %v626
        %v643 = vpack.c.b16 %v627, %v627
        %v644 = vpack.c.b16 %v628, %v628
        %vm661 = vcmask 519168
        %662 = vst.msk [vmem:[%s257] sm:$0xf] %vm661, %v629
        %663 = vst.msk [vmem:[%s257 + $0x4] sm:$0xf] %vm661, %v630
        %664 = vst.msk [vmem:[%s257 + $0x8] sm:$0xf] %vm661, %v631
        %665 = vst.msk [vmem:[%s257 + $0xc] sm:$0xf] %vm661, %v632
        %666 = vst.msk [vmem:[%s257 + $0x10] sm:$0xf] %vm661, %v633
        %667 = vst.msk [vmem:[%s257 + $0x14] sm:$0xf] %vm661, %v634
        %668 = vst.msk [vmem:[%s257 + $0x18] sm:$0xf] %vm661, %v635
        %669 = vst.msk [vmem:[%s257 + $0x1c] sm:$0xf] %vm661, %v636
        %670 = vst.msk [vmem:[%s257 + $0x20] sm:$0xf] %vm661, %v637
        %671 = vst.msk [vmem:[%s257 + $0x24] sm:$0xf] %vm661, %v638
        %672 = vst.msk [vmem:[%s257 + $0x28] sm:$0xf] %vm661, %v639
        %673 = vst.msk [vmem:[%s257 + $0x2c] sm:$0xf] %vm661, %v640
        %674 = vst.msk [vmem:[%s257 + $0x30] sm:$0xf] %vm661, %v641
        %675 = vst.msk [vmem:[%s257 + $0x34] sm:$0xf] %vm661, %v642
        %676 = vst.msk [vmem:[%s257 + $0x38] sm:$0xf] %vm661, %v643
        %677 = vst.msk [vmem:[%s257 + $0x3c] sm:$0xf] %vm661, %v644
      $region40: #{instance_attention_forward.27} parent=31 // pred_fallthru
        _
      %s678 = smul.u32 16, %s19
      %p679 = scmp.lt.s32.totalorder %s678, 63
      %s680 = scalar_select %p679, %s678, 63
      %p681 = scmp.lt.s32.totalorder %s20, 0
      %s682 = scalar_select %p681, %s20, 0
      %s683 = sadd.s32 %s682, %s680
      %s684 = smul.addr %s683, 4
      %s685 = scalar_lea.vmem %s3, %s684
      // Predicated region
      $region41: #{instance_attention_forward.27} parent=31 // pred_check
        %p686 = pneg %p135
      $region42: #{instance_attention_forward.27} parent=31 // pred_check_branch
        %688 = sbr.rel (%p686) target = $region44
      $region43: #{instance_attention_forward.27} parent=31 // pred_region
        %s689 = smul.u32 16, %s19
      $region44: #{instance_attention_forward.27} parent=31 // pred_fallthru
        _
    $region32: #{instance_attention_forward.27} parent=5 // pred_fallthru
      _
    %p690 = scmp.le.s32.totalorder 2, %s9
    // Predicated region
    $region45: #{instance_attention_forward.27} parent=5 // pred_check
      %p691 = pneg %p690
    $region46: #{instance_attention_forward.27} parent=5 // pred_check_branch
      %693 = sbr.rel (%p691) target = $region48
    $region47: #{instance_attention_forward.27} parent=5 // pred_region
      %s694 = ssub.s32 %s9, 2
      // Predicated region
      $region49: #{instance_attention_forward.27} parent=47 // pred_check
        %p695 = pneg %p141
      $region50: #{instance_attention_forward.27} parent=47 // pred_check_branch
        %697 = sbr.rel (%p695) target = $region52
      $region51: #{instance_attention_forward.27} parent=47 // pred_region
        %s698 = smul.u32 16, %s22
        %p699 = scmp.lt.s32.totalorder %s698, 63
        %s700 = scalar_select %p699, %s698, 63
        %p701 = scmp.lt.s32.totalorder %s23, 0
        %s702 = scalar_select %p701, %s23, 0
        %s703 = sadd.s32 %s702, %s700
        %s704 = smul.addr %s703, 4
        %s705 = scalar_lea.vmem %s3, %s704
      $region52: #{instance_attention_forward.27} parent=47 // pred_fallthru
        _
    $region48: #{instance_attention_forward.27} parent=5 // pred_fallthru
      _
  $region6: #{instance_attention_forward.27} parent=0 // loop_footer
    %s13 = sadd.s32 1, %s9
  $region7: #{instance_attention_forward.27} parent=0 // loop_footer_branch
    %8 = sbr.rel target = $region3
  $region8: #{instance_attention_forward.27} parent=0 // loop_exit
    _

// kernel: instance_attention_forward.31
$region0: #{instance_attention_forward.31}
  #allocation0 [shape = 'u32[]', space=smem, size = 0x4, offset = 0x4, fixed_abs, tag = 'smem constant byte address 0x4 - core index']
  #allocation1 [shape = 'u32[144,128]{1,0:T(1,128)}', space=vmem, size = 0x12000, scoped, tag = 'internal scratch']
  %s0 = inlined_call_operand.vmem [shape: bf16[2,256,64], index: 0, kind: input, shape index: {}]
  %s1 = inlined_call_operand.vmem [shape: bf16[2,8,64], index: 1, kind: input, shape index: {}]
  %s2 = inlined_call_operand.vmem [shape: bf16[2,8,64], index: 2, kind: input, shape index: {}]
  %s3 = inlined_call_operand.vmem [shape: f32[2,1,8], index: 3, kind: input, shape index: {}]
  %s4 = inlined_call_operand.vmem [shape: bf16[2,256,64], index: 4, kind: output, shape index: {}]
  %s5 = sld [smem:[#allocation0]]
  $region127: #{instance_attention_forward.31} parent=0
    _
  %s7 = ssub.s32 1, %s5
  %s8 = scalar_select 0, %s7, %s5
  $region1: #{instance_attention_forward.31} parent=0
    #allocation2 [shape = 'u8[131072]{0}', space=vmem, size = 0x20000, scoped, tag = 'input window, operand 0']
    #allocation3 [shape = 'u8[131072]{0}', space=vmem, size = 0x20000, scoped, tag = 'output window, operand 0']
    loop: start=0, step=1, limit=4
    $region2: #{instance_attention_forward.31} parent=1 // loop_pre_header
      _
    $region3: #{instance_attention_forward.31} parent=1 // loop_header
      %s10 = sphi 0, %s14
      %p11 = scmp.ge.s32.totalorder %s10, 4
      %s20 = sphi 0, %s22
      %s23 = sphi 0, %s20
      %s24 = sphi 0, %s23
      %s40 = sphi 0, %s24
      %s44 = sphi 0, %s44
      %s46 = sphi 0, %s44
      %s47 = sphi 0, %s46
      %s61 = sphi 0, %s47
      %s65 = sphi 0, %s65
      %s67 = sphi 0, %s65
      %s68 = sphi 0, %s67
      %s82 = sphi 0, %s68
      %s86 = sphi 0, %s86
      %s88 = sphi 0, %s86
      %s89 = sphi 0, %s88
      %s103 = sphi 0, %s89
      %s109 = sphi 0, %s111
      %s112 = sphi 0, %s109
      %s113 = sphi 0, %s112
      %s129 = sphi 0, %s113
    $region4: #{instance_attention_forward.31} parent=1 // loop_header_branch
      %13 = sbr.rel (%p11) target = $region8
    $region5: #{instance_attention_forward.31} parent=1 // loop_body
      %s15 = ssub.s32 %s10, 1
      %s16 = ssub.s32 %s10, 2
      %s17 = sadd.s32 %s10, 1
      %s18 = ssub.s32 %s10, %s17
      %p19 = scmp.eq.s32.totalorder %s18, 0
      %s21 = sadd.s32 %s20, 1
      %s22 = scalar_select %p19, %s20, %s21
      %p25 = pneg %p19
      %p26 = scmp.eq.s32.totalorder %s10, 1
      %p27 = por %p25, %p26
      %p28 = scmp.ne.s32.totalorder %s20, %s23
      %p29 = scmp.eq.s32.totalorder %s10, 0
      %p30 = por %p28, %p29
      %p31 = scmp.ne.s32.totalorder %s20, %s23
      %p32 = scmp.eq.s32.totalorder %s15, 1
      %p33 = por %p31, %p32
      %p34 = scmp.ne.s32.totalorder %s23, %s24
      %p35 = scmp.eq.s32.totalorder %s15, 0
      %p36 = por %p34, %p35
      %p37 = scmp.ne.s32.totalorder %s23, %s24
      %p38 = scmp.eq.s32.totalorder %s16, 1
      %p39 = por %p37, %p38
      %p41 = scmp.ne.s32.totalorder %s24, %s40
      %p42 = scmp.eq.s32.totalorder %s16, 0
      %p43 = por %p41, %p42
      %s45 = sadd.s32 %s44, 1
      %p48 = scmp.eq.s32.totalorder %s10, 1
      %p49 = scmp.ne.s32.totalorder %s44, %s46
      %p50 = scmp.eq.s32.totalorder %s10, 0
      %p51 = por %p49, %p50
      %p52 = scmp.ne.s32.totalorder %s44, %s46
      %p53 = scmp.eq.s32.totalorder %s15, 1
      %p54 = por %p52, %p53
      %p55 = scmp.ne.s32.totalorder %s46, %s47
      %p56 = scmp.eq.s32.totalorder %s15, 0
      %p57 = por %p55, %p56
      %p58 = scmp.ne.s32.totalorder %s46, %s47
      %p59 = scmp.eq.s32.totalorder %s16, 1
      %p60 = por %p58, %p59
      %p62 = scmp.ne.s32.totalorder %s47, %s61
      %p63 = scmp.eq.s32.totalorder %s16, 0
      %p64 = por %p62, %p63
      %s66 = sadd.s32 %s65, 1
      %p69 = scmp.eq.s32.totalorder %s10, 1
      %p70 = scmp.ne.s32.totalorder %s65, %s67
      %p71 = scmp.eq.s32.totalorder %s10, 0
      %p72 = por %p70, %p71
      %p73 = scmp.ne.s32.totalorder %s65, %s67
      %p74 = scmp.eq.s32.totalorder %s15, 1
      %p75 = por %p73, %p74
      %p76 = scmp.ne.s32.totalorder %s67, %s68
      %p77 = scmp.eq.s32.totalorder %s15, 0
      %p78 = por %p76, %p77
      %p79 = scmp.ne.s32.totalorder %s67, %s68
      %p80 = scmp.eq.s32.totalorder %s16, 1
      %p81 = por %p79, %p80
      %p83 = scmp.ne.s32.totalorder %s68, %s82
      %p84 = scmp.eq.s32.totalorder %s16, 0
      %p85 = por %p83, %p84
      %s87 = sadd.s32 %s86, 1
      %p90 = scmp.eq.s32.totalorder %s10, 1
      %p91 = scmp.ne.s32.totalorder %s86, %s88
      %p92 = scmp.eq.s32.totalorder %s10, 0
      %p93 = por %p91, %p92
      %p94 = scmp.ne.s32.totalorder %s86, %s88
      %p95 = scmp.eq.s32.totalorder %s15, 1
      %p96 = por %p94, %p95
      %p97 = scmp.ne.s32.totalorder %s88, %s89
      %p98 = scmp.eq.s32.totalorder %s15, 0
      %p99 = por %p97, %p98
      %p100 = scmp.ne.s32.totalorder %s88, %s89
      %p101 = scmp.eq.s32.totalorder %s16, 1
      %p102 = por %p100, %p101
      %p104 = scmp.ne.s32.totalorder %s89, %s103
      %p105 = scmp.eq.s32.totalorder %s16, 0
      %p106 = por %p104, %p105
      %s107 = ssub.s32 %s10, %s17
      %p108 = scmp.eq.s32.totalorder %s107, 0
      %s110 = sadd.s32 %s109, 1
      %s111 = scalar_select %p108, %s109, %s110
      %p114 = pneg %p108
      %p115 = scmp.eq.s32.totalorder %s10, 1
      %p116 = por %p114, %p115
      %p117 = scmp.ne.s32.totalorder %s109, %s112
      %p118 = scmp.eq.s32.totalorder %s10, 0
      %p119 = por %p117, %p118
      %p120 = scmp.ne.s32.totalorder %s109, %s112
      %p121 = scmp.eq.s32.totalorder %s15, 1
      %p122 = por %p120, %p121
      %p123 = scmp.ne.s32.totalorder %s112, %s113
      %p124 = scmp.eq.s32.totalorder %s15, 0
      %p125 = por %p123, %p124
      %p126 = scmp.ne.s32.totalorder %s112, %s113
      %p127 = scmp.eq.s32.totalorder %s16, 1
      %p128 = por %p126, %p127
      %p130 = scmp.ne.s32.totalorder %s113, %s129
      %p131 = scmp.eq.s32.totalorder %s16, 0
      %p132 = por %p130, %p131
      %p133 = scmp.le.s32.totalorder 1, %s10
      %p134 = scmp.lt.s32.totalorder %s10, 3
      %p135 = pnand %p133, %p134
      %p136 = pneg %p135
      // Predicated region
      $region9: #{instance_attention_forward.31} parent=5 // pred_check
        _
      $region10: #{instance_attention_forward.31} parent=5 // pred_check_branch
        %138 = sbr.rel (%p135) target = $region12
      $region11: #{instance_attention_forward.31} parent=5 // pred_region
        %s139 = ssub.s32 %s10, 1
        // Predicated region
        $region13: #{instance_attention_forward.31} parent=11 // pred_check
          %p140 = pneg %p57
        $region14: #{instance_attention_forward.31} parent=11 // pred_check_branch
          %142 = sbr.rel (%p140) target = $region16
        $region15: #{instance_attention_forward.31} parent=11 // pred_region
          _
        $region16: #{instance_attention_forward.31} parent=11 // pred_fallthru
          _
        // Predicated region
        $region17: #{instance_attention_forward.31} parent=11 // pred_check
          %p143 = pneg %p78
        $region18: #{instance_attention_forward.31} parent=11 // pred_check_branch
          %145 = sbr.rel (%p143) target = $region20
        $region19: #{instance_attention_forward.31} parent=11 // pred_region
          _
        $region20: #{instance_attention_forward.31} parent=11 // pred_fallthru
          _
        // Predicated region
        $region21: #{instance_attention_forward.31} parent=11 // pred_check
          %p146 = pneg %p99
        $region22: #{instance_attention_forward.31} parent=11 // pred_check_branch
          %148 = sbr.rel (%p146) target = $region24
        $region23: #{instance_attention_forward.31} parent=11 // pred_region
          _
        $region24: #{instance_attention_forward.31} parent=11 // pred_fallthru
          _
      $region12: #{instance_attention_forward.31} parent=5 // pred_fallthru
        _
      %p149 = scmp.lt.s32.totalorder %s10, 2
      // Predicated region
      $region25: #{instance_attention_forward.31} parent=5 // pred_check
        %p150 = pneg %p149
      $region26: #{instance_attention_forward.31} parent=5 // pred_check_branch
        %152 = sbr.rel (%p150) target = $region28
      $region27: #{instance_attention_forward.31} parent=5 // pred_region
        // Predicated region
        $region29: #{instance_attention_forward.31} parent=27 // pred_check
          %p153 = pneg %p30
        $region30: #{instance_attention_forward.31} parent=27 // pred_check_branch
          %155 = sbr.rel (%p153) target = $region32
        $region31: #{instance_attention_forward.31} parent=27 // pred_region
          %s156 = sand.u32 %s20, 1
          %s157 = sand.u32 %s20, 1
          %s158 = smul.addr %s157, 128
          %s159 = scalar_lea.vmem [#allocation2], %s158
          %s160 = smul.u32 16, %s10
          %s161 = smul.addr %s160, 4
          %s162 = scalar_lea.vmem %s0, %s161
          // Predicated region
          $region33: #{instance_attention_forward.31} parent=31 // pred_check
            _
          $region34: #{instance_attention_forward.31} parent=31 // pred_check_branch
            %164 = sbr.rel (0) target = $region36
          $region35: #{instance_attention_forward.31} parent=31 // pred_region
            // Predicated region
            $region37: #{instance_attention_forward.31} parent=35 // pred_check
              _
            $region38: #{instance_attention_forward.31} parent=35 // pred_check_branch
              %166 = sbr.rel target = $region40
            $region39: #{instance_attention_forward.31} parent=35 // pred_region
              // Predicated region
              $region52: #{instance_attention_forward.31} parent=39 // pred_check
                _
              $region53: #{instance_attention_forward.31} parent=39 // pred_check_branch
                %243 = sbr.rel (0) target = $region55
              $region54: #{instance_attention_forward.31} parent=39 // pred_region
                loop: start=0, step=1, limit=1
                $region56: #{instance_attention_forward.31} parent=54 // loop_pre_header
                  _
                $region57: #{instance_attention_forward.31} parent=54 // loop_header
                  %s245 = sphi 0, %s249
                  %p246 = scmp.ge.s32.totalorder %s245, 1
                  %s250 = sphi %s162, %s162
                  %s251 = sphi %s159, %s159
                $region58: #{instance_attention_forward.31} parent=54 // loop_header_branch
                  %248 = sbr.rel (%p246) target = $region62
                $region59: #{instance_attention_forward.31} parent=54 // loop_body
                  _
                $region60: #{instance_attention_forward.31} parent=54 // loop_footer
                  %s249 = sadd.s32 1, %s245
                $region61: #{instance_attention_forward.31} parent=54 // loop_footer_branch
                  %244 = sbr.rel target = $region57
                $region62: #{instance_attention_forward.31} parent=54 // loop_exit
                  _
                loop: start=0, step=1, limit=1
                $region63: #{instance_attention_forward.31} parent=54 // loop_pre_header
                  _
                $region64: #{instance_attention_forward.31} parent=54 // loop_header
                  %s254 = sphi 0, %s258
                  %p255 = scmp.ge.s32.totalorder %s254, 1
                  %s259 = sphi %s162, %s162
                  %s260 = sphi %s159, %s159
                $region65: #{instance_attention_forward.31} parent=54 // loop_header_branch
                  %257 = sbr.rel (%p255) target = $region69
                $region66: #{instance_attention_forward.31} parent=54 // loop_body
                  %v261 = vld [vmem:[%s259] sm:$0xf]
                  %262 = vst [vmem:[%s260] sm:$0xf] %v261
                  %v263 = vld [vmem:[%s259 + $0x4] sm:$0xf]
                  %264 = vst [vmem:[%s260 + $0x4] sm:$0xf] %v263
                  %v265 = vld [vmem:[%s259 + $0x8] sm:$0xf]
                  %266 = vst [vmem:[%s260 + $0x8] sm:$0xf] %v265
                  %v267 = vld [vmem:[%s259 + $0xc] sm:$0xf]
                  %268 = vst [vmem:[%s260 + $0xc] sm:$0xf] %v267
                  %v269 = vld [vmem:[%s259 + $0x10] sm:$0xf]
                  %270 = vst [vmem:[%s260 + $0x10] sm:$0xf] %v269
                  %v271 = vld [vmem:[%s259 + $0x14] sm:$0xf]
                  %272 = vst [vmem:[%s260 + $0x14] sm:$0xf] %v271
                  %v273 = vld [vmem:[%s259 + $0x18] sm:$0xf]
                  %274 = vst [vmem:[%s260 + $0x18] sm:$0xf] %v273
                  %v275 = vld [vmem:[%s259 + $0x1c] sm:$0xf]
                  %276 = vst [vmem:[%s260 + $0x1c] sm:$0xf] %v275
                  %v277 = vld [vmem:[%s259 + $0x20] sm:$0xf]
                  %278 = vst [vmem:[%s260 + $0x20] sm:$0xf] %v277
                  %v279 = vld [vmem:[%s259 + $0x24] sm:$0xf]
                  %280 = vst [vmem:[%s260 + $0x24] sm:$0xf] %v279
                  %v281 = vld [vmem:[%s259 + $0x28] sm:$0xf]
                  %282 = vst [vmem:[%s260 + $0x28] sm:$0xf] %v281
                  %v283 = vld [vmem:[%s259 + $0x2c] sm:$0xf]
                  %284 = vst [vmem:[%s260 + $0x2c] sm:$0xf] %v283
                  %v285 = vld [vmem:[%s259 + $0x30] sm:$0xf]
                  %286 = vst [vmem:[%s260 + $0x30] sm:$0xf] %v285
                  %v287 = vld [vmem:[%s259 + $0x34] sm:$0xf]
                  %288 = vst [vmem:[%s260 + $0x34] sm:$0xf] %v287
                  %v289 = vld [vmem:[%s259 + $0x38] sm:$0xf]
                  %290 = vst [vmem:[%s260 + $0x38] sm:$0xf] %v289
                  %v291 = vld [vmem:[%s259 + $0x3c] sm:$0xf]
                  %292 = vst [vmem:[%s260 + $0x3c] sm:$0xf] %v291
                  %v293 = vld [vmem:[%s259 + $0x80] sm:$0xf]
                  %294 = vst [vmem:[%s260 + $0x40] sm:$0xf] %v293
                  %v295 = vld [vmem:[%s259 + $0x84] sm:$0xf]
                  %296 = vst [vmem:[%s260 + $0x44] sm:$0xf] %v295
                  %v297 = vld [vmem:[%s259 + $0x88] sm:$0xf]
                  %298 = vst [vmem:[%s260 + $0x48] sm:$0xf] %v297
                  %v299 = vld [vmem:[%s259 + $0x8c] sm:$0xf]
                  %300 = vst [vmem:[%s260 + $0x4c] sm:$0xf] %v299
                  %v301 = vld [vmem:[%s259 + $0x90] sm:$0xf]
                  %302 = vst [vmem:[%s260 + $0x50] sm:$0xf] %v301
                  %v303 = vld [vmem:[%s259 + $0x94] sm:$0xf]
                  %304 = vst [vmem:[%s260 + $0x54] sm:$0xf] %v303
                  %v305 = vld [vmem:[%s259 + $0x98] sm:$0xf]
                  %306 = vst [vmem:[%s260 + $0x58] sm:$0xf] %v305
                  %v307 = vld [vmem:[%s259 + $0x9c] sm:$0xf]
                  %308 = vst [vmem:[%s260 + $0x5c] sm:$0xf] %v307
                  %v309 = vld [vmem:[%s259 + $0xa0] sm:$0xf]
                  %310 = vst [vmem:[%s260 + $0x60] sm:$0xf] %v309
                  %v311 = vld [vmem:[%s259 + $0xa4] sm:$0xf]
                  %312 = vst [vmem:[%s260 + $0x64] sm:$0xf] %v311
                  %v313 = vld [vmem:[%s259 + $0xa8] sm:$0xf]
                  %314 = vst [vmem:[%s260 + $0x68] sm:$0xf] %v313
                  %v315 = vld [vmem:[%s259 + $0xac] sm:$0xf]
                  %316 = vst [vmem:[%s260 + $0x6c] sm:$0xf] %v315
                  %v317 = vld [vmem:[%s259 + $0xb0] sm:$0xf]
                  %318 = vst [vmem:[%s260 + $0x70] sm:$0xf] %v317
                  %v319 = vld [vmem:[%s259 + $0xb4] sm:$0xf]
                  %320 = vst [vmem:[%s260 + $0x74] sm:$0xf] %v319
                  %v321 = vld [vmem:[%s259 + $0xb8] sm:$0xf]
                  %322 = vst [vmem:[%s260 + $0x78] sm:$0xf] %v321
                  %v323 = vld [vmem:[%s259 + $0xbc] sm:$0xf]
                  %324 = vst [vmem:[%s260 + $0x7c] sm:$0xf] %v323
                $region67: #{instance_attention_forward.31} parent=54 // loop_footer
                  %s258 = sadd.s32 1, %s254
                $region68: #{instance_attention_forward.31} parent=54 // loop_footer_branch
                  %253 = sbr.rel target = $region64
                $region69: #{instance_attention_forward.31} parent=54 // loop_exit
                  _
              $region55: #{instance_attention_forward.31} parent=39 // pred_fallthru
                _
            $region40: #{instance_attention_forward.31} parent=35 // pred_fallthru
              _
            // Predicated region
            $region41: #{instance_attention_forward.31} parent=35 // pred_check
              _
            $region42: #{instance_attention_forward.31} parent=35 // pred_check_branch
              %168 = sbr.rel (0) target = $region44
            $region43: #{instance_attention_forward.31} parent=35 // pred_region
              loop: start=0, step=1, limit=1
              $region45: #{instance_attention_forward.31} parent=43 // loop_pre_header
                _
              $region46: #{instance_attention_forward.31} parent=43 // loop_header
                %s171 = sphi 0, %s175
                %p172 = scmp.ge.s32.totalorder %s171, 1
                %s176 = sphi %s162, %s162
                %s177 = sphi %s159, %s159
              $region47: #{instance_attention_forward.31} parent=43 // loop_header_branch
                %174 = sbr.rel (%p172) target = $region51
              $region48: #{instance_attention_forward.31} parent=43 // loop_body
                %v178 = vld [vmem:[%s176] sm:$0xf]
                %179 = vst [vmem:[%s177] sm:$0xf] %v178
                %v180 = vld [vmem:[%s176 + $0x4] sm:$0xf]
                %181 = vst [vmem:[%s177 + $0x4] sm:$0xf] %v180
                %v182 = vld [vmem:[%s176 + $0x8] sm:$0xf]
                %183 = vst [vmem:[%s177 + $0x8] sm:$0xf] %v182
                %v184 = vld [vmem:[%s176 + $0xc] sm:$0xf]
                %185 = vst [vmem:[%s177 + $0xc] sm:$0xf] %v184
                %v186 = vld [vmem:[%s176 + $0x10] sm:$0xf]
                %187 = vst [vmem:[%s177 + $0x10] sm:$0xf] %v186
                %v188 = vld [vmem:[%s176 + $0x14] sm:$0xf]
                %189 = vst [vmem:[%s177 + $0x14] sm:$0xf] %v188
                %v190 = vld [vmem:[%s176 + $0x18] sm:$0xf]
                %191 = vst [vmem:[%s177 + $0x18] sm:$0xf] %v190
                %v192 = vld [vmem:[%s176 + $0x1c] sm:$0xf]
                %193 = vst [vmem:[%s177 + $0x1c] sm:$0xf] %v192
                %v194 = vld [vmem:[%s176 + $0x20] sm:$0xf]
                %195 = vst [vmem:[%s177 + $0x20] sm:$0xf] %v194
                %v196 = vld [vmem:[%s176 + $0x24] sm:$0xf]
                %197 = vst [vmem:[%s177 + $0x24] sm:$0xf] %v196
                %v198 = vld [vmem:[%s176 + $0x28] sm:$0xf]
                %199 = vst [vmem:[%s177 + $0x28] sm:$0xf] %v198
                %v200 = vld [vmem:[%s176 + $0x2c] sm:$0xf]
                %201 = vst [vmem:[%s177 + $0x2c] sm:$0xf] %v200
                %v202 = vld [vmem:[%s176 + $0x30] sm:$0xf]
                %203 = vst [vmem:[%s177 + $0x30] sm:$0xf] %v202
                %v204 = vld [vmem:[%s176 + $0x34] sm:$0xf]
                %205 = vst [vmem:[%s177 + $0x34] sm:$0xf] %v204
                %v206 = vld [vmem:[%s176 + $0x38] sm:$0xf]
                %207 = vst [vmem:[%s177 + $0x38] sm:$0xf] %v206
                %v208 = vld [vmem:[%s176 + $0x3c] sm:$0xf]
                %209 = vst [vmem:[%s177 + $0x3c] sm:$0xf] %v208
                %v210 = vld [vmem:[%s176 + $0x80] sm:$0xf]
                %211 = vst [vmem:[%s177 + $0x40] sm:$0xf] %v210
                %v212 = vld [vmem:[%s176 + $0x84] sm:$0xf]
                %213 = vst [vmem:[%s177 + $0x44] sm:$0xf] %v212
                %v214 = vld [vmem:[%s176 + $0x88] sm:$0xf]
                %215 = vst [vmem:[%s177 + $0x48] sm:$0xf] %v214
                %v216 = vld [vmem:[%s176 + $0x8c] sm:$0xf]
                %217 = vst [vmem:[%s177 + $0x4c] sm:$0xf] %v216
                %v218 = vld [vmem:[%s176 + $0x90] sm:$0xf]
                %219 = vst [vmem:[%s177 + $0x50] sm:$0xf] %v218
                %v220 = vld [vmem:[%s176 + $0x94] sm:$0xf]
                %221 = vst [vmem:[%s177 + $0x54] sm:$0xf] %v220
                %v222 = vld [vmem:[%s176 + $0x98] sm:$0xf]
                %223 = vst [vmem:[%s177 + $0x58] sm:$0xf] %v222
                %v224 = vld [vmem:[%s176 + $0x9c] sm:$0xf]
                %225 = vst [vmem:[%s177 + $0x5c] sm:$0xf] %v224
                %v226 = vld [vmem:[%s176 + $0xa0] sm:$0xf]
                %227 = vst [vmem:[%s177 + $0x60] sm:$0xf] %v226
                %v228 = vld [vmem:[%s176 + $0xa4] sm:$0xf]
                %229 = vst [vmem:[%s177 + $0x64] sm:$0xf] %v228
                %v230 = vld [vmem:[%s176 + $0xa8] sm:$0xf]
                %231 = vst [vmem:[%s177 + $0x68] sm:$0xf] %v230
                %v232 = vld [vmem:[%s176 + $0xac] sm:$0xf]
                %233 = vst [vmem:[%s177 + $0x6c] sm:$0xf] %v232
                %v234 = vld [vmem:[%s176 + $0xb0] sm:$0xf]
                %235 = vst [vmem:[%s177 + $0x70] sm:$0xf] %v234
                %v236 = vld [vmem:[%s176 + $0xb4] sm:$0xf]
                %237 = vst [vmem:[%s177 + $0x74] sm:$0xf] %v236
                %v238 = vld [vmem:[%s176 + $0xb8] sm:$0xf]
                %239 = vst [vmem:[%s177 + $0x78] sm:$0xf] %v238
                %v240 = vld [vmem:[%s176 + $0xbc] sm:$0xf]
                %241 = vst [vmem:[%s177 + $0x7c] sm:$0xf] %v240
              $region49: #{instance_attention_forward.31} parent=43 // loop_footer
                %s175 = sadd.s32 1, %s171
              $region50: #{instance_attention_forward.31} parent=43 // loop_footer_branch
                %170 = sbr.rel target = $region46
              $region51: #{instance_attention_forward.31} parent=43 // loop_exit
                _
            $region44: #{instance_attention_forward.31} parent=35 // pred_fallthru
              _
          $region36: #{instance_attention_forward.31} parent=31 // pred_fallthru
            _
          %325 = vnop
        $region32: #{instance_attention_forward.31} parent=27 // pred_fallthru
          _
      $region28: #{instance_attention_forward.31} parent=5 // pred_fallthru
        _
      %p326 = scmp.le.s32.totalorder 1, %s10
      %p327 = scmp.lt.s32.totalorder %s10, 3
      %p328 = pnand %p326, %p327
      %p329 = pneg %p328
      // Predicated region
      $region70: #{instance_attention_forward.31} parent=5 // pred_check
        _
      $region71: #{instance_attention_forward.31} parent=5 // pred_check_branch
        %331 = sbr.rel (%p328) target = $region73
      $region72: #{instance_attention_forward.31} parent=5 // pred_region
        %s332 = ssub.s32 %s10, 1
        %s333 = sand.u32 %s23, 1
        %s334 = sand.u32 %s23, 1
        %s335 = smul.addr %s334, 128
        %s336 = scalar_lea.vmem [#allocation2], %s335
        // Predicated region
        $region74: #{instance_attention_forward.31} parent=72 // pred_check
          %p337 = pneg %p36
        $region75: #{instance_attention_forward.31} parent=72 // pred_check_branch
          %339 = sbr.rel (%p337) target = $region77
        $region76: #{instance_attention_forward.31} parent=72 // pred_region
          _
        $region77: #{instance_attention_forward.31} parent=72 // pred_fallthru
          _
        %s340 = sand.u32 %s23, 1
        %s341 = sand.u32 %s23, 1
        %s342 = smul.addr %s341, 128
        %s343 = scalar_lea.vmem [#allocation2], %s342
        %p344 = pneg %p36
        %p345 = pneg %p33
        %p346 = pneg %p57
        %p347 = pneg %p54
        %p348 = pneg %p78
        %p349 = pneg %p75
        %p350 = pneg %p99
        %p351 = pneg %p96
        %p352 = pneg %p125
        %p353 = pneg %p122
        %s354 = sand.u32 %s112, 1
        %s355 = sand.u32 %s112, 1
        %s356 = smul.addr %s355, 128
        %s357 = scalar_lea.vmem [#allocation3], %s356
        %s358 = smul.u32 16, %s15
        %s359 = smul.u32 16, %s15
        %v361 = vld [vmem:[%s336] sm:$0xf]
        %v362 = vld [vmem:[%s336 + $0x4] sm:$0xf]
        %v363 = vld [vmem:[%s336 + $0x8] sm:$0xf]
        %v364 = vld [vmem:[%s336 + $0xc] sm:$0xf]
        %v365 = vld [vmem:[%s336 + $0x10] sm:$0xf]
        %v366 = vld [vmem:[%s336 + $0x14] sm:$0xf]
        %v367 = vld [vmem:[%s336 + $0x18] sm:$0xf]
        %v368 = vld [vmem:[%s336 + $0x1c] sm:$0xf]
        %v369 = vld [vmem:[%s336 + $0x20] sm:$0xf]
        %v370 = vld [vmem:[%s336 + $0x24] sm:$0xf]
        %v371 = vld [vmem:[%s336 + $0x28] sm:$0xf]
        %v372 = vld [vmem:[%s336 + $0x2c] sm:$0xf]
        %v373 = vld [vmem:[%s336 + $0x30] sm:$0xf]
        %v374 = vld [vmem:[%s336 + $0x34] sm:$0xf]
        %v375 = vld [vmem:[%s336 + $0x38] sm:$0xf]
        %v376 = vld [vmem:[%s336 + $0x3c] sm:$0xf]
        %v377 = vld [vmem:[%s336 + $0x40] sm:$0xf]
        %v378 = vld [vmem:[%s336 + $0x44] sm:$0xf]
        %v379 = vld [vmem:[%s336 + $0x48] sm:$0xf]
        %v380 = vld [vmem:[%s336 + $0x4c] sm:$0xf]
        %v381 = vld [vmem:[%s336 + $0x50] sm:$0xf]
        %v382 = vld [vmem:[%s336 + $0x54] sm:$0xf]
        %v383 = vld [vmem:[%s336 + $0x58] sm:$0xf]
        %v384 = vld [vmem:[%s336 + $0x5c] sm:$0xf]
        %v385 = vld [vmem:[%s336 + $0x60] sm:$0xf]
        %v386 = vld [vmem:[%s336 + $0x64] sm:$0xf]
        %v387 = vld [vmem:[%s336 + $0x68] sm:$0xf]
        %v388 = vld [vmem:[%s336 + $0x6c] sm:$0xf]
        %v389 = vld [vmem:[%s336 + $0x70] sm:$0xf]
        %v390 = vld [vmem:[%s336 + $0x74] sm:$0xf]
        %v391 = vld [vmem:[%s336 + $0x78] sm:$0xf]
        %v392 = vld [vmem:[%s336 + $0x7c] sm:$0xf]
        %v393 = vld [vmem:[%s1] sm:$0xf]
        %v394 = vld [vmem:[%s1 + $0x4] sm:$0xf]
        %v395 = vld [vmem:[%s2] sm:$0xf]
        %v396 = vld [vmem:[%s2 + $0x4] sm:$0xf]
        %v397 = vld [vmem:[%s3] sm:$0x1]
        %v398 = vld [vmem:[%s3 + $0x1] sm:$0x1]
        %v415 = vunpack.c.l.b16 %v361
        %v416 = vunpack.c.l.b16 %v362
        %v417 = vunpack.c.l.b16 %v363
        %v418 = vunpack.c.l.b16 %v364
        %v419 = vunpack.c.l.b16 %v365
        %v420 = vunpack.c.l.b16 %v366
        %v421 = vunpack.c.l.b16 %v367
        %v422 = vunpack.c.l.b16 %v368
        %v423 = vunpack.c.l.b16 %v369
        %v424 = vunpack.c.l.b16 %v370
        %v425 = vunpack.c.l.b16 %v371
        %v426 = vunpack.c.l.b16 %v372
        %v427 = vunpack.c.l.b16 %v373
        %v428 = vunpack.c.l.b16 %v374
        %v429 = vunpack.c.l.b16 %v375
        %v430 = vunpack.c.l.b16 %v376
        %v431 = vpack.c.b16 %v416, %v415
        %v432 = vpack.c.b16 %v418, %v417
        %v433 = vpack.c.b16 %v420, %v419
        %v434 = vpack.c.b16 %v422, %v421
        %v435 = vpack.c.b16 %v424, %v423
        %v436 = vpack.c.b16 %v426, %v425
        %v437 = vpack.c.b16 %v428, %v427
        %v438 = vpack.c.b16 %v430, %v429
        %vm439 = vcmask 523264
        %v441 = vsel %vm439, %v431, 0
        %v444 = vsel %vm439, %v432, 0
        %v447 = vsel %vm439, %v433, 0
        %v450 = vsel %vm439, %v434, 0
        %v453 = vsel %vm439, %v435, 0
        %v456 = vsel %vm439, %v436, 0
        %v459 = vsel %vm439, %v437, 0
        %v462 = vsel %vm439, %v438, 0
        %v465 = vsel %vm439, %v393, 0
        %467 = vmatprep.subr.bf16.mxu0 0
        %468 = vmatpush1.bf16.xpose.msra.mxu0 %v465
        %469 = vmatprep.subr.bf16.mxu0 0
        %470 = vmatpush1.bf16.xpose.msra.mxu0 0
        %471 = vmatprep.subr.bf16.mxu0 0
        %472 = vmatpush1.bf16.xpose.msra.mxu0 0
        %473 = vmatprep.subr.bf16.mxu0 0
        %474 = vmatpush1.bf16.xpose.msra.mxu0 0
        %475 = vmatprep.subr.bf16.mxu0 0
        %476 = vmatpush1.bf16.xpose.msra.mxu0 0
        %477 = vmatprep.subr.bf16.mxu0 0
        %478 = vmatpush1.bf16.xpose.msra.mxu0 0
        %479 = vmatprep.subr.bf16.mxu0 0
        %480 = vmatpush1.bf16.xpose.msra.mxu0 0
        %481 = vmatprep.subr.bf16.mxu0 0
        %482 = vmatpush1.bf16.xpose.msra.mxu0 0
        %483 = vmatprep.subr.bf16.mxu0 0
        %484 = vmatpush1.bf16.xpose.msra.mxu0 0
        %485 = vmatprep.subr.bf16.mxu0 0
        %486 = vmatpush1.bf16.xpose.msra.mxu0 0
        %487 = vmatprep.subr.bf16.mxu0 0
        %488 = vmatpush1.bf16.xpose.msra.mxu0 0
        %489 = vmatprep.subr.bf16.mxu0 0
        %490 = vmatpush1.bf16.xpose.msra.mxu0 0
        %491 = vmatprep.subr.bf16.mxu0 0
        %492 = vmatpush1.bf16.xpose.msra.mxu0 0
        %493 = vmatprep.subr.bf16.mxu0 0
        %494 = vmatpush1.bf16.xpose.msra.mxu0 0
        %495 = vmatprep.subr.bf16.mxu0 0
        %496 = vmatpush1.bf16.xpose.msra.mxu0 0
        %497 = vmatprep.subr.bf16.mxu0 0
        %498 = vmatpush1.bf16.xpose.msra.mxu0 0
        %499 = vmatprep.mubr.bf16.mxu0 0
        %500 = vmatmul.mubr.bf16.gmra.mrb[0].mxu0 %v441
        %v501 = vpop.f32.mrb[0].mxu0
        %v502 = vadd.f32 0.0, %v501
        %v503 = vpop.f32.mrb[0].mxu0
        %v504 = vpop.f32.mrb[0].mxu0
        %v505 = vadd.f32 0.0, %v504
        %v506 = vpop.f32.mrb[0].mxu0
        %507 = vmatprep.mubr.bf16.mxu0 0
        %508 = vmatmul.mubr.bf16.gmra.mrb[0].mxu0 %v444
        %v509 = vpop.f32.mrb[0].mxu0
        %v510 = vadd.f32 0.0, %v509
        %v511 = vpop.f32.mrb[0].mxu0
        %v512 = vpop.f32.mrb[0].mxu0
        %v513 = vadd.f32 0.0, %v512
        %v514 = vpop.f32.mrb[0].mxu0
        %515 = vmatprep.mubr.bf16.mxu0 0
        %516 = vmatmul.mubr.bf16.gmra.mrb[0].mxu0 %v447
        %v517 = vpop.f32.mrb[0].mxu0
        %v518 = vadd.f32 0.0, %v517
        %v519 = vpop.f32.mrb[0].mxu0
        %v520 = vpop.f32.mrb[0].mxu0
        %v521 = vadd.f32 0.0, %v520
        %v522 = vpop.f32.mrb[0].mxu0
        %523 = vmatprep.mubr.bf16.mxu0 0
        %524 = vmatmul.mubr.bf16.gmra.mrb[0].mxu0 %v450
        %v525 = vpop.f32.mrb[0].mxu0
        %v526 = vadd.f32 0.0, %v525
        %v527 = vpop.f32.mrb[0].mxu0
        %v528 = vpop.f32.mrb[0].mxu0
        %v529 = vadd.f32 0.0, %v528
        %v530 = vpop.f32.mrb[0].mxu0
        %531 = vmatprep.mubr.bf16.mxu0 0
        %532 = vmatmul.mubr.bf16.gmra.mrb[0].mxu0 %v453
        %v533 = vpop.f32.mrb[0].mxu0
        %v534 = vadd.f32 0.0, %v533
        %v535 = vpop.f32.mrb[0].mxu0
        %v536 = vpop.f32.mrb[0].mxu0
        %v537 = vadd.f32 0.0, %v536
        %v538 = vpop.f32.mrb[0].mxu0
        %539 = vmatprep.mubr.bf16.mxu0 0
        %540 = vmatmul.mubr.bf16.gmra.mrb[0].mxu0 %v456
        %v541 = vpop.f32.mrb[0].mxu0
        %v542 = vadd.f32 0.0, %v541
        %v543 = vpop.f32.mrb[0].mxu0
        %v544 = vpop.f32.mrb[0].mxu0
        %v545 = vadd.f32 0.0, %v544
        %v546 = vpop.f32.mrb[0].mxu0
        %547 = vmatprep.mubr.bf16.mxu0 0
        %548 = vmatmul.mubr.bf16.gmra.mrb[0].mxu0 %v459
        %v549 = vpop.f32.mrb[0].mxu0
        %v550 = vadd.f32 0.0, %v549
        %v551 = vpop.f32.mrb[0].mxu0
        %v552 = vpop.f32.mrb[0].mxu0
        %v553 = vadd.f32 0.0, %v552
        %v554 = vpop.f32.mrb[0].mxu0
        %555 = vmatprep.mubr.bf16.mxu0 0
        %556 = vmatmul.mubr.bf16.gmra.mrb[0].mxu0 %v462
        %v557 = vpop.f32.mrb[0].mxu0
        %v558 = vadd.f32 0.0, %v557
        %v559 = vpop.f32.mrb[0].mxu0
        %v560 = vpop.f32.mrb[0].mxu0
        %v561 = vadd.f32 0.0, %v560
        %v562 = vpop.f32.mrb[0].mxu0
        %563 = vdwg.mxu0
        %v580 = vunpack.c.l.b16 %v377
        %v581 = vunpack.c.l.b16 %v378
        %v582 = vunpack.c.l.b16 %v379
        %v583 = vunpack.c.l.b16 %v380
        %v584 = vunpack.c.l.b16 %v381
        %v585 = vunpack.c.l.b16 %v382
        %v586 = vunpack.c.l.b16 %v383
        %v587 = vunpack.c.l.b16 %v384
        %v588 = vunpack.c.l.b16 %v385
        %v589 = vunpack.c.l.b16 %v386
        %v590 = vunpack.c.l.b16 %v387
        %v591 = vunpack.c.l.b16 %v388
        %v592 = vunpack.c.l.b16 %v389
        %v593 = vunpack.c.l.b16 %v390
        %v594 = vunpack.c.l.b16 %v391
        %v595 = vunpack.c.l.b16 %v392
        %v596 = vpack.c.b16 %v581, %v580
        %v597 = vpack.c.b16 %v583, %v582
        %v598 = vpack.c.b16 %v585, %v584
        %v599 = vpack.c.b16 %v587, %v586
        %v600 = vpack.c.b16 %v589, %v588
        %v601 = vpack.c.b16 %v591, %v590
        %v602 = vpack.c.b16 %v593, %v592
        %v603 = vpack.c.b16 %v595, %v594
        %v605 = vsel %vm439, %v596, 0
        %v608 = vsel %vm439, %v597, 0
        %v611 = vsel %vm439, %v598, 0
        %v614 = vsel %vm439, %v599, 0
        %v617 = vsel %vm439, %v600, 0
        %v620 = vsel %vm439, %v601, 0
        %v623 = vsel %vm439, %v602, 0
        %v626 = vsel %vm439, %v603, 0
        %v629 = vsel %vm439, %v394, 0
        %631 = vmatprep.subr.bf16.mxu0 0
        %632 = vmatpush1.bf16.xpose.msra.mxu0 %v629
        %633 = vmatprep.subr.bf16.mxu0 0
        %634 = vmatpush1.bf16.xpose.msra.mxu0 0
        %635 = vmatprep.subr.bf16.mxu0 0
        %636 = vmatpush1.bf16.xpose.msra.mxu0 0
        %637 = vmatprep.subr.bf16.mxu0 0
        %638 = vmatpush1.bf16.xpose.msra.mxu0 0
        %639 = vmatprep.subr.bf16.mxu0 0
        %640 = vmatpush1.bf16.xpose.msra.mxu0 0
        %641 = vmatprep.subr.bf16.mxu0 0
        %642 = vmatpush1.bf16.xpose.msra.mxu0 0
        %643 = vmatprep.subr.bf16.mxu0 0
        %644 = vmatpush1.bf16.xpose.msra.mxu0 0
        %645 = vmatprep.subr.bf16.mxu0 0
        %646 = vmatpush1.bf16.xpose.msra.mxu0 0
        %647 = vmatprep.subr.bf16.mxu0 0
        %648 = vmatpush1.bf16.xpose.msra.mxu0 0
        %649 = vmatprep.subr.bf16.mxu0 0
        %650 = vmatpush1.bf16.xpose.msra.mxu0 0
        %651 = vmatprep.subr.bf16.mxu0 0
        %652 = vmatpush1.bf16.xpose.msra.mxu0 0
        %653 = vmatprep.subr.bf16.mxu0 0
        %654 = vmatpush1.bf16.xpose.msra.mxu0 0
        %655 = vmatprep.subr.bf16.mxu0 0
        %656 = vmatpush1.bf16.xpose.msra.mxu0 0
        %657 = vmatprep.subr.bf16.mxu0 0
        %658 = vmatpush1.bf16.xpose.msra.mxu0 0
        %659 = vmatprep.subr.bf16.mxu0 0
        %660 = vmatpush1.bf16.xpose.msra.mxu0 0
        %661 = vmatprep.subr.bf16.mxu0 0
        %662 = vmatpush1.bf16.xpose.msra.mxu0 0
        %663 = vmatprep.mubr.bf16.mxu0 0
        %664 = vmatmul.mubr.bf16.gmra.mrb[0].mxu0 %v605
        %v665 = vpop.f32.mrb[0].mxu0
        %v666 = vadd.f32 0.0, %v665
        %v667 = vpop.f32.mrb[0].mxu0
        %v668 = vpop.f32.mrb[0].mxu0
        %v669 = vadd.f32 0.0, %v668
        %v670 = vpop.f32.mrb[0].mxu0
        %671 = vmatprep.mubr.bf16.mxu0 0
        %672 = vmatmul.mubr.bf16.gmra.mrb[0].mxu0 %v608
        %v673 = vpop.f32.mrb[0].mxu0
        %v674 = vadd.f32 0.0, %v673
        %v675 = vpop.f32.mrb[0].mxu0
        %v676 = vpop.f32.mrb[0].mxu0
        %v677 = vadd.f32 0.0, %v676
        %v678 = vpop.f32.mrb[0].mxu0
        %679 = vmatprep.mubr.bf16.mxu0 0
        %680 = vmatmul.mubr.bf16.gmra.mrb[0].mxu0 %v611
        %v681 = vpop.f32.mrb[0].mxu0
        %v682 = vadd.f32 0.0, %v681
        %v683 = vpop.f32.mrb[0].mxu0
        %v684 = vpop.f32.mrb[0].mxu0
        %v685 = vadd.f32 0.0, %v684
        %v686 = vpop.f32.mrb[0].mxu0
        %687 = vmatprep.mubr.bf16.mxu0 0
        %688 = vmatmul.mubr.bf16.gmra.mrb[0].mxu0 %v614
        %v689 = vpop.f32.mrb[0].mxu0
        %v690 = vadd.f32 0.0, %v689
        %v691 = vpop.f32.mrb[0].mxu0
        %v692 = vpop.f32.mrb[0].mxu0
        %v693 = vadd.f32 0.0, %v692
        %v694 = vpop.f32.mrb[0].mxu0
        %695 = vmatprep.mubr.bf16.mxu0 0
        %696 = vmatmul.mubr.bf16.gmra.mrb[0].mxu0 %v617
        %v697 = vpop.f32.mrb[0].mxu0
        %v698 = vadd.f32 0.0, %v697
        %v699 = vpop.f32.mrb[0].mxu0
        %v700 = vpop.f32.mrb[0].mxu0
        %v701 = vadd.f32 0.0, %v700
        %v702 = vpop.f32.mrb[0].mxu0
        %703 = vmatprep.mubr.bf16.mxu0 0
        %704 = vmatmul.mubr.bf16.gmra.mrb[0].mxu0 %v620
        %v705 = vpop.f32.mrb[0].mxu0
        %v706 = vadd.f32 0.0, %v705
        %v707 = vpop.f32.mrb[0].mxu0
        %v708 = vpop.f32.mrb[0].mxu0
        %v709 = vadd.f32 0.0, %v708
        %v710 = vpop.f32.mrb[0].mxu0
        %711 = vmatprep.mubr.bf16.mxu0 0
        %712 = vmatmul.mubr.bf16.gmra.mrb[0].mxu0 %v623
        %v713 = vpop.f32.mrb[0].mxu0
        %v714 = vadd.f32 0.0, %v713
        %v715 = vpop.f32.mrb[0].mxu0
        %v716 = vpop.f32.mrb[0].mxu0
        %v717 = vadd.f32 0.0, %v716
        %v718 = vpop.f32.mrb[0].mxu0
        %719 = vmatprep.mubr.bf16.mxu0 0
        %720 = vmatmul.mubr.bf16.gmra.mrb[0].mxu0 %v626
        %v721 = vpop.f32.mrb[0].mxu0
        %v722 = vadd.f32 0.0, %v721
        %v723 = vpop.f32.mrb[0].mxu0
        %v724 = vpop.f32.mrb[0].mxu0
        %v725 = vadd.f32 0.0, %v724
        %v726 = vpop.f32.mrb[0].mxu0
        %727 = vdwg.mxu0
        %v728 = vmul.f32 %v502, 0.125
        %v729 = vmul.f32 %v505, 0.125
        %v730 = vmul.f32 %v510, 0.125
        %v731 = vmul.f32 %v513, 0.125
        %v732 = vmul.f32 %v518, 0.125
        %v733 = vmul.f32 %v521, 0.125
        %v734 = vmul.f32 %v526, 0.125
        %v735 = vmul.f32 %v529, 0.125
        %v736 = vmul.f32 %v534, 0.125
        %v737 = vmul.f32 %v537, 0.125
        %v738 = vmul.f32 %v542, 0.125
        %v739 = vmul.f32 %v545, 0.125
        %v740 = vmul.f32 %v550, 0.125
        %v741 = vmul.f32 %v553, 0.125
        %v742 = vmul.f32 %v558, 0.125
        %v743 = vmul.f32 %v561, 0.125
        %v744 = vmul.f32 %v666, 0.125
        %v745 = vmul.f32 %v669, 0.125
        %v746 = vmul.f32 %v674, 0.125
        %v747 = vmul.f32 %v677, 0.125
        %v748 = vmul.f32 %v682, 0.125
        %v749 = vmul.f32 %v685, 0.125
        %v750 = vmul.f32 %v690, 0.125
        %v751 = vmul.f32 %v693, 0.125
        %v752 = vmul.f32 %v698, 0.125
        %v753 = vmul.f32 %v701, 0.125
        %v754 = vmul.f32 %v706, 0.125
        %v755 = vmul.f32 %v709, 0.125
        %v756 = vmul.f32 %v714, 0.125
        %v757 = vmul.f32 %v717, 0.125
        %v758 = vmul.f32 %v722, 0.125
        %v759 = vmul.f32 %v725, 0.125
        %vm760 = vcmp.ne.f32.partialorder %v397, 0.0
        %vm761 = vcmp.ne.f32.partialorder %v398, 0.0
        %v762 = vsel %vm760, 1, 0
        %v763 = vsel %vm761, 1, 0
        %v764 = vlaneseq
        %v765 = vshrl.u32 %v764, 7
        %v766 = vsub.s32 0, %v765
        %v767 = vrot.slane %v762, %v766
        %v768 = vlaneseq
        %v769 = vshrl.u32 %v768, 7
        %v770 = vsub.s32 0, %v769
        %v771 = vrot.slane %v763, %v770
        %vm772 = vcmp.eq.s32.totalorder %v767, 1
        %vm773 = vcmp.eq.s32.totalorder %v771, 1
        %v774 = vsel %vm772, %v728, -10000000.0
        %v775 = vsel %vm772, %v729, -10000000.0
        %v776 = vsel %vm772, %v730, -10000000.0
        %v777 = vsel %vm772, %v731, -10000000.0
        %v778 = vsel %vm772, %v732, -10000000.0
        %v779 = vsel %vm772, %v733, -10000000.0
        %v780 = vsel %vm772, %v734, -10000000.0
        %v781 = vsel %vm772, %v735, -10000000.0
        %v782 = vsel %vm772, %v736, -10000000.0
        %v783 = vsel %vm772, %v737, -10000000.0
        %v784 = vsel %vm772, %v738, -10000000.0
        %v785 = vsel %vm772, %v739, -10000000.0
        %v786 = vsel %vm772, %v740, -10000000.0
        %v787 = vsel %vm772, %v741, -10000000.0
        %v788 = vsel %vm772, %v742, -10000000.0
        %v789 = vsel %vm772, %v743, -10000000.0
        %v790 = vsel %vm773, %v744, -10000000.0
        %v791 = vsel %vm773, %v745, -10000000.0
        %v792 = vsel %vm773, %v746, -10000000.0
        %v793 = vsel %vm773, %v747, -10000000.0
        %v794 = vsel %vm773, %v748, -10000000.0
        %v795 = vsel %vm773, %v749, -10000000.0
        %v796 = vsel %vm773, %v750, -10000000.0
        %v797 = vsel %vm773, %v751, -10000000.0
        %v798 = vsel %vm773, %v752, -10000000.0
        %v799 = vsel %vm773, %v753, -10000000.0
        %v800 = vsel %vm773, %v754, -10000000.0
        %v801 = vsel %vm773, %v755, -10000000.0
        %v802 = vsel %vm773, %v756, -10000000.0
        %v803 = vsel %vm773, %v757, -10000000.0
        %v804 = vsel %vm773, %v758, -10000000.0
        %v805 = vsel %vm773, %v759, -10000000.0
        %vm806 = vcmask 64512
        %v807 = vsel %vm806, %v774, -inf
        %808 = vmax.xlane.f32.xlu0 %v807
        %v809 = vpop.xlane.xlu0 %808
        %v810 = vsel %vm806, %v775, -inf
        %811 = vmax.xlane.f32.xlu0 %v810
        %v812 = vpop.xlane.xlu0 %811
        %v813 = vsel %vm806, %v776, -inf
        %814 = vmax.xlane.f32.xlu0 %v813
        %v815 = vpop.xlane.xlu0 %814
        %v816 = vsel %vm806, %v777, -inf
        %817 = vmax.xlane.f32.xlu0 %v816
        %v818 = vpop.xlane.xlu0 %817
        %v819 = vsel %vm806, %v778, -inf
        %820 = vmax.xlane.f32.xlu0 %v819
        %v821 = vpop.xlane.xlu0 %820
        %v822 = vsel %vm806, %v779, -inf
        %823 = vmax.xlane.f32.xlu0 %v822
        %v824 = vpop.xlane.xlu0 %823
        %v825 = vsel %vm806, %v780, -inf
        %826 = vmax.xlane.f32.xlu0 %v825
        %v827 = vpop.xlane.xlu0 %826
        %v828 = vsel %vm806, %v781, -inf
        %829 = vmax.xlane.f32.xlu0 %v828
        %v830 = vpop.xlane.xlu0 %829
        %v831 = vsel %vm806, %v782, -inf
        %832 = vmax.xlane.f32.xlu0 %v831
        %v833 = vpop.xlane.xlu0 %832
        %v834 = vsel %vm806, %v783, -inf
        %835 = vmax.xlane.f32.xlu0 %v834
        %v836 = vpop.xlane.xlu0 %835
        %v837 = vsel %vm806, %v784, -inf
        %838 = vmax.xlane.f32.xlu0 %v837
        %v839 = vpop.xlane.xlu0 %838
        %v840 = vsel %vm806, %v785, -inf
        %841 = vmax.xlane.f32.xlu0 %v840
        %v842 = vpop.xlane.xlu0 %841
        %v843 = vsel %vm806, %v786, -inf
        %844 = vmax.xlane.f32.xlu0 %v843
        %v845 = vpop.xlane.xlu0 %844
        %v846 = vsel %vm806, %v787, -inf
        %847 = vmax.xlane.f32.xlu0 %v846
        %v848 = vpop.xlane.xlu0 %847
        %v849 = vsel %vm806, %v788, -inf
        %850 = vmax.xlane.f32.xlu0 %v849
        %v851 = vpop.xlane.xlu0 %850
        %v852 = vsel %vm806, %v789, -inf
        %853 = vmax.xlane.f32.xlu0 %v852
        %v854 = vpop.xlane.xlu0 %853
        %v855 = vsel %vm806, %v790, -inf
        %856 = vmax.xlane.f32.xlu0 %v855
        %v857 = vpop.xlane.xlu0 %856
        %v858 = vsel %vm806, %v791, -inf
        %859 = vmax.xlane.f32.xlu0 %v858
        %v860 = vpop.xlane.xlu0 %859
        %v861 = vsel %vm806, %v792, -inf
        %862 = vmax.xlane.f32.xlu0 %v861
        %v863 = vpop.xlane.xlu0 %862
        %v864 = vsel %vm806, %v793, -inf
        %865 = vmax.xlane.f32.xlu0 %v864
        %v866 = vpop.xlane.xlu0 %865
        %v867 = vsel %vm806, %v794, -inf
        %868 = vmax.xlane.f32.xlu0 %v867
        %v869 = vpop.xlane.xlu0 %868
        %v870 = vsel %vm806, %v795, -inf
        %871 = vmax.xlane.f32.xlu0 %v870
        %v872 = vpop.xlane.xlu0 %871
        %v873 = vsel %vm806, %v796, -inf
        %874 = vmax.xlane.f32.xlu0 %v873
        %v875 = vpop.xlane.xlu0 %874
        %v876 = vsel %vm806, %v797, -inf
        %877 = vmax.xlane.f32.xlu0 %v876
        %v878 = vpop.xlane.xlu0 %877
        %v879 = vsel %vm806, %v798, -inf
        %880 = vmax.xlane.f32.xlu0 %v879
        %v881 = vpop.xlane.xlu0 %880
        %v882 = vsel %vm806, %v799, -inf
        %883 = vmax.xlane.f32.xlu0 %v882
        %v884 = vpop.xlane.xlu0 %883
        %v885 = vsel %vm806, %v800, -inf
        %886 = vmax.xlane.f32.xlu0 %v885
        %v887 = vpop.xlane.xlu0 %886
        %v888 = vsel %vm806, %v801, -inf
        %889 = vmax.xlane.f32.xlu0 %v888
        %v890 = vpop.xlane.xlu0 %889
        %v891 = vsel %vm806, %v802, -inf
        %892 = vmax.xlane.f32.xlu0 %v891
        %v893 = vpop.xlane.xlu0 %892
        %v894 = vsel %vm806, %v803, -inf
        %895 = vmax.xlane.f32.xlu0 %v894
        %v896 = vpop.xlane.xlu0 %895
        %v897 = vsel %vm806, %v804, -inf
        %898 = vmax.xlane.f32.xlu0 %v897
        %v899 = vpop.xlane.xlu0 %898
        %v900 = vsel %vm806, %v805, -inf
        %901 = vmax.xlane.f32.xlu0 %v900
        %v902 = vpop.xlane.xlu0 %901
        %v903 = vsub.f32 %v774, %v809
        %v904 = vsub.f32 %v775, %v812
        %v905 = vsub.f32 %v776, %v815
        %v906 = vsub.f32 %v777, %v818
        %v907 = vsub.f32 %v778, %v821
        %v908 = vsub.f32 %v779, %v824
        %v909 = vsub.f32 %v780, %v827
        %v910 = vsub.f32 %v781, %v830
        %v911 = vsub.f32 %v782, %v833
        %v912 = vsub.f32 %v783, %v836
        %v913 = vsub.f32 %v784, %v839
        %v914 = vsub.f32 %v785, %v842
        %v915 = vsub.f32 %v786, %v845
        %v916 = vsub.f32 %v787, %v848
        %v917 = vsub.f32 %v788, %v851
        %v918 = vsub.f32 %v789, %v854
        %v919 = vsub.f32 %v790, %v857
        %v920 = vsub.f32 %v791, %v860
        %v921 = vsub.f32 %v792, %v863
        %v922 = vsub.f32 %v793, %v866
        %v923 = vsub.f32 %v794, %v869
        %v924 = vsub.f32 %v795, %v872
        %v925 = vsub.f32 %v796, %v875
        %v926 = vsub.f32 %v797, %v878
        %v927 = vsub.f32 %v798, %v881
        %v928 = vsub.f32 %v799, %v884
        %v929 = vsub.f32 %v800, %v887
        %v930 = vsub.f32 %v801, %v890
        %v931 = vsub.f32 %v802, %v893
        %v932 = vsub.f32 %v803, %v896
        %v933 = vsub.f32 %v804, %v899
        %v934 = vsub.f32 %v805, %v902
        %v935 = vmul.f32 %v903, 1.442695
        %v936 = vpow.pop %v935
        %v937 = vmul.f32 %v904, 1.442695
        %v938 = vpow.pop %v937
        %v939 = vmul.f32 %v905, 1.442695
        %v940 = vpow.pop %v939
        %v941 = vmul.f32 %v906, 1.442695
        %v942 = vpow.pop %v941
        %v943 = vmul.f32 %v907, 1.442695
        %v944 = vpow.pop %v943
        %v945 = vmul.f32 %v908, 1.442695
        %v946 = vpow.pop %v945
        %v947 = vmul.f32 %v909, 1.442695
        %v948 = vpow.pop %v947
        %v949 = vmul.f32 %v910, 1.442695
        %v950 = vpow.pop %v949
        %v951 = vmul.f32 %v911, 1.442695
        %v952 = vpow.pop %v951
        %v953 = vmul.f32 %v912, 1.442695
        %v954 = vpow.pop %v953
        %v955 = vmul.f32 %v913, 1.442695
        %v956 = vpow.pop %v955
        %v957 = vmul.f32 %v914, 1.442695
        %v958 = vpow.pop %v957
        %v959 = vmul.f32 %v915, 1.442695
        %v960 = vpow.pop %v959
        %v961 = vmul.f32 %v916, 1.442695
        %v962 = vpow.pop %v961
        %v963 = vmul.f32 %v917, 1.442695
        %v964 = vpow.pop %v963
        %v965 = vmul.f32 %v918, 1.442695
        %v966 = vpow.pop %v965
        %v967 = vmul.f32 %v919, 1.442695
        %v968 = vpow.pop %v967
        %v969 = vmul.f32 %v920, 1.442695
        %v970 = vpow.pop %v969
        %v971 = vmul.f32 %v921, 1.442695
        %v972 = vpow.pop %v971
        %v973 = vmul.f32 %v922, 1.442695
        %v974 = vpow.pop %v973
        %v975 = vmul.f32 %v923, 1.442695
        %v976 = vpow.pop %v975
        %v977 = vmul.f32 %v924, 1.442695
        %v978 = vpow.pop %v977
        %v979 = vmul.f32 %v925, 1.442695
        %v980 = vpow.pop %v979
        %v981 = vmul.f32 %v926, 1.442695
        %v982 = vpow.pop %v981
        %v983 = vmul.f32 %v927, 1.442695
        %v984 = vpow.pop %v983
        %v985 = vmul.f32 %v928, 1.442695
        %v986 = vpow.pop %v985
        %v987 = vmul.f32 %v929, 1.442695
        %v988 = vpow.pop %v987
        %v989 = vmul.f32 %v930, 1.442695
        %v990 = vpow.pop %v989
        %v991 = vmul.f32 %v931, 1.442695
        %v992 = vpow.pop %v991
        %v993 = vmul.f32 %v932, 1.442695
        %v994 = vpow.pop %v993
        %v995 = vmul.f32 %v933, 1.442695
        %v996 = vpow.pop %v995
        %v997 = vmul.f32 %v934, 1.442695
        %v998 = vpow.pop %v997
        %v999 = vsel %vm806, %v936, 0.0
        %1000 = vadd.xlane.f32.xlu0 %v999
        %v1001 = vpop.xlane.xlu0 %1000
        %v1002 = vsel %vm806, %v938, 0.0
        %1003 = vadd.xlane.f32.xlu0 %v1002
        %v1004 = vpop.xlane.xlu0 %1003
        %v1005 = vsel %vm806, %v940, 0.0
        %1006 = vadd.xlane.f32.xlu0 %v1005
        %v1007 = vpop.xlane.xlu0 %1006
        %v1008 = vsel %vm806, %v942, 0.0
        %1009 = vadd.xlane.f32.xlu0 %v1008
        %v1010 = vpop.xlane.xlu0 %1009
        %v1011 = vsel %vm806, %v944, 0.0
        %1012 = vadd.xlane.f32.xlu0 %v1011
        %v1013 = vpop.xlane.xlu0 %1012
        %v1014 = vsel %vm806, %v946, 0.0
        %1015 = vadd.xlane.f32.xlu0 %v1014
        %v1016 = vpop.xlane.xlu0 %1015
        %v1017 = vsel %vm806, %v948, 0.0
        %1018 = vadd.xlane.f32.xlu0 %v1017
        %v1019 = vpop.xlane.xlu0 %1018
        %v1020 = vsel %vm806, %v950, 0.0
        %1021 = vadd.xlane.f32.xlu0 %v1020
        %v1022 = vpop.xlane.xlu0 %1021
        %v1023 = vsel %vm806, %v952, 0.0
        %1024 = vadd.xlane.f32.xlu0 %v1023
        %v1025 = vpop.xlane.xlu0 %1024
        %v1026 = vsel %vm806, %v954, 0.0
        %1027 = vadd.xlane.f32.xlu0 %v1026
        %v1028 = vpop.xlane.xlu0 %1027
        %v1029 = vsel %vm806, %v956, 0.0
        %1030 = vadd.xlane.f32.xlu0 %v1029
        %v1031 = vpop.xlane.xlu0 %1030
        %v1032 = vsel %vm806, %v958, 0.0
        %1033 = vadd.xlane.f32.xlu0 %v1032
        %v1034 = vpop.xlane.xlu0 %1033
        %v1035 = vsel %vm806, %v960, 0.0
        %1036 = vadd.xlane.f32.xlu0 %v1035
        %v1037 = vpop.xlane.xlu0 %1036
        %v1038 = vsel %vm806, %v962, 0.0
        %1039 = vadd.xlane.f32.xlu0 %v1038
        %v1040 = vpop.xlane.xlu0 %1039
        %v1041 = vsel %vm806, %v964, 0.0
        %1042 = vadd.xlane.f32.xlu0 %v1041
        %v1043 = vpop.xlane.xlu0 %1042
        %v1044 = vsel %vm806, %v966, 0.0
        %1045 = vadd.xlane.f32.xlu0 %v1044
        %v1046 = vpop.xlane.xlu0 %1045
        %v1047 = vsel %vm806, %v968, 0.0
        %1048 = vadd.xlane.f32.xlu0 %v1047
        %v1049 = vpop.xlane.xlu0 %1048
        %v1050 = vsel %vm806, %v970, 0.0
        %1051 = vadd.xlane.f32.xlu0 %v1050
        %v1052 = vpop.xlane.xlu0 %1051
        %v1053 = vsel %vm806, %v972, 0.0
        %1054 = vadd.xlane.f32.xlu0 %v1053
        %v1055 = vpop.xlane.xlu0 %1054
        %v1056 = vsel %vm806, %v974, 0.0
        %1057 = vadd.xlane.f32.xlu0 %v1056
        %v1058 = vpop.xlane.xlu0 %1057
        %v1059 = vsel %vm806, %v976, 0.0
        %1060 = vadd.xlane.f32.xlu0 %v1059
        %v1061 = vpop.xlane.xlu0 %1060
        %v1062 = vsel %vm806, %v978, 0.0
        %1063 = vadd.xlane.f32.xlu0 %v1062
        %v1064 = vpop.xlane.xlu0 %1063
        %v1065 = vsel %vm806, %v980, 0.0
        %1066 = vadd.xlane.f32.xlu0 %v1065
        %v1067 = vpop.xlane.xlu0 %1066
        %v1068 = vsel %vm806, %v982, 0.0
        %1069 = vadd.xlane.f32.xlu0 %v1068
        %v1070 = vpop.xlane.xlu0 %1069
        %v1071 = vsel %vm806, %v984, 0.0
        %1072 = vadd.xlane.f32.xlu0 %v1071
        %v1073 = vpop.xlane.xlu0 %1072
        %v1074 = vsel %vm806, %v986, 0.0
        %1075 = vadd.xlane.f32.xlu0 %v1074
        %v1076 = vpop.xlane.xlu0 %1075
        %v1077 = vsel %vm806, %v988, 0.0
        %1078 = vadd.xlane.f32.xlu0 %v1077
        %v1079 = vpop.xlane.xlu0 %1078
        %v1080 = vsel %vm806, %v990, 0.0
        %1081 = vadd.xlane.f32.xlu0 %v1080
        %v1082 = vpop.xlane.xlu0 %1081
        %v1083 = vsel %vm806, %v992, 0.0
        %1084 = vadd.xlane.f32.xlu0 %v1083
        %v1085 = vpop.xlane.xlu0 %1084
        %v1086 = vsel %vm806, %v994, 0.0
        %1087 = vadd.xlane.f32.xlu0 %v1086
        %v1088 = vpop.xlane.xlu0 %1087
        %v1089 = vsel %vm806, %v996, 0.0
        %1090 = vadd.xlane.f32.xlu0 %v1089
        %v1091 = vpop.xlane.xlu0 %1090
        %v1092 = vsel %vm806, %v998, 0.0
        %1093 = vadd.xlane.f32.xlu0 %v1092
        %v1094 = vpop.xlane.xlu0 %1093
        %v1095 = vrcp.pop %v1001
        %v1096 = vrcp.pop %v1004
        %v1097 = vrcp.pop %v1007
        %v1098 = vrcp.pop %v1010
        %v1099 = vrcp.pop %v1013
        %v1100 = vrcp.pop %v1016
        %v1101 = vrcp.pop %v1019
        %v1102 = vrcp.pop %v1022
        %v1103 = vrcp.pop %v1025
        %v1104 = vrcp.pop %v1028
        %v1105 = vrcp.pop %v1031
        %v1106 = vrcp.pop %v1034
        %v1107 = vrcp.pop %v1037
        %v1108 = vrcp.pop %v1040
        %v1109 = vrcp.pop %v1043
        %v1110 = vrcp.pop %v1046
        %v1111 = vrcp.pop %v1049
        %v1112 = vrcp.pop %v1052
        %v1113 = vrcp.pop %v1055
        %v1114 = vrcp.pop %v1058
        %v1115 = vrcp.pop %v1061
        %v1116 = vrcp.pop %v1064
        %v1117 = vrcp.pop %v1067
        %v1118 = vrcp.pop %v1070
        %v1119 = vrcp.pop %v1073
        %v1120 = vrcp.pop %v1076
        %v1121 = vrcp.pop %v1079
        %v1122 = vrcp.pop %v1082
        %v1123 = vrcp.pop %v1085
        %v1124 = vrcp.pop %v1088
        %v1125 = vrcp.pop %v1091
        %v1126 = vrcp.pop %v1094
        %v1127 = vmul.f32 %v936, %v1095
        %v1128 = vmul.f32 %v938, %v1096
        %v1129 = vmul.f32 %v940, %v1097
        %v1130 = vmul.f32 %v942, %v1098
        %v1131 = vmul.f32 %v944, %v1099
        %v1132 = vmul.f32 %v946, %v1100
        %v1133 = vmul.f32 %v948, %v1101
        %v1134 = vmul.f32 %v950, %v1102
        %v1135 = vmul.f32 %v952, %v1103
        %v1136 = vmul.f32 %v954, %v1104
        %v1137 = vmul.f32 %v956, %v1105
        %v1138 = vmul.f32 %v958, %v1106
        %v1139 = vmul.f32 %v960, %v1107
        %v1140 = vmul.f32 %v962, %v1108
        %v1141 = vmul.f32 %v964, %v1109
        %v1142 = vmul.f32 %v966, %v1110
        %v1143 = vmul.f32 %v968, %v1111
        %v1144 = vmul.f32 %v970, %v1112
        %v1145 = vmul.f32 %v972, %v1113
        %v1146 = vmul.f32 %v974, %v1114
        %v1147 = vmul.f32 %v976, %v1115
        %v1148 = vmul.f32 %v978, %v1116
        %v1149 = vmul.f32 %v980, %v1117
        %v1150 = vmul.f32 %v982, %v1118
        %v1151 = vmul.f32 %v984, %v1119
        %v1152 = vmul.f32 %v986, %v1120
        %v1153 = vmul.f32 %v988, %v1121
        %v1154 = vmul.f32 %v990, %v1122
        %v1155 = vmul.f32 %v992, %v1123
        %v1156 = vmul.f32 %v994, %v1124
        %v1157 = vmul.f32 %v996, %v1125
        %v1158 = vmul.f32 %v998, %v1126
        %v1159 = vpack.c.bf16 %v1128, %v1127
        %v1160 = vpack.c.bf16 %v1130, %v1129
        %v1161 = vpack.c.bf16 %v1132, %v1131
        %v1162 = vpack.c.bf16 %v1134, %v1133
        %v1163 = vpack.c.bf16 %v1136, %v1135
        %v1164 = vpack.c.bf16 %v1138, %v1137
        %v1165 = vpack.c.bf16 %v1140, %v1139
        %v1166 = vpack.c.bf16 %v1142, %v1141
        %v1167 = vpack.c.bf16 %v1144, %v1143
        %v1168 = vpack.c.bf16 %v1146, %v1145
        %v1169 = vpack.c.bf16 %v1148, %v1147
        %v1170 = vpack.c.bf16 %v1150, %v1149
        %v1171 = vpack.c.bf16 %v1152, %v1151
        %v1172 = vpack.c.bf16 %v1154, %v1153
        %v1173 = vpack.c.bf16 %v1156, %v1155
        %v1174 = vpack.c.bf16 %v1158, %v1157
        %v1176 = vsel %vm806, %v1159, 0
        %v1179 = vsel %vm806, %v1160, 0
        %v1182 = vsel %vm806, %v1161, 0
        %v1185 = vsel %vm806, %v1162, 0
        %v1188 = vsel %vm806, %v1163, 0
        %v1191 = vsel %vm806, %v1164, 0
        %v1194 = vsel %vm806, %v1165, 0
        %v1197 = vsel %vm806, %v1166, 0
        %vm1199 = vcmask 1043456
        %v1201 = vsel %vm1199, %v395, 0
        %1203 = vmatprep.subr.bf16.mxu0 0
        %1204 = vmatpush1.bf16.msra.mxu0 %v1201
        %1205 = vmatprep.subr.bf16.mxu0 0
        %1206 = vmatpush1.bf16.msra.mxu0 0
        %1207 = vmatprep.subr.bf16.mxu0 0
        %1208 = vmatpush1.bf16.msra.mxu0 0
        %1209 = vmatprep.subr.bf16.mxu0 0
        %1210 = vmatpush1.bf16.msra.mxu0 0
        %1211 = vmatprep.subr.bf16.mxu0 0
        %1212 = vmatpush1.bf16.msra.mxu0 0
        %1213 = vmatprep.subr.bf16.mxu0 0
        %1214 = vmatpush1.bf16.msra.mxu0 0
        %1215 = vmatprep.subr.bf16.mxu0 0
        %1216 = vmatpush1.bf16.msra.mxu0 0
        %1217 = vmatprep.subr.bf16.mxu0 0
        %1218 = vmatpush1.bf16.msra.mxu0 0
        %1219 = vmatprep.subr.bf16.mxu0 0
        %1220 = vmatpush1.bf16.msra.mxu0 0
        %1221 = vmatprep.subr.bf16.mxu0 0
        %1222 = vmatpush1.bf16.msra.mxu0 0
        %1223 = vmatprep.subr.bf16.mxu0 0
        %1224 = vmatpush1.bf16.msra.mxu0 0
        %1225 = vmatprep.subr.bf16.mxu0 0
        %1226 = vmatpush1.bf16.msra.mxu0 0
        %1227 = vmatprep.subr.bf16.mxu0 0
        %1228 = vmatpush1.bf16.msra.mxu0 0
        %1229 = vmatprep.subr.bf16.mxu0 0
        %1230 = vmatpush1.bf16.msra.mxu0 0
        %1231 = vmatprep.subr.bf16.mxu0 0
        %1232 = vmatpush1.bf16.msra.mxu0 0
        %1233 = vmatprep.subr.bf16.mxu0 0
        %1234 = vmatpush1.bf16.msra.mxu0 0
        %1235 = vmatprep.mubr.bf16.mxu0 0
        %1236 = vmatmul.mubr.bf16.gmra.mrb[0].mxu0 %v1176
        %v1237 = vpop.f32.mrb[0].mxu0
        %v1238 = vadd.f32 0.0, %v1237
        %v1239 = vpop.f32.mrb[0].mxu0
        %v1240 = vpop.f32.mrb[0].mxu0
        %v1241 = vadd.f32 0.0, %v1240
        %v1242 = vpop.f32.mrb[0].mxu0
        %1243 = vmatprep.mubr.bf16.mxu0 0
        %1244 = vmatmul.mubr.bf16.gmra.mrb[0].mxu0 %v1179
        %v1245 = vpop.f32.mrb[0].mxu0
        %v1246 = vadd.f32 0.0, %v1245
        %v1247 = vpop.f32.mrb[0].mxu0
        %v1248 = vpop.f32.mrb[0].mxu0
        %v1249 = vadd.f32 0.0, %v1248
        %v1250 = vpop.f32.mrb[0].mxu0
        %1251 = vmatprep.mubr.bf16.mxu0 0
        %1252 = vmatmul.mubr.bf16.gmra.mrb[0].mxu0 %v1182
        %v1253 = vpop.f32.mrb[0].mxu0
        %v1254 = vadd.f32 0.0, %v1253
        %v1255 = vpop.f32.mrb[0].mxu0
        %v1256 = vpop.f32.mrb[0].mxu0
        %v1257 = vadd.f32 0.0, %v1256
        %v1258 = vpop.f32.mrb[0].mxu0
        %1259 = vmatprep.mubr.bf16.mxu0 0
        %1260 = vmatmul.mubr.bf16.gmra.mrb[0].mxu0 %v1185
        %v1261 = vpop.f32.mrb[0].mxu0
        %v1262 = vadd.f32 0.0, %v1261
        %v1263 = vpop.f32.mrb[0].mxu0
        %v1264 = vpop.f32.mrb[0].mxu0
        %v1265 = vadd.f32 0.0, %v1264
        %v1266 = vpop.f32.mrb[0].mxu0
        %1267 = vmatprep.mubr.bf16.mxu0 0
        %1268 = vmatmul.mubr.bf16.gmra.mrb[0].mxu0 %v1188
        %v1269 = vpop.f32.mrb[0].mxu0
        %v1270 = vadd.f32 0.0, %v1269
        %v1271 = vpop.f32.mrb[0].mxu0
        %v1272 = vpop.f32.mrb[0].mxu0
        %v1273 = vadd.f32 0.0, %v1272
        %v1274 = vpop.f32.mrb[0].mxu0
        %1275 = vmatprep.mubr.bf16.mxu0 0
        %1276 = vmatmul.mubr.bf16.gmra.mrb[0].mxu0 %v1191
        %v1277 = vpop.f32.mrb[0].mxu0
        %v1278 = vadd.f32 0.0, %v1277
        %v1279 = vpop.f32.mrb[0].mxu0
        %v1280 = vpop.f32.mrb[0].mxu0
        %v1281 = vadd.f32 0.0, %v1280
        %v1282 = vpop.f32.mrb[0].mxu0
        %1283 = vmatprep.mubr.bf16.mxu0 0
        %1284 = vmatmul.mubr.bf16.gmra.mrb[0].mxu0 %v1194
        %v1285 = vpop.f32.mrb[0].mxu0
        %v1286 = vadd.f32 0.0, %v1285
        %v1287 = vpop.f32.mrb[0].mxu0
        %v1288 = vpop.f32.mrb[0].mxu0
        %v1289 = vadd.f32 0.0, %v1288
        %v1290 = vpop.f32.mrb[0].mxu0
        %1291 = vmatprep.mubr.bf16.mxu0 0
        %1292 = vmatmul.mubr.bf16.gmra.mrb[0].mxu0 %v1197
        %v1293 = vpop.f32.mrb[0].mxu0
        %v1294 = vadd.f32 0.0, %v1293
        %v1295 = vpop.f32.mrb[0].mxu0
        %v1296 = vpop.f32.mrb[0].mxu0
        %v1297 = vadd.f32 0.0, %v1296
        %v1298 = vpop.f32.mrb[0].mxu0
        %1299 = vdwg.mxu0
        %v1301 = vsel %vm806, %v1167, 0
        %v1304 = vsel %vm806, %v1168, 0
        %v1307 = vsel %vm806, %v1169, 0
        %v1310 = vsel %vm806, %v1170, 0
        %v1313 = vsel %vm806, %v1171, 0
        %v1316 = vsel %vm806, %v1172, 0
        %v1319 = vsel %vm806, %v1173, 0
        %v1322 = vsel %vm806, %v1174, 0
        %v1325 = vsel %vm1199, %v396, 0
        %1327 = vmatprep.subr.bf16.mxu0 0
        %1328 = vmatpush1.bf16.msra.mxu0 %v1325
        %1329 = vmatprep.subr.bf16.mxu0 0
        %1330 = vmatpush1.bf16.msra.mxu0 0
        %1331 = vmatprep.subr.bf16.mxu0 0
        %1332 = vmatpush1.bf16.msra.mxu0 0
        %1333 = vmatprep.subr.bf16.mxu0 0
        %1334 = vmatpush1.bf16.msra.mxu0 0
        %1335 = vmatprep.subr.bf16.mxu0 0
        %1336 = vmatpush1.bf16.msra.mxu0 0
        %1337 = vmatprep.subr.bf16.mxu0 0
        %1338 = vmatpush1.bf16.msra.mxu0 0
        %1339 = vmatprep.subr.bf16.mxu0 0
        %1340 = vmatpush1.bf16.msra.mxu0 0
        %1341 = vmatprep.subr.bf16.mxu0 0
        %1342 = vmatpush1.bf16.msra.mxu0 0
        %1343 = vmatprep.subr.bf16.mxu0 0
        %1344 = vmatpush1.bf16.msra.mxu0 0
        %1345 = vmatprep.subr.bf16.mxu0 0
        %1346 = vmatpush1.bf16.msra.mxu0 0
        %1347 = vmatprep.subr.bf16.mxu0 0
        %1348 = vmatpush1.bf16.msra.mxu0 0
        %1349 = vmatprep.subr.bf16.mxu0 0
        %1350 = vmatpush1.bf16.msra.mxu0 0
        %1351 = vmatprep.subr.bf16.mxu0 0
        %1352 = vmatpush1.bf16.msra.mxu0 0
        %1353 = vmatprep.subr.bf16.mxu0 0
        %1354 = vmatpush1.bf16.msra.mxu0 0
        %1355 = vmatprep.subr.bf16.mxu0 0
        %1356 = vmatpush1.bf16.msra.mxu0 0
        %1357 = vmatprep.subr.bf16.mxu0 0
        %1358 = vmatpush1.bf16.msra.mxu0 0
        %1359 = vmatprep.mubr.bf16.mxu0 0
        %1360 = vmatmul.mubr.bf16.gmra.mrb[0].mxu0 %v1301
        %v1361 = vpop.f32.mrb[0].mxu0
        %v1362 = vadd.f32 0.0, %v1361
        %v1363 = vpop.f32.mrb[0].mxu0
        %v1364 = vpop.f32.mrb[0].mxu0
        %v1365 = vadd.f32 0.0, %v1364
        %v1366 = vpop.f32.mrb[0].mxu0
        %1367 = vmatprep.mubr.bf16.mxu0 0
        %1368 = vmatmul.mubr.bf16.gmra.mrb[0].mxu0 %v1304
        %v1369 = vpop.f32.mrb[0].mxu0
        %v1370 = vadd.f32 0.0, %v1369
        %v1371 = vpop.f32.mrb[0].mxu0
        %v1372 = vpop.f32.mrb[0].mxu0
        %v1373 = vadd.f32 0.0, %v1372
        %v1374 = vpop.f32.mrb[0].mxu0
        %1375 = vmatprep.mubr.bf16.mxu0 0
        %1376 = vmatmul.mubr.bf16.gmra.mrb[0].mxu0 %v1307
        %v1377 = vpop.f32.mrb[0].mxu0
        %v1378 = vadd.f32 0.0, %v1377
        %v1379 = vpop.f32.mrb[0].mxu0
        %v1380 = vpop.f32.mrb[0].mxu0
        %v1381 = vadd.f32 0.0, %v1380
        %v1382 = vpop.f32.mrb[0].mxu0
        %1383 = vmatprep.mubr.bf16.mxu0 0
        %1384 = vmatmul.mubr.bf16.gmra.mrb[0].mxu0 %v1310
        %v1385 = vpop.f32.mrb[0].mxu0
        %v1386 = vadd.f32 0.0, %v1385
        %v1387 = vpop.f32.mrb[0].mxu0
        %v1388 = vpop.f32.mrb[0].mxu0
        %v1389 = vadd.f32 0.0, %v1388
        %v1390 = vpop.f32.mrb[0].mxu0
        %1391 = vmatprep.mubr.bf16.mxu0 0
        %1392 = vmatmul.mubr.bf16.gmra.mrb[0].mxu0 %v1313
        %v1393 = vpop.f32.mrb[0].mxu0
        %v1394 = vadd.f32 0.0, %v1393
        %v1395 = vpop.f32.mrb[0].mxu0
        %v1396 = vpop.f32.mrb[0].mxu0
        %v1397 = vadd.f32 0.0, %v1396
        %v1398 = vpop.f32.mrb[0].mxu0
        %1399 = vmatprep.mubr.bf16.mxu0 0
        %1400 = vmatmul.mubr.bf16.gmra.mrb[0].mxu0 %v1316
        %v1401 = vpop.f32.mrb[0].mxu0
        %v1402 = vadd.f32 0.0, %v1401
        %v1403 = vpop.f32.mrb[0].mxu0
        %v1404 = vpop.f32.mrb[0].mxu0
        %v1405 = vadd.f32 0.0, %v1404
        %v1406 = vpop.f32.mrb[0].mxu0
        %1407 = vmatprep.mubr.bf16.mxu0 0
        %1408 = vmatmul.mubr.bf16.gmra.mrb[0].mxu0 %v1319
        %v1409 = vpop.f32.mrb[0].mxu0
        %v1410 = vadd.f32 0.0, %v1409
        %v1411 = vpop.f32.mrb[0].mxu0
        %v1412 = vpop.f32.mrb[0].mxu0
        %v1413 = vadd.f32 0.0, %v1412
        %v1414 = vpop.f32.mrb[0].mxu0
        %1415 = vmatprep.mubr.bf16.mxu0 0
        %1416 = vmatmul.mubr.bf16.gmra.mrb[0].mxu0 %v1322
        %v1417 = vpop.f32.mrb[0].mxu0
        %v1418 = vadd.f32 0.0, %v1417
        %v1419 = vpop.f32.mrb[0].mxu0
        %v1420 = vpop.f32.mrb[0].mxu0
        %v1421 = vadd.f32 0.0, %v1420
        %v1422 = vpop.f32.mrb[0].mxu0
        %1423 = vdwg.mxu0
        %v1424 = vpack.c.bf16 %v1241, %v1238
        %v1425 = vpack.c.bf16 %v1249, %v1246
        %v1426 = vpack.c.bf16 %v1257, %v1254
        %v1427 = vpack.c.bf16 %v1265, %v1262
        %v1428 = vpack.c.bf16 %v1273, %v1270
        %v1429 = vpack.c.bf16 %v1281, %v1278
        %v1430 = vpack.c.bf16 %v1289, %v1286
        %v1431 = vpack.c.bf16 %v1297, %v1294
        %v1432 = vpack.c.bf16 %v1365, %v1362
        %v1433 = vpack.c.bf16 %v1373, %v1370
        %v1434 = vpack.c.bf16 %v1381, %v1378
        %v1435 = vpack.c.bf16 %v1389, %v1386
        %v1436 = vpack.c.bf16 %v1397, %v1394
        %v1437 = vpack.c.bf16 %v1405, %v1402
        %v1438 = vpack.c.bf16 %v1413, %v1410
        %v1439 = vpack.c.bf16 %v1421, %v1418
        %v1456 = vunpack.c.l.b16 %v1424
        %v1457 = vunpack.c.h.b16 %v1424
        %v1458 = vunpack.c.l.b16 %v1425
        %v1459 = vunpack.c.h.b16 %v1425
        %v1460 = vunpack.c.l.b16 %v1426
        %v1461 = vunpack.c.h.b16 %v1426
        %v1462 = vunpack.c.l.b16 %v1427
        %v1463 = vunpack.c.h.b16 %v1427
        %v1464 = vunpack.c.l.b16 %v1428
        %v1465 = vunpack.c.h.b16 %v1428
        %v1466 = vunpack.c.l.b16 %v1429
        %v1467 = vunpack.c.h.b16 %v1429
        %v1468 = vunpack.c.l.b16 %v1430
        %v1469 = vunpack.c.h.b16 %v1430
        %v1470 = vunpack.c.l.b16 %v1431
        %v1471 = vunpack.c.h.b16 %v1431
        %v1472 = vunpack.c.l.b16 %v1432
        %v1473 = vunpack.c.h.b16 %v1432
        %v1474 = vunpack.c.l.b16 %v1433
        %v1475 = vunpack.c.h.b16 %v1433
        %v1476 = vunpack.c.l.b16 %v1434
        %v1477 = vunpack.c.h.b16 %v1434
        %v1478 = vunpack.c.l.b16 %v1435
        %v1479 = vunpack.c.h.b16 %v1435
        %v1480 = vunpack.c.l.b16 %v1436
        %v1481 = vunpack.c.h.b16 %v1436
        %v1482 = vunpack.c.l.b16 %v1437
        %v1483 = vunpack.c.h.b16 %v1437
        %v1484 = vunpack.c.l.b16 %v1438
        %v1485 = vunpack.c.h.b16 %v1438
        %v1486 = vunpack.c.l.b16 %v1439
        %v1487 = vunpack.c.h.b16 %v1439
        %v1488 = vpack.c.b16 %v1456, %v1456
        %v1489 = vpack.c.b16 %v1457, %v1457
        %v1490 = vpack.c.b16 %v1458, %v1458
        %v1491 = vpack.c.b16 %v1459, %v1459
        %v1492 = vpack.c.b16 %v1460, %v1460
        %v1493 = vpack.c.b16 %v1461, %v1461
        %v1494 = vpack.c.b16 %v1462, %v1462
        %v1495 = vpack.c.b16 %v1463, %v1463
        %v1496 = vpack.c.b16 %v1464, %v1464
        %v1497 = vpack.c.b16 %v1465, %v1465
        %v1498 = vpack.c.b16 %v1466, %v1466
        %v1499 = vpack.c.b16 %v1467, %v1467
        %v1500 = vpack.c.b16 %v1468, %v1468
        %v1501 = vpack.c.b16 %v1469, %v1469
        %v1502 = vpack.c.b16 %v1470, %v1470
        %v1503 = vpack.c.b16 %v1471, %v1471
        %v1504 = vpack.c.b16 %v1472, %v1472
        %v1505 = vpack.c.b16 %v1473, %v1473
        %v1506 = vpack.c.b16 %v1474, %v1474
        %v1507 = vpack.c.b16 %v1475, %v1475
        %v1508 = vpack.c.b16 %v1476, %v1476
        %v1509 = vpack.c.b16 %v1477, %v1477
        %v1510 = vpack.c.b16 %v1478, %v1478
        %v1511 = vpack.c.b16 %v1479, %v1479
        %v1512 = vpack.c.b16 %v1480, %v1480
        %v1513 = vpack.c.b16 %v1481, %v1481
        %v1514 = vpack.c.b16 %v1482, %v1482
        %v1515 = vpack.c.b16 %v1483, %v1483
        %v1516 = vpack.c.b16 %v1484, %v1484
        %v1517 = vpack.c.b16 %v1485, %v1485
        %v1518 = vpack.c.b16 %v1486, %v1486
        %v1519 = vpack.c.b16 %v1487, %v1487
        %vm1552 = vcmask 519168
        %1553 = vst.msk [vmem:[%s357] sm:$0xf] %vm1552, %v1488
        %1554 = vst.msk [vmem:[%s357 + $0x4] sm:$0xf] %vm1552, %v1489
        %1555 = vst.msk [vmem:[%s357 + $0x8] sm:$0xf] %vm1552, %v1490
        %1556 = vst.msk [vmem:[%s357 + $0xc] sm:$0xf] %vm1552, %v1491
        %1557 = vst.msk [vmem:[%s357 + $0x10] sm:$0xf] %vm1552, %v1492
        %1558 = vst.msk [vmem:[%s357 + $0x14] sm:$0xf] %vm1552, %v1493
        %1559 = vst.msk [vmem:[%s357 + $0x18] sm:$0xf] %vm1552, %v1494
        %1560 = vst.msk [vmem:[%s357 + $0x1c] sm:$0xf] %vm1552, %v1495
        %1561 = vst.msk [vmem:[%s357 + $0x20] sm:$0xf] %vm1552, %v1496
        %1562 = vst.msk [vmem:[%s357 + $0x24] sm:$0xf] %vm1552, %v1497
        %1563 = vst.msk [vmem:[%s357 + $0x28] sm:$0xf] %vm1552, %v1498
        %1564 = vst.msk [vmem:[%s357 + $0x2c] sm:$0xf] %vm1552, %v1499
        %1565 = vst.msk [vmem:[%s357 + $0x30] sm:$0xf] %vm1552, %v1500
        %1566 = vst.msk [vmem:[%s357 + $0x34] sm:$0xf] %vm1552, %v1501
        %1567 = vst.msk [vmem:[%s357 + $0x38] sm:$0xf] %vm1552, %v1502
        %1568 = vst.msk [vmem:[%s357 + $0x3c] sm:$0xf] %vm1552, %v1503
        %1569 = vst.msk [vmem:[%s357 + $0x40] sm:$0xf] %vm1552, %v1504
        %1570 = vst.msk [vmem:[%s357 + $0x44] sm:$0xf] %vm1552, %v1505
        %1571 = vst.msk [vmem:[%s357 + $0x48] sm:$0xf] %vm1552, %v1506
        %1572 = vst.msk [vmem:[%s357 + $0x4c] sm:$0xf] %vm1552, %v1507
        %1573 = vst.msk [vmem:[%s357 + $0x50] sm:$0xf] %vm1552, %v1508
        %1574 = vst.msk [vmem:[%s357 + $0x54] sm:$0xf] %vm1552, %v1509
        %1575 = vst.msk [vmem:[%s357 + $0x58] sm:$0xf] %vm1552, %v1510
        %1576 = vst.msk [vmem:[%s357 + $0x5c] sm:$0xf] %vm1552, %v1511
        %1577 = vst.msk [vmem:[%s357 + $0x60] sm:$0xf] %vm1552, %v1512
        %1578 = vst.msk [vmem:[%s357 + $0x64] sm:$0xf] %vm1552, %v1513
        %1579 = vst.msk [vmem:[%s357 + $0x68] sm:$0xf] %vm1552, %v1514
        %1580 = vst.msk [vmem:[%s357 + $0x6c] sm:$0xf] %vm1552, %v1515
        %1581 = vst.msk [vmem:[%s357 + $0x70] sm:$0xf] %vm1552, %v1516
        %1582 = vst.msk [vmem:[%s357 + $0x74] sm:$0xf] %vm1552, %v1517
        %1583 = vst.msk [vmem:[%s357 + $0x78] sm:$0xf] %vm1552, %v1518
        %1584 = vst.msk [vmem:[%s357 + $0x7c] sm:$0xf] %vm1552, %v1519
        %s1585 = sand.u32 %s112, 1
        %s1586 = sand.u32 %s112, 1
        %s1587 = smul.addr %s1586, 128
        %s1588 = scalar_lea.vmem [#allocation3], %s1587
        // Predicated region
        $region78: #{instance_attention_forward.31} parent=72 // pred_check
          %p1589 = pneg %p122
        $region79: #{instance_attention_forward.31} parent=72 // pred_check_branch
          %1591 = sbr.rel (%p1589) target = $region81
        $region80: #{instance_attention_forward.31} parent=72 // pred_region
          %s1592 = smul.u32 16, %s15
          %s1593 = smul.addr %s1592, 4
          %s1594 = scalar_lea.vmem %s4, %s1593
          // Predicated region
          $region82: #{instance_attention_forward.31} parent=80 // pred_check
            _
          $region83: #{instance_attention_forward.31} parent=80 // pred_check_branch
            %1596 = sbr.rel (0) target = $region85
          $region84: #{instance_attention_forward.31} parent=80 // pred_region
            // Predicated region
            $region86: #{instance_attention_forward.31} parent=84 // pred_check
              _
            $region87: #{instance_attention_forward.31} parent=84 // pred_check_branch
              %1598 = sbr.rel target = $region89
            $region88: #{instance_attention_forward.31} parent=84 // pred_region
              // Predicated region
              $region101: #{instance_attention_forward.31} parent=88 // pred_check
                _
              $region102: #{instance_attention_forward.31} parent=88 // pred_check_branch
                %1675 = sbr.rel (0) target = $region104
              $region103: #{instance_attention_forward.31} parent=88 // pred_region
                loop: start=0, step=1, limit=1
                $region105: #{instance_attention_forward.31} parent=103 // loop_pre_header
                  _
                $region106: #{instance_attention_forward.31} parent=103 // loop_header
                  %s1677 = sphi 0, %s1681
                  %p1678 = scmp.ge.s32.totalorder %s1677, 1
                  %s1682 = sphi %s1588, %s1588
                  %s1683 = sphi %s1594, %s1594
                $region107: #{instance_attention_forward.31} parent=103 // loop_header_branch
                  %1680 = sbr.rel (%p1678) target = $region111
                $region108: #{instance_attention_forward.31} parent=103 // loop_body
                  _
                $region109: #{instance_attention_forward.31} parent=103 // loop_footer
                  %s1681 = sadd.s32 1, %s1677
                $region110: #{instance_attention_forward.31} parent=103 // loop_footer_branch
                  %1676 = sbr.rel target = $region106
                $region111: #{instance_attention_forward.31} parent=103 // loop_exit
                  _
                loop: start=0, step=1, limit=1
                $region112: #{instance_attention_forward.31} parent=103 // loop_pre_header
                  _
                $region113: #{instance_attention_forward.31} parent=103 // loop_header
                  %s1686 = sphi 0, %s1690
                  %p1687 = scmp.ge.s32.totalorder %s1686, 1
                  %s1691 = sphi %s1588, %s1588
                  %s1692 = sphi %s1594, %s1594
                $region114: #{instance_attention_forward.31} parent=103 // loop_header_branch
                  %1689 = sbr.rel (%p1687) target = $region118
                $region115: #{instance_attention_forward.31} parent=103 // loop_body
                  %v1693 = vld [vmem:[%s1691] sm:$0xf]
                  %1694 = vst [vmem:[%s1692] sm:$0xf] %v1693
                  %v1695 = vld [vmem:[%s1691 + $0x4] sm:$0xf]
                  %1696 = vst [vmem:[%s1692 + $0x4] sm:$0xf] %v1695
                  %v1697 = vld [vmem:[%s1691 + $0x8] sm:$0xf]
                  %1698 = vst [vmem:[%s1692 + $0x8] sm:$0xf] %v1697
                  %v1699 = vld [vmem:[%s1691 + $0xc] sm:$0xf]
                  %1700 = vst [vmem:[%s1692 + $0xc] sm:$0xf] %v1699
                  %v1701 = vld [vmem:[%s1691 + $0x10] sm:$0xf]
                  %1702 = vst [vmem:[%s1692 + $0x10] sm:$0xf] %v1701
                  %v1703 = vld [vmem:[%s1691 + $0x14] sm:$0xf]
                  %1704 = vst [vmem:[%s1692 + $0x14] sm:$0xf] %v1703
                  %v1705 = vld [vmem:[%s1691 + $0x18] sm:$0xf]
                  %1706 = vst [vmem:[%s1692 + $0x18] sm:$0xf] %v1705
                  %v1707 = vld [vmem:[%s1691 + $0x1c] sm:$0xf]
                  %1708 = vst [vmem:[%s1692 + $0x1c] sm:$0xf] %v1707
                  %v1709 = vld [vmem:[%s1691 + $0x20] sm:$0xf]
                  %1710 = vst [vmem:[%s1692 + $0x20] sm:$0xf] %v1709
                  %v1711 = vld [vmem:[%s1691 + $0x24] sm:$0xf]
                  %1712 = vst [vmem:[%s1692 + $0x24] sm:$0xf] %v1711
                  %v1713 = vld [vmem:[%s1691 + $0x28] sm:$0xf]
                  %1714 = vst [vmem:[%s1692 + $0x28] sm:$0xf] %v1713
                  %v1715 = vld [vmem:[%s1691 + $0x2c] sm:$0xf]
                  %1716 = vst [vmem:[%s1692 + $0x2c] sm:$0xf] %v1715
                  %v1717 = vld [vmem:[%s1691 + $0x30] sm:$0xf]
                  %1718 = vst [vmem:[%s1692 + $0x30] sm:$0xf] %v1717
                  %v1719 = vld [vmem:[%s1691 + $0x34] sm:$0xf]
                  %1720 = vst [vmem:[%s1692 + $0x34] sm:$0xf] %v1719
                  %v1721 = vld [vmem:[%s1691 + $0x38] sm:$0xf]
                  %1722 = vst [vmem:[%s1692 + $0x38] sm:$0xf] %v1721
                  %v1723 = vld [vmem:[%s1691 + $0x3c] sm:$0xf]
                  %1724 = vst [vmem:[%s1692 + $0x3c] sm:$0xf] %v1723
                  %v1725 = vld [vmem:[%s1691 + $0x40] sm:$0xf]
                  %1726 = vst [vmem:[%s1692 + $0x80] sm:$0xf] %v1725
                  %v1727 = vld [vmem:[%s1691 + $0x44] sm:$0xf]
                  %1728 = vst [vmem:[%s1692 + $0x84] sm:$0xf] %v1727
                  %v1729 = vld [vmem:[%s1691 + $0x48] sm:$0xf]
                  %1730 = vst [vmem:[%s1692 + $0x88] sm:$0xf] %v1729
                  %v1731 = vld [vmem:[%s1691 + $0x4c] sm:$0xf]
                  %1732 = vst [vmem:[%s1692 + $0x8c] sm:$0xf] %v1731
                  %v1733 = vld [vmem:[%s1691 + $0x50] sm:$0xf]
                  %1734 = vst [vmem:[%s1692 + $0x90] sm:$0xf] %v1733
                  %v1735 = vld [vmem:[%s1691 + $0x54] sm:$0xf]
                  %1736 = vst [vmem:[%s1692 + $0x94] sm:$0xf] %v1735
                  %v1737 = vld [vmem:[%s1691 + $0x58] sm:$0xf]
                  %1738 = vst [vmem:[%s1692 + $0x98] sm:$0xf] %v1737
                  %v1739 = vld [vmem:[%s1691 + $0x5c] sm:$0xf]
                  %1740 = vst [vmem:[%s1692 + $0x9c] sm:$0xf] %v1739
                  %v1741 = vld [vmem:[%s1691 + $0x60] sm:$0xf]
                  %1742 = vst [vmem:[%s1692 + $0xa0] sm:$0xf] %v1741
                  %v1743 = vld [vmem:[%s1691 + $0x64] sm:$0xf]
                  %1744 = vst [vmem:[%s1692 + $0xa4] sm:$0xf] %v1743
                  %v1745 = vld [vmem:[%s1691 + $0x68] sm:$0xf]
                  %1746 = vst [vmem:[%s1692 + $0xa8] sm:$0xf] %v1745
                  %v1747 = vld [vmem:[%s1691 + $0x6c] sm:$0xf]
                  %1748 = vst [vmem:[%s1692 + $0xac] sm:$0xf] %v1747
                  %v1749 = vld [vmem:[%s1691 + $0x70] sm:$0xf]
                  %1750 = vst [vmem:[%s1692 + $0xb0] sm:$0xf] %v1749
                  %v1751 = vld [vmem:[%s1691 + $0x74] sm:$0xf]
                  %1752 = vst [vmem:[%s1692 + $0xb4] sm:$0xf] %v1751
                  %v1753 = vld [vmem:[%s1691 + $0x78] sm:$0xf]
                  %1754 = vst [vmem:[%s1692 + $0xb8] sm:$0xf] %v1753
                  %v1755 = vld [vmem:[%s1691 + $0x7c] sm:$0xf]
                  %1756 = vst [vmem:[%s1692 + $0xbc] sm:$0xf] %v1755
                $region116: #{instance_attention_forward.31} parent=103 // loop_footer
                  %s1690 = sadd.s32 1, %s1686
                $region117: #{instance_attention_forward.31} parent=103 // loop_footer_branch
                  %1685 = sbr.rel target = $region113
                $region118: #{instance_attention_forward.31} parent=103 // loop_exit
                  _
              $region104: #{instance_attention_forward.31} parent=88 // pred_fallthru
                _
            $region89: #{instance_attention_forward.31} parent=84 // pred_fallthru
              _
            // Predicated region
            $region90: #{instance_attention_forward.31} parent=84 // pred_check
              _
            $region91: #{instance_attention_forward.31} parent=84 // pred_check_branch
              %1600 = sbr.rel (0) target = $region93
            $region92: #{instance_attention_forward.31} parent=84 // pred_region
              loop: start=0, step=1, limit=1
              $region94: #{instance_attention_forward.31} parent=92 // loop_pre_header
                _
              $region95: #{instance_attention_forward.31} parent=92 // loop_header
                %s1603 = sphi 0, %s1607
                %p1604 = scmp.ge.s32.totalorder %s1603, 1
                %s1608 = sphi %s1588, %s1588
                %s1609 = sphi %s1594, %s1594
              $region96: #{instance_attention_forward.31} parent=92 // loop_header_branch
                %1606 = sbr.rel (%p1604) target = $region100
              $region97: #{instance_attention_forward.31} parent=92 // loop_body
                %v1610 = vld [vmem:[%s1608] sm:$0xf]
                %1611 = vst [vmem:[%s1609] sm:$0xf] %v1610
                %v1612 = vld [vmem:[%s1608 + $0x4] sm:$0xf]
                %1613 = vst [vmem:[%s1609 + $0x4] sm:$0xf] %v1612
                %v1614 = vld [vmem:[%s1608 + $0x8] sm:$0xf]
                %1615 = vst [vmem:[%s1609 + $0x8] sm:$0xf] %v1614
                %v1616 = vld [vmem:[%s1608 + $0xc] sm:$0xf]
                %1617 = vst [vmem:[%s1609 + $0xc] sm:$0xf] %v1616
                %v1618 = vld [vmem:[%s1608 + $0x10] sm:$0xf]
                %1619 = vst [vmem:[%s1609 + $0x10] sm:$0xf] %v1618
                %v1620 = vld [vmem:[%s1608 + $0x14] sm:$0xf]
                %1621 = vst [vmem:[%s1609 + $0x14] sm:$0xf] %v1620
                %v1622 = vld [vmem:[%s1608 + $0x18] sm:$0xf]
                %1623 = vst [vmem:[%s1609 + $0x18] sm:$0xf] %v1622
                %v1624 = vld [vmem:[%s1608 + $0x1c] sm:$0xf]
                %1625 = vst [vmem:[%s1609 + $0x1c] sm:$0xf] %v1624
                %v1626 = vld [vmem:[%s1608 + $0x20] sm:$0xf]
                %1627 = vst [vmem:[%s1609 + $0x20] sm:$0xf] %v1626
                %v1628 = vld [vmem:[%s1608 + $0x24] sm:$0xf]
                %1629 = vst [vmem:[%s1609 + $0x24] sm:$0xf] %v1628
                %v1630 = vld [vmem:[%s1608 + $0x28] sm:$0xf]
                %1631 = vst [vmem:[%s1609 + $0x28] sm:$0xf] %v1630
                %v1632 = vld [vmem:[%s1608 + $0x2c] sm:$0xf]
                %1633 = vst [vmem:[%s1609 + $0x2c] sm:$0xf] %v1632
                %v1634 = vld [vmem:[%s1608 + $0x30] sm:$0xf]
                %1635 = vst [vmem:[%s1609 + $0x30] sm:$0xf] %v1634
                %v1636 = vld [vmem:[%s1608 + $0x34] sm:$0xf]
                %1637 = vst [vmem:[%s1609 + $0x34] sm:$0xf] %v1636
                %v1638 = vld [vmem:[%s1608 + $0x38] sm:$0xf]
                %1639 = vst [vmem:[%s1609 + $0x38] sm:$0xf] %v1638
                %v1640 = vld [vmem:[%s1608 + $0x3c] sm:$0xf]
                %1641 = vst [vmem:[%s1609 + $0x3c] sm:$0xf] %v1640
                %v1642 = vld [vmem:[%s1608 + $0x40] sm:$0xf]
                %1643 = vst [vmem:[%s1609 + $0x80] sm:$0xf] %v1642
                %v1644 = vld [vmem:[%s1608 + $0x44] sm:$0xf]
                %1645 = vst [vmem:[%s1609 + $0x84] sm:$0xf] %v1644
                %v1646 = vld [vmem:[%s1608 + $0x48] sm:$0xf]
                %1647 = vst [vmem:[%s1609 + $0x88] sm:$0xf] %v1646
                %v1648 = vld [vmem:[%s1608 + $0x4c] sm:$0xf]
                %1649 = vst [vmem:[%s1609 + $0x8c] sm:$0xf] %v1648
                %v1650 = vld [vmem:[%s1608 + $0x50] sm:$0xf]
                %1651 = vst [vmem:[%s1609 + $0x90] sm:$0xf] %v1650
                %v1652 = vld [vmem:[%s1608 + $0x54] sm:$0xf]
                %1653 = vst [vmem:[%s1609 + $0x94] sm:$0xf] %v1652
                %v1654 = vld [vmem:[%s1608 + $0x58] sm:$0xf]
                %1655 = vst [vmem:[%s1609 + $0x98] sm:$0xf] %v1654
                %v1656 = vld [vmem:[%s1608 + $0x5c] sm:$0xf]
                %1657 = vst [vmem:[%s1609 + $0x9c] sm:$0xf] %v1656
                %v1658 = vld [vmem:[%s1608 + $0x60] sm:$0xf]
                %1659 = vst [vmem:[%s1609 + $0xa0] sm:$0xf] %v1658
                %v1660 = vld [vmem:[%s1608 + $0x64] sm:$0xf]
                %1661 = vst [vmem:[%s1609 + $0xa4] sm:$0xf] %v1660
                %v1662 = vld [vmem:[%s1608 + $0x68] sm:$0xf]
                %1663 = vst [vmem:[%s1609 + $0xa8] sm:$0xf] %v1662
                %v1664 = vld [vmem:[%s1608 + $0x6c] sm:$0xf]
                %1665 = vst [vmem:[%s1609 + $0xac] sm:$0xf] %v1664
                %v1666 = vld [vmem:[%s1608 + $0x70] sm:$0xf]
                %1667 = vst [vmem:[%s1609 + $0xb0] sm:$0xf] %v1666
                %v1668 = vld [vmem:[%s1608 + $0x74] sm:$0xf]
                %1669 = vst [vmem:[%s1609 + $0xb4] sm:$0xf] %v1668
                %v1670 = vld [vmem:[%s1608 + $0x78] sm:$0xf]
                %1671 = vst [vmem:[%s1609 + $0xb8] sm:$0xf] %v1670
                %v1672 = vld [vmem:[%s1608 + $0x7c] sm:$0xf]
                %1673 = vst [vmem:[%s1609 + $0xbc] sm:$0xf] %v1672
              $region98: #{instance_attention_forward.31} parent=92 // loop_footer
                %s1607 = sadd.s32 1, %s1603
              $region99: #{instance_attention_forward.31} parent=92 // loop_footer_branch
                %1602 = sbr.rel target = $region95
              $region100: #{instance_attention_forward.31} parent=92 // loop_exit
                _
            $region93: #{instance_attention_forward.31} parent=84 // pred_fallthru
              _
          $region85: #{instance_attention_forward.31} parent=80 // pred_fallthru
            _
          %1757 = vnop
        $region81: #{instance_attention_forward.31} parent=72 // pred_fallthru
          _
      $region73: #{instance_attention_forward.31} parent=5 // pred_fallthru
        _
      %p1758 = scmp.le.s32.totalorder 2, %s10
      // Predicated region
      $region119: #{instance_attention_forward.31} parent=5 // pred_check
        %p1759 = pneg %p1758
      $region120: #{instance_attention_forward.31} parent=5 // pred_check_branch
        %1761 = sbr.rel (%p1759) target = $region122
      $region121: #{instance_attention_forward.31} parent=5 // pred_region
        %s1762 = ssub.s32 %s10, 2
        // Predicated region
        $region123: #{instance_attention_forward.31} parent=121 // pred_check
          %p1763 = pneg %p128
        $region124: #{instance_attention_forward.31} parent=121 // pred_check_branch
          %1765 = sbr.rel (%p1763) target = $region126
        $region125: #{instance_attention_forward.31} parent=121 // pred_region
          %s1766 = sand.u32 %s113, 1
          %s1767 = sand.u32 %s113, 1
          %s1768 = smul.addr %s1767, 128
          %s1769 = scalar_lea.vmem [#allocation3], %s1768
        $region126: #{instance_attention_forward.31} parent=121 // pred_fallthru
          _
      $region122: #{instance_attention_forward.31} parent=5 // pred_fallthru
        _
    $region6: #{instance_attention_forward.31} parent=1 // loop_footer
      %s14 = sadd.s32 1, %s10
    $region7: #{instance_attention_forward.31} parent=1 // loop_footer_branch
      %9 = sbr.rel target = $region3
    $region8: #{instance_attention_forward.31} parent=1 // loop_exit
      _

// kernel: instance_attention_forward.33
$region0: #{instance_attention_forward.33}
  #allocation0 [shape = 'u32[]', space=smem, size = 0x4, offset = 0x4, fixed_abs, tag = 'smem constant byte address 0x4 - core index']
  #allocation1 [shape = 'u32[144,128]{1,0:T(1,128)}', space=vmem, size = 0x12000, scoped, tag = 'internal scratch']
  #allocation2 [shape = 'f32[128,16]{1,0:T(8,128)}', space=vmem, size = 0x10000, scoped, tag = 'scratch operand']
  %s0 = inlined_call_operand.vmem [shape: bf16[512,64], index: 0, kind: input, shape index: {}]
  %s1 = inlined_call_operand.vmem [shape: bf16[512,64], index: 1, kind: input, shape index: {}]
  %s2 = inlined_call_operand.vmem [shape: bf16[64,16], index: 2, kind: input, shape index: {}]
  %s3 = inlined_call_operand.vmem [shape: bf16[64,16], index: 3, kind: input, shape index: {}]
  %s4 = inlined_call_operand.vmem [shape: f32[1,16], index: 4, kind: input, shape index: {}]
  %s5 = inlined_call_operand.vmem [shape: bf16[512,16], index: 5, kind: output, shape index: {}]
  %s6 = sld [smem:[#allocation0]]
  $region61: #{instance_attention_forward.33} parent=0
    _
  %s8 = ssub.s32 1, %s6
  %s9 = scalar_select 0, %s8, %s6
  loop: start=0, step=1, limit=6
  $region2: #{instance_attention_forward.33} parent=0 // loop_pre_header
    _
  $region3: #{instance_attention_forward.33} parent=0 // loop_header
    %s11 = sphi 0, %s15
    %p12 = scmp.ge.s32.totalorder %s11, 6
    %s18 = sphi 0, %s37
    %s19 = sphi 0, %s33
    %s20 = sphi 0, %s29
    %s21 = sphi 0, %s18
    %s22 = sphi 0, %s19
    %s23 = sphi 0, %s20
    %s24 = sphi 0, %s21
    %s25 = sphi 0, %s22
    %s26 = sphi 0, %s23
    %s42 = sphi 0, %s44
    %s45 = sphi 0, %s42
    %s46 = sphi 0, %s45
    %s62 = sphi 0, %s46
    %s70 = sphi 0, %s72
    %s73 = sphi 0, %s70
    %s74 = sphi 0, %s73
    %s90 = sphi 0, %s74
    %s98 = sphi 0, %s100
    %s101 = sphi 0, %s98
    %s102 = sphi 0, %s101
    %s118 = sphi 0, %s102
    %s126 = sphi 0, %s128
    %s129 = sphi 0, %s126
    %s130 = sphi 0, %s129
    %s146 = sphi 0, %s130
    %s152 = sphi 0, %s154
    %s155 = sphi 0, %s152
    %s156 = sphi 0, %s155
    %s172 = sphi 0, %s156
    %s180 = sphi 0, %s182
    %s183 = sphi 0, %s180
    %s184 = sphi 0, %s183
    %s200 = sphi 0, %s184
  $region4: #{instance_attention_forward.33} parent=0 // loop_header_branch
    %14 = sbr.rel (%p12) target = $region8
  $region5: #{instance_attention_forward.33} parent=0 // loop_body
    %s16 = ssub.s32 %s11, 1
    %s17 = ssub.s32 %s11, 2
    %s27 = sadd.s32 1, %s20
    %p28 = scmp.ge.s32.totalorder %s27, 1
    %s29 = scalar_select %p28, 0, %s27
    %s30 = sadd.s32 1, %s19
    %s31 = scalar_select %p28, %s30, %s19
    %p32 = scmp.ge.s32.totalorder %s31, 1
    %s33 = scalar_select %p32, 0, %s31
    %s34 = sadd.s32 1, %s18
    %s35 = scalar_select %p32, %s34, %s18
    %p36 = scmp.ge.s32.totalorder %s35, 4
    %s37 = scalar_select %p36, 0, %s35
    %s38 = ssub.s32 %s18, %s37
    %s39 = ssub.s32 %s20, %s29
    %s40 = sor.u32 %s38, %s39
    %p41 = scmp.eq.s32.totalorder %s40, 0
    %s43 = sadd.s32 %s42, 1
    %s44 = scalar_select %p41, %s42, %s43
    %p47 = pneg %p41
    %p48 = scmp.eq.s32.totalorder %s11, 3
    %p49 = por %p47, %p48
    %p50 = scmp.ne.s32.totalorder %s42, %s45
    %p51 = scmp.eq.s32.totalorder %s11, 0
    %p52 = por %p50, %p51
    %p53 = scmp.ne.s32.totalorder %s42, %s45
    %p54 = scmp.eq.s32.totalorder %s16, 3
    %p55 = por %p53, %p54
    %p56 = scmp.ne.s32.totalorder %s45, %s46
    %p57 = scmp.eq.s32.totalorder %s16, 0
    %p58 = por %p56, %p57
    %p59 = scmp.ne.s32.totalorder %s45, %s46
    %p60 = scmp.eq.s32.totalorder %s17, 3
    %p61 = por %p59, %p60
    %p63 = scmp.ne.s32.totalorder %s46, %s62
    %p64 = scmp.eq.s32.totalorder %s17, 0
    %p65 = por %p63, %p64
    %s66 = ssub.s32 %s18, %s37
    %s67 = ssub.s32 %s20, %s29
    %s68 = sor.u32 %s66, %s67
    %p69 = scmp.eq.s32.totalorder %s68, 0
    %s71 = sadd.s32 %s70, 1
    %s72 = scalar_select %p69, %s70, %s71
    %p75 = pneg %p69
    %p76 = scmp.eq.s32.totalorder %s11, 3
    %p77 = por %p75, %p76
    %p78 = scmp.ne.s32.totalorder %s70, %s73
    %p79 = scmp.eq.s32.totalorder %s11, 0
    %p80 = por %p78, %p79
    %p81 = scmp.ne.s32.totalorder %s70, %s73
    %p82 = scmp.eq.s32.totalorder %s16, 3
    %p83 = por %p81, %p82
    %p84 = scmp.ne.s32.totalorder %s73, %s74
    %p85 = scmp.eq.s32.totalorder %s16, 0
    %p86 = por %p84, %p85
    %p87 = scmp.ne.s32.totalorder %s73, %s74
    %p88 = scmp.eq.s32.totalorder %s17, 3
    %p89 = por %p87, %p88
    %p91 = scmp.ne.s32.totalorder %s74, %s90
    %p92 = scmp.eq.s32.totalorder %s17, 0
    %p93 = por %p91, %p92
    %s94 = ssub.s32 %s20, %s29
    %s95 = ssub.s32 %s19, %s33
    %s96 = sor.u32 %s94, %s95
    %p97 = scmp.eq.s32.totalorder %s96, 0
    %s99 = sadd.s32 %s98, 1
    %s100 = scalar_select %p97, %s98, %s99
    %p103 = pneg %p97
    %p104 = scmp.eq.s32.totalorder %s11, 3
    %p105 = por %p103, %p104
    %p106 = scmp.ne.s32.totalorder %s98, %s101
    %p107 = scmp.eq.s32.totalorder %s11, 0
    %p108 = por %p106, %p107
    %p109 = scmp.ne.s32.totalorder %s98, %s101
    %p110 = scmp.eq.s32.totalorder %s16, 3
    %p111 = por %p109, %p110
    %p112 = scmp.ne.s32.totalorder %s101, %s102
    %p113 = scmp.eq.s32.totalorder %s16, 0
    %p114 = por %p112, %p113
    %p115 = scmp.ne.s32.totalorder %s101, %s102
    %p116 = scmp.eq.s32.totalorder %s17, 3
    %p117 = por %p115, %p116
    %p119 = scmp.ne.s32.totalorder %s102, %s118
    %p120 = scmp.eq.s32.totalorder %s17, 0
    %p121 = por %p119, %p120
    %s122 = ssub.s32 %s20, %s29
    %s123 = ssub.s32 %s19, %s33
    %s124 = sor.u32 %s122, %s123
    %p125 = scmp.eq.s32.totalorder %s124, 0
    %s127 = sadd.s32 %s126, 1
    %s128 = scalar_select %p125, %s126, %s127
    %p131 = pneg %p125
    %p132 = scmp.eq.s32.totalorder %s11, 3
    %p133 = por %p131, %p132
    %p134 = scmp.ne.s32.totalorder %s126, %s129
    %p135 = scmp.eq.s32.totalorder %s11, 0
    %p136 = por %p134, %p135
    %p137 = scmp.ne.s32.totalorder %s126, %s129
    %p138 = scmp.eq.s32.totalorder %s16, 3
    %p139 = por %p137, %p138
    %p140 = scmp.ne.s32.totalorder %s129, %s130
    %p141 = scmp.eq.s32.totalorder %s16, 0
    %p142 = por %p140, %p141
    %p143 = scmp.ne.s32.totalorder %s129, %s130
    %p144 = scmp.eq.s32.totalorder %s17, 3
    %p145 = por %p143, %p144
    %p147 = scmp.ne.s32.totalorder %s130, %s146
    %p148 = scmp.eq.s32.totalorder %s17, 0
    %p149 = por %p147, %p148
    %s150 = ssub.s32 %s19, %s33
    %p151 = scmp.eq.s32.totalorder %s150, 0
    %s153 = sadd.s32 %s152, 1
    %s154 = scalar_select %p151, %s152, %s153
    %p157 = pneg %p151
    %p158 = scmp.eq.s32.totalorder %s11, 3
    %p159 = por %p157, %p158
    %p160 = scmp.ne.s32.totalorder %s152, %s155
    %p161 = scmp.eq.s32.totalorder %s11, 0
    %p162 = por %p160, %p161
    %p163 = scmp.ne.s32.totalorder %s152, %s155
    %p164 = scmp.eq.s32.totalorder %s16, 3
    %p165 = por %p163, %p164
    %p166 = scmp.ne.s32.totalorder %s155, %s156
    %p167 = scmp.eq.s32.totalorder %s16, 0
    %p168 = por %p166, %p167
    %p169 = scmp.ne.s32.totalorder %s155, %s156
    %p170 = scmp.eq.s32.totalorder %s17, 3
    %p171 = por %p169, %p170
    %p173 = scmp.ne.s32.totalorder %s156, %s172
    %p174 = scmp.eq.s32.totalorder %s17, 0
    %p175 = por %p173, %p174
    %s176 = ssub.s32 %s18, %s37
    %s177 = ssub.s32 %s19, %s33
    %s178 = sor.u32 %s176, %s177
    %p179 = scmp.eq.s32.totalorder %s178, 0
    %s181 = sadd.s32 %s180, 1
    %s182 = scalar_select %p179, %s180, %s181
    %p185 = pneg %p179
    %p186 = scmp.eq.s32.totalorder %s11, 3
    %p187 = por %p185, %p186
    %p188 = scmp.ne.s32.totalorder %s180, %s183
    %p189 = scmp.eq.s32.totalorder %s11, 0
    %p190 = por %p188, %p189
    %p191 = scmp.ne.s32.totalorder %s180, %s183
    %p192 = scmp.eq.s32.totalorder %s16, 3
    %p193 = por %p191, %p192
    %p194 = scmp.ne.s32.totalorder %s183, %s184
    %p195 = scmp.eq.s32.totalorder %s16, 0
    %p196 = por %p194, %p195
    %p197 = scmp.ne.s32.totalorder %s183, %s184
    %p198 = scmp.eq.s32.totalorder %s17, 3
    %p199 = por %p197, %p198
    %p201 = scmp.ne.s32.totalorder %s184, %s200
    %p202 = scmp.eq.s32.totalorder %s17, 0
    %p203 = por %p201, %p202
    %p204 = scmp.le.s32.totalorder 1, %s11
    %p205 = scmp.lt.s32.totalorder %s11, 5
    %p206 = pnand %p204, %p205
    %p207 = pneg %p206
    // Predicated region
    $region9: #{instance_attention_forward.33} parent=5 // pred_check
      _
    $region10: #{instance_attention_forward.33} parent=5 // pred_check_branch
      %209 = sbr.rel (%p206) target = $region12
    $region11: #{instance_attention_forward.33} parent=5 // pred_region
      %s210 = ssub.s32 %s11, 1
      // Predicated region
      $region13: #{instance_attention_forward.33} parent=11 // pred_check
        %p211 = pneg %p114
      $region14: #{instance_attention_forward.33} parent=11 // pred_check_branch
        %213 = sbr.rel (%p211) target = $region16
      $region15: #{instance_attention_forward.33} parent=11 // pred_region
        %s214 = smul.u32 8, %s23
        %p215 = scmp.lt.s32.totalorder %s214, 7
        %s216 = scalar_select %p215, %s214, 7
        %p217 = scmp.lt.s32.totalorder %s22, 0
        %s218 = scalar_select %p217, %s22, 0
        %s219 = sadd.s32 %s218, %s216
        %s220 = smul.addr %s219, 4
        %s221 = scalar_lea.vmem %s2, %s220
        %s222 = smul.u32 8, %s23
      $region16: #{instance_attention_forward.33} parent=11 // pred_fallthru
        _
      // Predicated region
      $region17: #{instance_attention_forward.33} parent=11 // pred_check
        %p223 = pneg %p142
      $region18: #{instance_attention_forward.33} parent=11 // pred_check_branch
        %225 = sbr.rel (%p223) target = $region20
      $region19: #{instance_attention_forward.33} parent=11 // pred_region
        %s226 = smul.u32 8, %s23
        %p227 = scmp.lt.s32.totalorder %s226, 7
        %s228 = scalar_select %p227, %s226, 7
        %p229 = scmp.lt.s32.totalorder %s22, 0
        %s230 = scalar_select %p229, %s22, 0
        %s231 = sadd.s32 %s230, %s228
        %s232 = smul.addr %s231, 4
        %s233 = scalar_lea.vmem %s3, %s232
        %s234 = smul.u32 8, %s23
      $region20: #{instance_attention_forward.33} parent=11 // pred_fallthru
        _
      // Predicated region
      $region21: #{instance_attention_forward.33} parent=11 // pred_check
        %p235 = pneg %p168
      $region22: #{instance_attention_forward.33} parent=11 // pred_check_branch
        %237 = sbr.rel (%p235) target = $region24
      $region23: #{instance_attention_forward.33} parent=11 // pred_region
        %p238 = scmp.lt.s32.totalorder %s22, 0
        %s239 = scalar_select %p238, %s22, 0
        %s240 = scalar_lea.vmem %s4, %s239
      $region24: #{instance_attention_forward.33} parent=11 // pred_fallthru
        _
    $region12: #{instance_attention_forward.33} parent=5 // pred_fallthru
      _
    %p241 = scmp.lt.s32.totalorder %s11, 4
    // Predicated region
    $region25: #{instance_attention_forward.33} parent=5 // pred_check
      %p242 = pneg %p241
    $region26: #{instance_attention_forward.33} parent=5 // pred_check_branch
      %244 = sbr.rel (%p242) target = $region28
    $region27: #{instance_attention_forward.33} parent=5 // pred_region
      // Predicated region
      $region29: #{instance_attention_forward.33} parent=27 // pred_check
        %p245 = pneg %p52
      $region30: #{instance_attention_forward.33} parent=27 // pred_check_branch
        %247 = sbr.rel (%p245) target = $region32
      $region31: #{instance_attention_forward.33} parent=27 // pred_region
        %s248 = smul.u32 16, %s18
        %p249 = scmp.lt.s32.totalorder %s248, 63
        %s250 = scalar_select %p249, %s248, 63
        %p251 = scmp.lt.s32.totalorder %s20, 0
        %s252 = scalar_select %p251, %s20, 0
        %s253 = sadd.s32 %s252, %s250
        %s254 = smul.addr %s253, 4
        %s255 = scalar_lea.vmem %s0, %s254
        %s256 = smul.u32 16, %s18
      $region32: #{instance_attention_forward.33} parent=27 // pred_fallthru
        _
      // Predicated region
      $region33: #{instance_attention_forward.33} parent=27 // pred_check
        %p257 = pneg %p80
      $region34: #{instance_attention_forward.33} parent=27 // pred_check_branch
        %259 = sbr.rel (%p257) target = $region36
      $region35: #{instance_attention_forward.33} parent=27 // pred_region
        %s260 = smul.u32 16, %s18
        %p261 = scmp.lt.s32.totalorder %s260, 63
        %s262 = scalar_select %p261, %s260, 63
        %p263 = scmp.lt.s32.totalorder %s20, 0
        %s264 = scalar_select %p263, %s20, 0
        %s265 = sadd.s32 %s264, %s262
        %s266 = smul.addr %s265, 4
        %s267 = scalar_lea.vmem %s1, %s266
        %s268 = smul.u32 16, %s18
      $region36: #{instance_attention_forward.33} parent=27 // pred_fallthru
        _
    $region28: #{instance_attention_forward.33} parent=5 // pred_fallthru
      _
    %p269 = scmp.le.s32.totalorder 1, %s11
    %p270 = scmp.lt.s32.totalorder %s11, 5
    %p271 = pnand %p269, %p270
    %p272 = pneg %p271
    // Predicated region
    $region37: #{instance_attention_forward.33} parent=5 // pred_check
      _
    $region38: #{instance_attention_forward.33} parent=5 // pred_check_branch
      %274 = sbr.rel (%p271) target = $region40
    $region39: #{instance_attention_forward.33} parent=5 // pred_region
      %s275 = ssub.s32 %s11, 1
      %s276 = smul.u32 16, %s21
      %p277 = scmp.lt.s32.totalorder %s276, 63
      %s278 = scalar_select %p277, %s276, 63
      %p279 = scmp.lt.s32.totalorder %s23, 0
      %s280 = scalar_select %p279, %s23, 0
      %s281 = sadd.s32 %s280, %s278
      %s282 = smul.addr %s281, 4
      %s283 = scalar_lea.vmem %s0, %s282
      %p284 = pneg %p58
      %p285 = pneg %p55
      %s286 = smul.u32 16, %s21
      %p287 = scmp.lt.s32.totalorder %s286, 63
      %s288 = scalar_select %p287, %s286, 63
      %p289 = scmp.lt.s32.totalorder %s23, 0
      %s290 = scalar_select %p289, %s23, 0
      %s291 = sadd.s32 %s290, %s288
      %s292 = smul.addr %s291, 4
      %s293 = scalar_lea.vmem %s1, %s292
      %p294 = pneg %p86
      %p295 = pneg %p83
      %s296 = smul.u32 8, %s23
      %p297 = scmp.lt.s32.totalorder %s296, 7
      %s298 = scalar_select %p297, %s296, 7
      %p299 = scmp.lt.s32.totalorder %s22, 0
      %s300 = scalar_select %p299, %s22, 0
      %s301 = sadd.s32 %s300, %s298
      %s302 = smul.addr %s301, 4
      %s303 = scalar_lea.vmem %s2, %s302
      %p304 = pneg %p114
      %p305 = pneg %p111
      %s306 = smul.u32 8, %s23
      %p307 = scmp.lt.s32.totalorder %s306, 7
      %s308 = scalar_select %p307, %s306, 7
      %p309 = scmp.lt.s32.totalorder %s22, 0
      %s310 = scalar_select %p309, %s22, 0
      %s311 = sadd.s32 %s310, %s308
      %s312 = smul.addr %s311, 4
      %s313 = scalar_lea.vmem %s3, %s312
      %p314 = pneg %p142
      %p315 = pneg %p139
      %p316 = scmp.lt.s32.totalorder %s22, 0
      %s317 = scalar_select %p316, %s22, 0
      %s318 = scalar_lea.vmem %s4, %s317
      %p319 = pneg %p168
      %p320 = pneg %p165
      %p321 = pneg %p196
      %p322 = pneg %p193
      %s323 = smul.u32 16, %s21
      %p324 = scmp.lt.s32.totalorder %s323, 63
      %s325 = scalar_select %p324, %s323, 63
      %p326 = scmp.lt.s32.totalorder %s22, 0
      %s327 = scalar_select %p326, %s22, 0
      %s328 = sadd.s32 %s327, %s325
      %s329 = smul.addr %s328, 4
      %s330 = scalar_lea.vmem %s5, %s329
      %s331 = smul.u32 16, %s21
      %p332 = scmp.lt.s32.totalorder %s331, 63
      %s333 = scalar_select %p332, %s331, 63
      %p334 = scmp.lt.s32.totalorder %s23, 0
      %s335 = scalar_select %p334, %s23, 0
      %s336 = sadd.s32 %s335, %s333
      %s337 = smul.addr %s336, 4
      %s338 = scalar_lea.vmem %s0, %s337
      %s339 = smul.u32 16, %s21
      %s340 = smul.u32 16, %s21
      %p341 = scmp.lt.s32.totalorder %s340, 63
      %s342 = scalar_select %p341, %s340, 63
      %p343 = scmp.lt.s32.totalorder %s23, 0
      %s344 = scalar_select %p343, %s23, 0
      %s345 = sadd.s32 %s344, %s342
      %s346 = smul.addr %s345, 4
      %s347 = scalar_lea.vmem %s1, %s346
      %s348 = smul.u32 16, %s21
      %s349 = smul.u32 8, %s23
      %p350 = scmp.lt.s32.totalorder %s349, 7
      %s351 = scalar_select %p350, %s349, 7
      %p352 = scmp.lt.s32.totalorder %s22, 0
      %s353 = scalar_select %p352, %s22, 0
      %s354 = sadd.s32 %s353, %s351
      %s355 = smul.addr %s354, 4
      %s356 = scalar_lea.vmem %s2, %s355
      %s357 = smul.u32 8, %s23
      %s358 = smul.u32 8, %s23
      %p359 = scmp.lt.s32.totalorder %s358, 7
      %s360 = scalar_select %p359, %s358, 7
      %p361 = scmp.lt.s32.totalorder %s22, 0
      %s362 = scalar_select %p361, %s22, 0
      %s363 = sadd.s32 %s362, %s360
      %s364 = smul.addr %s363, 4
      %s365 = scalar_lea.vmem %s3, %s364
      %s366 = smul.u32 8, %s23
      %p367 = scmp.lt.s32.totalorder %s22, 0
      %s368 = scalar_select %p367, %s22, 0
      %s369 = scalar_lea.vmem %s4, %s368
      %s370 = smul.u32 16, %s21
      %p371 = scmp.lt.s32.totalorder %s370, 63
      %s372 = scalar_select %p371, %s370, 63
      %p373 = scmp.lt.s32.totalorder %s22, 0
      %s374 = scalar_select %p373, %s22, 0
      %s375 = sadd.s32 %s374, %s372
      %s376 = smul.addr %s375, 4
      %s377 = scalar_lea.vmem %s5, %s376
      %s378 = smul.u32 16, %s21
      %p380 = scmp.eq.s32.totalorder %s23, 0
      // Predicated region
      $region41: #{instance_attention_forward.33} parent=39 // pred_check
        %p381 = pneg %p380
      $region42: #{instance_attention_forward.33} parent=39 // pred_check_branch
        %383 = sbr.rel (%p381) target = $region44
      $region43: #{instance_attention_forward.33} parent=39 // pred_region
        %vm384 = vcmask 130048
        %385 = vst.msk [vmem:[#allocation2] sm:$0xff] %vm384, 0.0
        %386 = vst.msk [vmem:[#allocation2 + $0x8] sm:$0xff] %vm384, 0.0
        %387 = vst.msk [vmem:[#allocation2 + $0x10] sm:$0xff] %vm384, 0.0
        %388 = vst.msk [vmem:[#allocation2 + $0x18] sm:$0xff] %vm384, 0.0
        %389 = vst.msk [vmem:[#allocation2 + $0x20] sm:$0xff] %vm384, 0.0
        %390 = vst.msk [vmem:[#allocation2 + $0x28] sm:$0xff] %vm384, 0.0
        %391 = vst.msk [vmem:[#allocation2 + $0x30] sm:$0xff] %vm384, 0.0
        %392 = vst.msk [vmem:[#allocation2 + $0x38] sm:$0xff] %vm384, 0.0
        %393 = vst.msk [vmem:[#allocation2 + $0x40] sm:$0xff] %vm384, 0.0
        %394 = vst.msk [vmem:[#allocation2 + $0x48] sm:$0xff] %vm384, 0.0
        %395 = vst.msk [vmem:[#allocation2 + $0x50] sm:$0xff] %vm384, 0.0
        %396 = vst.msk [vmem:[#allocation2 + $0x58] sm:$0xff] %vm384, 0.0
        %397 = vst.msk [vmem:[#allocation2 + $0x60] sm:$0xff] %vm384, 0.0
        %398 = vst.msk [vmem:[#allocation2 + $0x68] sm:$0xff] %vm384, 0.0
        %399 = vst.msk [vmem:[#allocation2 + $0x70] sm:$0xff] %vm384, 0.0
        %400 = vst.msk [vmem:[#allocation2 + $0x78] sm:$0xff] %vm384, 0.0
      $region44: #{instance_attention_forward.33} parent=39 // pred_fallthru
        _
      %v401 = vld [vmem:[%s338] sm:$0xf]
      %v402 = vld [vmem:[%s338 + $0x4] sm:$0xf]
      %v403 = vld [vmem:[%s338 + $0x8] sm:$0xf]
      %v404 = vld [vmem:[%s338 + $0xc] sm:$0xf]
      %v405 = vld [vmem:[%s338 + $0x10] sm:$0xf]
      %v406 = vld [vmem:[%s338 + $0x14] sm:$0xf]
      %v407 = vld [vmem:[%s338 + $0x18] sm:$0xf]
      %v408 = vld [vmem:[%s338 + $0x1c] sm:$0xf]
      %v409 = vld [vmem:[%s338 + $0x20] sm:$0xf]
      %v410 = vld [vmem:[%s338 + $0x24] sm:$0xf]
      %v411 = vld [vmem:[%s338 + $0x28] sm:$0xf]
      %v412 = vld [vmem:[%s338 + $0x2c] sm:$0xf]
      %v413 = vld [vmem:[%s338 + $0x30] sm:$0xf]
      %v414 = vld [vmem:[%s338 + $0x34] sm:$0xf]
      %v415 = vld [vmem:[%s338 + $0x38] sm:$0xf]
      %v416 = vld [vmem:[%s338 + $0x3c] sm:$0xf]
      %v417 = vld [vmem:[%s356] sm:$0xf]
      %v418 = vld [vmem:[%s356 + $0x4] sm:$0xf]
      %v419 = vld [vmem:[%s356 + $0x8] sm:$0xf]
      %v420 = vld [vmem:[%s356 + $0xc] sm:$0xf]
      %v421 = vld [vmem:[%s356 + $0x10] sm:$0xf]
      %v422 = vld [vmem:[%s356 + $0x14] sm:$0xf]
      %v423 = vld [vmem:[%s356 + $0x18] sm:$0xf]
      %v424 = vld [vmem:[%s356 + $0x1c] sm:$0xf]
      %v425 = vld [vmem:[%s347] sm:$0xf]
      %v426 = vld [vmem:[%s347 + $0x4] sm:$0xf]
      %v427 = vld [vmem:[%s347 + $0x8] sm:$0xf]
      %v428 = vld [vmem:[%s347 + $0xc] sm:$0xf]
      %v429 = vld [vmem:[%s347 + $0x10] sm:$0xf]
      %v430 = vld [vmem:[%s347 + $0x14] sm:$0xf]
      %v431 = vld [vmem:[%s347 + $0x18] sm:$0xf]
      %v432 = vld [vmem:[%s347 + $0x1c] sm:$0xf]
      %v433 = vld [vmem:[%s347 + $0x20] sm:$0xf]
      %v434 = vld [vmem:[%s347 + $0x24] sm:$0xf]
      %v435 = vld [vmem:[%s347 + $0x28] sm:$0xf]
      %v436 = vld [vmem:[%s347 + $0x2c] sm:$0xf]
      %v437 = vld [vmem:[%s347 + $0x30] sm:$0xf]
      %v438 = vld [vmem:[%s347 + $0x34] sm:$0xf]
      %v439 = vld [vmem:[%s347 + $0x38] sm:$0xf]
      %v440 = vld [vmem:[%s347 + $0x3c] sm:$0xf]
      %v441 = vld [vmem:[%s365] sm:$0xf]
      %v442 = vld [vmem:[%s365 + $0x4] sm:$0xf]
      %v443 = vld [vmem:[%s365 + $0x8] sm:$0xf]
      %v444 = vld [vmem:[%s365 + $0xc] sm:$0xf]
      %v445 = vld [vmem:[%s365 + $0x10] sm:$0xf]
      %v446 = vld [vmem:[%s365 + $0x14] sm:$0xf]
      %v447 = vld [vmem:[%s365 + $0x18] sm:$0xf]
      %v448 = vld [vmem:[%s365 + $0x1c] sm:$0xf]
      %v465 = vunpack.c.l.b16 %v425
      %v466 = vunpack.c.l.b16 %v426
      %v467 = vunpack.c.l.b16 %v427
      %v468 = vunpack.c.l.b16 %v428
      %v469 = vunpack.c.l.b16 %v429
      %v470 = vunpack.c.l.b16 %v430
      %v471 = vunpack.c.l.b16 %v431
      %v472 = vunpack.c.l.b16 %v432
      %v473 = vunpack.c.l.b16 %v433
      %v474 = vunpack.c.l.b16 %v434
      %v475 = vunpack.c.l.b16 %v435
      %v476 = vunpack.c.l.b16 %v436
      %v477 = vunpack.c.l.b16 %v437
      %v478 = vunpack.c.l.b16 %v438
      %v479 = vunpack.c.l.b16 %v439
      %v480 = vunpack.c.l.b16 %v440
      %v481 = vpack.c.b16 %v466, %v465
      %v482 = vpack.c.b16 %v468, %v467
      %v483 = vpack.c.b16 %v470, %v469
      %v484 = vpack.c.b16 %v472, %v471
      %v485 = vpack.c.b16 %v474, %v473
      %v486 = vpack.c.b16 %v476, %v475
      %v487 = vpack.c.b16 %v478, %v477
      %v488 = vpack.c.b16 %v480, %v479
      %v497 = vunpack.c.l.b16 %v441
      %v498 = vunpack.c.l.b16 %v442
      %v499 = vunpack.c.l.b16 %v443
      %v500 = vunpack.c.l.b16 %v444
      %v501 = vunpack.c.l.b16 %v445
      %v502 = vunpack.c.l.b16 %v446
      %v503 = vunpack.c.l.b16 %v447
      %v504 = vunpack.c.l.b16 %v448
      %v505 = vpack.c.b16 %v498, %v497
      %v506 = vpack.c.b16 %v500, %v499
      %v507 = vpack.c.b16 %v502, %v501
      %v508 = vpack.c.b16 %v504, %v503
      %vm513 = vcmask 523264
      %v515 = vsel %vm513, %v481, 0
      %v518 = vsel %vm513, %v482, 0
      %v521 = vsel %vm513, %v483, 0
      %v524 = vsel %vm513, %v484, 0
      %v527 = vsel %vm513, %v485, 0
      %v530 = vsel %vm513, %v486, 0
      %v533 = vsel %vm513, %v487, 0
      %v536 = vsel %vm513, %v488, 0
      %538 = vmatprep.subr.bf16.mxu0 0
      %539 = vmatpush1.bf16.msra.mxu0 %v505
      %540 = vmatprep.subr.bf16.mxu0 0
      %541 = vmatpush1.bf16.msra.mxu0 %v506
      %542 = vmatprep.subr.bf16.mxu0 0
      %543 = vmatpush1.bf16.msra.mxu0 %v507
      %544 = vmatprep.subr.bf16.mxu0 0
      %545 = vmatpush1.bf16.msra.mxu0 %v508
      %546 = vmatprep.subr.bf16.mxu0 0
      %547 = vmatpush1.bf16.msra.mxu0 0
      %548 = vmatprep.subr.bf16.mxu0 0
      %549 = vmatpush1.bf16.msra.mxu0 0
      %550 = vmatprep.subr.bf16.mxu0 0
      %551 = vmatpush1.bf16.msra.mxu0 0
      %552 = vmatprep.subr.bf16.mxu0 0
      %553 = vmatpush1.bf16.msra.mxu0 0
      %554 = vmatprep.subr.bf16.mxu0 0
      %555 = vmatpush1.bf16.msra.mxu0 0
      %556 = vmatprep.subr.bf16.mxu0 0
      %557 = vmatpush1.bf16.msra.mxu0 0
      %558 = vmatprep.subr.bf16.mxu0 0
      %559 = vmatpush1.bf16.msra.mxu0 0
      %560 = vmatprep.subr.bf16.mxu0 0
      %561 = vmatpush1.bf16.msra.mxu0 0
      %562 = vmatprep.subr.bf16.mxu0 0
      %563 = vmatpush1.bf16.msra.mxu0 0
      %564 = vmatprep.subr.bf16.mxu0 0
      %565 = vmatpush1.bf16.msra.mxu0 0
      %566 = vmatprep.subr.bf16.mxu0 0
      %567 = vmatpush1.bf16.msra.mxu0 0
      %568 = vmatprep.subr.bf16.mxu0 0
      %569 = vmatpush1.bf16.msra.mxu0 0
      %570 = vmatprep.mubr.bf16.mxu0 0
      %571 = vmatmul.mubr.bf16.gmra.mrb[0].mxu0 %v515
      %v572 = vpop.f32.mrb[0].mxu0
      %v573 = vadd.f32 0.0, %v572
      %v574 = vpop.f32.mrb[0].mxu0
      %v575 = vpop.f32.mrb[0].mxu0
      %v576 = vadd.f32 0.0, %v575
      %v577 = vpop.f32.mrb[0].mxu0
      %578 = vmatprep.mubr.bf16.mxu0 0
      %579 = vmatmul.mubr.bf16.gmra.mrb[0].mxu0 %v518
      %v580 = vpop.f32.mrb[0].mxu0
      %v581 = vadd.f32 0.0, %v580
      %v582 = vpop.f32.mrb[0].mxu0
      %v583 = vpop.f32.mrb[0].mxu0
      %v584 = vadd.f32 0.0, %v583
      %v585 = vpop.f32.mrb[0].mxu0
      %586 = vmatprep.mubr.bf16.mxu0 0
      %587 = vmatmul.mubr.bf16.gmra.mrb[0].mxu0 %v521
      %v588 = vpop.f32.mrb[0].mxu0
      %v589 = vadd.f32 0.0, %v588
      %v590 = vpop.f32.mrb[0].mxu0
      %v591 = vpop.f32.mrb[0].mxu0
      %v592 = vadd.f32 0.0, %v591
      %v593 = vpop.f32.mrb[0].mxu0
      %594 = vmatprep.mubr.bf16.mxu0 0
      %595 = vmatmul.mubr.bf16.gmra.mrb[0].mxu0 %v524
      %v596 = vpop.f32.mrb[0].mxu0
      %v597 = vadd.f32 0.0, %v596
      %v598 = vpop.f32.mrb[0].mxu0
      %v599 = vpop.f32.mrb[0].mxu0
      %v600 = vadd.f32 0.0, %v599
      %v601 = vpop.f32.mrb[0].mxu0
      %602 = vmatprep.mubr.bf16.mxu0 0
      %603 = vmatmul.mubr.bf16.gmra.mrb[0].mxu0 %v527
      %v604 = vpop.f32.mrb[0].mxu0
      %v605 = vadd.f32 0.0, %v604
      %v606 = vpop.f32.mrb[0].mxu0
      %v607 = vpop.f32.mrb[0].mxu0
      %v608 = vadd.f32 0.0, %v607
      %v609 = vpop.f32.mrb[0].mxu0
      %610 = vmatprep.mubr.bf16.mxu0 0
      %611 = vmatmul.mubr.bf16.gmra.mrb[0].mxu0 %v530
      %v612 = vpop.f32.mrb[0].mxu0
      %v613 = vadd.f32 0.0, %v612
      %v614 = vpop.f32.mrb[0].mxu0
      %v615 = vpop.f32.mrb[0].mxu0
      %v616 = vadd.f32 0.0, %v615
      %v617 = vpop.f32.mrb[0].mxu0
      %618 = vmatprep.mubr.bf16.mxu0 0
      %619 = vmatmul.mubr.bf16.gmra.mrb[0].mxu0 %v533
      %v620 = vpop.f32.mrb[0].mxu0
      %v621 = vadd.f32 0.0, %v620
      %v622 = vpop.f32.mrb[0].mxu0
      %v623 = vpop.f32.mrb[0].mxu0
      %v624 = vadd.f32 0.0, %v623
      %v625 = vpop.f32.mrb[0].mxu0
      %626 = vmatprep.mubr.bf16.mxu0 0
      %627 = vmatmul.mubr.bf16.gmra.mrb[0].mxu0 %v536
      %v628 = vpop.f32.mrb[0].mxu0
      %v629 = vadd.f32 0.0, %v628
      %v630 = vpop.f32.mrb[0].mxu0
      %v631 = vpop.f32.mrb[0].mxu0
      %v632 = vadd.f32 0.0, %v631
      %v633 = vpop.f32.mrb[0].mxu0
      %634 = vdwg.mxu0
      %v651 = vunpack.c.l.b16 %v401
      %v652 = vunpack.c.l.b16 %v402
      %v653 = vunpack.c.l.b16 %v403
      %v654 = vunpack.c.l.b16 %v404
      %v655 = vunpack.c.l.b16 %v405
      %v656 = vunpack.c.l.b16 %v406
      %v657 = vunpack.c.l.b16 %v407
      %v658 = vunpack.c.l.b16 %v408
      %v659 = vunpack.c.l.b16 %v409
      %v660 = vunpack.c.l.b16 %v410
      %v661 = vunpack.c.l.b16 %v411
      %v662 = vunpack.c.l.b16 %v412
      %v663 = vunpack.c.l.b16 %v413
      %v664 = vunpack.c.l.b16 %v414
      %v665 = vunpack.c.l.b16 %v415
      %v666 = vunpack.c.l.b16 %v416
      %v667 = vpack.c.b16 %v652, %v651
      %v668 = vpack.c.b16 %v654, %v653
      %v669 = vpack.c.b16 %v656, %v655
      %v670 = vpack.c.b16 %v658, %v657
      %v671 = vpack.c.b16 %v660, %v659
      %v672 = vpack.c.b16 %v662, %v661
      %v673 = vpack.c.b16 %v664, %v663
      %v674 = vpack.c.b16 %v666, %v665
      %v683 = vunpack.c.l.b16 %v417
      %v684 = vunpack.c.l.b16 %v418
      %v685 = vunpack.c.l.b16 %v419
      %v686 = vunpack.c.l.b16 %v420
      %v687 = vunpack.c.l.b16 %v421
      %v688 = vunpack.c.l.b16 %v422
      %v689 = vunpack.c.l.b16 %v423
      %v690 = vunpack.c.l.b16 %v424
      %v691 = vpack.c.b16 %v684, %v683
      %v692 = vpack.c.b16 %v686, %v685
      %v693 = vpack.c.b16 %v688, %v687
      %v694 = vpack.c.b16 %v690, %v689
      %v700 = vsel %vm513, %v667, 0
      %v703 = vsel %vm513, %v668, 0
      %v706 = vsel %vm513, %v669, 0
      %v709 = vsel %vm513, %v670, 0
      %v712 = vsel %vm513, %v671, 0
      %v715 = vsel %vm513, %v672, 0
      %v718 = vsel %vm513, %v673, 0
      %v721 = vsel %vm513, %v674, 0
      %723 = vmatprep.subr.bf16.mxu0 0
      %724 = vmatpush1.bf16.msra.mxu0 %v691
      %725 = vmatprep.subr.bf16.mxu0 0
      %726 = vmatpush1.bf16.msra.mxu0 %v692
      %727 = vmatprep.subr.bf16.mxu0 0
      %728 = vmatpush1.bf16.msra.mxu0 %v693
      %729 = vmatprep.subr.bf16.mxu0 0
      %730 = vmatpush1.bf16.msra.mxu0 %v694
      %731 = vmatprep.subr.bf16.mxu0 0
      %732 = vmatpush1.bf16.msra.mxu0 0
      %733 = vmatprep.subr.bf16.mxu0 0
      %734 = vmatpush1.bf16.msra.mxu0 0
      %735 = vmatprep.subr.bf16.mxu0 0
      %736 = vmatpush1.bf16.msra.mxu0 0
      %737 = vmatprep.subr.bf16.mxu0 0
      %738 = vmatpush1.bf16.msra.mxu0 0
      %739 = vmatprep.subr.bf16.mxu0 0
      %740 = vmatpush1.bf16.msra.mxu0 0
      %741 = vmatprep.subr.bf16.mxu0 0
      %742 = vmatpush1.bf16.msra.mxu0 0
      %743 = vmatprep.subr.bf16.mxu0 0
      %744 = vmatpush1.bf16.msra.mxu0 0
      %745 = vmatprep.subr.bf16.mxu0 0
      %746 = vmatpush1.bf16.msra.mxu0 0
      %747 = vmatprep.subr.bf16.mxu0 0
      %748 = vmatpush1.bf16.msra.mxu0 0
      %749 = vmatprep.subr.bf16.mxu0 0
      %750 = vmatpush1.bf16.msra.mxu0 0
      %751 = vmatprep.subr.bf16.mxu0 0
      %752 = vmatpush1.bf16.msra.mxu0 0
      %753 = vmatprep.subr.bf16.mxu0 0
      %754 = vmatpush1.bf16.msra.mxu0 0
      %755 = vmatprep.mubr.bf16.mxu0 0
      %756 = vmatmul.mubr.bf16.gmra.mrb[0].mxu0 %v700
      %v757 = vpop.f32.mrb[0].mxu0
      %v758 = vadd.f32 %v573, %v757
      %v759 = vpop.f32.mrb[0].mxu0
      %v760 = vpop.f32.mrb[0].mxu0
      %v761 = vadd.f32 %v576, %v760
      %v762 = vpop.f32.mrb[0].mxu0
      %763 = vmatprep.mubr.bf16.mxu0 0
      %764 = vmatmul.mubr.bf16.gmra.mrb[0].mxu0 %v703
      %v765 = vpop.f32.mrb[0].mxu0
      %v766 = vadd.f32 %v581, %v765
      %v767 = vpop.f32.mrb[0].mxu0
      %v768 = vpop.f32.mrb[0].mxu0
      %v769 = vadd.f32 %v584, %v768
      %v770 = vpop.f32.mrb[0].mxu0
      %771 = vmatprep.mubr.bf16.mxu0 0
      %772 = vmatmul.mubr.bf16.gmra.mrb[0].mxu0 %v706
      %v773 = vpop.f32.mrb[0].mxu0
      %v774 = vadd.f32 %v589, %v773
      %v775 = vpop.f32.mrb[0].mxu0
      %v776 = vpop.f32.mrb[0].mxu0
      %v777 = vadd.f32 %v592, %v776
      %v778 = vpop.f32.mrb[0].mxu0
      %779 = vmatprep.mubr.bf16.mxu0 0
      %780 = vmatmul.mubr.bf16.gmra.mrb[0].mxu0 %v709
      %v781 = vpop.f32.mrb[0].mxu0
      %v782 = vadd.f32 %v597, %v781
      %v783 = vpop.f32.mrb[0].mxu0
      %v784 = vpop.f32.mrb[0].mxu0
      %v785 = vadd.f32 %v600, %v784
      %v786 = vpop.f32.mrb[0].mxu0
      %787 = vmatprep.mubr.bf16.mxu0 0
      %788 = vmatmul.mubr.bf16.gmra.mrb[0].mxu0 %v712
      %v789 = vpop.f32.mrb[0].mxu0
      %v790 = vadd.f32 %v605, %v789
      %v791 = vpop.f32.mrb[0].mxu0
      %v792 = vpop.f32.mrb[0].mxu0
      %v793 = vadd.f32 %v608, %v792
      %v794 = vpop.f32.mrb[0].mxu0
      %795 = vmatprep.mubr.bf16.mxu0 0
      %796 = vmatmul.mubr.bf16.gmra.mrb[0].mxu0 %v715
      %v797 = vpop.f32.mrb[0].mxu0
      %v798 = vadd.f32 %v613, %v797
      %v799 = vpop.f32.mrb[0].mxu0
      %v800 = vpop.f32.mrb[0].mxu0
      %v801 = vadd.f32 %v616, %v800
      %v802 = vpop.f32.mrb[0].mxu0
      %803 = vmatprep.mubr.bf16.mxu0 0
      %804 = vmatmul.mubr.bf16.gmra.mrb[0].mxu0 %v718
      %v805 = vpop.f32.mrb[0].mxu0
      %v806 = vadd.f32 %v621, %v805
      %v807 = vpop.f32.mrb[0].mxu0
      %v808 = vpop.f32.mrb[0].mxu0
      %v809 = vadd.f32 %v624, %v808
      %v810 = vpop.f32.mrb[0].mxu0
      %811 = vmatprep.mubr.bf16.mxu0 0
      %812 = vmatmul.mubr.bf16.gmra.mrb[0].mxu0 %v721
      %v813 = vpop.f32.mrb[0].mxu0
      %v814 = vadd.f32 %v629, %v813
      %v815 = vpop.f32.mrb[0].mxu0
      %v816 = vpop.f32.mrb[0].mxu0
      %v817 = vadd.f32 %v632, %v816
      %v818 = vpop.f32.mrb[0].mxu0
      %819 = vdwg.mxu0
      %v820 = vld [vmem:[#allocation2] sm:$0xff]
      %v821 = vld [vmem:[#allocation2 + $0x8] sm:$0xff]
      %v822 = vld [vmem:[#allocation2 + $0x10] sm:$0xff]
      %v823 = vld [vmem:[#allocation2 + $0x18] sm:$0xff]
      %v824 = vld [vmem:[#allocation2 + $0x20] sm:$0xff]
      %v825 = vld [vmem:[#allocation2 + $0x28] sm:$0xff]
      %v826 = vld [vmem:[#allocation2 + $0x30] sm:$0xff]
      %v827 = vld [vmem:[#allocation2 + $0x38] sm:$0xff]
      %v828 = vld [vmem:[#allocation2 + $0x40] sm:$0xff]
      %v829 = vld [vmem:[#allocation2 + $0x48] sm:$0xff]
      %v830 = vld [vmem:[#allocation2 + $0x50] sm:$0xff]
      %v831 = vld [vmem:[#allocation2 + $0x58] sm:$0xff]
      %v832 = vld [vmem:[#allocation2 + $0x60] sm:$0xff]
      %v833 = vld [vmem:[#allocation2 + $0x68] sm:$0xff]
      %v834 = vld [vmem:[#allocation2 + $0x70] sm:$0xff]
      %v835 = vld [vmem:[#allocation2 + $0x78] sm:$0xff]
      %v836 = vadd.f32 %v820, %v758
      %v837 = vadd.f32 %v821, %v761
      %v838 = vadd.f32 %v822, %v766
      %v839 = vadd.f32 %v823, %v769
      %v840 = vadd.f32 %v824, %v774
      %v841 = vadd.f32 %v825, %v777
      %v842 = vadd.f32 %v826, %v782
      %v843 = vadd.f32 %v827, %v785
      %v844 = vadd.f32 %v828, %v790
      %v845 = vadd.f32 %v829, %v793
      %v846 = vadd.f32 %v830, %v798
      %v847 = vadd.f32 %v831, %v801
      %v848 = vadd.f32 %v832, %v806
      %v849 = vadd.f32 %v833, %v809
      %v850 = vadd.f32 %v834, %v814
      %v851 = vadd.f32 %v835, %v817
      %vm852 = vcmask 130048
      %853 = vst.msk [vmem:[#allocation2] sm:$0xff] %vm852, %v836
      %854 = vst.msk [vmem:[#allocation2 + $0x8] sm:$0xff] %vm852, %v837
      %855 = vst.msk [vmem:[#allocation2 + $0x10] sm:$0xff] %vm852, %v838
      %856 = vst.msk [vmem:[#allocation2 + $0x18] sm:$0xff] %vm852, %v839
      %857 = vst.msk [vmem:[#allocation2 + $0x20] sm:$0xff] %vm852, %v840
      %858 = vst.msk [vmem:[#allocation2 + $0x28] sm:$0xff] %vm852, %v841
      %859 = vst.msk [vmem:[#allocation2 + $0x30] sm:$0xff] %vm852, %v842
      %860 = vst.msk [vmem:[#allocation2 + $0x38] sm:$0xff] %vm852, %v843
      %861 = vst.msk [vmem:[#allocation2 + $0x40] sm:$0xff] %vm852, %v844
      %862 = vst.msk [vmem:[#allocation2 + $0x48] sm:$0xff] %vm852, %v845
      %863 = vst.msk [vmem:[#allocation2 + $0x50] sm:$0xff] %vm852, %v846
      %864 = vst.msk [vmem:[#allocation2 + $0x58] sm:$0xff] %vm852, %v847
      %865 = vst.msk [vmem:[#allocation2 + $0x60] sm:$0xff] %vm852, %v848
      %866 = vst.msk [vmem:[#allocation2 + $0x68] sm:$0xff] %vm852, %v849
      %867 = vst.msk [vmem:[#allocation2 + $0x70] sm:$0xff] %vm852, %v850
      %868 = vst.msk [vmem:[#allocation2 + $0x78] sm:$0xff] %vm852, %v851
      // Predicated region
      $region45: #{instance_attention_forward.33} parent=39 // pred_check
        %p869 = pneg %p380
      $region46: #{instance_attention_forward.33} parent=39 // pred_check_branch
        %871 = sbr.rel (%p869) target = $region48
      $region47: #{instance_attention_forward.33} parent=39 // pred_region
        %v872 = vld [vmem:[#allocation2] sm:$0xff]
        %v873 = vld [vmem:[#allocation2 + $0x8] sm:$0xff]
        %v874 = vld [vmem:[#allocation2 + $0x10] sm:$0xff]
        %v875 = vld [vmem:[#allocation2 + $0x18] sm:$0xff]
        %v876 = vld [vmem:[#allocation2 + $0x20] sm:$0xff]
        %v877 = vld [vmem:[#allocation2 + $0x28] sm:$0xff]
        %v878 = vld [vmem:[#allocation2 + $0x30] sm:$0xff]
        %v879 = vld [vmem:[#allocation2 + $0x38] sm:$0xff]
        %v880 = vld [vmem:[#allocation2 + $0x40] sm:$0xff]
        %v881 = vld [vmem:[#allocation2 + $0x48] sm:$0xff]
        %v882 = vld [vmem:[#allocation2 + $0x50] sm:$0xff]
        %v883 = vld [vmem:[#allocation2 + $0x58] sm:$0xff]
        %v884 = vld [vmem:[#allocation2 + $0x60] sm:$0xff]
        %v885 = vld [vmem:[#allocation2 + $0x68] sm:$0xff]
        %v886 = vld [vmem:[#allocation2 + $0x70] sm:$0xff]
        %v887 = vld [vmem:[#allocation2 + $0x78] sm:$0xff]
        %v888 = vld [vmem:[%s369] sm:$0x1]
        %v890 = vlaneseq
        %v891 = vshrl.u32 %v890, 7
        %v892 = vsub.s32 0, %v891
        %v893 = vrot.slane %v888, %v892
        %v895 = vadd.f32 %v872, %v893
        %v896 = vadd.f32 %v873, %v893
        %v897 = vadd.f32 %v874, %v893
        %v898 = vadd.f32 %v875, %v893
        %v899 = vadd.f32 %v876, %v893
        %v900 = vadd.f32 %v877, %v893
        %v901 = vadd.f32 %v878, %v893
        %v902 = vadd.f32 %v879, %v893
        %v903 = vadd.f32 %v880, %v893
        %v904 = vadd.f32 %v881, %v893
        %v905 = vadd.f32 %v882, %v893
        %v906 = vadd.f32 %v883, %v893
        %v907 = vadd.f32 %v884, %v893
        %v908 = vadd.f32 %v885, %v893
        %v909 = vadd.f32 %v886, %v893
        %v910 = vadd.f32 %v887, %v893
        %v911 = vmax.f32 %v895, 0.0
        %v912 = vmax.f32 %v896, 0.0
        %v913 = vmax.f32 %v897, 0.0
        %v914 = vmax.f32 %v898, 0.0
        %v915 = vmax.f32 %v899, 0.0
        %v916 = vmax.f32 %v900, 0.0
        %v917 = vmax.f32 %v901, 0.0
        %v918 = vmax.f32 %v902, 0.0
        %v919 = vmax.f32 %v903, 0.0
        %v920 = vmax.f32 %v904, 0.0
        %v921 = vmax.f32 %v905, 0.0
        %v922 = vmax.f32 %v906, 0.0
        %v923 = vmax.f32 %v907, 0.0
        %v924 = vmax.f32 %v908, 0.0
        %v925 = vmax.f32 %v909, 0.0
        %v926 = vmax.f32 %v910, 0.0
        %v927 = vpack.c.bf16 %v912, %v911
        %v928 = vpack.c.bf16 %v914, %v913
        %v929 = vpack.c.bf16 %v916, %v915
        %v930 = vpack.c.bf16 %v918, %v917
        %v931 = vpack.c.bf16 %v920, %v919
        %v932 = vpack.c.bf16 %v922, %v921
        %v933 = vpack.c.bf16 %v924, %v923
        %v934 = vpack.c.bf16 %v926, %v925
        %v943 = vunpack.c.l.b16 %v927
        %v944 = vunpack.c.h.b16 %v927
        %v945 = vunpack.c.l.b16 %v928
        %v946 = vunpack.c.h.b16 %v928
        %v947 = vunpack.c.l.b16 %v929
        %v948 = vunpack.c.h.b16 %v929
        %v949 = vunpack.c.l.b16 %v930
        %v950 = vunpack.c.h.b16 %v930
        %v951 = vunpack.c.l.b16 %v931
        %v952 = vunpack.c.h.b16 %v931
        %v953 = vunpack.c.l.b16 %v932
        %v954 = vunpack.c.h.b16 %v932
        %v955 = vunpack.c.l.b16 %v933
        %v956 = vunpack.c.h.b16 %v933
        %v957 = vunpack.c.l.b16 %v934
        %v958 = vunpack.c.h.b16 %v934
        %v959 = vpack.c.b16 %v943, %v943
        %v960 = vpack.c.b16 %v944, %v944
        %v961 = vpack.c.b16 %v945, %v945
        %v962 = vpack.c.b16 %v946, %v946
        %v963 = vpack.c.b16 %v947, %v947
        %v964 = vpack.c.b16 %v948, %v948
        %v965 = vpack.c.b16 %v949, %v949
        %v966 = vpack.c.b16 %v950, %v950
        %v967 = vpack.c.b16 %v951, %v951
        %v968 = vpack.c.b16 %v952, %v952
        %v969 = vpack.c.b16 %v953, %v953
        %v970 = vpack.c.b16 %v954, %v954
        %v971 = vpack.c.b16 %v955, %v955
        %v972 = vpack.c.b16 %v956, %v956
        %v973 = vpack.c.b16 %v957, %v957
        %v974 = vpack.c.b16 %v958, %v958
        %vm991 = vcmask 125952
        %992 = vst.msk [vmem:[%s377] sm:$0xf] %vm991, %v959
        %993 = vst.msk [vmem:[%s377 + $0x4] sm:$0xf] %vm991, %v960
        %994 = vst.msk [vmem:[%s377 + $0x8] sm:$0xf] %vm991, %v961
        %995 = vst.msk [vmem:[%s377 + $0xc] sm:$0xf] %vm991, %v962
        %996 = vst.msk [vmem:[%s377 + $0x10] sm:$0xf] %vm991, %v963
        %997 = vst.msk [vmem:[%s377 + $0x14] sm:$0xf] %vm991, %v964
        %998 = vst.msk [vmem:[%s377 + $0x18] sm:$0xf] %vm991, %v965
        %999 = vst.msk [vmem:[%s377 + $0x1c] sm:$0xf] %vm991, %v966
        %1000 = vst.msk [vmem:[%s377 + $0x20] sm:$0xf] %vm991, %v967
        %1001 = vst.msk [vmem:[%s377 + $0x24] sm:$0xf] %vm991, %v968
        %1002 = vst.msk [vmem:[%s377 + $0x28] sm:$0xf] %vm991, %v969
        %1003 = vst.msk [vmem:[%s377 + $0x2c] sm:$0xf] %vm991, %v970
        %1004 = vst.msk [vmem:[%s377 + $0x30] sm:$0xf] %vm991, %v971
        %1005 = vst.msk [vmem:[%s377 + $0x34] sm:$0xf] %vm991, %v972
        %1006 = vst.msk [vmem:[%s377 + $0x38] sm:$0xf] %vm991, %v973
        %1007 = vst.msk [vmem:[%s377 + $0x3c] sm:$0xf] %vm991, %v974
      $region48: #{instance_attention_forward.33} parent=39 // pred_fallthru
        _
      %s1008 = smul.u32 16, %s21
      %p1009 = scmp.lt.s32.totalorder %s1008, 63
      %s1010 = scalar_select %p1009, %s1008, 63
      %p1011 = scmp.lt.s32.totalorder %s22, 0
      %s1012 = scalar_select %p1011, %s22, 0
      %s1013 = sadd.s32 %s1012, %s1010
      %s1014 = smul.addr %s1013, 4
      %s1015 = scalar_lea.vmem %s5, %s1014
      // Predicated region
      $region49: #{instance_attention_forward.33} parent=39 // pred_check
        %p1016 = pneg %p193
      $region50: #{instance_attention_forward.33} parent=39 // pred_check_branch
        %1018 = sbr.rel (%p1016) target = $region52
      $region51: #{instance_attention_forward.33} parent=39 // pred_region
        %s1019 = smul.u32 16, %s21
      $region52: #{instance_attention_forward.33} parent=39 // pred_fallthru
        _
    $region40: #{instance_attention_forward.33} parent=5 // pred_fallthru
      _
    %p1020 = scmp.le.s32.totalorder 2, %s11
    // Predicated region
    $region53: #{instance_attention_forward.33} parent=5 // pred_check
      %p1021 = pneg %p1020
    $region54: #{instance_attention_forward.33} parent=5 // pred_check_branch
      %1023 = sbr.rel (%p1021) target = $region56
    $region55: #{instance_attention_forward.33} parent=5 // pred_region
      %s1024 = ssub.s32 %s11, 2
      // Predicated region
      $region57: #{instance_attention_forward.33} parent=55 // pred_check
        %p1025 = pneg %p199
      $region58: #{instance_attention_forward.33} parent=55 // pred_check_branch
        %1027 = sbr.rel (%p1025) target = $region60
      $region59: #{instance_attention_forward.33} parent=55 // pred_region
        %s1028 = smul.u32 16, %s24
        %p1029 = scmp.lt.s32.totalorder %s1028, 63
        %s1030 = scalar_select %p1029, %s1028, 63
        %p1031 = scmp.lt.s32.totalorder %s25, 0
        %s1032 = scalar_select %p1031, %s25, 0
        %s1033 = sadd.s32 %s1032, %s1030
        %s1034 = smul.addr %s1033, 4
        %s1035 = scalar_lea.vmem %s5, %s1034
      $region60: #{instance_attention_forward.33} parent=55 // pred_fallthru
        _
    $region56: #{instance_attention_forward.33} parent=5 // pred_fallthru
      _
  $region6: #{instance_attention_forward.33} parent=0 // loop_footer
    %s15 = sadd.s32 1, %s11
  $region7: #{instance_attention_forward.33} parent=0 // loop_footer_branch
    %10 = sbr.rel target = $region3
  $region8: #{instance_attention_forward.33} parent=0 // loop_exit
    _

</llo_original>
